<compile_context>
chip_gen: v6e
topology: v6e:2x2x1
jax: 0.10.0
libtpu: 0.0.40
codegen_flags: <defaults>
</compile_context>

<pallas_src>
import math

import jax
import jax.numpy as jnp
from jax.experimental import pallas as pl
from jax.experimental.pallas import tpu as pltpu

_EPS = 1e-5
_LANE = 128
_K = 7  # conv kernel width


def _round_up(x, m):
    return (x + m - 1) // m * m


def _vmem_limit_bytes():
    """Generation-aware scoped-VMEM limit (v7x: 64 MiB physical vs 128 on v5e/v6e)."""
    try:
        cap = int(pltpu.get_tpu_info().vmem_capacity_bytes)
    except Exception:
        cap = 64 * 1024 * 1024
    return int(min(cap * 3 // 4, 96 * 1024 * 1024))


# ----------------------------------------------------------------------------
# Pallas kernel: Conv1d(k=7,s=1,p=3) + BN(eval,folded) + ReLU + 1x1 head + sigmoid
# ----------------------------------------------------------------------------
def _fused_final_kernel(xa_ref, xb_ref, w1_ref, b1_ref, w2_ref, b2_ref,
                        o_ref, col_ref):
    # xa_ref : (1, tm, Cip)   bf16  current row tile, channel-last
    # xb_ref : (1, 8,  Cip)   bf16  halo: first 8 rows of the next tile
    # w1_ref : (7*Cip, Cop)   bf16  BN-scale-folded conv weights, im2col layout
    # b1_ref : (1, Cop)       f32   folded conv+BN bias
    # w2_ref : (Cop, 128)     bf16  1x1 head weights (2 real cols, lane-padded)
    # b2_ref : (1, 128)       f32   head bias (lane-padded)
    # o_ref  : (1, tm, 128)   f32   sigmoid(head), lane-padded output
    # col_ref: (tm, 7*Cip)    bf16  im2col scratch
    tm = o_ref.shape[1]
    cip = xa_ref.shape[2]

    xa = xa_ref[0]                                       # (tm, Cip)
    xb = xb_ref[0]                                       # (8,  Cip)

    # im2col: column block t holds rows [t, t + tm) of the (tm + 8)-row window.
    col_ref[:, 0:cip] = xa
    for t in range(1, _K):                               # static unroll over taps
        lo = t * cip
        col_ref[0:tm - t, lo:lo + cip] = xa[t:tm, :]
        col_ref[tm - t:tm, lo:lo + cip] = xb[0:t, :]

    # Conv(k=7) as one long-K bf16 matmul (f32 accumulation inside the MXU),
    # then folded-BN bias + ReLU — stays on-chip, never round-trips HBM.
    h = jnp.dot(col_ref[...], w1_ref[...], preferred_element_type=jnp.float32)
    h = jnp.maximum(h + b1_ref[...], 0.0)                # (tm, Cop)

    # Fused 1x1 head (Co -> 2, lane-padded to 128) + sigmoid.
    z = jnp.dot(h.astype(jnp.bfloat16), w2_ref[...],
                preferred_element_type=jnp.float32) + b2_ref[...]
    o_ref[0] = 1.0 / (1.0 + jnp.exp(-z))


def _fused_forward(xpad, w1, b1, w2, b2, *, tm, nb_m):
    B, Lp, cip = xpad.shape
    kcip, cop = w1.shape
    assert tm % 128 == 0 and Lp == nb_m * tm + 8, (tm, Lp, nb_m)   # halo invariants
    return pl.pallas_call(
        _fused_final_kernel,
        out_shape=jax.ShapeDtypeStruct((B, nb_m * tm, _LANE), jnp.float32),
        grid_spec=pltpu.PrefetchScalarGridSpec(
            num_scalar_prefetch=0,
            grid=(B, nb_m),
            in_specs=[
                pl.BlockSpec((1, tm, cip), lambda b, i: (b, i, 0)),
                pl.BlockSpec((1, 8, cip),
                             lambda b, i: (b, (i + 1) * (tm // 8), 0)),
                # Weight / bias block indices never change -> DMA'd once total.
                pl.BlockSpec((kcip, cop), lambda b, i: (0, 0)),
                pl.BlockSpec((1, cop), lambda b, i: (0, 0)),
                pl.BlockSpec((cop, _LANE), lambda b, i: (0, 0)),
                pl.BlockSpec((1, _LANE), lambda b, i: (0, 0)),
            ],
            out_specs=pl.BlockSpec((1, tm, _LANE), lambda b, i: (b, i, 0)),
            scratch_shapes=[pltpu.VMEM((tm, kcip), jnp.bfloat16)],
        ),
        compiler_params=pltpu.CompilerParams(
            dimension_semantics=("parallel", "parallel"),
            vmem_limit_bytes=_vmem_limit_bytes()),
    )(xpad, xpad, w1, b1, w2, b2)


# ----------------------------------------------------------------------------
# One-time parameter packing (BN fold, im2col relayout, lane pad, bf16) + forward
# ----------------------------------------------------------------------------
def init_final_layer_params(key, in_ch):
    """Deterministic raw parameters mirroring the PyTorch module (eval mode)."""
    co = in_ch // 2
    k1, k2, k3, k4, k5, k6 = jax.random.split(key, 6)
    return {
        "fuse_w": jax.random.normal(k1, (co, in_ch, _K), jnp.float32) / math.sqrt(in_ch * _K),
        "fuse_b": 0.01 * jax.random.normal(k2, (co,), jnp.float32),
        "bn_gamma": 1.0 + 0.1 * jax.random.normal(k3, (co,), jnp.float32),
        "bn_beta": 0.1 * jax.random.normal(k4, (co,), jnp.float32),
        "bn_mean": 0.1 * jax.random.normal(k5, (co,), jnp.float32),
        "bn_var": jnp.ones((co,), jnp.float32),
        "final_w": jax.random.normal(k6, (2, co, 1), jnp.float32) / math.sqrt(co),
        "final_b": jnp.zeros((2,), jnp.float32),
    }


def pack_final_layer_params(raw):
    """Done once: fold BN, relayout conv weights to im2col (7*Cip, Cop), pad, bf16."""
    w1 = raw["fuse_w"]                                            # (Co, Ci, 7)
    co, ci, k = w1.shape
    s = raw["bn_gamma"] / jnp.sqrt(raw["bn_var"] + _EPS)          # (Co,)
    bias = raw["bn_beta"] + (raw["fuse_b"] - raw["bn_mean"]) * s  # (Co,)
    w_kic = jnp.transpose(w1, (2, 1, 0)) * s[None, None, :]       # (7, Ci, Co), BN folded
    cip, cop = _round_up(ci, _LANE), _round_up(co, _LANE)
    w1p = jnp.zeros((k, cip, cop), jnp.float32).at[:, :ci, :co].set(w_kic)
    w1p = w1p.reshape(k * cip, cop).astype(jnp.bfloat16)          # im2col layout
    b1p = jnp.zeros((1, cop), jnp.float32).at[0, :co].set(bias)
    w2 = raw["final_w"][:, :, 0]                                  # (2, Co)
    w2p = jnp.zeros((cop, _LANE), jnp.float32).at[:co, :2].set(w2.T).astype(jnp.bfloat16)
    b2p = jnp.zeros((1, _LANE), jnp.float32).at[0, :2].set(raw["final_b"])
    return {"w1": w1p, "b1": b1p, "w2": w2p, "b2": b2p}


@jax.jit
def final_layer_forward(packed, x):
    """x: (B, in_ch, L) float32 (PyTorch NCL).  Returns (B, L, 2) — the torch
    sigmoid(conv_final(fuse_conv(x))).permute(0, 2, 1)."""
    w1, b1, w2, b2 = packed["w1"], packed["b1"], packed["w2"], packed["b2"]
    kcip, cop = w1.shape
    cip = kcip // _K
    B, cin, L = x.shape
    assert cin <= cip, (cin, cip)

    # Row tiling: big tiles amortize per-step overhead; when B == 1 make sure a
    # parallel grid axis has extent >= 2 for v7x's two TensorCores.
    tm = min(512, _round_up(L, _LANE))
    if B == 1 and L > _LANE:
        tm = min(tm, _round_up(-(-L // 2), _LANE))
    nb_m = -(-L // tm)
    Lp = nb_m * tm + 8                                   # +8 halo rows for the last tile

    # Rough double-buffered VMEM footprint (x tile, weights, col scratch, out, acc).
    est = (2 * tm * cip * 2 + 2 * kcip * cop * 2 + tm * kcip * 2
           + 2 * tm * _LANE * 4 + 2 * tm * cop * 4)
    assert est < _vmem_limit_bytes(), \
        "final_layer tile footprint exceeds VMEM; add output-channel tiling"
    # TODO(synk): add a channel-tiled (non-fused-head) fallback for in_ch > 1024.

    # Channel-last bf16 operand; cast BEFORE the transpose so the transpose+pad HBM
    # pass is half-width.  "same" padding: 3 zero rows left, zeros right up to Lp.
    xc = jnp.transpose(x.astype(jnp.bfloat16), (0, 2, 1))          # (B, L, Cin)
    xpad = jnp.pad(xc, ((0, 0), (3, Lp - L - 3), (0, cip - cin)))

    y = _fused_forward(xpad, w1, b1, w2, b2, tm=tm, nb_m=nb_m)     # (B, nb_m*tm, 128)
    return y[:, :L, :2]                                            # rows/cols beyond L/2 dropped


# ----------------------------------------------------------------------------
# Pure-JAX f32 reference (matches the PyTorch module exactly) for validation
# ----------------------------------------------------------------------------
def _reference_forward(raw, x):
    y = jax.lax.conv_general_dilated(
        x, raw["fuse_w"], window_strides=(1,), padding=[(3, 3)],
        dimension_numbers=("NCH", "OIH", "NCH"))
    y = y + raw["fuse_b"][None, :, None]
    s = raw["bn_gamma"] / jnp.sqrt(raw["bn_var"] + _EPS)
    y = (y - raw["bn_mean"][None, :, None]) * s[None, :, None] + raw["bn_beta"][None, :, None]
    y = jnp.maximum(y, 0.0)
    z = jnp.einsum("bcl,oc->bol", y, raw["final_w"][:, :, 0]) + raw["final_b"][None, :, None]
    z = jax.nn.sigmoid(z)
    return jnp.transpose(z, (0, 2, 1))


if __name__ == "__main__":
    # Small shapes consistent with the module (real model uses in_ch in {128..1024},
    # L in {79..625}); Dropout is unused in forward.
    B, in_ch, L = 2, 256, 500
    key = jax.random.PRNGKey(0)
    kx, kp = jax.random.split(key)
    x = jax.random.normal(kx, (B, in_ch, L), jnp.float32)

    raw = init_final_layer_params(kp, in_ch)
    packed = pack_final_layer_params(raw)          # one-time weight packing

    out = final_layer_forward(packed, x)
    out = jax.block_until_ready(out)

    assert out.shape == (B, L, 2), out.shape
    assert bool(jnp.all(jnp.isfinite(out)))

    ref = _reference_forward(raw, x)
    err = float(jnp.max(jnp.abs(out - ref)))
    assert err < 3e-2, f"max |pallas - reference| = {err}"
    print("KERNEL_OK")
</pallas_src>

<mosaic_0001>
module attributes {stable_mosaic.version = 11 : i64} {
  func.func @_fused_final_kernel(%arg0: i32, %arg1: i32, %arg2: memref<1x512x256xbf16, #tpu.memory_space<vmem>>, %arg3: memref<1x8x256xbf16, #tpu.memory_space<vmem>>, %arg4: memref<1792x128xbf16, #tpu.memory_space<vmem>>, %arg5: memref<1x128xf32, #tpu.memory_space<vmem>>, %arg6: memref<128x128xbf16, #tpu.memory_space<vmem>>, %arg7: memref<1x128xf32, #tpu.memory_space<vmem>>, %arg8: memref<1x512x128xf32, #tpu.memory_space<vmem>>, %arg9: memref<512x1792xbf16, #tpu.memory_space<vmem>>) attributes {dimension_semantics = [#tpu.dimension_semantics<parallel>, #tpu.dimension_semantics<parallel>], iteration_bounds = array<i64: 2, 1>, scalar_prefetch = 0 : i64, scratch_operands = 1 : i64, tpu.core_type = #tpu.core_type<tc>, window_params = [{transform_indices = @transform_0, window_bounds = array<i64: 1, 512, 256>}, {transform_indices = @transform_1, window_bounds = array<i64: 1, 8, 256>}, {pipeline_mode = #tpu.pipeline_mode<synchronous>, transform_indices = @transform_2, window_bounds = array<i64: 1792, 128>}, {pipeline_mode = #tpu.pipeline_mode<synchronous>, transform_indices = @transform_3, window_bounds = array<i64: 1, 128>}, {pipeline_mode = #tpu.pipeline_mode<synchronous>, transform_indices = @transform_4, window_bounds = array<i64: 128, 128>}, {pipeline_mode = #tpu.pipeline_mode<synchronous>, transform_indices = @transform_5, window_bounds = array<i64: 1, 128>}, {transform_indices = @transform_6, window_bounds = array<i64: 1, 512, 128>}]} {
    %c0 = arith.constant 0 : index
    %c0_0 = arith.constant 0 : index
    %c0_1 = arith.constant 0 : index
    %0 = vector.load %arg2[%c0, %c0_0, %c0_1] : memref<1x512x256xbf16, #tpu.memory_space<vmem>>, vector<1x512x256xbf16>
    %1 = vector.shape_cast %0 : vector<1x512x256xbf16> to vector<512x256xbf16>
    %c0_2 = arith.constant 0 : index
    %c0_3 = arith.constant 0 : index
    %c0_4 = arith.constant 0 : index
    %2 = vector.load %arg3[%c0_2, %c0_3, %c0_4] : memref<1x8x256xbf16, #tpu.memory_space<vmem>>, vector<1x8x256xbf16>
    %3 = vector.shape_cast %2 : vector<1x8x256xbf16> to vector<8x256xbf16>
    %c0_5 = arith.constant 0 : index
    %c0_6 = arith.constant 0 : index
    %4 = vector.load %arg9[%c0_5, %c0_6] : memref<512x1792xbf16, #tpu.memory_space<vmem>>, vector<512x256xbf16>
    tpu.vector_store %arg9[%c0_5, %c0_6], %1 {strides = array<i32>} : memref<512x1792xbf16, #tpu.memory_space<vmem>>, vector<512x256xbf16>,
    %5 = vector.extract_strided_slice %1 {offsets = [1, 0], sizes = [511, 256], strides = [1, 1]} : vector<512x256xbf16> to vector<511x256xbf16>
    %c0_7 = arith.constant 0 : index
    %c256 = arith.constant 256 : index
    %6 = vector.load %arg9[%c0_7, %c256] : memref<512x1792xbf16, #tpu.memory_space<vmem>>, vector<511x256xbf16>
    tpu.vector_store %arg9[%c0_7, %c256], %5 {strides = array<i32>} : memref<512x1792xbf16, #tpu.memory_space<vmem>>, vector<511x256xbf16>,
    %7 = vector.extract_strided_slice %3 {offsets = [0, 0], sizes = [1, 256], strides = [1, 1]} : vector<8x256xbf16> to vector<1x256xbf16>
    %c511 = arith.constant 511 : index
    %c256_8 = arith.constant 256 : index
    %8 = vector.load %arg9[%c511, %c256_8] : memref<512x1792xbf16, #tpu.memory_space<vmem>>, vector<1x256xbf16>
    tpu.vector_store %arg9[%c511, %c256_8], %7 {strides = array<i32>} : memref<512x1792xbf16, #tpu.memory_space<vmem>>, vector<1x256xbf16>,
    %9 = vector.extract_strided_slice %1 {offsets = [2, 0], sizes = [510, 256], strides = [1, 1]} : vector<512x256xbf16> to vector<510x256xbf16>
    %c0_9 = arith.constant 0 : index
    %c512 = arith.constant 512 : index
    %10 = vector.load %arg9[%c0_9, %c512] : memref<512x1792xbf16, #tpu.memory_space<vmem>>, vector<510x256xbf16>
    tpu.vector_store %arg9[%c0_9, %c512], %9 {strides = array<i32>} : memref<512x1792xbf16, #tpu.memory_space<vmem>>, vector<510x256xbf16>,
    %11 = vector.extract_strided_slice %3 {offsets = [0, 0], sizes = [2, 256], strides = [1, 1]} : vector<8x256xbf16> to vector<2x256xbf16>
    %c510 = arith.constant 510 : index
    %c512_10 = arith.constant 512 : index
    %12 = vector.load %arg9[%c510, %c512_10] : memref<512x1792xbf16, #tpu.memory_space<vmem>>, vector<2x256xbf16>
    tpu.vector_store %arg9[%c510, %c512_10], %11 {strides = array<i32>} : memref<512x1792xbf16, #tpu.memory_space<vmem>>, vector<2x256xbf16>,
    %13 = vector.extract_strided_slice %1 {offsets = [3, 0], sizes = [509, 256], strides = [1, 1]} : vector<512x256xbf16> to vector<509x256xbf16>
    %c0_11 = arith.constant 0 : index
    %c768 = arith.constant 768 : index
    %14 = vector.load %arg9[%c0_11, %c768] : memref<512x1792xbf16, #tpu.memory_space<vmem>>, vector<509x256xbf16>
    tpu.vector_store %arg9[%c0_11, %c768], %13 {strides = array<i32>} : memref<512x1792xbf16, #tpu.memory_space<vmem>>, vector<509x256xbf16>,
    %15 = vector.extract_strided_slice %3 {offsets = [0, 0], sizes = [3, 256], strides = [1, 1]} : vector<8x256xbf16> to vector<3x256xbf16>
    %c509 = arith.constant 509 : index
    %c768_12 = arith.constant 768 : index
    %16 = vector.load %arg9[%c509, %c768_12] : memref<512x1792xbf16, #tpu.memory_space<vmem>>, vector<3x256xbf16>
    tpu.vector_store %arg9[%c509, %c768_12], %15 {strides = array<i32>} : memref<512x1792xbf16, #tpu.memory_space<vmem>>, vector<3x256xbf16>,
    %17 = vector.extract_strided_slice %1 {offsets = [4, 0], sizes = [508, 256], strides = [1, 1]} : vector<512x256xbf16> to vector<508x256xbf16>
    %c0_13 = arith.constant 0 : index
    %c1024 = arith.constant 1024 : index
    %18 = vector.load %arg9[%c0_13, %c1024] : memref<512x1792xbf16, #tpu.memory_space<vmem>>, vector<508x256xbf16>
    tpu.vector_store %arg9[%c0_13, %c1024], %17 {strides = array<i32>} : memref<512x1792xbf16, #tpu.memory_space<vmem>>, vector<508x256xbf16>,
    %19 = vector.extract_strided_slice %3 {offsets = [0, 0], sizes = [4, 256], strides = [1, 1]} : vector<8x256xbf16> to vector<4x256xbf16>
    %c508 = arith.constant 508 : index
    %c1024_14 = arith.constant 1024 : index
    %20 = vector.load %arg9[%c508, %c1024_14] : memref<512x1792xbf16, #tpu.memory_space<vmem>>, vector<4x256xbf16>
    tpu.vector_store %arg9[%c508, %c1024_14], %19 {strides = array<i32>} : memref<512x1792xbf16, #tpu.memory_space<vmem>>, vector<4x256xbf16>,
    %21 = vector.extract_strided_slice %1 {offsets = [5, 0], sizes = [507, 256], strides = [1, 1]} : vector<512x256xbf16> to vector<507x256xbf16>
    %c0_15 = arith.constant 0 : index
    %c1280 = arith.constant 1280 : index
    %22 = vector.load %arg9[%c0_15, %c1280] : memref<512x1792xbf16, #tpu.memory_space<vmem>>, vector<507x256xbf16>
    tpu.vector_store %arg9[%c0_15, %c1280], %21 {strides = array<i32>} : memref<512x1792xbf16, #tpu.memory_space<vmem>>, vector<507x256xbf16>,
    %23 = vector.extract_strided_slice %3 {offsets = [0, 0], sizes = [5, 256], strides = [1, 1]} : vector<8x256xbf16> to vector<5x256xbf16>
    %c507 = arith.constant 507 : index
    %c1280_16 = arith.constant 1280 : index
    %24 = vector.load %arg9[%c507, %c1280_16] : memref<512x1792xbf16, #tpu.memory_space<vmem>>, vector<5x256xbf16>
    tpu.vector_store %arg9[%c507, %c1280_16], %23 {strides = array<i32>} : memref<512x1792xbf16, #tpu.memory_space<vmem>>, vector<5x256xbf16>,
    %25 = vector.extract_strided_slice %1 {offsets = [6, 0], sizes = [506, 256], strides = [1, 1]} : vector<512x256xbf16> to vector<506x256xbf16>
    %c0_17 = arith.constant 0 : index
    %c1536 = arith.constant 1536 : index
    %26 = vector.load %arg9[%c0_17, %c1536] : memref<512x1792xbf16, #tpu.memory_space<vmem>>, vector<506x256xbf16>
    tpu.vector_store %arg9[%c0_17, %c1536], %25 {strides = array<i32>} : memref<512x1792xbf16, #tpu.memory_space<vmem>>, vector<506x256xbf16>,
    %27 = vector.extract_strided_slice %3 {offsets = [0, 0], sizes = [6, 256], strides = [1, 1]} : vector<8x256xbf16> to vector<6x256xbf16>
    %c506 = arith.constant 506 : index
    %c1536_18 = arith.constant 1536 : index
    %28 = vector.load %arg9[%c506, %c1536_18] : memref<512x1792xbf16, #tpu.memory_space<vmem>>, vector<6x256xbf16>
    tpu.vector_store %arg9[%c506, %c1536_18], %27 {strides = array<i32>} : memref<512x1792xbf16, #tpu.memory_space<vmem>>, vector<6x256xbf16>,
    %c0_19 = arith.constant 0 : index
    %c0_20 = arith.constant 0 : index
    %29 = vector.load %arg9[%c0_19, %c0_20] : memref<512x1792xbf16, #tpu.memory_space<vmem>>, vector<512x1792xbf16>
    %c0_21 = arith.constant 0 : index
    %c0_22 = arith.constant 0 : index
    %30 = vector.load %arg4[%c0_21, %c0_22] : memref<1792x128xbf16, #tpu.memory_space<vmem>>, vector<1792x128xbf16>
    %cst = arith.constant dense<0.000000e+00> : vector<512x128xf32>
    %31 = tpu.matmul %29, %30, %cst {dimension_numbers = #tpu.dot_dimension_numbers<[1], [0], [0], [1], [0, 0, 1, 1], [], []>} : vector<512x1792xbf16>, vector<1792x128xbf16>, vector<512x128xf32> -> vector<512x128xf32>
    %c0_23 = arith.constant 0 : index
    %c0_24 = arith.constant 0 : index
    %32 = vector.load %arg5[%c0_23, %c0_24] : memref<1x128xf32, #tpu.memory_space<vmem>>, vector<1x128xf32>
    %33 = vector.broadcast %32 : vector<1x128xf32> to vector<512x128xf32>
    %34 = arith.addf %31, %33 : vector<512x128xf32>
    %cst_25 = arith.constant 0.000000e+00 : f32
    %35 = vector.broadcast %cst_25 : f32 to vector<512x128xf32>
    %36 = arith.maximumf %34, %35 : vector<512x128xf32>
    %37 = arith.truncf %36 : vector<512x128xf32> to vector<512x128xbf16>
    %c0_26 = arith.constant 0 : index
    %c0_27 = arith.constant 0 : index
    %38 = vector.load %arg6[%c0_26, %c0_27] : memref<128x128xbf16, #tpu.memory_space<vmem>>, vector<128x128xbf16>
    %cst_28 = arith.constant dense<0.000000e+00> : vector<512x128xf32>
    %39 = tpu.matmul %37, %38, %cst_28 {dimension_numbers = #tpu.dot_dimension_numbers<[1], [0], [0], [1], [0, 0, 1, 1], [], []>} : vector<512x128xbf16>, vector<128x128xbf16>, vector<512x128xf32> -> vector<512x128xf32>
    %c0_29 = arith.constant 0 : index
    %c0_30 = arith.constant 0 : index
    %40 = vector.load %arg7[%c0_29, %c0_30] : memref<1x128xf32, #tpu.memory_space<vmem>>, vector<1x128xf32>
    %41 = vector.broadcast %40 : vector<1x128xf32> to vector<512x128xf32>
    %42 = arith.addf %39, %41 : vector<512x128xf32>
    %cst_31 = arith.constant 0.000000e+00 : f32
    %43 = vector.broadcast %cst_31 : f32 to vector<512x128xf32>
    %44 = arith.subf %43, %42 : vector<512x128xf32>
    %45 = math.exp %44 : vector<512x128xf32>
    %cst_32 = arith.constant 1.000000e+00 : f32
    %46 = vector.broadcast %cst_32 : f32 to vector<512x128xf32>
    %47 = arith.addf %46, %45 : vector<512x128xf32>
    %cst_33 = arith.constant 1.000000e+00 : f32
    %48 = vector.broadcast %cst_33 : f32 to vector<512x128xf32>
    %49 = arith.divf %48, %47 : vector<512x128xf32>
    %c0_34 = arith.constant 0 : index
    %c0_35 = arith.constant 0 : index
    %c0_36 = arith.constant 0 : index
    %50 = vector.load %arg8[%c0_34, %c0_35, %c0_36] : memref<1x512x128xf32, #tpu.memory_space<vmem>>, vector<1x512x128xf32>
    %51 = vector.shape_cast %50 : vector<1x512x128xf32> to vector<512x128xf32>
    %52 = vector.shape_cast %49 : vector<512x128xf32> to vector<1x512x128xf32>
    tpu.vector_store %arg8[%c0_34, %c0_35, %c0_36], %52 {strides = array<i32>} : memref<1x512x128xf32, #tpu.memory_space<vmem>>, vector<1x512x128xf32>,
    return
  }
  func.func @transform_0(%arg0: i32, %arg1: i32) -> (i32, i32, i32) {
    %c0_i32 = arith.constant 0 : i32
    %c0_i32_0 = arith.constant 0 : i32
    return %arg0, %arg1, %c0_i32 : i32, i32, i32
  }
  func.func @transform_1(%arg0: i32, %arg1: i32) -> (i32, i32, i32) {
    %c1_i32 = arith.constant 1 : i32
    %0 = arith.addi %arg1, %c1_i32 : i32
    %c64_i32 = arith.constant 64 : i32
    %1 = arith.muli %0, %c64_i32 : i32
    %c0_i32 = arith.constant 0 : i32
    %c0_i32_0 = arith.constant 0 : i32
    return %arg0, %1, %c0_i32 : i32, i32, i32
  }
  func.func @transform_2(%arg0: i32, %arg1: i32) -> (i32, i32) {
    %c0_i32 = arith.constant 0 : i32
    %c0_i32_0 = arith.constant 0 : i32
    %c0_i32_1 = arith.constant 0 : i32
    return %c0_i32, %c0_i32_0 : i32, i32
  }
  func.func @transform_3(%arg0: i32, %arg1: i32) -> (i32, i32) {
    %c0_i32 = arith.constant 0 : i32
    %c0_i32_0 = arith.constant 0 : i32
    %c0_i32_1 = arith.constant 0 : i32
    return %c0_i32, %c0_i32_0 : i32, i32
  }
  func.func @transform_4(%arg0: i32, %arg1: i32) -> (i32, i32) {
    %c0_i32 = arith.constant 0 : i32
    %c0_i32_0 = arith.constant 0 : i32
    %c0_i32_1 = arith.constant 0 : i32
    return %c0_i32, %c0_i32_0 : i32, i32
  }
  func.func @transform_5(%arg0: i32, %arg1: i32) -> (i32, i32) {
    %c0_i32 = arith.constant 0 : i32
    %c0_i32_0 = arith.constant 0 : i32
    %c0_i32_1 = arith.constant 0 : i32
    return %c0_i32, %c0_i32_0 : i32, i32
  }
  func.func @transform_6(%arg0: i32, %arg1: i32) -> (i32, i32, i32) {
    %c0_i32 = arith.constant 0 : i32
    %c0_i32_0 = arith.constant 0 : i32
    return %arg0, %arg1, %c0_i32 : i32, i32, i32
  }
}

</mosaic_0001>

<llo_original>
// kernel: final_layer_forward.1
$region0: #{final_layer_forward.1}
  #allocation0 [shape = 'u32[]', space=smem, size = 0x4, offset = 0x4, fixed_abs, tag = 'smem constant byte address 0x4 - core index']
  #allocation1 [shape = 'u32[144,128]{1,0:T(1,128)}', space=vmem, size = 0x12000, scoped, tag = 'internal scratch']
  #allocation2 [shape = 'bf16[512,1792]{1,0:T(8,128)(2,1)}', space=vmem, size = 0x1c0000, scoped, tag = 'scratch operand']
  %s0 = inlined_call_operand.vmem [shape: bf16[2,520,256], index: 0, kind: input, shape index: {}, may-alias: {0,1}]
  %s1 = inlined_call_operand.vmem [shape: bf16[2,520,256], index: 1, kind: input, shape index: {}, may-alias: {0,1}]
  %s2 = inlined_call_operand.vmem [shape: bf16[1792,128], index: 2, kind: input, shape index: {}]
  %s3 = inlined_call_operand.vmem [shape: f32[1,128], index: 3, kind: input, shape index: {}]
  %s4 = inlined_call_operand.vmem [shape: bf16[128,128], index: 4, kind: input, shape index: {}]
  %s5 = inlined_call_operand.vmem [shape: f32[1,128], index: 5, kind: input, shape index: {}]
  %s6 = inlined_call_operand.vmem [shape: f32[2,512,128], index: 6, kind: output, shape index: {}]
  %s7 = sld [smem:[#allocation0]]
  $region57: #{final_layer_forward.1} parent=0
    _
  %s9 = ssub.s32 1, %s7
  %s10 = scalar_select 0, %s9, %s7
  loop: start=0, step=1, limit=4
  $region2: #{final_layer_forward.1} parent=0 // loop_pre_header
    _
  $region3: #{final_layer_forward.1} parent=0 // loop_header
    %s12 = sphi 0, %s16
    %p13 = scmp.ge.s32.totalorder %s12, 4
    %s19 = sphi 0, %s31
    %s20 = sphi 0, %s27
    %s21 = sphi 0, %s19
    %s22 = sphi 0, %s20
    %s23 = sphi 0, %s21
    %s24 = sphi 0, %s22
    %s36 = sphi 0, %s38
    %s39 = sphi 0, %s36
    %s40 = sphi 0, %s39
    %s56 = sphi 0, %s40
    %s68 = sphi 0, %s70
    %s71 = sphi 0, %s68
    %s72 = sphi 0, %s71
    %s88 = sphi 0, %s72
    %s92 = sphi 0, %s92
    %s94 = sphi 0, %s92
    %s95 = sphi 0, %s94
    %s109 = sphi 0, %s95
    %s113 = sphi 0, %s113
    %s115 = sphi 0, %s113
    %s116 = sphi 0, %s115
    %s130 = sphi 0, %s116
    %s134 = sphi 0, %s134
    %s136 = sphi 0, %s134
    %s137 = sphi 0, %s136
    %s151 = sphi 0, %s137
    %s155 = sphi 0, %s155
    %s157 = sphi 0, %s155
    %s158 = sphi 0, %s157
    %s172 = sphi 0, %s158
    %s180 = sphi 0, %s182
    %s183 = sphi 0, %s180
    %s184 = sphi 0, %s183
    %s200 = sphi 0, %s184
  $region4: #{final_layer_forward.1} parent=0 // loop_header_branch
    %15 = sbr.rel (%p13) target = $region8
  $region5: #{final_layer_forward.1} parent=0 // loop_body
    %s17 = ssub.s32 %s12, 1
    %s18 = ssub.s32 %s12, 2
    %s25 = sadd.s32 1, %s20
    %p26 = scmp.ge.s32.totalorder %s25, 1
    %s27 = scalar_select %p26, 0, %s25
    %s28 = sadd.s32 1, %s19
    %s29 = scalar_select %p26, %s28, %s19
    %p30 = scmp.ge.s32.totalorder %s29, 2
    %s31 = scalar_select %p30, 0, %s29
    %s32 = ssub.s32 %s19, %s31
    %s33 = ssub.s32 %s20, %s27
    %s34 = sor.u32 %s32, %s33
    %p35 = scmp.eq.s32.totalorder %s34, 0
    %s37 = sadd.s32 %s36, 1
    %s38 = scalar_select %p35, %s36, %s37
    %p41 = pneg %p35
    %p42 = scmp.eq.s32.totalorder %s12, 1
    %p43 = por %p41, %p42
    %p44 = scmp.ne.s32.totalorder %s36, %s39
    %p45 = scmp.eq.s32.totalorder %s12, 0
    %p46 = por %p44, %p45
    %p47 = scmp.ne.s32.totalorder %s36, %s39
    %p48 = scmp.eq.s32.totalorder %s17, 1
    %p49 = por %p47, %p48
    %p50 = scmp.ne.s32.totalorder %s39, %s40
    %p51 = scmp.eq.s32.totalorder %s17, 0
    %p52 = por %p50, %p51
    %p53 = scmp.ne.s32.totalorder %s39, %s40
    %p54 = scmp.eq.s32.totalorder %s18, 1
    %p55 = por %p53, %p54
    %p57 = scmp.ne.s32.totalorder %s40, %s56
    %p58 = scmp.eq.s32.totalorder %s18, 0
    %p59 = por %p57, %p58
    %s60 = sadd.s32 %s20, 1
    %s61 = smul.u32 %s60, 64
    %s62 = sadd.s32 %s27, 1
    %s63 = smul.u32 %s62, 64
    %s64 = ssub.s32 %s19, %s31
    %s65 = ssub.s32 %s61, %s63
    %s66 = sor.u32 %s64, %s65
    %p67 = scmp.eq.s32.totalorder %s66, 0
    %s69 = sadd.s32 %s68, 1
    %s70 = scalar_select %p67, %s68, %s69
    %p73 = pneg %p67
    %p74 = scmp.eq.s32.totalorder %s12, 1
    %p75 = por %p73, %p74
    %p76 = scmp.ne.s32.totalorder %s68, %s71
    %p77 = scmp.eq.s32.totalorder %s12, 0
    %p78 = por %p76, %p77
    %p79 = scmp.ne.s32.totalorder %s68, %s71
    %p80 = scmp.eq.s32.totalorder %s17, 1
    %p81 = por %p79, %p80
    %p82 = scmp.ne.s32.totalorder %s71, %s72
    %p83 = scmp.eq.s32.totalorder %s17, 0
    %p84 = por %p82, %p83
    %p85 = scmp.ne.s32.totalorder %s71, %s72
    %p86 = scmp.eq.s32.totalorder %s18, 1
    %p87 = por %p85, %p86
    %p89 = scmp.ne.s32.totalorder %s72, %s88
    %p90 = scmp.eq.s32.totalorder %s18, 0
    %p91 = por %p89, %p90
    %s93 = sadd.s32 %s92, 1
    %p96 = scmp.eq.s32.totalorder %s12, 1
    %p97 = scmp.ne.s32.totalorder %s92, %s94
    %p98 = scmp.eq.s32.totalorder %s12, 0
    %p99 = por %p97, %p98
    %p100 = scmp.ne.s32.totalorder %s92, %s94
    %p101 = scmp.eq.s32.totalorder %s17, 1
    %p102 = por %p100, %p101
    %p103 = scmp.ne.s32.totalorder %s94, %s95
    %p104 = scmp.eq.s32.totalorder %s17, 0
    %p105 = por %p103, %p104
    %p106 = scmp.ne.s32.totalorder %s94, %s95
    %p107 = scmp.eq.s32.totalorder %s18, 1
    %p108 = por %p106, %p107
    %p110 = scmp.ne.s32.totalorder %s95, %s109
    %p111 = scmp.eq.s32.totalorder %s18, 0
    %p112 = por %p110, %p111
    %s114 = sadd.s32 %s113, 1
    %p117 = scmp.eq.s32.totalorder %s12, 1
    %p118 = scmp.ne.s32.totalorder %s113, %s115
    %p119 = scmp.eq.s32.totalorder %s12, 0
    %p120 = por %p118, %p119
    %p121 = scmp.ne.s32.totalorder %s113, %s115
    %p122 = scmp.eq.s32.totalorder %s17, 1
    %p123 = por %p121, %p122
    %p124 = scmp.ne.s32.totalorder %s115, %s116
    %p125 = scmp.eq.s32.totalorder %s17, 0
    %p126 = por %p124, %p125
    %p127 = scmp.ne.s32.totalorder %s115, %s116
    %p128 = scmp.eq.s32.totalorder %s18, 1
    %p129 = por %p127, %p128
    %p131 = scmp.ne.s32.totalorder %s116, %s130
    %p132 = scmp.eq.s32.totalorder %s18, 0
    %p133 = por %p131, %p132
    %s135 = sadd.s32 %s134, 1
    %p138 = scmp.eq.s32.totalorder %s12, 1
    %p139 = scmp.ne.s32.totalorder %s134, %s136
    %p140 = scmp.eq.s32.totalorder %s12, 0
    %p141 = por %p139, %p140
    %p142 = scmp.ne.s32.totalorder %s134, %s136
    %p143 = scmp.eq.s32.totalorder %s17, 1
    %p144 = por %p142, %p143
    %p145 = scmp.ne.s32.totalorder %s136, %s137
    %p146 = scmp.eq.s32.totalorder %s17, 0
    %p147 = por %p145, %p146
    %p148 = scmp.ne.s32.totalorder %s136, %s137
    %p149 = scmp.eq.s32.totalorder %s18, 1
    %p150 = por %p148, %p149
    %p152 = scmp.ne.s32.totalorder %s137, %s151
    %p153 = scmp.eq.s32.totalorder %s18, 0
    %p154 = por %p152, %p153
    %s156 = sadd.s32 %s155, 1
    %p159 = scmp.eq.s32.totalorder %s12, 1
    %p160 = scmp.ne.s32.totalorder %s155, %s157
    %p161 = scmp.eq.s32.totalorder %s12, 0
    %p162 = por %p160, %p161
    %p163 = scmp.ne.s32.totalorder %s155, %s157
    %p164 = scmp.eq.s32.totalorder %s17, 1
    %p165 = por %p163, %p164
    %p166 = scmp.ne.s32.totalorder %s157, %s158
    %p167 = scmp.eq.s32.totalorder %s17, 0
    %p168 = por %p166, %p167
    %p169 = scmp.ne.s32.totalorder %s157, %s158
    %p170 = scmp.eq.s32.totalorder %s18, 1
    %p171 = por %p169, %p170
    %p173 = scmp.ne.s32.totalorder %s158, %s172
    %p174 = scmp.eq.s32.totalorder %s18, 0
    %p175 = por %p173, %p174
    %s176 = ssub.s32 %s19, %s31
    %s177 = ssub.s32 %s20, %s27
    %s178 = sor.u32 %s176, %s177
    %p179 = scmp.eq.s32.totalorder %s178, 0
    %s181 = sadd.s32 %s180, 1
    %s182 = scalar_select %p179, %s180, %s181
    %p185 = pneg %p179
    %p186 = scmp.eq.s32.totalorder %s12, 1
    %p187 = por %p185, %p186
    %p188 = scmp.ne.s32.totalorder %s180, %s183
    %p189 = scmp.eq.s32.totalorder %s12, 0
    %p190 = por %p188, %p189
    %p191 = scmp.ne.s32.totalorder %s180, %s183
    %p192 = scmp.eq.s32.totalorder %s17, 1
    %p193 = por %p191, %p192
    %p194 = scmp.ne.s32.totalorder %s183, %s184
    %p195 = scmp.eq.s32.totalorder %s17, 0
    %p196 = por %p194, %p195
    %p197 = scmp.ne.s32.totalorder %s183, %s184
    %p198 = scmp.eq.s32.totalorder %s18, 1
    %p199 = por %p197, %p198
    %p201 = scmp.ne.s32.totalorder %s184, %s200
    %p202 = scmp.eq.s32.totalorder %s18, 0
    %p203 = por %p201, %p202
    %p204 = scmp.le.s32.totalorder 1, %s12
    %p205 = scmp.lt.s32.totalorder %s12, 3
    %p206 = pnand %p204, %p205
    %p207 = pneg %p206
    // Predicated region
    $region9: #{final_layer_forward.1} parent=5 // pred_check
      _
    $region10: #{final_layer_forward.1} parent=5 // pred_check_branch
      %209 = sbr.rel (%p206) target = $region12
    $region11: #{final_layer_forward.1} parent=5 // pred_region
      %s210 = ssub.s32 %s12, 1
      // Predicated region
      $region13: #{final_layer_forward.1} parent=11 // pred_check
        %p211 = pneg %p105
      $region14: #{final_layer_forward.1} parent=11 // pred_check_branch
        %213 = sbr.rel (%p211) target = $region16
      $region15: #{final_layer_forward.1} parent=11 // pred_region
        _
      $region16: #{final_layer_forward.1} parent=11 // pred_fallthru
        _
      // Predicated region
      $region17: #{final_layer_forward.1} parent=11 // pred_check
        %p214 = pneg %p126
      $region18: #{final_layer_forward.1} parent=11 // pred_check_branch
        %216 = sbr.rel (%p214) target = $region20
      $region19: #{final_layer_forward.1} parent=11 // pred_region
        _
      $region20: #{final_layer_forward.1} parent=11 // pred_fallthru
        _
      // Predicated region
      $region21: #{final_layer_forward.1} parent=11 // pred_check
        %p217 = pneg %p147
      $region22: #{final_layer_forward.1} parent=11 // pred_check_branch
        %219 = sbr.rel (%p217) target = $region24
      $region23: #{final_layer_forward.1} parent=11 // pred_region
        _
      $region24: #{final_layer_forward.1} parent=11 // pred_fallthru
        _
      // Predicated region
      $region25: #{final_layer_forward.1} parent=11 // pred_check
        %p220 = pneg %p168
      $region26: #{final_layer_forward.1} parent=11 // pred_check_branch
        %222 = sbr.rel (%p220) target = $region28
      $region27: #{final_layer_forward.1} parent=11 // pred_region
        _
      $region28: #{final_layer_forward.1} parent=11 // pred_fallthru
        _
    $region12: #{final_layer_forward.1} parent=5 // pred_fallthru
      _
    %p223 = scmp.lt.s32.totalorder %s12, 2
    // Predicated region
    $region29: #{final_layer_forward.1} parent=5 // pred_check
      %p224 = pneg %p223
    $region30: #{final_layer_forward.1} parent=5 // pred_check_branch
      %226 = sbr.rel (%p224) target = $region32
    $region31: #{final_layer_forward.1} parent=5 // pred_region
      // Predicated region
      $region33: #{final_layer_forward.1} parent=31 // pred_check
        %p227 = pneg %p46
      $region34: #{final_layer_forward.1} parent=31 // pred_check_branch
        %229 = sbr.rel (%p227) target = $region36
      $region35: #{final_layer_forward.1} parent=31 // pred_region
        %s230 = smul.u32 64, %s20
        %s231 = ssub.s32 65, %s230
        %p232 = scmp.lt.s32.totalorder %s231, 64
        %s233 = scalar_select %p232, %s231, 64
        %s234 = smul.u32 64, %s233
        %s235 = smul.u32 %s234, 2
        %p236 = scmp.lt.s32.totalorder %s19, 1
        %s237 = scalar_select %p236, %s19, 1
        %p238 = scmp.lt.s32.totalorder %s230, 64
        %s239 = scalar_select %p238, %s230, 64
        %s240 = smul.addr %s239, 2
        %s241 = smul.addr %s237, 130
        %s242 = sadd.s32 %s240, %s241
        %s243 = smul.addr %s242, 4
        %s244 = scalar_lea.vmem %s0, %s243
        %s245 = smul.u32 64, %s20
        %s246 = ssub.s32 65, %s245
        %p247 = scmp.lt.s32.totalorder %s246, 64
        %s248 = scalar_select %p247, %s246, 64
        %s249 = smul.u32 64, %s248
        %s250 = smul.u32 %s249, 2
      $region36: #{final_layer_forward.1} parent=31 // pred_fallthru
        _
      // Predicated region
      $region37: #{final_layer_forward.1} parent=31 // pred_check
        %p251 = pneg %p78
      $region38: #{final_layer_forward.1} parent=31 // pred_check_branch
        %253 = sbr.rel (%p251) target = $region40
      $region39: #{final_layer_forward.1} parent=31 // pred_region
        %s254 = sadd.s32 %s20, 1
        %s255 = smul.u32 %s254, 64
        %p256 = scmp.lt.s32.totalorder %s19, 1
        %s257 = scalar_select %p256, %s19, 1
        %p258 = scmp.lt.s32.totalorder %s255, 64
        %s259 = scalar_select %p258, %s255, 64
        %s260 = smul.addr %s259, 2
        %s261 = smul.addr %s257, 130
        %s262 = sadd.s32 %s260, %s261
        %s263 = smul.addr %s262, 4
        %s264 = scalar_lea.vmem %s1, %s263
        %s265 = sadd.s32 %s20, 1
        %s266 = smul.u32 %s265, 64
      $region40: #{final_layer_forward.1} parent=31 // pred_fallthru
        _
    $region32: #{final_layer_forward.1} parent=5 // pred_fallthru
      _
    %p267 = scmp.le.s32.totalorder 1, %s12
    %p268 = scmp.lt.s32.totalorder %s12, 3
    %p269 = pnand %p267, %p268
    %p270 = pneg %p269
    // Predicated region
    $region41: #{final_layer_forward.1} parent=5 // pred_check
      _
    $region42: #{final_layer_forward.1} parent=5 // pred_check_branch
      %272 = sbr.rel (%p269) target = $region44
    $region43: #{final_layer_forward.1} parent=5 // pred_region
      %s273 = ssub.s32 %s12, 1
      %s274 = smul.u32 64, %s22
      %s275 = ssub.s32 65, %s274
      %p276 = scmp.lt.s32.totalorder %s275, 64
      %s277 = scalar_select %p276, %s275, 64
      %s278 = smul.u32 64, %s277
      %s279 = smul.u32 %s278, 2
      %p280 = scmp.lt.s32.totalorder %s21, 1
      %s281 = scalar_select %p280, %s21, 1
      %p282 = scmp.lt.s32.totalorder %s274, 64
      %s283 = scalar_select %p282, %s274, 64
      %s284 = smul.addr %s283, 2
      %s285 = smul.addr %s281, 130
      %s286 = sadd.s32 %s284, %s285
      %s287 = smul.addr %s286, 4
      %s288 = scalar_lea.vmem %s0, %s287
      %p289 = pneg %p52
      %p290 = pneg %p49
      %s291 = sadd.s32 %s22, 1
      %s292 = smul.u32 %s291, 64
      %p293 = scmp.lt.s32.totalorder %s21, 1
      %s294 = scalar_select %p293, %s21, 1
      %p295 = scmp.lt.s32.totalorder %s292, 64
      %s296 = scalar_select %p295, %s292, 64
      %s297 = smul.addr %s296, 2
      %s298 = smul.addr %s294, 130
      %s299 = sadd.s32 %s297, %s298
      %s300 = smul.addr %s299, 4
      %s301 = scalar_lea.vmem %s1, %s300
      %p302 = pneg %p84
      %p303 = pneg %p81
      %p304 = pneg %p105
      %p305 = pneg %p102
      %p306 = pneg %p126
      %p307 = pneg %p123
      %p308 = pneg %p147
      %p309 = pneg %p144
      %p310 = pneg %p168
      %p311 = pneg %p165
      %p312 = pneg %p196
      %p313 = pneg %p193
      %s314 = smul.u32 64, %s22
      %p315 = scmp.lt.s32.totalorder %s21, 1
      %s316 = scalar_select %p315, %s21, 1
      %p317 = scmp.lt.s32.totalorder %s314, 63
      %s318 = scalar_select %p317, %s314, 63
      %s319 = smul.addr %s316, 64
      %s320 = sadd.s32 %s318, %s319
      %s321 = smul.addr %s320, 8
      %s322 = scalar_lea.vmem %s6, %s321
      %s323 = smul.u32 64, %s22
      %s324 = ssub.s32 65, %s323
      %p325 = scmp.lt.s32.totalorder %s324, 64
      %s326 = scalar_select %p325, %s324, 64
      %s327 = smul.u32 64, %s326
      %s328 = smul.u32 %s327, 2
      %p329 = scmp.lt.s32.totalorder %s21, 1
      %s330 = scalar_select %p329, %s21, 1
      %p331 = scmp.lt.s32.totalorder %s323, 64
      %s332 = scalar_select %p331, %s323, 64
      %s333 = smul.addr %s332, 2
      %s334 = smul.addr %s330, 130
      %s335 = sadd.s32 %s333, %s334
      %s336 = smul.addr %s335, 4
      %s337 = scalar_lea.vmem %s0, %s336
      %s338 = smul.u32 64, %s22
      %s339 = ssub.s32 65, %s338
      %p340 = scmp.lt.s32.totalorder %s339, 64
      %s341 = scalar_select %p340, %s339, 64
      %s342 = smul.u32 64, %s341
      %s343 = smul.u32 %s342, 2
      %s344 = sadd.s32 %s22, 1
      %s345 = smul.u32 %s344, 64
      %p346 = scmp.lt.s32.totalorder %s21, 1
      %s347 = scalar_select %p346, %s21, 1
      %p348 = scmp.lt.s32.totalorder %s345, 64
      %s349 = scalar_select %p348, %s345, 64
      %s350 = smul.addr %s349, 2
      %s351 = smul.addr %s347, 130
      %s352 = sadd.s32 %s350, %s351
      %s353 = smul.addr %s352, 4
      %s354 = scalar_lea.vmem %s1, %s353
      %s355 = sadd.s32 %s22, 1
      %s356 = smul.u32 %s355, 64
      %s357 = smul.u32 64, %s22
      %p358 = scmp.lt.s32.totalorder %s21, 1
      %s359 = scalar_select %p358, %s21, 1
      %p360 = scmp.lt.s32.totalorder %s357, 63
      %s361 = scalar_select %p360, %s357, 63
      %s362 = smul.addr %s359, 64
      %s363 = sadd.s32 %s361, %s362
      %s364 = smul.addr %s363, 8
      %s365 = scalar_lea.vmem %s6, %s364
      %s366 = smul.u32 64, %s22
      %v368 = vld [vmem:[%s337] sm:$0xff]
      %v369 = vld [vmem:[%s337 + $0x8] sm:$0xff]
      %v370 = vld [vmem:[%s337 + $0x10] sm:$0xff]
      %v371 = vld [vmem:[%s337 + $0x18] sm:$0xff]
      %v372 = vld [vmem:[%s337 + $0x20] sm:$0xff]
      %v373 = vld [vmem:[%s337 + $0x28] sm:$0xff]
      %v374 = vld [vmem:[%s337 + $0x30] sm:$0xff]
      %v375 = vld [vmem:[%s337 + $0x38] sm:$0xff]
      %v376 = vld [vmem:[%s337 + $0x40] sm:$0xff]
      %v377 = vld [vmem:[%s337 + $0x48] sm:$0xff]
      %v378 = vld [vmem:[%s337 + $0x50] sm:$0xff]
      %v379 = vld [vmem:[%s337 + $0x58] sm:$0xff]
      %v380 = vld [vmem:[%s337 + $0x60] sm:$0xff]
      %v381 = vld [vmem:[%s337 + $0x68] sm:$0xff]
      %v382 = vld [vmem:[%s337 + $0x70] sm:$0xff]
      %v383 = vld [vmem:[%s337 + $0x78] sm:$0xff]
      %v384 = vld [vmem:[%s337 + $0x80] sm:$0xff]
      %v385 = vld [vmem:[%s337 + $0x88] sm:$0xff]
      %v386 = vld [vmem:[%s337 + $0x90] sm:$0xff]
      %v387 = vld [vmem:[%s337 + $0x98] sm:$0xff]
      %v388 = vld [vmem:[%s337 + $0xa0] sm:$0xff]
      %v389 = vld [vmem:[%s337 + $0xa8] sm:$0xff]
      %v390 = vld [vmem:[%s337 + $0xb0] sm:$0xff]
      %v391 = vld [vmem:[%s337 + $0xb8] sm:$0xff]
      %v392 = vld [vmem:[%s337 + $0xc0] sm:$0xff]
      %v393 = vld [vmem:[%s337 + $0xc8] sm:$0xff]
      %v394 = vld [vmem:[%s337 + $0xd0] sm:$0xff]
      %v395 = vld [vmem:[%s337 + $0xd8] sm:$0xff]
      %v396 = vld [vmem:[%s337 + $0xe0] sm:$0xff]
      %v397 = vld [vmem:[%s337 + $0xe8] sm:$0xff]
      %v398 = vld [vmem:[%s337 + $0xf0] sm:$0xff]
      %v399 = vld [vmem:[%s337 + $0xf8] sm:$0xff]
      %v400 = vld [vmem:[%s337 + $0x100] sm:$0xff]
      %v401 = vld [vmem:[%s337 + $0x108] sm:$0xff]
      %v402 = vld [vmem:[%s337 + $0x110] sm:$0xff]
      %v403 = vld [vmem:[%s337 + $0x118] sm:$0xff]
      %v404 = vld [vmem:[%s337 + $0x120] sm:$0xff]
      %v405 = vld [vmem:[%s337 + $0x128] sm:$0xff]
      %v406 = vld [vmem:[%s337 + $0x130] sm:$0xff]
      %v407 = vld [vmem:[%s337 + $0x138] sm:$0xff]
      %v408 = vld [vmem:[%s337 + $0x140] sm:$0xff]
      %v409 = vld [vmem:[%s337 + $0x148] sm:$0xff]
      %v410 = vld [vmem:[%s337 + $0x150] sm:$0xff]
      %v411 = vld [vmem:[%s337 + $0x158] sm:$0xff]
      %v412 = vld [vmem:[%s337 + $0x160] sm:$0xff]
      %v413 = vld [vmem:[%s337 + $0x168] sm:$0xff]
      %v414 = vld [vmem:[%s337 + $0x170] sm:$0xff]
      %v415 = vld [vmem:[%s337 + $0x178] sm:$0xff]
      %v416 = vld [vmem:[%s337 + $0x180] sm:$0xff]
      %v417 = vld [vmem:[%s337 + $0x188] sm:$0xff]
      %v418 = vld [vmem:[%s337 + $0x190] sm:$0xff]
      %v419 = vld [vmem:[%s337 + $0x198] sm:$0xff]
      %v420 = vld [vmem:[%s337 + $0x1a0] sm:$0xff]
      %v421 = vld [vmem:[%s337 + $0x1a8] sm:$0xff]
      %v422 = vld [vmem:[%s337 + $0x1b0] sm:$0xff]
      %v423 = vld [vmem:[%s337 + $0x1b8] sm:$0xff]
      %v424 = vld [vmem:[%s337 + $0x1c0] sm:$0xff]
      %v425 = vld [vmem:[%s337 + $0x1c8] sm:$0xff]
      %v426 = vld [vmem:[%s337 + $0x1d0] sm:$0xff]
      %v427 = vld [vmem:[%s337 + $0x1d8] sm:$0xff]
      %v428 = vld [vmem:[%s337 + $0x1e0] sm:$0xff]
      %v429 = vld [vmem:[%s337 + $0x1e8] sm:$0xff]
      %v430 = vld [vmem:[%s337 + $0x1f0] sm:$0xff]
      %v431 = vld [vmem:[%s337 + $0x1f8] sm:$0xff]
      %v432 = vld [vmem:[%s354] sm:$0xff]
      %433 = vst [vmem:[#allocation2] sm:$0xff] %v368
      %434 = vst [vmem:[#allocation2 + $0x38] sm:$0xff] %v369
      %435 = vst [vmem:[#allocation2 + $0x70] sm:$0xff] %v370
      %436 = vst [vmem:[#allocation2 + $0xa8] sm:$0xff] %v371
      %437 = vst [vmem:[#allocation2 + $0xe0] sm:$0xff] %v372
      %438 = vst [vmem:[#allocation2 + $0x118] sm:$0xff] %v373
      %439 = vst [vmem:[#allocation2 + $0x150] sm:$0xff] %v374
      %440 = vst [vmem:[#allocation2 + $0x188] sm:$0xff] %v375
      %441 = vst [vmem:[#allocation2 + $0x1c0] sm:$0xff] %v376
      %442 = vst [vmem:[#allocation2 + $0x1f8] sm:$0xff] %v377
      %443 = vst [vmem:[#allocation2 + $0x230] sm:$0xff] %v378
      %444 = vst [vmem:[#allocation2 + $0x268] sm:$0xff] %v379
      %445 = vst [vmem:[#allocation2 + $0x2a0] sm:$0xff] %v380
      %446 = vst [vmem:[#allocation2 + $0x2d8] sm:$0xff] %v381
      %447 = vst [vmem:[#allocation2 + $0x310] sm:$0xff] %v382
      %448 = vst [vmem:[#allocation2 + $0x348] sm:$0xff] %v383
      %449 = vst [vmem:[#allocation2 + $0x380] sm:$0xff] %v384
      %450 = vst [vmem:[#allocation2 + $0x3b8] sm:$0xff] %v385
      %451 = vst [vmem:[#allocation2 + $0x3f0] sm:$0xff] %v386
      %452 = vst [vmem:[#allocation2 + $0x428] sm:$0xff] %v387
      %453 = vst [vmem:[#allocation2 + $0x460] sm:$0xff] %v388
      %454 = vst [vmem:[#allocation2 + $0x498] sm:$0xff] %v389
      %455 = vst [vmem:[#allocation2 + $0x4d0] sm:$0xff] %v390
      %456 = vst [vmem:[#allocation2 + $0x508] sm:$0xff] %v391
      %457 = vst [vmem:[#allocation2 + $0x540] sm:$0xff] %v392
      %458 = vst [vmem:[#allocation2 + $0x578] sm:$0xff] %v393
      %459 = vst [vmem:[#allocation2 + $0x5b0] sm:$0xff] %v394
      %460 = vst [vmem:[#allocation2 + $0x5e8] sm:$0xff] %v395
      %461 = vst [vmem:[#allocation2 + $0x620] sm:$0xff] %v396
      %462 = vst [vmem:[#allocation2 + $0x658] sm:$0xff] %v397
      %463 = vst [vmem:[#allocation2 + $0x690] sm:$0xff] %v398
      %464 = vst [vmem:[#allocation2 + $0x6c8] sm:$0xff] %v399
      %465 = vst [vmem:[#allocation2 + $0x700] sm:$0xff] %v400
      %466 = vst [vmem:[#allocation2 + $0x738] sm:$0xff] %v401
      %467 = vst [vmem:[#allocation2 + $0x770] sm:$0xff] %v402
      %468 = vst [vmem:[#allocation2 + $0x7a8] sm:$0xff] %v403
      %469 = vst [vmem:[#allocation2 + $0x7e0] sm:$0xff] %v404
      %470 = vst [vmem:[#allocation2 + $0x818] sm:$0xff] %v405
      %471 = vst [vmem:[#allocation2 + $0x850] sm:$0xff] %v406
      %472 = vst [vmem:[#allocation2 + $0x888] sm:$0xff] %v407
      %473 = vst [vmem:[#allocation2 + $0x8c0] sm:$0xff] %v408
      %474 = vst [vmem:[#allocation2 + $0x8f8] sm:$0xff] %v409
      %475 = vst [vmem:[#allocation2 + $0x930] sm:$0xff] %v410
      %476 = vst [vmem:[#allocation2 + $0x968] sm:$0xff] %v411
      %477 = vst [vmem:[#allocation2 + $0x9a0] sm:$0xff] %v412
      %478 = vst [vmem:[#allocation2 + $0x9d8] sm:$0xff] %v413
      %479 = vst [vmem:[#allocation2 + $0xa10] sm:$0xff] %v414
      %480 = vst [vmem:[#allocation2 + $0xa48] sm:$0xff] %v415
      %481 = vst [vmem:[#allocation2 + $0xa80] sm:$0xff] %v416
      %482 = vst [vmem:[#allocation2 + $0xab8] sm:$0xff] %v417
      %483 = vst [vmem:[#allocation2 + $0xaf0] sm:$0xff] %v418
      %484 = vst [vmem:[#allocation2 + $0xb28] sm:$0xff] %v419
      %485 = vst [vmem:[#allocation2 + $0xb60] sm:$0xff] %v420
      %486 = vst [vmem:[#allocation2 + $0xb98] sm:$0xff] %v421
      %487 = vst [vmem:[#allocation2 + $0xbd0] sm:$0xff] %v422
      %488 = vst [vmem:[#allocation2 + $0xc08] sm:$0xff] %v423
      %489 = vst [vmem:[#allocation2 + $0xc40] sm:$0xff] %v424
      %490 = vst [vmem:[#allocation2 + $0xc78] sm:$0xff] %v425
      %491 = vst [vmem:[#allocation2 + $0xcb0] sm:$0xff] %v426
      %492 = vst [vmem:[#allocation2 + $0xce8] sm:$0xff] %v427
      %493 = vst [vmem:[#allocation2 + $0xd20] sm:$0xff] %v428
      %494 = vst [vmem:[#allocation2 + $0xd58] sm:$0xff] %v429
      %495 = vst [vmem:[#allocation2 + $0xd90] sm:$0xff] %v430
      %496 = vst [vmem:[#allocation2 + $0xdc8] sm:$0xff] %v431
      %vm497 = vsmask.f32 3328
      %vm498 = vsmask.f32 7440
      %vm499 = vmor %vm497, %vm498
      %v501 = vshrl.u32 %v368, 16
      %v503 = vrot.slane %v501, 4
      %v504 = vshll.u32 %v368, 16
      %v506 = vrot.slane %v504, 5
      %v507 = vor.u32 %v503, %v506
      %v508 = vrot.slane %v507, 4
      %v510 = vshll.u32 %v369, 16
      %v512 = vrot.slane %v510, 5
      %v513 = vsel %vm499, %v508, %v512
      %v514 = vshrl.u32 %v369, 16
      %v516 = vrot.slane %v514, 4
      %v517 = vor.u32 %v516, %v512
      %v518 = vrot.slane %v517, 4
      %v520 = vshll.u32 %v370, 16
      %v522 = vrot.slane %v520, 5
      %v523 = vsel %vm499, %v518, %v522
      %v524 = vshrl.u32 %v370, 16
      %v526 = vrot.slane %v524, 4
      %v527 = vor.u32 %v526, %v522
      %v528 = vrot.slane %v527, 4
      %v530 = vshll.u32 %v371, 16
      %v532 = vrot.slane %v530, 5
      %v533 = vsel %vm499, %v528, %v532
      %v534 = vshrl.u32 %v371, 16
      %v536 = vrot.slane %v534, 4
      %v537 = vor.u32 %v536, %v532
      %v538 = vrot.slane %v537, 4
      %v540 = vshll.u32 %v372, 16
      %v542 = vrot.slane %v540, 5
      %v543 = vsel %vm499, %v538, %v542
      %v544 = vshrl.u32 %v372, 16
      %v546 = vrot.slane %v544, 4
      %v547 = vor.u32 %v546, %v542
      %v548 = vrot.slane %v547, 4
      %v550 = vshll.u32 %v373, 16
      %v552 = vrot.slane %v550, 5
      %v553 = vsel %vm499, %v548, %v552
      %v554 = vshrl.u32 %v373, 16
      %v556 = vrot.slane %v554, 4
      %v557 = vor.u32 %v556, %v552
      %v558 = vrot.slane %v557, 4
      %v560 = vshll.u32 %v374, 16
      %v562 = vrot.slane %v560, 5
      %v563 = vsel %vm499, %v558, %v562
      %v564 = vshrl.u32 %v374, 16
      %v566 = vrot.slane %v564, 4
      %v567 = vor.u32 %v566, %v562
      %v568 = vrot.slane %v567, 4
      %v570 = vshll.u32 %v375, 16
      %v572 = vrot.slane %v570, 5
      %v573 = vsel %vm499, %v568, %v572
      %v574 = vshrl.u32 %v375, 16
      %v576 = vrot.slane %v574, 4
      %v577 = vor.u32 %v576, %v572
      %v578 = vrot.slane %v577, 4
      %v580 = vshll.u32 %v376, 16
      %v582 = vrot.slane %v580, 5
      %v583 = vsel %vm499, %v578, %v582
      %v584 = vshrl.u32 %v376, 16
      %v586 = vrot.slane %v584, 4
      %v587 = vor.u32 %v586, %v582
      %v588 = vrot.slane %v587, 4
      %v590 = vshll.u32 %v377, 16
      %v592 = vrot.slane %v590, 5
      %v593 = vsel %vm499, %v588, %v592
      %v594 = vshrl.u32 %v377, 16
      %v596 = vrot.slane %v594, 4
      %v597 = vor.u32 %v596, %v592
      %v598 = vrot.slane %v597, 4
      %v600 = vshll.u32 %v378, 16
      %v602 = vrot.slane %v600, 5
      %v603 = vsel %vm499, %v598, %v602
      %v604 = vshrl.u32 %v378, 16
      %v606 = vrot.slane %v604, 4
      %v607 = vor.u32 %v606, %v602
      %v608 = vrot.slane %v607, 4
      %v610 = vshll.u32 %v379, 16
      %v612 = vrot.slane %v610, 5
      %v613 = vsel %vm499, %v608, %v612
      %v614 = vshrl.u32 %v379, 16
      %v616 = vrot.slane %v614, 4
      %v617 = vor.u32 %v616, %v612
      %v618 = vrot.slane %v617, 4
      %v620 = vshll.u32 %v380, 16
      %v622 = vrot.slane %v620, 5
      %v623 = vsel %vm499, %v618, %v622
      %v624 = vshrl.u32 %v380, 16
      %v626 = vrot.slane %v624, 4
      %v627 = vor.u32 %v626, %v622
      %v628 = vrot.slane %v627, 4
      %v630 = vshll.u32 %v381, 16
      %v632 = vrot.slane %v630, 5
      %v633 = vsel %vm499, %v628, %v632
      %v634 = vshrl.u32 %v381, 16
      %v636 = vrot.slane %v634, 4
      %v637 = vor.u32 %v636, %v632
      %v638 = vrot.slane %v637, 4
      %v640 = vshll.u32 %v382, 16
      %v642 = vrot.slane %v640, 5
      %v643 = vsel %vm499, %v638, %v642
      %v644 = vshrl.u32 %v382, 16
      %v646 = vrot.slane %v644, 4
      %v647 = vor.u32 %v646, %v642
      %v648 = vrot.slane %v647, 4
      %v650 = vshll.u32 %v383, 16
      %v652 = vrot.slane %v650, 5
      %v653 = vsel %vm499, %v648, %v652
      %v654 = vshrl.u32 %v383, 16
      %v656 = vrot.slane %v654, 4
      %v657 = vor.u32 %v656, %v652
      %v658 = vrot.slane %v657, 4
      %v660 = vshll.u32 %v384, 16
      %v662 = vrot.slane %v660, 5
      %v663 = vsel %vm499, %v658, %v662
      %v664 = vshrl.u32 %v384, 16
      %v666 = vrot.slane %v664, 4
      %v667 = vor.u32 %v666, %v662
      %v668 = vrot.slane %v667, 4
      %v670 = vshll.u32 %v385, 16
      %v672 = vrot.slane %v670, 5
      %v673 = vsel %vm499, %v668, %v672
      %v674 = vshrl.u32 %v385, 16
      %v676 = vrot.slane %v674, 4
      %v677 = vor.u32 %v676, %v672
      %v678 = vrot.slane %v677, 4
      %v680 = vshll.u32 %v386, 16
      %v682 = vrot.slane %v680, 5
      %v683 = vsel %vm499, %v678, %v682
      %v684 = vshrl.u32 %v386, 16
      %v686 = vrot.slane %v684, 4
      %v687 = vor.u32 %v686, %v682
      %v688 = vrot.slane %v687, 4
      %v690 = vshll.u32 %v387, 16
      %v692 = vrot.slane %v690, 5
      %v693 = vsel %vm499, %v688, %v692
      %v694 = vshrl.u32 %v387, 16
      %v696 = vrot.slane %v694, 4
      %v697 = vor.u32 %v696, %v692
      %v698 = vrot.slane %v697, 4
      %v700 = vshll.u32 %v388, 16
      %v702 = vrot.slane %v700, 5
      %v703 = vsel %vm499, %v698, %v702
      %v704 = vshrl.u32 %v388, 16
      %v706 = vrot.slane %v704, 4
      %v707 = vor.u32 %v706, %v702
      %v708 = vrot.slane %v707, 4
      %v710 = vshll.u32 %v389, 16
      %v712 = vrot.slane %v710, 5
      %v713 = vsel %vm499, %v708, %v712
      %v714 = vshrl.u32 %v389, 16
      %v716 = vrot.slane %v714, 4
      %v717 = vor.u32 %v716, %v712
      %v718 = vrot.slane %v717, 4
      %v720 = vshll.u32 %v390, 16
      %v722 = vrot.slane %v720, 5
      %v723 = vsel %vm499, %v718, %v722
      %v724 = vshrl.u32 %v390, 16
      %v726 = vrot.slane %v724, 4
      %v727 = vor.u32 %v726, %v722
      %v728 = vrot.slane %v727, 4
      %v730 = vshll.u32 %v391, 16
      %v732 = vrot.slane %v730, 5
      %v733 = vsel %vm499, %v728, %v732
      %v734 = vshrl.u32 %v391, 16
      %v736 = vrot.slane %v734, 4
      %v737 = vor.u32 %v736, %v732
      %v738 = vrot.slane %v737, 4
      %v740 = vshll.u32 %v392, 16
      %v742 = vrot.slane %v740, 5
      %v743 = vsel %vm499, %v738, %v742
      %v744 = vshrl.u32 %v392, 16
      %v746 = vrot.slane %v744, 4
      %v747 = vor.u32 %v746, %v742
      %v748 = vrot.slane %v747, 4
      %v750 = vshll.u32 %v393, 16
      %v752 = vrot.slane %v750, 5
      %v753 = vsel %vm499, %v748, %v752
      %v754 = vshrl.u32 %v393, 16
      %v756 = vrot.slane %v754, 4
      %v757 = vor.u32 %v756, %v752
      %v758 = vrot.slane %v757, 4
      %v760 = vshll.u32 %v394, 16
      %v762 = vrot.slane %v760, 5
      %v763 = vsel %vm499, %v758, %v762
      %v764 = vshrl.u32 %v394, 16
      %v766 = vrot.slane %v764, 4
      %v767 = vor.u32 %v766, %v762
      %v768 = vrot.slane %v767, 4
      %v770 = vshll.u32 %v395, 16
      %v772 = vrot.slane %v770, 5
      %v773 = vsel %vm499, %v768, %v772
      %v774 = vshrl.u32 %v395, 16
      %v776 = vrot.slane %v774, 4
      %v777 = vor.u32 %v776, %v772
      %v778 = vrot.slane %v777, 4
      %v780 = vshll.u32 %v396, 16
      %v782 = vrot.slane %v780, 5
      %v783 = vsel %vm499, %v778, %v782
      %v784 = vshrl.u32 %v396, 16
      %v786 = vrot.slane %v784, 4
      %v787 = vor.u32 %v786, %v782
      %v788 = vrot.slane %v787, 4
      %v790 = vshll.u32 %v397, 16
      %v792 = vrot.slane %v790, 5
      %v793 = vsel %vm499, %v788, %v792
      %v794 = vshrl.u32 %v397, 16
      %v796 = vrot.slane %v794, 4
      %v797 = vor.u32 %v796, %v792
      %v798 = vrot.slane %v797, 4
      %v800 = vshll.u32 %v398, 16
      %v802 = vrot.slane %v800, 5
      %v803 = vsel %vm499, %v798, %v802
      %v804 = vshrl.u32 %v398, 16
      %v806 = vrot.slane %v804, 4
      %v807 = vor.u32 %v806, %v802
      %v808 = vrot.slane %v807, 4
      %v810 = vshll.u32 %v399, 16
      %v812 = vrot.slane %v810, 5
      %v813 = vsel %vm499, %v808, %v812
      %v814 = vshrl.u32 %v399, 16
      %v816 = vrot.slane %v814, 4
      %v817 = vor.u32 %v816, %v812
      %v818 = vrot.slane %v817, 4
      %v820 = vshll.u32 %v400, 16
      %v822 = vrot.slane %v820, 5
      %v823 = vsel %vm499, %v818, %v822
      %v824 = vshrl.u32 %v400, 16
      %v826 = vrot.slane %v824, 4
      %v827 = vor.u32 %v826, %v822
      %v828 = vrot.slane %v827, 4
      %v830 = vshll.u32 %v401, 16
      %v832 = vrot.slane %v830, 5
      %v833 = vsel %vm499, %v828, %v832
      %v834 = vshrl.u32 %v401, 16
      %v836 = vrot.slane %v834, 4
      %v837 = vor.u32 %v836, %v832
      %v838 = vrot.slane %v837, 4
      %v840 = vshll.u32 %v402, 16
      %v842 = vrot.slane %v840, 5
      %v843 = vsel %vm499, %v838, %v842
      %v844 = vshrl.u32 %v402, 16
      %v846 = vrot.slane %v844, 4
      %v847 = vor.u32 %v846, %v842
      %v848 = vrot.slane %v847, 4
      %v850 = vshll.u32 %v403, 16
      %v852 = vrot.slane %v850, 5
      %v853 = vsel %vm499, %v848, %v852
      %v854 = vshrl.u32 %v403, 16
      %v856 = vrot.slane %v854, 4
      %v857 = vor.u32 %v856, %v852
      %v858 = vrot.slane %v857, 4
      %v860 = vshll.u32 %v404, 16
      %v862 = vrot.slane %v860, 5
      %v863 = vsel %vm499, %v858, %v862
      %v864 = vshrl.u32 %v404, 16
      %v866 = vrot.slane %v864, 4
      %v867 = vor.u32 %v866, %v862
      %v868 = vrot.slane %v867, 4
      %v870 = vshll.u32 %v405, 16
      %v872 = vrot.slane %v870, 5
      %v873 = vsel %vm499, %v868, %v872
      %v874 = vshrl.u32 %v405, 16
      %v876 = vrot.slane %v874, 4
      %v877 = vor.u32 %v876, %v872
      %v878 = vrot.slane %v877, 4
      %v880 = vshll.u32 %v406, 16
      %v882 = vrot.slane %v880, 5
      %v883 = vsel %vm499, %v878, %v882
      %v884 = vshrl.u32 %v406, 16
      %v886 = vrot.slane %v884, 4
      %v887 = vor.u32 %v886, %v882
      %v888 = vrot.slane %v887, 4
      %v890 = vshll.u32 %v407, 16
      %v892 = vrot.slane %v890, 5
      %v893 = vsel %vm499, %v888, %v892
      %v894 = vshrl.u32 %v407, 16
      %v896 = vrot.slane %v894, 4
      %v897 = vor.u32 %v896, %v892
      %v898 = vrot.slane %v897, 4
      %v900 = vshll.u32 %v408, 16
      %v902 = vrot.slane %v900, 5
      %v903 = vsel %vm499, %v898, %v902
      %v904 = vshrl.u32 %v408, 16
      %v906 = vrot.slane %v904, 4
      %v907 = vor.u32 %v906, %v902
      %v908 = vrot.slane %v907, 4
      %v910 = vshll.u32 %v409, 16
      %v912 = vrot.slane %v910, 5
      %v913 = vsel %vm499, %v908, %v912
      %v914 = vshrl.u32 %v409, 16
      %v916 = vrot.slane %v914, 4
      %v917 = vor.u32 %v916, %v912
      %v918 = vrot.slane %v917, 4
      %v920 = vshll.u32 %v410, 16
      %v922 = vrot.slane %v920, 5
      %v923 = vsel %vm499, %v918, %v922
      %v924 = vshrl.u32 %v410, 16
      %v926 = vrot.slane %v924, 4
      %v927 = vor.u32 %v926, %v922
      %v928 = vrot.slane %v927, 4
      %v930 = vshll.u32 %v411, 16
      %v932 = vrot.slane %v930, 5
      %v933 = vsel %vm499, %v928, %v932
      %v934 = vshrl.u32 %v411, 16
      %v936 = vrot.slane %v934, 4
      %v937 = vor.u32 %v936, %v932
      %v938 = vrot.slane %v937, 4
      %v940 = vshll.u32 %v412, 16
      %v942 = vrot.slane %v940, 5
      %v943 = vsel %vm499, %v938, %v942
      %v944 = vshrl.u32 %v412, 16
      %v946 = vrot.slane %v944, 4
      %v947 = vor.u32 %v946, %v942
      %v948 = vrot.slane %v947, 4
      %v950 = vshll.u32 %v413, 16
      %v952 = vrot.slane %v950, 5
      %v953 = vsel %vm499, %v948, %v952
      %v954 = vshrl.u32 %v413, 16
      %v956 = vrot.slane %v954, 4
      %v957 = vor.u32 %v956, %v952
      %v958 = vrot.slane %v957, 4
      %v960 = vshll.u32 %v414, 16
      %v962 = vrot.slane %v960, 5
      %v963 = vsel %vm499, %v958, %v962
      %v964 = vshrl.u32 %v414, 16
      %v966 = vrot.slane %v964, 4
      %v967 = vor.u32 %v966, %v962
      %v968 = vrot.slane %v967, 4
      %v970 = vshll.u32 %v415, 16
      %v972 = vrot.slane %v970, 5
      %v973 = vsel %vm499, %v968, %v972
      %v974 = vshrl.u32 %v415, 16
      %v976 = vrot.slane %v974, 4
      %v977 = vor.u32 %v976, %v972
      %v978 = vrot.slane %v977, 4
      %v980 = vshll.u32 %v416, 16
      %v982 = vrot.slane %v980, 5
      %v983 = vsel %vm499, %v978, %v982
      %v984 = vshrl.u32 %v416, 16
      %v986 = vrot.slane %v984, 4
      %v987 = vor.u32 %v986, %v982
      %v988 = vrot.slane %v987, 4
      %v990 = vshll.u32 %v417, 16
      %v992 = vrot.slane %v990, 5
      %v993 = vsel %vm499, %v988, %v992
      %v994 = vshrl.u32 %v417, 16
      %v996 = vrot.slane %v994, 4
      %v997 = vor.u32 %v996, %v992
      %v998 = vrot.slane %v997, 4
      %v1000 = vshll.u32 %v418, 16
      %v1002 = vrot.slane %v1000, 5
      %v1003 = vsel %vm499, %v998, %v1002
      %v1004 = vshrl.u32 %v418, 16
      %v1006 = vrot.slane %v1004, 4
      %v1007 = vor.u32 %v1006, %v1002
      %v1008 = vrot.slane %v1007, 4
      %v1010 = vshll.u32 %v419, 16
      %v1012 = vrot.slane %v1010, 5
      %v1013 = vsel %vm499, %v1008, %v1012
      %v1014 = vshrl.u32 %v419, 16
      %v1016 = vrot.slane %v1014, 4
      %v1017 = vor.u32 %v1016, %v1012
      %v1018 = vrot.slane %v1017, 4
      %v1020 = vshll.u32 %v420, 16
      %v1022 = vrot.slane %v1020, 5
      %v1023 = vsel %vm499, %v1018, %v1022
      %v1024 = vshrl.u32 %v420, 16
      %v1026 = vrot.slane %v1024, 4
      %v1027 = vor.u32 %v1026, %v1022
      %v1028 = vrot.slane %v1027, 4
      %v1030 = vshll.u32 %v421, 16
      %v1032 = vrot.slane %v1030, 5
      %v1033 = vsel %vm499, %v1028, %v1032
      %v1034 = vshrl.u32 %v421, 16
      %v1036 = vrot.slane %v1034, 4
      %v1037 = vor.u32 %v1036, %v1032
      %v1038 = vrot.slane %v1037, 4
      %v1040 = vshll.u32 %v422, 16
      %v1042 = vrot.slane %v1040, 5
      %v1043 = vsel %vm499, %v1038, %v1042
      %v1044 = vshrl.u32 %v422, 16
      %v1046 = vrot.slane %v1044, 4
      %v1047 = vor.u32 %v1046, %v1042
      %v1048 = vrot.slane %v1047, 4
      %v1050 = vshll.u32 %v423, 16
      %v1052 = vrot.slane %v1050, 5
      %v1053 = vsel %vm499, %v1048, %v1052
      %v1054 = vshrl.u32 %v423, 16
      %v1056 = vrot.slane %v1054, 4
      %v1057 = vor.u32 %v1056, %v1052
      %v1058 = vrot.slane %v1057, 4
      %v1060 = vshll.u32 %v424, 16
      %v1062 = vrot.slane %v1060, 5
      %v1063 = vsel %vm499, %v1058, %v1062
      %v1064 = vshrl.u32 %v424, 16
      %v1066 = vrot.slane %v1064, 4
      %v1067 = vor.u32 %v1066, %v1062
      %v1068 = vrot.slane %v1067, 4
      %v1070 = vshll.u32 %v425, 16
      %v1072 = vrot.slane %v1070, 5
      %v1073 = vsel %vm499, %v1068, %v1072
      %v1074 = vshrl.u32 %v425, 16
      %v1076 = vrot.slane %v1074, 4
      %v1077 = vor.u32 %v1076, %v1072
      %v1078 = vrot.slane %v1077, 4
      %v1080 = vshll.u32 %v426, 16
      %v1082 = vrot.slane %v1080, 5
      %v1083 = vsel %vm499, %v1078, %v1082
      %v1084 = vshrl.u32 %v426, 16
      %v1086 = vrot.slane %v1084, 4
      %v1087 = vor.u32 %v1086, %v1082
      %v1088 = vrot.slane %v1087, 4
      %v1090 = vshll.u32 %v427, 16
      %v1092 = vrot.slane %v1090, 5
      %v1093 = vsel %vm499, %v1088, %v1092
      %v1094 = vshrl.u32 %v427, 16
      %v1096 = vrot.slane %v1094, 4
      %v1097 = vor.u32 %v1096, %v1092
      %v1098 = vrot.slane %v1097, 4
      %v1100 = vshll.u32 %v428, 16
      %v1102 = vrot.slane %v1100, 5
      %v1103 = vsel %vm499, %v1098, %v1102
      %v1104 = vshrl.u32 %v428, 16
      %v1106 = vrot.slane %v1104, 4
      %v1107 = vor.u32 %v1106, %v1102
      %v1108 = vrot.slane %v1107, 4
      %v1110 = vshll.u32 %v429, 16
      %v1112 = vrot.slane %v1110, 5
      %v1113 = vsel %vm499, %v1108, %v1112
      %v1114 = vshrl.u32 %v429, 16
      %v1116 = vrot.slane %v1114, 4
      %v1117 = vor.u32 %v1116, %v1112
      %v1118 = vrot.slane %v1117, 4
      %v1120 = vshll.u32 %v430, 16
      %v1122 = vrot.slane %v1120, 5
      %v1123 = vsel %vm499, %v1118, %v1122
      %v1124 = vshrl.u32 %v430, 16
      %v1126 = vrot.slane %v1124, 4
      %v1127 = vor.u32 %v1126, %v1122
      %v1128 = vrot.slane %v1127, 4
      %v1130 = vshll.u32 %v431, 16
      %v1132 = vrot.slane %v1130, 5
      %v1133 = vsel %vm499, %v1128, %v1132
      %v1134 = vshrl.u32 %v431, 16
      %v1136 = vrot.slane %v1134, 4
      %v1137 = vor.u32 %v1136, %v1132
      %v1138 = vrot.slane %v1137, 4
      %1203 = vst [vmem:[#allocation2 + $0x8] sm:$0xff] %v513
      %1204 = vst [vmem:[#allocation2 + $0x40] sm:$0xff] %v523
      %1205 = vst [vmem:[#allocation2 + $0x78] sm:$0xff] %v533
      %1206 = vst [vmem:[#allocation2 + $0xb0] sm:$0xff] %v543
      %1207 = vst [vmem:[#allocation2 + $0xe8] sm:$0xff] %v553
      %1208 = vst [vmem:[#allocation2 + $0x120] sm:$0xff] %v563
      %1209 = vst [vmem:[#allocation2 + $0x158] sm:$0xff] %v573
      %1210 = vst [vmem:[#allocation2 + $0x190] sm:$0xff] %v583
      %1211 = vst [vmem:[#allocation2 + $0x1c8] sm:$0xff] %v593
      %1212 = vst [vmem:[#allocation2 + $0x200] sm:$0xff] %v603
      %1213 = vst [vmem:[#allocation2 + $0x238] sm:$0xff] %v613
      %1214 = vst [vmem:[#allocation2 + $0x270] sm:$0xff] %v623
      %1215 = vst [vmem:[#allocation2 + $0x2a8] sm:$0xff] %v633
      %1216 = vst [vmem:[#allocation2 + $0x2e0] sm:$0xff] %v643
      %1217 = vst [vmem:[#allocation2 + $0x318] sm:$0xff] %v653
      %1218 = vst [vmem:[#allocation2 + $0x350] sm:$0xff] %v663
      %1219 = vst [vmem:[#allocation2 + $0x388] sm:$0xff] %v673
      %1220 = vst [vmem:[#allocation2 + $0x3c0] sm:$0xff] %v683
      %1221 = vst [vmem:[#allocation2 + $0x3f8] sm:$0xff] %v693
      %1222 = vst [vmem:[#allocation2 + $0x430] sm:$0xff] %v703
      %1223 = vst [vmem:[#allocation2 + $0x468] sm:$0xff] %v713
      %1224 = vst [vmem:[#allocation2 + $0x4a0] sm:$0xff] %v723
      %1225 = vst [vmem:[#allocation2 + $0x4d8] sm:$0xff] %v733
      %1226 = vst [vmem:[#allocation2 + $0x510] sm:$0xff] %v743
      %1227 = vst [vmem:[#allocation2 + $0x548] sm:$0xff] %v753
      %1228 = vst [vmem:[#allocation2 + $0x580] sm:$0xff] %v763
      %1229 = vst [vmem:[#allocation2 + $0x5b8] sm:$0xff] %v773
      %1230 = vst [vmem:[#allocation2 + $0x5f0] sm:$0xff] %v783
      %1231 = vst [vmem:[#allocation2 + $0x628] sm:$0xff] %v793
      %1232 = vst [vmem:[#allocation2 + $0x660] sm:$0xff] %v803
      %1233 = vst [vmem:[#allocation2 + $0x698] sm:$0xff] %v813
      %1234 = vst [vmem:[#allocation2 + $0x6d0] sm:$0xff] %v823
      %1235 = vst [vmem:[#allocation2 + $0x708] sm:$0xff] %v833
      %1236 = vst [vmem:[#allocation2 + $0x740] sm:$0xff] %v843
      %1237 = vst [vmem:[#allocation2 + $0x778] sm:$0xff] %v853
      %1238 = vst [vmem:[#allocation2 + $0x7b0] sm:$0xff] %v863
      %1239 = vst [vmem:[#allocation2 + $0x7e8] sm:$0xff] %v873
      %1240 = vst [vmem:[#allocation2 + $0x820] sm:$0xff] %v883
      %1241 = vst [vmem:[#allocation2 + $0x858] sm:$0xff] %v893
      %1242 = vst [vmem:[#allocation2 + $0x890] sm:$0xff] %v903
      %1243 = vst [vmem:[#allocation2 + $0x8c8] sm:$0xff] %v913
      %1244 = vst [vmem:[#allocation2 + $0x900] sm:$0xff] %v923
      %1245 = vst [vmem:[#allocation2 + $0x938] sm:$0xff] %v933
      %1246 = vst [vmem:[#allocation2 + $0x970] sm:$0xff] %v943
      %1247 = vst [vmem:[#allocation2 + $0x9a8] sm:$0xff] %v953
      %1248 = vst [vmem:[#allocation2 + $0x9e0] sm:$0xff] %v963
      %1249 = vst [vmem:[#allocation2 + $0xa18] sm:$0xff] %v973
      %1250 = vst [vmem:[#allocation2 + $0xa50] sm:$0xff] %v983
      %1251 = vst [vmem:[#allocation2 + $0xa88] sm:$0xff] %v993
      %1252 = vst [vmem:[#allocation2 + $0xac0] sm:$0xff] %v1003
      %1253 = vst [vmem:[#allocation2 + $0xaf8] sm:$0xff] %v1013
      %1254 = vst [vmem:[#allocation2 + $0xb30] sm:$0xff] %v1023
      %1255 = vst [vmem:[#allocation2 + $0xb68] sm:$0xff] %v1033
      %1256 = vst [vmem:[#allocation2 + $0xba0] sm:$0xff] %v1043
      %1257 = vst [vmem:[#allocation2 + $0xbd8] sm:$0xff] %v1053
      %1258 = vst [vmem:[#allocation2 + $0xc10] sm:$0xff] %v1063
      %1259 = vst [vmem:[#allocation2 + $0xc48] sm:$0xff] %v1073
      %1260 = vst [vmem:[#allocation2 + $0xc80] sm:$0xff] %v1083
      %1261 = vst [vmem:[#allocation2 + $0xcb8] sm:$0xff] %v1093
      %1262 = vst [vmem:[#allocation2 + $0xcf0] sm:$0xff] %v1103
      %1263 = vst [vmem:[#allocation2 + $0xd28] sm:$0xff] %v1113
      %1264 = vst [vmem:[#allocation2 + $0xd60] sm:$0xff] %v1123
      %1265 = vst [vmem:[#allocation2 + $0xd98] sm:$0xff] %v1133
      %vm1266 = vcmask 1043456
      %vm1267 = vmand %vm1266, %vm497
      %vm1268 = vcmask 1047556
      %vm1269 = vsmask.f32 7424
      %vm1270 = vmand %vm1268, %vm1269
      %vm1271 = vmor %vm1270, %vm1267
      %v1272 = vld [vmem:[#allocation2 + $0xdd0] sm:$0xff]
      %v1273 = vsel %vm1271, %v1138, %v1272
      %1274 = vst [vmem:[#allocation2 + $0xdd0] sm:$0xff] %v1273
      %v1276 = vshll.u32 %v432, 16
      %v1278 = vrot.slane %v1276, 5
      %vm1280 = vcmask 1043459
      %vm1281 = vsmask.f32 7950
      %vm1282 = vmand %vm1280, %vm1281
      %vm1283 = vcmask 1047559
      %vm1284 = vsmask.f32 7966
      %vm1285 = vmand %vm1283, %vm1284
      %vm1286 = vmor %vm1285, %vm1282
      %v1287 = vld [vmem:[#allocation2 + $0xdd0] sm:$0x88]
      %v1288 = vsel %vm1286, %v1278, %v1287
      %1289 = vst [vmem:[#allocation2 + $0xdd0] sm:$0x88] %v1288
      %vm1354 = vcmask 1042432
      %vm1355 = vcmask 1046532
      %vm1356 = vmor %vm1354, %vm1355
      %v1357 = vrot.slane %v368, 5
      %v1358 = vrot.slane %v1357, 4
      %v1359 = vrot.slane %v369, 5
      %v1360 = vsel %vm1356, %v1358, %v1359
      %v1361 = vrot.slane %v1359, 4
      %v1362 = vrot.slane %v370, 5
      %v1363 = vsel %vm1356, %v1361, %v1362
      %v1364 = vrot.slane %v1362, 4
      %v1365 = vrot.slane %v371, 5
      %v1366 = vsel %vm1356, %v1364, %v1365
      %v1367 = vrot.slane %v1365, 4
      %v1368 = vrot.slane %v372, 5
      %v1369 = vsel %vm1356, %v1367, %v1368
      %v1370 = vrot.slane %v1368, 4
      %v1371 = vrot.slane %v373, 5
      %v1372 = vsel %vm1356, %v1370, %v1371
      %v1373 = vrot.slane %v1371, 4
      %v1374 = vrot.slane %v374, 5
      %v1375 = vsel %vm1356, %v1373, %v1374
      %v1376 = vrot.slane %v1374, 4
      %v1377 = vrot.slane %v375, 5
      %v1378 = vsel %vm1356, %v1376, %v1377
      %v1379 = vrot.slane %v1377, 4
      %v1380 = vrot.slane %v376, 5
      %v1381 = vsel %vm1356, %v1379, %v1380
      %v1382 = vrot.slane %v1380, 4
      %v1383 = vrot.slane %v377, 5
      %v1384 = vsel %vm1356, %v1382, %v1383
      %v1385 = vrot.slane %v1383, 4
      %v1386 = vrot.slane %v378, 5
      %v1387 = vsel %vm1356, %v1385, %v1386
      %v1388 = vrot.slane %v1386, 4
      %v1389 = vrot.slane %v379, 5
      %v1390 = vsel %vm1356, %v1388, %v1389
      %v1391 = vrot.slane %v1389, 4
      %v1392 = vrot.slane %v380, 5
      %v1393 = vsel %vm1356, %v1391, %v1392
      %v1394 = vrot.slane %v1392, 4
      %v1395 = vrot.slane %v381, 5
      %v1396 = vsel %vm1356, %v1394, %v1395
      %v1397 = vrot.slane %v1395, 4
      %v1398 = vrot.slane %v382, 5
      %v1399 = vsel %vm1356, %v1397, %v1398
      %v1400 = vrot.slane %v1398, 4
      %v1401 = vrot.slane %v383, 5
      %v1402 = vsel %vm1356, %v1400, %v1401
      %v1403 = vrot.slane %v1401, 4
      %v1404 = vrot.slane %v384, 5
      %v1405 = vsel %vm1356, %v1403, %v1404
      %v1406 = vrot.slane %v1404, 4
      %v1407 = vrot.slane %v385, 5
      %v1408 = vsel %vm1356, %v1406, %v1407
      %v1409 = vrot.slane %v1407, 4
      %v1410 = vrot.slane %v386, 5
      %v1411 = vsel %vm1356, %v1409, %v1410
      %v1412 = vrot.slane %v1410, 4
      %v1413 = vrot.slane %v387, 5
      %v1414 = vsel %vm1356, %v1412, %v1413
      %v1415 = vrot.slane %v1413, 4
      %v1416 = vrot.slane %v388, 5
      %v1417 = vsel %vm1356, %v1415, %v1416
      %v1418 = vrot.slane %v1416, 4
      %v1419 = vrot.slane %v389, 5
      %v1420 = vsel %vm1356, %v1418, %v1419
      %v1421 = vrot.slane %v1419, 4
      %v1422 = vrot.slane %v390, 5
      %v1423 = vsel %vm1356, %v1421, %v1422
      %v1424 = vrot.slane %v1422, 4
      %v1425 = vrot.slane %v391, 5
      %v1426 = vsel %vm1356, %v1424, %v1425
      %v1427 = vrot.slane %v1425, 4
      %v1428 = vrot.slane %v392, 5
      %v1429 = vsel %vm1356, %v1427, %v1428
      %v1430 = vrot.slane %v1428, 4
      %v1431 = vrot.slane %v393, 5
      %v1432 = vsel %vm1356, %v1430, %v1431
      %v1433 = vrot.slane %v1431, 4
      %v1434 = vrot.slane %v394, 5
      %v1435 = vsel %vm1356, %v1433, %v1434
      %v1436 = vrot.slane %v1434, 4
      %v1437 = vrot.slane %v395, 5
      %v1438 = vsel %vm1356, %v1436, %v1437
      %v1439 = vrot.slane %v1437, 4
      %v1440 = vrot.slane %v396, 5
      %v1441 = vsel %vm1356, %v1439, %v1440
      %v1442 = vrot.slane %v1440, 4
      %v1443 = vrot.slane %v397, 5
      %v1444 = vsel %vm1356, %v1442, %v1443
      %v1445 = vrot.slane %v1443, 4
      %v1446 = vrot.slane %v398, 5
      %v1447 = vsel %vm1356, %v1445, %v1446
      %v1448 = vrot.slane %v1446, 4
      %v1449 = vrot.slane %v399, 5
      %v1450 = vsel %vm1356, %v1448, %v1449
      %v1451 = vrot.slane %v1449, 4
      %v1452 = vrot.slane %v400, 5
      %v1453 = vsel %vm1356, %v1451, %v1452
      %v1454 = vrot.slane %v1452, 4
      %v1455 = vrot.slane %v401, 5
      %v1456 = vsel %vm1356, %v1454, %v1455
      %v1457 = vrot.slane %v1455, 4
      %v1458 = vrot.slane %v402, 5
      %v1459 = vsel %vm1356, %v1457, %v1458
      %v1460 = vrot.slane %v1458, 4
      %v1461 = vrot.slane %v403, 5
      %v1462 = vsel %vm1356, %v1460, %v1461
      %v1463 = vrot.slane %v1461, 4
      %v1464 = vrot.slane %v404, 5
      %v1465 = vsel %vm1356, %v1463, %v1464
      %v1466 = vrot.slane %v1464, 4
      %v1467 = vrot.slane %v405, 5
      %v1468 = vsel %vm1356, %v1466, %v1467
      %v1469 = vrot.slane %v1467, 4
      %v1470 = vrot.slane %v406, 5
      %v1471 = vsel %vm1356, %v1469, %v1470
      %v1472 = vrot.slane %v1470, 4
      %v1473 = vrot.slane %v407, 5
      %v1474 = vsel %vm1356, %v1472, %v1473
      %v1475 = vrot.slane %v1473, 4
      %v1476 = vrot.slane %v408, 5
      %v1477 = vsel %vm1356, %v1475, %v1476
      %v1478 = vrot.slane %v1476, 4
      %v1479 = vrot.slane %v409, 5
      %v1480 = vsel %vm1356, %v1478, %v1479
      %v1481 = vrot.slane %v1479, 4
      %v1482 = vrot.slane %v410, 5
      %v1483 = vsel %vm1356, %v1481, %v1482
      %v1484 = vrot.slane %v1482, 4
      %v1485 = vrot.slane %v411, 5
      %v1486 = vsel %vm1356, %v1484, %v1485
      %v1487 = vrot.slane %v1485, 4
      %v1488 = vrot.slane %v412, 5
      %v1489 = vsel %vm1356, %v1487, %v1488
      %v1490 = vrot.slane %v1488, 4
      %v1491 = vrot.slane %v413, 5
      %v1492 = vsel %vm1356, %v1490, %v1491
      %v1493 = vrot.slane %v1491, 4
      %v1494 = vrot.slane %v414, 5
      %v1495 = vsel %vm1356, %v1493, %v1494
      %v1496 = vrot.slane %v1494, 4
      %v1497 = vrot.slane %v415, 5
      %v1498 = vsel %vm1356, %v1496, %v1497
      %v1499 = vrot.slane %v1497, 4
      %v1500 = vrot.slane %v416, 5
      %v1501 = vsel %vm1356, %v1499, %v1500
      %v1502 = vrot.slane %v1500, 4
      %v1503 = vrot.slane %v417, 5
      %v1504 = vsel %vm1356, %v1502, %v1503
      %v1505 = vrot.slane %v1503, 4
      %v1506 = vrot.slane %v418, 5
      %v1507 = vsel %vm1356, %v1505, %v1506
      %v1508 = vrot.slane %v1506, 4
      %v1509 = vrot.slane %v419, 5
      %v1510 = vsel %vm1356, %v1508, %v1509
      %v1511 = vrot.slane %v1509, 4
      %v1512 = vrot.slane %v420, 5
      %v1513 = vsel %vm1356, %v1511, %v1512
      %v1514 = vrot.slane %v1512, 4
      %v1515 = vrot.slane %v421, 5
      %v1516 = vsel %vm1356, %v1514, %v1515
      %v1517 = vrot.slane %v1515, 4
      %v1518 = vrot.slane %v422, 5
      %v1519 = vsel %vm1356, %v1517, %v1518
      %v1520 = vrot.slane %v1518, 4
      %v1521 = vrot.slane %v423, 5
      %v1522 = vsel %vm1356, %v1520, %v1521
      %v1523 = vrot.slane %v1521, 4
      %v1524 = vrot.slane %v424, 5
      %v1525 = vsel %vm1356, %v1523, %v1524
      %v1526 = vrot.slane %v1524, 4
      %v1527 = vrot.slane %v425, 5
      %v1528 = vsel %vm1356, %v1526, %v1527
      %v1529 = vrot.slane %v1527, 4
      %v1530 = vrot.slane %v426, 5
      %v1531 = vsel %vm1356, %v1529, %v1530
      %v1532 = vrot.slane %v1530, 4
      %v1533 = vrot.slane %v427, 5
      %v1534 = vsel %vm1356, %v1532, %v1533
      %v1535 = vrot.slane %v1533, 4
      %v1536 = vrot.slane %v428, 5
      %v1537 = vsel %vm1356, %v1535, %v1536
      %v1538 = vrot.slane %v1536, 4
      %v1539 = vrot.slane %v429, 5
      %v1540 = vsel %vm1356, %v1538, %v1539
      %v1541 = vrot.slane %v1539, 4
      %v1542 = vrot.slane %v430, 5
      %v1543 = vsel %vm1356, %v1541, %v1542
      %v1544 = vrot.slane %v1542, 4
      %v1545 = vrot.slane %v431, 5
      %v1546 = vsel %vm1356, %v1544, %v1545
      %v1547 = vrot.slane %v1545, 4
      %1612 = vst [vmem:[#allocation2 + $0x10] sm:$0xff] %v1360
      %1613 = vst [vmem:[#allocation2 + $0x48] sm:$0xff] %v1363
      %1614 = vst [vmem:[#allocation2 + $0x80] sm:$0xff] %v1366
      %1615 = vst [vmem:[#allocation2 + $0xb8] sm:$0xff] %v1369
      %1616 = vst [vmem:[#allocation2 + $0xf0] sm:$0xff] %v1372
      %1617 = vst [vmem:[#allocation2 + $0x128] sm:$0xff] %v1375
      %1618 = vst [vmem:[#allocation2 + $0x160] sm:$0xff] %v1378
      %1619 = vst [vmem:[#allocation2 + $0x198] sm:$0xff] %v1381
      %1620 = vst [vmem:[#allocation2 + $0x1d0] sm:$0xff] %v1384
      %1621 = vst [vmem:[#allocation2 + $0x208] sm:$0xff] %v1387
      %1622 = vst [vmem:[#allocation2 + $0x240] sm:$0xff] %v1390
      %1623 = vst [vmem:[#allocation2 + $0x278] sm:$0xff] %v1393
      %1624 = vst [vmem:[#allocation2 + $0x2b0] sm:$0xff] %v1396
      %1625 = vst [vmem:[#allocation2 + $0x2e8] sm:$0xff] %v1399
      %1626 = vst [vmem:[#allocation2 + $0x320] sm:$0xff] %v1402
      %1627 = vst [vmem:[#allocation2 + $0x358] sm:$0xff] %v1405
      %1628 = vst [vmem:[#allocation2 + $0x390] sm:$0xff] %v1408
      %1629 = vst [vmem:[#allocation2 + $0x3c8] sm:$0xff] %v1411
      %1630 = vst [vmem:[#allocation2 + $0x400] sm:$0xff] %v1414
      %1631 = vst [vmem:[#allocation2 + $0x438] sm:$0xff] %v1417
      %1632 = vst [vmem:[#allocation2 + $0x470] sm:$0xff] %v1420
      %1633 = vst [vmem:[#allocation2 + $0x4a8] sm:$0xff] %v1423
      %1634 = vst [vmem:[#allocation2 + $0x4e0] sm:$0xff] %v1426
      %1635 = vst [vmem:[#allocation2 + $0x518] sm:$0xff] %v1429
      %1636 = vst [vmem:[#allocation2 + $0x550] sm:$0xff] %v1432
      %1637 = vst [vmem:[#allocation2 + $0x588] sm:$0xff] %v1435
      %1638 = vst [vmem:[#allocation2 + $0x5c0] sm:$0xff] %v1438
      %1639 = vst [vmem:[#allocation2 + $0x5f8] sm:$0xff] %v1441
      %1640 = vst [vmem:[#allocation2 + $0x630] sm:$0xff] %v1444
      %1641 = vst [vmem:[#allocation2 + $0x668] sm:$0xff] %v1447
      %1642 = vst [vmem:[#allocation2 + $0x6a0] sm:$0xff] %v1450
      %1643 = vst [vmem:[#allocation2 + $0x6d8] sm:$0xff] %v1453
      %1644 = vst [vmem:[#allocation2 + $0x710] sm:$0xff] %v1456
      %1645 = vst [vmem:[#allocation2 + $0x748] sm:$0xff] %v1459
      %1646 = vst [vmem:[#allocation2 + $0x780] sm:$0xff] %v1462
      %1647 = vst [vmem:[#allocation2 + $0x7b8] sm:$0xff] %v1465
      %1648 = vst [vmem:[#allocation2 + $0x7f0] sm:$0xff] %v1468
      %1649 = vst [vmem:[#allocation2 + $0x828] sm:$0xff] %v1471
      %1650 = vst [vmem:[#allocation2 + $0x860] sm:$0xff] %v1474
      %1651 = vst [vmem:[#allocation2 + $0x898] sm:$0xff] %v1477
      %1652 = vst [vmem:[#allocation2 + $0x8d0] sm:$0xff] %v1480
      %1653 = vst [vmem:[#allocation2 + $0x908] sm:$0xff] %v1483
      %1654 = vst [vmem:[#allocation2 + $0x940] sm:$0xff] %v1486
      %1655 = vst [vmem:[#allocation2 + $0x978] sm:$0xff] %v1489
      %1656 = vst [vmem:[#allocation2 + $0x9b0] sm:$0xff] %v1492
      %1657 = vst [vmem:[#allocation2 + $0x9e8] sm:$0xff] %v1495
      %1658 = vst [vmem:[#allocation2 + $0xa20] sm:$0xff] %v1498
      %1659 = vst [vmem:[#allocation2 + $0xa58] sm:$0xff] %v1501
      %1660 = vst [vmem:[#allocation2 + $0xa90] sm:$0xff] %v1504
      %1661 = vst [vmem:[#allocation2 + $0xac8] sm:$0xff] %v1507
      %1662 = vst [vmem:[#allocation2 + $0xb00] sm:$0xff] %v1510
      %1663 = vst [vmem:[#allocation2 + $0xb38] sm:$0xff] %v1513
      %1664 = vst [vmem:[#allocation2 + $0xb70] sm:$0xff] %v1516
      %1665 = vst [vmem:[#allocation2 + $0xba8] sm:$0xff] %v1519
      %1666 = vst [vmem:[#allocation2 + $0xbe0] sm:$0xff] %v1522
      %1667 = vst [vmem:[#allocation2 + $0xc18] sm:$0xff] %v1525
      %1668 = vst [vmem:[#allocation2 + $0xc50] sm:$0xff] %v1528
      %1669 = vst [vmem:[#allocation2 + $0xc88] sm:$0xff] %v1531
      %1670 = vst [vmem:[#allocation2 + $0xcc0] sm:$0xff] %v1534
      %1671 = vst [vmem:[#allocation2 + $0xcf8] sm:$0xff] %v1537
      %1672 = vst [vmem:[#allocation2 + $0xd30] sm:$0xff] %v1540
      %1673 = vst [vmem:[#allocation2 + $0xd68] sm:$0xff] %v1543
      %1674 = vst [vmem:[#allocation2 + $0xda0] sm:$0xff] %v1546
      %1675 = vst [vmem:[#allocation2 + $0xdd8] sm:$0x77] %v1547
      %v1677 = vrot.slane %v432, 5
      %1679 = vst [vmem:[#allocation2 + $0xdd8] sm:$0x88] %v1677
      %vm1680 = vsmask.f32 2304
      %vm1681 = vsmask.f32 6416
      %vm1682 = vmor %vm1680, %vm1681
      %v1683 = vrot.slane %v501, 5
      %v1684 = vrot.slane %v504, 6
      %v1685 = vor.u32 %v1683, %v1684
      %v1686 = vrot.slane %v1685, 4
      %v1687 = vrot.slane %v514, 5
      %v1688 = vrot.slane %v510, 6
      %v1689 = vor.u32 %v1687, %v1688
      %v1690 = vsel %vm1682, %v1686, %v1689
      %v1691 = vrot.slane %v1689, 4
      %v1692 = vrot.slane %v524, 5
      %v1693 = vrot.slane %v520, 6
      %v1694 = vor.u32 %v1692, %v1693
      %v1695 = vsel %vm1682, %v1691, %v1694
      %v1696 = vrot.slane %v1694, 4
      %v1697 = vrot.slane %v534, 5
      %v1698 = vrot.slane %v530, 6
      %v1699 = vor.u32 %v1697, %v1698
      %v1700 = vsel %vm1682, %v1696, %v1699
      %v1701 = vrot.slane %v1699, 4
      %v1702 = vrot.slane %v544, 5
      %v1703 = vrot.slane %v540, 6
      %v1704 = vor.u32 %v1702, %v1703
      %v1705 = vsel %vm1682, %v1701, %v1704
      %v1706 = vrot.slane %v1704, 4
      %v1707 = vrot.slane %v554, 5
      %v1708 = vrot.slane %v550, 6
      %v1709 = vor.u32 %v1707, %v1708
      %v1710 = vsel %vm1682, %v1706, %v1709
      %v1711 = vrot.slane %v1709, 4
      %v1712 = vrot.slane %v564, 5
      %v1713 = vrot.slane %v560, 6
      %v1714 = vor.u32 %v1712, %v1713
      %v1715 = vsel %vm1682, %v1711, %v1714
      %v1716 = vrot.slane %v1714, 4
      %v1717 = vrot.slane %v574, 5
      %v1718 = vrot.slane %v570, 6
      %v1719 = vor.u32 %v1717, %v1718
      %v1720 = vsel %vm1682, %v1716, %v1719
      %v1721 = vrot.slane %v1719, 4
      %v1722 = vrot.slane %v584, 5
      %v1723 = vrot.slane %v580, 6
      %v1724 = vor.u32 %v1722, %v1723
      %v1725 = vsel %vm1682, %v1721, %v1724
      %v1726 = vrot.slane %v1724, 4
      %v1727 = vrot.slane %v594, 5
      %v1728 = vrot.slane %v590, 6
      %v1729 = vor.u32 %v1727, %v1728
      %v1730 = vsel %vm1682, %v1726, %v1729
      %v1731 = vrot.slane %v1729, 4
      %v1732 = vrot.slane %v604, 5
      %v1733 = vrot.slane %v600, 6
      %v1734 = vor.u32 %v1732, %v1733
      %v1735 = vsel %vm1682, %v1731, %v1734
      %v1736 = vrot.slane %v1734, 4
      %v1737 = vrot.slane %v614, 5
      %v1738 = vrot.slane %v610, 6
      %v1739 = vor.u32 %v1737, %v1738
      %v1740 = vsel %vm1682, %v1736, %v1739
      %v1741 = vrot.slane %v1739, 4
      %v1742 = vrot.slane %v624, 5
      %v1743 = vrot.slane %v620, 6
      %v1744 = vor.u32 %v1742, %v1743
      %v1745 = vsel %vm1682, %v1741, %v1744
      %v1746 = vrot.slane %v1744, 4
      %v1747 = vrot.slane %v634, 5
      %v1748 = vrot.slane %v630, 6
      %v1749 = vor.u32 %v1747, %v1748
      %v1750 = vsel %vm1682, %v1746, %v1749
      %v1751 = vrot.slane %v1749, 4
      %v1752 = vrot.slane %v644, 5
      %v1753 = vrot.slane %v640, 6
      %v1754 = vor.u32 %v1752, %v1753
      %v1755 = vsel %vm1682, %v1751, %v1754
      %v1756 = vrot.slane %v1754, 4
      %v1757 = vrot.slane %v654, 5
      %v1758 = vrot.slane %v650, 6
      %v1759 = vor.u32 %v1757, %v1758
      %v1760 = vsel %vm1682, %v1756, %v1759
      %v1761 = vrot.slane %v1759, 4
      %v1762 = vrot.slane %v664, 5
      %v1763 = vrot.slane %v660, 6
      %v1764 = vor.u32 %v1762, %v1763
      %v1765 = vsel %vm1682, %v1761, %v1764
      %v1766 = vrot.slane %v1764, 4
      %v1767 = vrot.slane %v674, 5
      %v1768 = vrot.slane %v670, 6
      %v1769 = vor.u32 %v1767, %v1768
      %v1770 = vsel %vm1682, %v1766, %v1769
      %v1771 = vrot.slane %v1769, 4
      %v1772 = vrot.slane %v684, 5
      %v1773 = vrot.slane %v680, 6
      %v1774 = vor.u32 %v1772, %v1773
      %v1775 = vsel %vm1682, %v1771, %v1774
      %v1776 = vrot.slane %v1774, 4
      %v1777 = vrot.slane %v694, 5
      %v1778 = vrot.slane %v690, 6
      %v1779 = vor.u32 %v1777, %v1778
      %v1780 = vsel %vm1682, %v1776, %v1779
      %v1781 = vrot.slane %v1779, 4
      %v1782 = vrot.slane %v704, 5
      %v1783 = vrot.slane %v700, 6
      %v1784 = vor.u32 %v1782, %v1783
      %v1785 = vsel %vm1682, %v1781, %v1784
      %v1786 = vrot.slane %v1784, 4
      %v1787 = vrot.slane %v714, 5
      %v1788 = vrot.slane %v710, 6
      %v1789 = vor.u32 %v1787, %v1788
      %v1790 = vsel %vm1682, %v1786, %v1789
      %v1791 = vrot.slane %v1789, 4
      %v1792 = vrot.slane %v724, 5
      %v1793 = vrot.slane %v720, 6
      %v1794 = vor.u32 %v1792, %v1793
      %v1795 = vsel %vm1682, %v1791, %v1794
      %v1796 = vrot.slane %v1794, 4
      %v1797 = vrot.slane %v734, 5
      %v1798 = vrot.slane %v730, 6
      %v1799 = vor.u32 %v1797, %v1798
      %v1800 = vsel %vm1682, %v1796, %v1799
      %v1801 = vrot.slane %v1799, 4
      %v1802 = vrot.slane %v744, 5
      %v1803 = vrot.slane %v740, 6
      %v1804 = vor.u32 %v1802, %v1803
      %v1805 = vsel %vm1682, %v1801, %v1804
      %v1806 = vrot.slane %v1804, 4
      %v1807 = vrot.slane %v754, 5
      %v1808 = vrot.slane %v750, 6
      %v1809 = vor.u32 %v1807, %v1808
      %v1810 = vsel %vm1682, %v1806, %v1809
      %v1811 = vrot.slane %v1809, 4
      %v1812 = vrot.slane %v764, 5
      %v1813 = vrot.slane %v760, 6
      %v1814 = vor.u32 %v1812, %v1813
      %v1815 = vsel %vm1682, %v1811, %v1814
      %v1816 = vrot.slane %v1814, 4
      %v1817 = vrot.slane %v774, 5
      %v1818 = vrot.slane %v770, 6
      %v1819 = vor.u32 %v1817, %v1818
      %v1820 = vsel %vm1682, %v1816, %v1819
      %v1821 = vrot.slane %v1819, 4
      %v1822 = vrot.slane %v784, 5
      %v1823 = vrot.slane %v780, 6
      %v1824 = vor.u32 %v1822, %v1823
      %v1825 = vsel %vm1682, %v1821, %v1824
      %v1826 = vrot.slane %v1824, 4
      %v1827 = vrot.slane %v794, 5
      %v1828 = vrot.slane %v790, 6
      %v1829 = vor.u32 %v1827, %v1828
      %v1830 = vsel %vm1682, %v1826, %v1829
      %v1831 = vrot.slane %v1829, 4
      %v1832 = vrot.slane %v804, 5
      %v1833 = vrot.slane %v800, 6
      %v1834 = vor.u32 %v1832, %v1833
      %v1835 = vsel %vm1682, %v1831, %v1834
      %v1836 = vrot.slane %v1834, 4
      %v1837 = vrot.slane %v814, 5
      %v1838 = vrot.slane %v810, 6
      %v1839 = vor.u32 %v1837, %v1838
      %v1840 = vsel %vm1682, %v1836, %v1839
      %v1841 = vrot.slane %v1839, 4
      %v1842 = vrot.slane %v824, 5
      %v1843 = vrot.slane %v820, 6
      %v1844 = vor.u32 %v1842, %v1843
      %v1845 = vsel %vm1682, %v1841, %v1844
      %v1846 = vrot.slane %v1844, 4
      %v1847 = vrot.slane %v834, 5
      %v1848 = vrot.slane %v830, 6
      %v1849 = vor.u32 %v1847, %v1848
      %v1850 = vsel %vm1682, %v1846, %v1849
      %v1851 = vrot.slane %v1849, 4
      %v1852 = vrot.slane %v844, 5
      %v1853 = vrot.slane %v840, 6
      %v1854 = vor.u32 %v1852, %v1853
      %v1855 = vsel %vm1682, %v1851, %v1854
      %v1856 = vrot.slane %v1854, 4
      %v1857 = vrot.slane %v854, 5
      %v1858 = vrot.slane %v850, 6
      %v1859 = vor.u32 %v1857, %v1858
      %v1860 = vsel %vm1682, %v1856, %v1859
      %v1861 = vrot.slane %v1859, 4
      %v1862 = vrot.slane %v864, 5
      %v1863 = vrot.slane %v860, 6
      %v1864 = vor.u32 %v1862, %v1863
      %v1865 = vsel %vm1682, %v1861, %v1864
      %v1866 = vrot.slane %v1864, 4
      %v1867 = vrot.slane %v874, 5
      %v1868 = vrot.slane %v870, 6
      %v1869 = vor.u32 %v1867, %v1868
      %v1870 = vsel %vm1682, %v1866, %v1869
      %v1871 = vrot.slane %v1869, 4
      %v1872 = vrot.slane %v884, 5
      %v1873 = vrot.slane %v880, 6
      %v1874 = vor.u32 %v1872, %v1873
      %v1875 = vsel %vm1682, %v1871, %v1874
      %v1876 = vrot.slane %v1874, 4
      %v1877 = vrot.slane %v894, 5
      %v1878 = vrot.slane %v890, 6
      %v1879 = vor.u32 %v1877, %v1878
      %v1880 = vsel %vm1682, %v1876, %v1879
      %v1881 = vrot.slane %v1879, 4
      %v1882 = vrot.slane %v904, 5
      %v1883 = vrot.slane %v900, 6
      %v1884 = vor.u32 %v1882, %v1883
      %v1885 = vsel %vm1682, %v1881, %v1884
      %v1886 = vrot.slane %v1884, 4
      %v1887 = vrot.slane %v914, 5
      %v1888 = vrot.slane %v910, 6
      %v1889 = vor.u32 %v1887, %v1888
      %v1890 = vsel %vm1682, %v1886, %v1889
      %v1891 = vrot.slane %v1889, 4
      %v1892 = vrot.slane %v924, 5
      %v1893 = vrot.slane %v920, 6
      %v1894 = vor.u32 %v1892, %v1893
      %v1895 = vsel %vm1682, %v1891, %v1894
      %v1896 = vrot.slane %v1894, 4
      %v1897 = vrot.slane %v934, 5
      %v1898 = vrot.slane %v930, 6
      %v1899 = vor.u32 %v1897, %v1898
      %v1900 = vsel %vm1682, %v1896, %v1899
      %v1901 = vrot.slane %v1899, 4
      %v1902 = vrot.slane %v944, 5
      %v1903 = vrot.slane %v940, 6
      %v1904 = vor.u32 %v1902, %v1903
      %v1905 = vsel %vm1682, %v1901, %v1904
      %v1906 = vrot.slane %v1904, 4
      %v1907 = vrot.slane %v954, 5
      %v1908 = vrot.slane %v950, 6
      %v1909 = vor.u32 %v1907, %v1908
      %v1910 = vsel %vm1682, %v1906, %v1909
      %v1911 = vrot.slane %v1909, 4
      %v1912 = vrot.slane %v964, 5
      %v1913 = vrot.slane %v960, 6
      %v1914 = vor.u32 %v1912, %v1913
      %v1915 = vsel %vm1682, %v1911, %v1914
      %v1916 = vrot.slane %v1914, 4
      %v1917 = vrot.slane %v974, 5
      %v1918 = vrot.slane %v970, 6
      %v1919 = vor.u32 %v1917, %v1918
      %v1920 = vsel %vm1682, %v1916, %v1919
      %v1921 = vrot.slane %v1919, 4
      %v1922 = vrot.slane %v984, 5
      %v1923 = vrot.slane %v980, 6
      %v1924 = vor.u32 %v1922, %v1923
      %v1925 = vsel %vm1682, %v1921, %v1924
      %v1926 = vrot.slane %v1924, 4
      %v1927 = vrot.slane %v994, 5
      %v1928 = vrot.slane %v990, 6
      %v1929 = vor.u32 %v1927, %v1928
      %v1930 = vsel %vm1682, %v1926, %v1929
      %v1931 = vrot.slane %v1929, 4
      %v1932 = vrot.slane %v1004, 5
      %v1933 = vrot.slane %v1000, 6
      %v1934 = vor.u32 %v1932, %v1933
      %v1935 = vsel %vm1682, %v1931, %v1934
      %v1936 = vrot.slane %v1934, 4
      %v1937 = vrot.slane %v1014, 5
      %v1938 = vrot.slane %v1010, 6
      %v1939 = vor.u32 %v1937, %v1938
      %v1940 = vsel %vm1682, %v1936, %v1939
      %v1941 = vrot.slane %v1939, 4
      %v1942 = vrot.slane %v1024, 5
      %v1943 = vrot.slane %v1020, 6
      %v1944 = vor.u32 %v1942, %v1943
      %v1945 = vsel %vm1682, %v1941, %v1944
      %v1946 = vrot.slane %v1944, 4
      %v1947 = vrot.slane %v1034, 5
      %v1948 = vrot.slane %v1030, 6
      %v1949 = vor.u32 %v1947, %v1948
      %v1950 = vsel %vm1682, %v1946, %v1949
      %v1951 = vrot.slane %v1949, 4
      %v1952 = vrot.slane %v1044, 5
      %v1953 = vrot.slane %v1040, 6
      %v1954 = vor.u32 %v1952, %v1953
      %v1955 = vsel %vm1682, %v1951, %v1954
      %v1956 = vrot.slane %v1954, 4
      %v1957 = vrot.slane %v1054, 5
      %v1958 = vrot.slane %v1050, 6
      %v1959 = vor.u32 %v1957, %v1958
      %v1960 = vsel %vm1682, %v1956, %v1959
      %v1961 = vrot.slane %v1959, 4
      %v1962 = vrot.slane %v1064, 5
      %v1963 = vrot.slane %v1060, 6
      %v1964 = vor.u32 %v1962, %v1963
      %v1965 = vsel %vm1682, %v1961, %v1964
      %v1966 = vrot.slane %v1964, 4
      %v1967 = vrot.slane %v1074, 5
      %v1968 = vrot.slane %v1070, 6
      %v1969 = vor.u32 %v1967, %v1968
      %v1970 = vsel %vm1682, %v1966, %v1969
      %v1971 = vrot.slane %v1969, 4
      %v1972 = vrot.slane %v1084, 5
      %v1973 = vrot.slane %v1080, 6
      %v1974 = vor.u32 %v1972, %v1973
      %v1975 = vsel %vm1682, %v1971, %v1974
      %v1976 = vrot.slane %v1974, 4
      %v1977 = vrot.slane %v1094, 5
      %v1978 = vrot.slane %v1090, 6
      %v1979 = vor.u32 %v1977, %v1978
      %v1980 = vsel %vm1682, %v1976, %v1979
      %v1981 = vrot.slane %v1979, 4
      %v1982 = vrot.slane %v1104, 5
      %v1983 = vrot.slane %v1100, 6
      %v1984 = vor.u32 %v1982, %v1983
      %v1985 = vsel %vm1682, %v1981, %v1984
      %v1986 = vrot.slane %v1984, 4
      %v1987 = vrot.slane %v1114, 5
      %v1988 = vrot.slane %v1110, 6
      %v1989 = vor.u32 %v1987, %v1988
      %v1990 = vsel %vm1682, %v1986, %v1989
      %v1991 = vrot.slane %v1989, 4
      %v1992 = vrot.slane %v1124, 5
      %v1993 = vrot.slane %v1120, 6
      %v1994 = vor.u32 %v1992, %v1993
      %v1995 = vsel %vm1682, %v1991, %v1994
      %v1996 = vrot.slane %v1994, 4
      %v1997 = vrot.slane %v1134, 5
      %v1998 = vrot.slane %v1130, 6
      %v1999 = vor.u32 %v1997, %v1998
      %v2000 = vsel %vm1682, %v1996, %v1999
      %v2001 = vrot.slane %v1999, 4
      %2066 = vst [vmem:[#allocation2 + $0x18] sm:$0xff] %v1690
      %2067 = vst [vmem:[#allocation2 + $0x50] sm:$0xff] %v1695
      %2068 = vst [vmem:[#allocation2 + $0x88] sm:$0xff] %v1700
      %2069 = vst [vmem:[#allocation2 + $0xc0] sm:$0xff] %v1705
      %2070 = vst [vmem:[#allocation2 + $0xf8] sm:$0xff] %v1710
      %2071 = vst [vmem:[#allocation2 + $0x130] sm:$0xff] %v1715
      %2072 = vst [vmem:[#allocation2 + $0x168] sm:$0xff] %v1720
      %2073 = vst [vmem:[#allocation2 + $0x1a0] sm:$0xff] %v1725
      %2074 = vst [vmem:[#allocation2 + $0x1d8] sm:$0xff] %v1730
      %2075 = vst [vmem:[#allocation2 + $0x210] sm:$0xff] %v1735
      %2076 = vst [vmem:[#allocation2 + $0x248] sm:$0xff] %v1740
      %2077 = vst [vmem:[#allocation2 + $0x280] sm:$0xff] %v1745
      %2078 = vst [vmem:[#allocation2 + $0x2b8] sm:$0xff] %v1750
      %2079 = vst [vmem:[#allocation2 + $0x2f0] sm:$0xff] %v1755
      %2080 = vst [vmem:[#allocation2 + $0x328] sm:$0xff] %v1760
      %2081 = vst [vmem:[#allocation2 + $0x360] sm:$0xff] %v1765
      %2082 = vst [vmem:[#allocation2 + $0x398] sm:$0xff] %v1770
      %2083 = vst [vmem:[#allocation2 + $0x3d0] sm:$0xff] %v1775
      %2084 = vst [vmem:[#allocation2 + $0x408] sm:$0xff] %v1780
      %2085 = vst [vmem:[#allocation2 + $0x440] sm:$0xff] %v1785
      %2086 = vst [vmem:[#allocation2 + $0x478] sm:$0xff] %v1790
      %2087 = vst [vmem:[#allocation2 + $0x4b0] sm:$0xff] %v1795
      %2088 = vst [vmem:[#allocation2 + $0x4e8] sm:$0xff] %v1800
      %2089 = vst [vmem:[#allocation2 + $0x520] sm:$0xff] %v1805
      %2090 = vst [vmem:[#allocation2 + $0x558] sm:$0xff] %v1810
      %2091 = vst [vmem:[#allocation2 + $0x590] sm:$0xff] %v1815
      %2092 = vst [vmem:[#allocation2 + $0x5c8] sm:$0xff] %v1820
      %2093 = vst [vmem:[#allocation2 + $0x600] sm:$0xff] %v1825
      %2094 = vst [vmem:[#allocation2 + $0x638] sm:$0xff] %v1830
      %2095 = vst [vmem:[#allocation2 + $0x670] sm:$0xff] %v1835
      %2096 = vst [vmem:[#allocation2 + $0x6a8] sm:$0xff] %v1840
      %2097 = vst [vmem:[#allocation2 + $0x6e0] sm:$0xff] %v1845
      %2098 = vst [vmem:[#allocation2 + $0x718] sm:$0xff] %v1850
      %2099 = vst [vmem:[#allocation2 + $0x750] sm:$0xff] %v1855
      %2100 = vst [vmem:[#allocation2 + $0x788] sm:$0xff] %v1860
      %2101 = vst [vmem:[#allocation2 + $0x7c0] sm:$0xff] %v1865
      %2102 = vst [vmem:[#allocation2 + $0x7f8] sm:$0xff] %v1870
      %2103 = vst [vmem:[#allocation2 + $0x830] sm:$0xff] %v1875
      %2104 = vst [vmem:[#allocation2 + $0x868] sm:$0xff] %v1880
      %2105 = vst [vmem:[#allocation2 + $0x8a0] sm:$0xff] %v1885
      %2106 = vst [vmem:[#allocation2 + $0x8d8] sm:$0xff] %v1890
      %2107 = vst [vmem:[#allocation2 + $0x910] sm:$0xff] %v1895
      %2108 = vst [vmem:[#allocation2 + $0x948] sm:$0xff] %v1900
      %2109 = vst [vmem:[#allocation2 + $0x980] sm:$0xff] %v1905
      %2110 = vst [vmem:[#allocation2 + $0x9b8] sm:$0xff] %v1910
      %2111 = vst [vmem:[#allocation2 + $0x9f0] sm:$0xff] %v1915
      %2112 = vst [vmem:[#allocation2 + $0xa28] sm:$0xff] %v1920
      %2113 = vst [vmem:[#allocation2 + $0xa60] sm:$0xff] %v1925
      %2114 = vst [vmem:[#allocation2 + $0xa98] sm:$0xff] %v1930
      %2115 = vst [vmem:[#allocation2 + $0xad0] sm:$0xff] %v1935
      %2116 = vst [vmem:[#allocation2 + $0xb08] sm:$0xff] %v1940
      %2117 = vst [vmem:[#allocation2 + $0xb40] sm:$0xff] %v1945
      %2118 = vst [vmem:[#allocation2 + $0xb78] sm:$0xff] %v1950
      %2119 = vst [vmem:[#allocation2 + $0xbb0] sm:$0xff] %v1955
      %2120 = vst [vmem:[#allocation2 + $0xbe8] sm:$0xff] %v1960
      %2121 = vst [vmem:[#allocation2 + $0xc20] sm:$0xff] %v1965
      %2122 = vst [vmem:[#allocation2 + $0xc58] sm:$0xff] %v1970
      %2123 = vst [vmem:[#allocation2 + $0xc90] sm:$0xff] %v1975
      %2124 = vst [vmem:[#allocation2 + $0xcc8] sm:$0xff] %v1980
      %2125 = vst [vmem:[#allocation2 + $0xd00] sm:$0xff] %v1985
      %2126 = vst [vmem:[#allocation2 + $0xd38] sm:$0xff] %v1990
      %2127 = vst [vmem:[#allocation2 + $0xd70] sm:$0xff] %v1995
      %2128 = vst [vmem:[#allocation2 + $0xda8] sm:$0xff] %v2000
      %vm2129 = vmand %vm1354, %vm1680
      %vm2130 = vsmask.f32 6400
      %vm2131 = vmand %vm1355, %vm2130
      %vm2132 = vmor %vm2131, %vm2129
      %v2133 = vld [vmem:[#allocation2 + $0xde0] sm:$0x77]
      %v2134 = vsel %vm2132, %v2001, %v2133
      %2135 = vst [vmem:[#allocation2 + $0xde0] sm:$0x77] %v2134
      %v2136 = vshrl.u32 %v432, 16
      %v2138 = vrot.slane %v2136, 5
      %v2139 = vrot.slane %v1276, 6
      %v2140 = vor.u32 %v2138, %v2139
      %vm2142 = vcmask 1043458
      %vm2143 = vsmask.f32 7946
      %vm2144 = vmand %vm2142, %vm2143
      %vm2145 = vcmask 1047558
      %vm2146 = vsmask.f32 7962
      %vm2147 = vmand %vm2145, %vm2146
      %vm2148 = vmor %vm2147, %vm2144
      %v2149 = vld [vmem:[#allocation2 + $0xde0] sm:$0xcc]
      %v2150 = vsel %vm2148, %v2140, %v2149
      %2151 = vst [vmem:[#allocation2 + $0xde0] sm:$0xcc] %v2150
      %vm2152 = vcmask 1041408
      %vm2153 = vcmask 1045508
      %vm2154 = vmor %vm2152, %vm2153
      %v2155 = vrot.slane %v368, 6
      %v2156 = vrot.slane %v2155, 4
      %v2157 = vrot.slane %v369, 6
      %v2158 = vsel %vm2154, %v2156, %v2157
      %v2159 = vrot.slane %v2157, 4
      %v2160 = vrot.slane %v370, 6
      %v2161 = vsel %vm2154, %v2159, %v2160
      %v2162 = vrot.slane %v2160, 4
      %v2163 = vrot.slane %v371, 6
      %v2164 = vsel %vm2154, %v2162, %v2163
      %v2165 = vrot.slane %v2163, 4
      %v2166 = vrot.slane %v372, 6
      %v2167 = vsel %vm2154, %v2165, %v2166
      %v2168 = vrot.slane %v2166, 4
      %v2169 = vrot.slane %v373, 6
      %v2170 = vsel %vm2154, %v2168, %v2169
      %v2171 = vrot.slane %v2169, 4
      %v2172 = vrot.slane %v374, 6
      %v2173 = vsel %vm2154, %v2171, %v2172
      %v2174 = vrot.slane %v2172, 4
      %v2175 = vrot.slane %v375, 6
      %v2176 = vsel %vm2154, %v2174, %v2175
      %v2177 = vrot.slane %v2175, 4
      %v2178 = vrot.slane %v376, 6
      %v2179 = vsel %vm2154, %v2177, %v2178
      %v2180 = vrot.slane %v2178, 4
      %v2181 = vrot.slane %v377, 6
      %v2182 = vsel %vm2154, %v2180, %v2181
      %v2183 = vrot.slane %v2181, 4
      %v2184 = vrot.slane %v378, 6
      %v2185 = vsel %vm2154, %v2183, %v2184
      %v2186 = vrot.slane %v2184, 4
      %v2187 = vrot.slane %v379, 6
      %v2188 = vsel %vm2154, %v2186, %v2187
      %v2189 = vrot.slane %v2187, 4
      %v2190 = vrot.slane %v380, 6
      %v2191 = vsel %vm2154, %v2189, %v2190
      %v2192 = vrot.slane %v2190, 4
      %v2193 = vrot.slane %v381, 6
      %v2194 = vsel %vm2154, %v2192, %v2193
      %v2195 = vrot.slane %v2193, 4
      %v2196 = vrot.slane %v382, 6
      %v2197 = vsel %vm2154, %v2195, %v2196
      %v2198 = vrot.slane %v2196, 4
      %v2199 = vrot.slane %v383, 6
      %v2200 = vsel %vm2154, %v2198, %v2199
      %v2201 = vrot.slane %v2199, 4
      %v2202 = vrot.slane %v384, 6
      %v2203 = vsel %vm2154, %v2201, %v2202
      %v2204 = vrot.slane %v2202, 4
      %v2205 = vrot.slane %v385, 6
      %v2206 = vsel %vm2154, %v2204, %v2205
      %v2207 = vrot.slane %v2205, 4
      %v2208 = vrot.slane %v386, 6
      %v2209 = vsel %vm2154, %v2207, %v2208
      %v2210 = vrot.slane %v2208, 4
      %v2211 = vrot.slane %v387, 6
      %v2212 = vsel %vm2154, %v2210, %v2211
      %v2213 = vrot.slane %v2211, 4
      %v2214 = vrot.slane %v388, 6
      %v2215 = vsel %vm2154, %v2213, %v2214
      %v2216 = vrot.slane %v2214, 4
      %v2217 = vrot.slane %v389, 6
      %v2218 = vsel %vm2154, %v2216, %v2217
      %v2219 = vrot.slane %v2217, 4
      %v2220 = vrot.slane %v390, 6
      %v2221 = vsel %vm2154, %v2219, %v2220
      %v2222 = vrot.slane %v2220, 4
      %v2223 = vrot.slane %v391, 6
      %v2224 = vsel %vm2154, %v2222, %v2223
      %v2225 = vrot.slane %v2223, 4
      %v2226 = vrot.slane %v392, 6
      %v2227 = vsel %vm2154, %v2225, %v2226
      %v2228 = vrot.slane %v2226, 4
      %v2229 = vrot.slane %v393, 6
      %v2230 = vsel %vm2154, %v2228, %v2229
      %v2231 = vrot.slane %v2229, 4
      %v2232 = vrot.slane %v394, 6
      %v2233 = vsel %vm2154, %v2231, %v2232
      %v2234 = vrot.slane %v2232, 4
      %v2235 = vrot.slane %v395, 6
      %v2236 = vsel %vm2154, %v2234, %v2235
      %v2237 = vrot.slane %v2235, 4
      %v2238 = vrot.slane %v396, 6
      %v2239 = vsel %vm2154, %v2237, %v2238
      %v2240 = vrot.slane %v2238, 4
      %v2241 = vrot.slane %v397, 6
      %v2242 = vsel %vm2154, %v2240, %v2241
      %v2243 = vrot.slane %v2241, 4
      %v2244 = vrot.slane %v398, 6
      %v2245 = vsel %vm2154, %v2243, %v2244
      %v2246 = vrot.slane %v2244, 4
      %v2247 = vrot.slane %v399, 6
      %v2248 = vsel %vm2154, %v2246, %v2247
      %v2249 = vrot.slane %v2247, 4
      %v2250 = vrot.slane %v400, 6
      %v2251 = vsel %vm2154, %v2249, %v2250
      %v2252 = vrot.slane %v2250, 4
      %v2253 = vrot.slane %v401, 6
      %v2254 = vsel %vm2154, %v2252, %v2253
      %v2255 = vrot.slane %v2253, 4
      %v2256 = vrot.slane %v402, 6
      %v2257 = vsel %vm2154, %v2255, %v2256
      %v2258 = vrot.slane %v2256, 4
      %v2259 = vrot.slane %v403, 6
      %v2260 = vsel %vm2154, %v2258, %v2259
      %v2261 = vrot.slane %v2259, 4
      %v2262 = vrot.slane %v404, 6
      %v2263 = vsel %vm2154, %v2261, %v2262
      %v2264 = vrot.slane %v2262, 4
      %v2265 = vrot.slane %v405, 6
      %v2266 = vsel %vm2154, %v2264, %v2265
      %v2267 = vrot.slane %v2265, 4
      %v2268 = vrot.slane %v406, 6
      %v2269 = vsel %vm2154, %v2267, %v2268
      %v2270 = vrot.slane %v2268, 4
      %v2271 = vrot.slane %v407, 6
      %v2272 = vsel %vm2154, %v2270, %v2271
      %v2273 = vrot.slane %v2271, 4
      %v2274 = vrot.slane %v408, 6
      %v2275 = vsel %vm2154, %v2273, %v2274
      %v2276 = vrot.slane %v2274, 4
      %v2277 = vrot.slane %v409, 6
      %v2278 = vsel %vm2154, %v2276, %v2277
      %v2279 = vrot.slane %v2277, 4
      %v2280 = vrot.slane %v410, 6
      %v2281 = vsel %vm2154, %v2279, %v2280
      %v2282 = vrot.slane %v2280, 4
      %v2283 = vrot.slane %v411, 6
      %v2284 = vsel %vm2154, %v2282, %v2283
      %v2285 = vrot.slane %v2283, 4
      %v2286 = vrot.slane %v412, 6
      %v2287 = vsel %vm2154, %v2285, %v2286
      %v2288 = vrot.slane %v2286, 4
      %v2289 = vrot.slane %v413, 6
      %v2290 = vsel %vm2154, %v2288, %v2289
      %v2291 = vrot.slane %v2289, 4
      %v2292 = vrot.slane %v414, 6
      %v2293 = vsel %vm2154, %v2291, %v2292
      %v2294 = vrot.slane %v2292, 4
      %v2295 = vrot.slane %v415, 6
      %v2296 = vsel %vm2154, %v2294, %v2295
      %v2297 = vrot.slane %v2295, 4
      %v2298 = vrot.slane %v416, 6
      %v2299 = vsel %vm2154, %v2297, %v2298
      %v2300 = vrot.slane %v2298, 4
      %v2301 = vrot.slane %v417, 6
      %v2302 = vsel %vm2154, %v2300, %v2301
      %v2303 = vrot.slane %v2301, 4
      %v2304 = vrot.slane %v418, 6
      %v2305 = vsel %vm2154, %v2303, %v2304
      %v2306 = vrot.slane %v2304, 4
      %v2307 = vrot.slane %v419, 6
      %v2308 = vsel %vm2154, %v2306, %v2307
      %v2309 = vrot.slane %v2307, 4
      %v2310 = vrot.slane %v420, 6
      %v2311 = vsel %vm2154, %v2309, %v2310
      %v2312 = vrot.slane %v2310, 4
      %v2313 = vrot.slane %v421, 6
      %v2314 = vsel %vm2154, %v2312, %v2313
      %v2315 = vrot.slane %v2313, 4
      %v2316 = vrot.slane %v422, 6
      %v2317 = vsel %vm2154, %v2315, %v2316
      %v2318 = vrot.slane %v2316, 4
      %v2319 = vrot.slane %v423, 6
      %v2320 = vsel %vm2154, %v2318, %v2319
      %v2321 = vrot.slane %v2319, 4
      %v2322 = vrot.slane %v424, 6
      %v2323 = vsel %vm2154, %v2321, %v2322
      %v2324 = vrot.slane %v2322, 4
      %v2325 = vrot.slane %v425, 6
      %v2326 = vsel %vm2154, %v2324, %v2325
      %v2327 = vrot.slane %v2325, 4
      %v2328 = vrot.slane %v426, 6
      %v2329 = vsel %vm2154, %v2327, %v2328
      %v2330 = vrot.slane %v2328, 4
      %v2331 = vrot.slane %v427, 6
      %v2332 = vsel %vm2154, %v2330, %v2331
      %v2333 = vrot.slane %v2331, 4
      %v2334 = vrot.slane %v428, 6
      %v2335 = vsel %vm2154, %v2333, %v2334
      %v2336 = vrot.slane %v2334, 4
      %v2337 = vrot.slane %v429, 6
      %v2338 = vsel %vm2154, %v2336, %v2337
      %v2339 = vrot.slane %v2337, 4
      %v2340 = vrot.slane %v430, 6
      %v2341 = vsel %vm2154, %v2339, %v2340
      %v2342 = vrot.slane %v2340, 4
      %v2343 = vrot.slane %v431, 6
      %v2344 = vsel %vm2154, %v2342, %v2343
      %v2345 = vrot.slane %v2343, 4
      %2410 = vst [vmem:[#allocation2 + $0x20] sm:$0xff] %v2158
      %2411 = vst [vmem:[#allocation2 + $0x58] sm:$0xff] %v2161
      %2412 = vst [vmem:[#allocation2 + $0x90] sm:$0xff] %v2164
      %2413 = vst [vmem:[#allocation2 + $0xc8] sm:$0xff] %v2167
      %2414 = vst [vmem:[#allocation2 + $0x100] sm:$0xff] %v2170
      %2415 = vst [vmem:[#allocation2 + $0x138] sm:$0xff] %v2173
      %2416 = vst [vmem:[#allocation2 + $0x170] sm:$0xff] %v2176
      %2417 = vst [vmem:[#allocation2 + $0x1a8] sm:$0xff] %v2179
      %2418 = vst [vmem:[#allocation2 + $0x1e0] sm:$0xff] %v2182
      %2419 = vst [vmem:[#allocation2 + $0x218] sm:$0xff] %v2185
      %2420 = vst [vmem:[#allocation2 + $0x250] sm:$0xff] %v2188
      %2421 = vst [vmem:[#allocation2 + $0x288] sm:$0xff] %v2191
      %2422 = vst [vmem:[#allocation2 + $0x2c0] sm:$0xff] %v2194
      %2423 = vst [vmem:[#allocation2 + $0x2f8] sm:$0xff] %v2197
      %2424 = vst [vmem:[#allocation2 + $0x330] sm:$0xff] %v2200
      %2425 = vst [vmem:[#allocation2 + $0x368] sm:$0xff] %v2203
      %2426 = vst [vmem:[#allocation2 + $0x3a0] sm:$0xff] %v2206
      %2427 = vst [vmem:[#allocation2 + $0x3d8] sm:$0xff] %v2209
      %2428 = vst [vmem:[#allocation2 + $0x410] sm:$0xff] %v2212
      %2429 = vst [vmem:[#allocation2 + $0x448] sm:$0xff] %v2215
      %2430 = vst [vmem:[#allocation2 + $0x480] sm:$0xff] %v2218
      %2431 = vst [vmem:[#allocation2 + $0x4b8] sm:$0xff] %v2221
      %2432 = vst [vmem:[#allocation2 + $0x4f0] sm:$0xff] %v2224
      %2433 = vst [vmem:[#allocation2 + $0x528] sm:$0xff] %v2227
      %2434 = vst [vmem:[#allocation2 + $0x560] sm:$0xff] %v2230
      %2435 = vst [vmem:[#allocation2 + $0x598] sm:$0xff] %v2233
      %2436 = vst [vmem:[#allocation2 + $0x5d0] sm:$0xff] %v2236
      %2437 = vst [vmem:[#allocation2 + $0x608] sm:$0xff] %v2239
      %2438 = vst [vmem:[#allocation2 + $0x640] sm:$0xff] %v2242
      %2439 = vst [vmem:[#allocation2 + $0x678] sm:$0xff] %v2245
      %2440 = vst [vmem:[#allocation2 + $0x6b0] sm:$0xff] %v2248
      %2441 = vst [vmem:[#allocation2 + $0x6e8] sm:$0xff] %v2251
      %2442 = vst [vmem:[#allocation2 + $0x720] sm:$0xff] %v2254
      %2443 = vst [vmem:[#allocation2 + $0x758] sm:$0xff] %v2257
      %2444 = vst [vmem:[#allocation2 + $0x790] sm:$0xff] %v2260
      %2445 = vst [vmem:[#allocation2 + $0x7c8] sm:$0xff] %v2263
      %2446 = vst [vmem:[#allocation2 + $0x800] sm:$0xff] %v2266
      %2447 = vst [vmem:[#allocation2 + $0x838] sm:$0xff] %v2269
      %2448 = vst [vmem:[#allocation2 + $0x870] sm:$0xff] %v2272
      %2449 = vst [vmem:[#allocation2 + $0x8a8] sm:$0xff] %v2275
      %2450 = vst [vmem:[#allocation2 + $0x8e0] sm:$0xff] %v2278
      %2451 = vst [vmem:[#allocation2 + $0x918] sm:$0xff] %v2281
      %2452 = vst [vmem:[#allocation2 + $0x950] sm:$0xff] %v2284
      %2453 = vst [vmem:[#allocation2 + $0x988] sm:$0xff] %v2287
      %2454 = vst [vmem:[#allocation2 + $0x9c0] sm:$0xff] %v2290
      %2455 = vst [vmem:[#allocation2 + $0x9f8] sm:$0xff] %v2293
      %2456 = vst [vmem:[#allocation2 + $0xa30] sm:$0xff] %v2296
      %2457 = vst [vmem:[#allocation2 + $0xa68] sm:$0xff] %v2299
      %2458 = vst [vmem:[#allocation2 + $0xaa0] sm:$0xff] %v2302
      %2459 = vst [vmem:[#allocation2 + $0xad8] sm:$0xff] %v2305
      %2460 = vst [vmem:[#allocation2 + $0xb10] sm:$0xff] %v2308
      %2461 = vst [vmem:[#allocation2 + $0xb48] sm:$0xff] %v2311
      %2462 = vst [vmem:[#allocation2 + $0xb80] sm:$0xff] %v2314
      %2463 = vst [vmem:[#allocation2 + $0xbb8] sm:$0xff] %v2317
      %2464 = vst [vmem:[#allocation2 + $0xbf0] sm:$0xff] %v2320
      %2465 = vst [vmem:[#allocation2 + $0xc28] sm:$0xff] %v2323
      %2466 = vst [vmem:[#allocation2 + $0xc60] sm:$0xff] %v2326
      %2467 = vst [vmem:[#allocation2 + $0xc98] sm:$0xff] %v2329
      %2468 = vst [vmem:[#allocation2 + $0xcd0] sm:$0xff] %v2332
      %2469 = vst [vmem:[#allocation2 + $0xd08] sm:$0xff] %v2335
      %2470 = vst [vmem:[#allocation2 + $0xd40] sm:$0xff] %v2338
      %2471 = vst [vmem:[#allocation2 + $0xd78] sm:$0xff] %v2341
      %2472 = vst [vmem:[#allocation2 + $0xdb0] sm:$0xff] %v2344
      %2473 = vst [vmem:[#allocation2 + $0xde8] sm:$0x33] %v2345
      %v2474 = vrot.slane %v432, 6
      %2476 = vst [vmem:[#allocation2 + $0xde8] sm:$0xcc] %v2474
      %vm2477 = vsmask.f32 1280
      %vm2478 = vsmask.f32 5392
      %vm2479 = vmor %vm2477, %vm2478
      %v2480 = vrot.slane %v501, 6
      %v2481 = vrot.slane %v504, 7
      %v2482 = vor.u32 %v2480, %v2481
      %v2483 = vrot.slane %v2482, 4
      %v2484 = vrot.slane %v514, 6
      %v2485 = vrot.slane %v510, 7
      %v2486 = vor.u32 %v2484, %v2485
      %v2487 = vsel %vm2479, %v2483, %v2486
      %v2488 = vrot.slane %v2486, 4
      %v2489 = vrot.slane %v524, 6
      %v2490 = vrot.slane %v520, 7
      %v2491 = vor.u32 %v2489, %v2490
      %v2492 = vsel %vm2479, %v2488, %v2491
      %v2493 = vrot.slane %v2491, 4
      %v2494 = vrot.slane %v534, 6
      %v2495 = vrot.slane %v530, 7
      %v2496 = vor.u32 %v2494, %v2495
      %v2497 = vsel %vm2479, %v2493, %v2496
      %v2498 = vrot.slane %v2496, 4
      %v2499 = vrot.slane %v544, 6
      %v2500 = vrot.slane %v540, 7
      %v2501 = vor.u32 %v2499, %v2500
      %v2502 = vsel %vm2479, %v2498, %v2501
      %v2503 = vrot.slane %v2501, 4
      %v2504 = vrot.slane %v554, 6
      %v2505 = vrot.slane %v550, 7
      %v2506 = vor.u32 %v2504, %v2505
      %v2507 = vsel %vm2479, %v2503, %v2506
      %v2508 = vrot.slane %v2506, 4
      %v2509 = vrot.slane %v564, 6
      %v2510 = vrot.slane %v560, 7
      %v2511 = vor.u32 %v2509, %v2510
      %v2512 = vsel %vm2479, %v2508, %v2511
      %v2513 = vrot.slane %v2511, 4
      %v2514 = vrot.slane %v574, 6
      %v2515 = vrot.slane %v570, 7
      %v2516 = vor.u32 %v2514, %v2515
      %v2517 = vsel %vm2479, %v2513, %v2516
      %v2518 = vrot.slane %v2516, 4
      %v2519 = vrot.slane %v584, 6
      %v2520 = vrot.slane %v580, 7
      %v2521 = vor.u32 %v2519, %v2520
      %v2522 = vsel %vm2479, %v2518, %v2521
      %v2523 = vrot.slane %v2521, 4
      %v2524 = vrot.slane %v594, 6
      %v2525 = vrot.slane %v590, 7
      %v2526 = vor.u32 %v2524, %v2525
      %v2527 = vsel %vm2479, %v2523, %v2526
      %v2528 = vrot.slane %v2526, 4
      %v2529 = vrot.slane %v604, 6
      %v2530 = vrot.slane %v600, 7
      %v2531 = vor.u32 %v2529, %v2530
      %v2532 = vsel %vm2479, %v2528, %v2531
      %v2533 = vrot.slane %v2531, 4
      %v2534 = vrot.slane %v614, 6
      %v2535 = vrot.slane %v610, 7
      %v2536 = vor.u32 %v2534, %v2535
      %v2537 = vsel %vm2479, %v2533, %v2536
      %v2538 = vrot.slane %v2536, 4
      %v2539 = vrot.slane %v624, 6
      %v2540 = vrot.slane %v620, 7
      %v2541 = vor.u32 %v2539, %v2540
      %v2542 = vsel %vm2479, %v2538, %v2541
      %v2543 = vrot.slane %v2541, 4
      %v2544 = vrot.slane %v634, 6
      %v2545 = vrot.slane %v630, 7
      %v2546 = vor.u32 %v2544, %v2545
      %v2547 = vsel %vm2479, %v2543, %v2546
      %v2548 = vrot.slane %v2546, 4
      %v2549 = vrot.slane %v644, 6
      %v2550 = vrot.slane %v640, 7
      %v2551 = vor.u32 %v2549, %v2550
      %v2552 = vsel %vm2479, %v2548, %v2551
      %v2553 = vrot.slane %v2551, 4
      %v2554 = vrot.slane %v654, 6
      %v2555 = vrot.slane %v650, 7
      %v2556 = vor.u32 %v2554, %v2555
      %v2557 = vsel %vm2479, %v2553, %v2556
      %v2558 = vrot.slane %v2556, 4
      %v2559 = vrot.slane %v664, 6
      %v2560 = vrot.slane %v660, 7
      %v2561 = vor.u32 %v2559, %v2560
      %v2562 = vsel %vm2479, %v2558, %v2561
      %v2563 = vrot.slane %v2561, 4
      %v2564 = vrot.slane %v674, 6
      %v2565 = vrot.slane %v670, 7
      %v2566 = vor.u32 %v2564, %v2565
      %v2567 = vsel %vm2479, %v2563, %v2566
      %v2568 = vrot.slane %v2566, 4
      %v2569 = vrot.slane %v684, 6
      %v2570 = vrot.slane %v680, 7
      %v2571 = vor.u32 %v2569, %v2570
      %v2572 = vsel %vm2479, %v2568, %v2571
      %v2573 = vrot.slane %v2571, 4
      %v2574 = vrot.slane %v694, 6
      %v2575 = vrot.slane %v690, 7
      %v2576 = vor.u32 %v2574, %v2575
      %v2577 = vsel %vm2479, %v2573, %v2576
      %v2578 = vrot.slane %v2576, 4
      %v2579 = vrot.slane %v704, 6
      %v2580 = vrot.slane %v700, 7
      %v2581 = vor.u32 %v2579, %v2580
      %v2582 = vsel %vm2479, %v2578, %v2581
      %v2583 = vrot.slane %v2581, 4
      %v2584 = vrot.slane %v714, 6
      %v2585 = vrot.slane %v710, 7
      %v2586 = vor.u32 %v2584, %v2585
      %v2587 = vsel %vm2479, %v2583, %v2586
      %v2588 = vrot.slane %v2586, 4
      %v2589 = vrot.slane %v724, 6
      %v2590 = vrot.slane %v720, 7
      %v2591 = vor.u32 %v2589, %v2590
      %v2592 = vsel %vm2479, %v2588, %v2591
      %v2593 = vrot.slane %v2591, 4
      %v2594 = vrot.slane %v734, 6
      %v2595 = vrot.slane %v730, 7
      %v2596 = vor.u32 %v2594, %v2595
      %v2597 = vsel %vm2479, %v2593, %v2596
      %v2598 = vrot.slane %v2596, 4
      %v2599 = vrot.slane %v744, 6
      %v2600 = vrot.slane %v740, 7
      %v2601 = vor.u32 %v2599, %v2600
      %v2602 = vsel %vm2479, %v2598, %v2601
      %v2603 = vrot.slane %v2601, 4
      %v2604 = vrot.slane %v754, 6
      %v2605 = vrot.slane %v750, 7
      %v2606 = vor.u32 %v2604, %v2605
      %v2607 = vsel %vm2479, %v2603, %v2606
      %v2608 = vrot.slane %v2606, 4
      %v2609 = vrot.slane %v764, 6
      %v2610 = vrot.slane %v760, 7
      %v2611 = vor.u32 %v2609, %v2610
      %v2612 = vsel %vm2479, %v2608, %v2611
      %v2613 = vrot.slane %v2611, 4
      %v2614 = vrot.slane %v774, 6
      %v2615 = vrot.slane %v770, 7
      %v2616 = vor.u32 %v2614, %v2615
      %v2617 = vsel %vm2479, %v2613, %v2616
      %v2618 = vrot.slane %v2616, 4
      %v2619 = vrot.slane %v784, 6
      %v2620 = vrot.slane %v780, 7
      %v2621 = vor.u32 %v2619, %v2620
      %v2622 = vsel %vm2479, %v2618, %v2621
      %v2623 = vrot.slane %v2621, 4
      %v2624 = vrot.slane %v794, 6
      %v2625 = vrot.slane %v790, 7
      %v2626 = vor.u32 %v2624, %v2625
      %v2627 = vsel %vm2479, %v2623, %v2626
      %v2628 = vrot.slane %v2626, 4
      %v2629 = vrot.slane %v804, 6
      %v2630 = vrot.slane %v800, 7
      %v2631 = vor.u32 %v2629, %v2630
      %v2632 = vsel %vm2479, %v2628, %v2631
      %v2633 = vrot.slane %v2631, 4
      %v2634 = vrot.slane %v814, 6
      %v2635 = vrot.slane %v810, 7
      %v2636 = vor.u32 %v2634, %v2635
      %v2637 = vsel %vm2479, %v2633, %v2636
      %v2638 = vrot.slane %v2636, 4
      %v2639 = vrot.slane %v824, 6
      %v2640 = vrot.slane %v820, 7
      %v2641 = vor.u32 %v2639, %v2640
      %v2642 = vsel %vm2479, %v2638, %v2641
      %v2643 = vrot.slane %v2641, 4
      %v2644 = vrot.slane %v834, 6
      %v2645 = vrot.slane %v830, 7
      %v2646 = vor.u32 %v2644, %v2645
      %v2647 = vsel %vm2479, %v2643, %v2646
      %v2648 = vrot.slane %v2646, 4
      %v2649 = vrot.slane %v844, 6
      %v2650 = vrot.slane %v840, 7
      %v2651 = vor.u32 %v2649, %v2650
      %v2652 = vsel %vm2479, %v2648, %v2651
      %v2653 = vrot.slane %v2651, 4
      %v2654 = vrot.slane %v854, 6
      %v2655 = vrot.slane %v850, 7
      %v2656 = vor.u32 %v2654, %v2655
      %v2657 = vsel %vm2479, %v2653, %v2656
      %v2658 = vrot.slane %v2656, 4
      %v2659 = vrot.slane %v864, 6
      %v2660 = vrot.slane %v860, 7
      %v2661 = vor.u32 %v2659, %v2660
      %v2662 = vsel %vm2479, %v2658, %v2661
      %v2663 = vrot.slane %v2661, 4
      %v2664 = vrot.slane %v874, 6
      %v2665 = vrot.slane %v870, 7
      %v2666 = vor.u32 %v2664, %v2665
      %v2667 = vsel %vm2479, %v2663, %v2666
      %v2668 = vrot.slane %v2666, 4
      %v2669 = vrot.slane %v884, 6
      %v2670 = vrot.slane %v880, 7
      %v2671 = vor.u32 %v2669, %v2670
      %v2672 = vsel %vm2479, %v2668, %v2671
      %v2673 = vrot.slane %v2671, 4
      %v2674 = vrot.slane %v894, 6
      %v2675 = vrot.slane %v890, 7
      %v2676 = vor.u32 %v2674, %v2675
      %v2677 = vsel %vm2479, %v2673, %v2676
      %v2678 = vrot.slane %v2676, 4
      %v2679 = vrot.slane %v904, 6
      %v2680 = vrot.slane %v900, 7
      %v2681 = vor.u32 %v2679, %v2680
      %v2682 = vsel %vm2479, %v2678, %v2681
      %v2683 = vrot.slane %v2681, 4
      %v2684 = vrot.slane %v914, 6
      %v2685 = vrot.slane %v910, 7
      %v2686 = vor.u32 %v2684, %v2685
      %v2687 = vsel %vm2479, %v2683, %v2686
      %v2688 = vrot.slane %v2686, 4
      %v2689 = vrot.slane %v924, 6
      %v2690 = vrot.slane %v920, 7
      %v2691 = vor.u32 %v2689, %v2690
      %v2692 = vsel %vm2479, %v2688, %v2691
      %v2693 = vrot.slane %v2691, 4
      %v2694 = vrot.slane %v934, 6
      %v2695 = vrot.slane %v930, 7
      %v2696 = vor.u32 %v2694, %v2695
      %v2697 = vsel %vm2479, %v2693, %v2696
      %v2698 = vrot.slane %v2696, 4
      %v2699 = vrot.slane %v944, 6
      %v2700 = vrot.slane %v940, 7
      %v2701 = vor.u32 %v2699, %v2700
      %v2702 = vsel %vm2479, %v2698, %v2701
      %v2703 = vrot.slane %v2701, 4
      %v2704 = vrot.slane %v954, 6
      %v2705 = vrot.slane %v950, 7
      %v2706 = vor.u32 %v2704, %v2705
      %v2707 = vsel %vm2479, %v2703, %v2706
      %v2708 = vrot.slane %v2706, 4
      %v2709 = vrot.slane %v964, 6
      %v2710 = vrot.slane %v960, 7
      %v2711 = vor.u32 %v2709, %v2710
      %v2712 = vsel %vm2479, %v2708, %v2711
      %v2713 = vrot.slane %v2711, 4
      %v2714 = vrot.slane %v974, 6
      %v2715 = vrot.slane %v970, 7
      %v2716 = vor.u32 %v2714, %v2715
      %v2717 = vsel %vm2479, %v2713, %v2716
      %v2718 = vrot.slane %v2716, 4
      %v2719 = vrot.slane %v984, 6
      %v2720 = vrot.slane %v980, 7
      %v2721 = vor.u32 %v2719, %v2720
      %v2722 = vsel %vm2479, %v2718, %v2721
      %v2723 = vrot.slane %v2721, 4
      %v2724 = vrot.slane %v994, 6
      %v2725 = vrot.slane %v990, 7
      %v2726 = vor.u32 %v2724, %v2725
      %v2727 = vsel %vm2479, %v2723, %v2726
      %v2728 = vrot.slane %v2726, 4
      %v2729 = vrot.slane %v1004, 6
      %v2730 = vrot.slane %v1000, 7
      %v2731 = vor.u32 %v2729, %v2730
      %v2732 = vsel %vm2479, %v2728, %v2731
      %v2733 = vrot.slane %v2731, 4
      %v2734 = vrot.slane %v1014, 6
      %v2735 = vrot.slane %v1010, 7
      %v2736 = vor.u32 %v2734, %v2735
      %v2737 = vsel %vm2479, %v2733, %v2736
      %v2738 = vrot.slane %v2736, 4
      %v2739 = vrot.slane %v1024, 6
      %v2740 = vrot.slane %v1020, 7
      %v2741 = vor.u32 %v2739, %v2740
      %v2742 = vsel %vm2479, %v2738, %v2741
      %v2743 = vrot.slane %v2741, 4
      %v2744 = vrot.slane %v1034, 6
      %v2745 = vrot.slane %v1030, 7
      %v2746 = vor.u32 %v2744, %v2745
      %v2747 = vsel %vm2479, %v2743, %v2746
      %v2748 = vrot.slane %v2746, 4
      %v2749 = vrot.slane %v1044, 6
      %v2750 = vrot.slane %v1040, 7
      %v2751 = vor.u32 %v2749, %v2750
      %v2752 = vsel %vm2479, %v2748, %v2751
      %v2753 = vrot.slane %v2751, 4
      %v2754 = vrot.slane %v1054, 6
      %v2755 = vrot.slane %v1050, 7
      %v2756 = vor.u32 %v2754, %v2755
      %v2757 = vsel %vm2479, %v2753, %v2756
      %v2758 = vrot.slane %v2756, 4
      %v2759 = vrot.slane %v1064, 6
      %v2760 = vrot.slane %v1060, 7
      %v2761 = vor.u32 %v2759, %v2760
      %v2762 = vsel %vm2479, %v2758, %v2761
      %v2763 = vrot.slane %v2761, 4
      %v2764 = vrot.slane %v1074, 6
      %v2765 = vrot.slane %v1070, 7
      %v2766 = vor.u32 %v2764, %v2765
      %v2767 = vsel %vm2479, %v2763, %v2766
      %v2768 = vrot.slane %v2766, 4
      %v2769 = vrot.slane %v1084, 6
      %v2770 = vrot.slane %v1080, 7
      %v2771 = vor.u32 %v2769, %v2770
      %v2772 = vsel %vm2479, %v2768, %v2771
      %v2773 = vrot.slane %v2771, 4
      %v2774 = vrot.slane %v1094, 6
      %v2775 = vrot.slane %v1090, 7
      %v2776 = vor.u32 %v2774, %v2775
      %v2777 = vsel %vm2479, %v2773, %v2776
      %v2778 = vrot.slane %v2776, 4
      %v2779 = vrot.slane %v1104, 6
      %v2780 = vrot.slane %v1100, 7
      %v2781 = vor.u32 %v2779, %v2780
      %v2782 = vsel %vm2479, %v2778, %v2781
      %v2783 = vrot.slane %v2781, 4
      %v2784 = vrot.slane %v1114, 6
      %v2785 = vrot.slane %v1110, 7
      %v2786 = vor.u32 %v2784, %v2785
      %v2787 = vsel %vm2479, %v2783, %v2786
      %v2788 = vrot.slane %v2786, 4
      %v2789 = vrot.slane %v1124, 6
      %v2790 = vrot.slane %v1120, 7
      %v2791 = vor.u32 %v2789, %v2790
      %v2792 = vsel %vm2479, %v2788, %v2791
      %v2793 = vrot.slane %v2791, 4
      %v2794 = vrot.slane %v1134, 6
      %v2795 = vrot.slane %v1130, 7
      %v2796 = vor.u32 %v2794, %v2795
      %v2797 = vsel %vm2479, %v2793, %v2796
      %v2798 = vrot.slane %v2796, 4
      %2863 = vst [vmem:[#allocation2 + $0x28] sm:$0xff] %v2487
      %2864 = vst [vmem:[#allocation2 + $0x60] sm:$0xff] %v2492
      %2865 = vst [vmem:[#allocation2 + $0x98] sm:$0xff] %v2497
      %2866 = vst [vmem:[#allocation2 + $0xd0] sm:$0xff] %v2502
      %2867 = vst [vmem:[#allocation2 + $0x108] sm:$0xff] %v2507
      %2868 = vst [vmem:[#allocation2 + $0x140] sm:$0xff] %v2512
      %2869 = vst [vmem:[#allocation2 + $0x178] sm:$0xff] %v2517
      %2870 = vst [vmem:[#allocation2 + $0x1b0] sm:$0xff] %v2522
      %2871 = vst [vmem:[#allocation2 + $0x1e8] sm:$0xff] %v2527
      %2872 = vst [vmem:[#allocation2 + $0x220] sm:$0xff] %v2532
      %2873 = vst [vmem:[#allocation2 + $0x258] sm:$0xff] %v2537
      %2874 = vst [vmem:[#allocation2 + $0x290] sm:$0xff] %v2542
      %2875 = vst [vmem:[#allocation2 + $0x2c8] sm:$0xff] %v2547
      %2876 = vst [vmem:[#allocation2 + $0x300] sm:$0xff] %v2552
      %2877 = vst [vmem:[#allocation2 + $0x338] sm:$0xff] %v2557
      %2878 = vst [vmem:[#allocation2 + $0x370] sm:$0xff] %v2562
      %2879 = vst [vmem:[#allocation2 + $0x3a8] sm:$0xff] %v2567
      %2880 = vst [vmem:[#allocation2 + $0x3e0] sm:$0xff] %v2572
      %2881 = vst [vmem:[#allocation2 + $0x418] sm:$0xff] %v2577
      %2882 = vst [vmem:[#allocation2 + $0x450] sm:$0xff] %v2582
      %2883 = vst [vmem:[#allocation2 + $0x488] sm:$0xff] %v2587
      %2884 = vst [vmem:[#allocation2 + $0x4c0] sm:$0xff] %v2592
      %2885 = vst [vmem:[#allocation2 + $0x4f8] sm:$0xff] %v2597
      %2886 = vst [vmem:[#allocation2 + $0x530] sm:$0xff] %v2602
      %2887 = vst [vmem:[#allocation2 + $0x568] sm:$0xff] %v2607
      %2888 = vst [vmem:[#allocation2 + $0x5a0] sm:$0xff] %v2612
      %2889 = vst [vmem:[#allocation2 + $0x5d8] sm:$0xff] %v2617
      %2890 = vst [vmem:[#allocation2 + $0x610] sm:$0xff] %v2622
      %2891 = vst [vmem:[#allocation2 + $0x648] sm:$0xff] %v2627
      %2892 = vst [vmem:[#allocation2 + $0x680] sm:$0xff] %v2632
      %2893 = vst [vmem:[#allocation2 + $0x6b8] sm:$0xff] %v2637
      %2894 = vst [vmem:[#allocation2 + $0x6f0] sm:$0xff] %v2642
      %2895 = vst [vmem:[#allocation2 + $0x728] sm:$0xff] %v2647
      %2896 = vst [vmem:[#allocation2 + $0x760] sm:$0xff] %v2652
      %2897 = vst [vmem:[#allocation2 + $0x798] sm:$0xff] %v2657
      %2898 = vst [vmem:[#allocation2 + $0x7d0] sm:$0xff] %v2662
      %2899 = vst [vmem:[#allocation2 + $0x808] sm:$0xff] %v2667
      %2900 = vst [vmem:[#allocation2 + $0x840] sm:$0xff] %v2672
      %2901 = vst [vmem:[#allocation2 + $0x878] sm:$0xff] %v2677
      %2902 = vst [vmem:[#allocation2 + $0x8b0] sm:$0xff] %v2682
      %2903 = vst [vmem:[#allocation2 + $0x8e8] sm:$0xff] %v2687
      %2904 = vst [vmem:[#allocation2 + $0x920] sm:$0xff] %v2692
      %2905 = vst [vmem:[#allocation2 + $0x958] sm:$0xff] %v2697
      %2906 = vst [vmem:[#allocation2 + $0x990] sm:$0xff] %v2702
      %2907 = vst [vmem:[#allocation2 + $0x9c8] sm:$0xff] %v2707
      %2908 = vst [vmem:[#allocation2 + $0xa00] sm:$0xff] %v2712
      %2909 = vst [vmem:[#allocation2 + $0xa38] sm:$0xff] %v2717
      %2910 = vst [vmem:[#allocation2 + $0xa70] sm:$0xff] %v2722
      %2911 = vst [vmem:[#allocation2 + $0xaa8] sm:$0xff] %v2727
      %2912 = vst [vmem:[#allocation2 + $0xae0] sm:$0xff] %v2732
      %2913 = vst [vmem:[#allocation2 + $0xb18] sm:$0xff] %v2737
      %2914 = vst [vmem:[#allocation2 + $0xb50] sm:$0xff] %v2742
      %2915 = vst [vmem:[#allocation2 + $0xb88] sm:$0xff] %v2747
      %2916 = vst [vmem:[#allocation2 + $0xbc0] sm:$0xff] %v2752
      %2917 = vst [vmem:[#allocation2 + $0xbf8] sm:$0xff] %v2757
      %2918 = vst [vmem:[#allocation2 + $0xc30] sm:$0xff] %v2762
      %2919 = vst [vmem:[#allocation2 + $0xc68] sm:$0xff] %v2767
      %2920 = vst [vmem:[#allocation2 + $0xca0] sm:$0xff] %v2772
      %2921 = vst [vmem:[#allocation2 + $0xcd8] sm:$0xff] %v2777
      %2922 = vst [vmem:[#allocation2 + $0xd10] sm:$0xff] %v2782
      %2923 = vst [vmem:[#allocation2 + $0xd48] sm:$0xff] %v2787
      %2924 = vst [vmem:[#allocation2 + $0xd80] sm:$0xff] %v2792
      %2925 = vst [vmem:[#allocation2 + $0xdb8] sm:$0xff] %v2797
      %vm2926 = vmand %vm2152, %vm2477
      %vm2927 = vsmask.f32 5376
      %vm2928 = vmand %vm2153, %vm2927
      %vm2929 = vmor %vm2928, %vm2926
      %v2930 = vld [vmem:[#allocation2 + $0xdf0] sm:$0x33]
      %v2931 = vsel %vm2929, %v2798, %v2930
      %2932 = vst [vmem:[#allocation2 + $0xdf0] sm:$0x33] %v2931
      %v2933 = vrot.slane %v2136, 6
      %v2934 = vrot.slane %v1276, 7
      %v2935 = vor.u32 %v2933, %v2934
      %vm2937 = vcmask 1043457
      %vm2938 = vsmask.f32 7942
      %vm2939 = vmand %vm2937, %vm2938
      %vm2940 = vcmask 1047557
      %vm2941 = vsmask.f32 7958
      %vm2942 = vmand %vm2940, %vm2941
      %vm2943 = vmor %vm2942, %vm2939
      %v2944 = vld [vmem:[#allocation2 + $0xdf0] sm:$0xee]
      %v2945 = vsel %vm2943, %v2935, %v2944
      %2946 = vst [vmem:[#allocation2 + $0xdf0] sm:$0xee] %v2945
      %vm2947 = vcmask 1040384
      %vm2948 = vcmask 1044484
      %vm2949 = vmor %vm2947, %vm2948
      %v2950 = vrot.slane %v368, 7
      %v2951 = vrot.slane %v2950, 4
      %v2952 = vrot.slane %v369, 7
      %v2953 = vsel %vm2949, %v2951, %v2952
      %v2954 = vrot.slane %v2952, 4
      %v2955 = vrot.slane %v370, 7
      %v2956 = vsel %vm2949, %v2954, %v2955
      %v2957 = vrot.slane %v2955, 4
      %v2958 = vrot.slane %v371, 7
      %v2959 = vsel %vm2949, %v2957, %v2958
      %v2960 = vrot.slane %v2958, 4
      %v2961 = vrot.slane %v372, 7
      %v2962 = vsel %vm2949, %v2960, %v2961
      %v2963 = vrot.slane %v2961, 4
      %v2964 = vrot.slane %v373, 7
      %v2965 = vsel %vm2949, %v2963, %v2964
      %v2966 = vrot.slane %v2964, 4
      %v2967 = vrot.slane %v374, 7
      %v2968 = vsel %vm2949, %v2966, %v2967
      %v2969 = vrot.slane %v2967, 4
      %v2970 = vrot.slane %v375, 7
      %v2971 = vsel %vm2949, %v2969, %v2970
      %v2972 = vrot.slane %v2970, 4
      %v2973 = vrot.slane %v376, 7
      %v2974 = vsel %vm2949, %v2972, %v2973
      %v2975 = vrot.slane %v2973, 4
      %v2976 = vrot.slane %v377, 7
      %v2977 = vsel %vm2949, %v2975, %v2976
      %v2978 = vrot.slane %v2976, 4
      %v2979 = vrot.slane %v378, 7
      %v2980 = vsel %vm2949, %v2978, %v2979
      %v2981 = vrot.slane %v2979, 4
      %v2982 = vrot.slane %v379, 7
      %v2983 = vsel %vm2949, %v2981, %v2982
      %v2984 = vrot.slane %v2982, 4
      %v2985 = vrot.slane %v380, 7
      %v2986 = vsel %vm2949, %v2984, %v2985
      %v2987 = vrot.slane %v2985, 4
      %v2988 = vrot.slane %v381, 7
      %v2989 = vsel %vm2949, %v2987, %v2988
      %v2990 = vrot.slane %v2988, 4
      %v2991 = vrot.slane %v382, 7
      %v2992 = vsel %vm2949, %v2990, %v2991
      %v2993 = vrot.slane %v2991, 4
      %v2994 = vrot.slane %v383, 7
      %v2995 = vsel %vm2949, %v2993, %v2994
      %v2996 = vrot.slane %v2994, 4
      %v2997 = vrot.slane %v384, 7
      %v2998 = vsel %vm2949, %v2996, %v2997
      %v2999 = vrot.slane %v2997, 4
      %v3000 = vrot.slane %v385, 7
      %v3001 = vsel %vm2949, %v2999, %v3000
      %v3002 = vrot.slane %v3000, 4
      %v3003 = vrot.slane %v386, 7
      %v3004 = vsel %vm2949, %v3002, %v3003
      %v3005 = vrot.slane %v3003, 4
      %v3006 = vrot.slane %v387, 7
      %v3007 = vsel %vm2949, %v3005, %v3006
      %v3008 = vrot.slane %v3006, 4
      %v3009 = vrot.slane %v388, 7
      %v3010 = vsel %vm2949, %v3008, %v3009
      %v3011 = vrot.slane %v3009, 4
      %v3012 = vrot.slane %v389, 7
      %v3013 = vsel %vm2949, %v3011, %v3012
      %v3014 = vrot.slane %v3012, 4
      %v3015 = vrot.slane %v390, 7
      %v3016 = vsel %vm2949, %v3014, %v3015
      %v3017 = vrot.slane %v3015, 4
      %v3018 = vrot.slane %v391, 7
      %v3019 = vsel %vm2949, %v3017, %v3018
      %v3020 = vrot.slane %v3018, 4
      %v3021 = vrot.slane %v392, 7
      %v3022 = vsel %vm2949, %v3020, %v3021
      %v3023 = vrot.slane %v3021, 4
      %v3024 = vrot.slane %v393, 7
      %v3025 = vsel %vm2949, %v3023, %v3024
      %v3026 = vrot.slane %v3024, 4
      %v3027 = vrot.slane %v394, 7
      %v3028 = vsel %vm2949, %v3026, %v3027
      %v3029 = vrot.slane %v3027, 4
      %v3030 = vrot.slane %v395, 7
      %v3031 = vsel %vm2949, %v3029, %v3030
      %v3032 = vrot.slane %v3030, 4
      %v3033 = vrot.slane %v396, 7
      %v3034 = vsel %vm2949, %v3032, %v3033
      %v3035 = vrot.slane %v3033, 4
      %v3036 = vrot.slane %v397, 7
      %v3037 = vsel %vm2949, %v3035, %v3036
      %v3038 = vrot.slane %v3036, 4
      %v3039 = vrot.slane %v398, 7
      %v3040 = vsel %vm2949, %v3038, %v3039
      %v3041 = vrot.slane %v3039, 4
      %v3042 = vrot.slane %v399, 7
      %v3043 = vsel %vm2949, %v3041, %v3042
      %v3044 = vrot.slane %v3042, 4
      %v3045 = vrot.slane %v400, 7
      %v3046 = vsel %vm2949, %v3044, %v3045
      %v3047 = vrot.slane %v3045, 4
      %v3048 = vrot.slane %v401, 7
      %v3049 = vsel %vm2949, %v3047, %v3048
      %v3050 = vrot.slane %v3048, 4
      %v3051 = vrot.slane %v402, 7
      %v3052 = vsel %vm2949, %v3050, %v3051
      %v3053 = vrot.slane %v3051, 4
      %v3054 = vrot.slane %v403, 7
      %v3055 = vsel %vm2949, %v3053, %v3054
      %v3056 = vrot.slane %v3054, 4
      %v3057 = vrot.slane %v404, 7
      %v3058 = vsel %vm2949, %v3056, %v3057
      %v3059 = vrot.slane %v3057, 4
      %v3060 = vrot.slane %v405, 7
      %v3061 = vsel %vm2949, %v3059, %v3060
      %v3062 = vrot.slane %v3060, 4
      %v3063 = vrot.slane %v406, 7
      %v3064 = vsel %vm2949, %v3062, %v3063
      %v3065 = vrot.slane %v3063, 4
      %v3066 = vrot.slane %v407, 7
      %v3067 = vsel %vm2949, %v3065, %v3066
      %v3068 = vrot.slane %v3066, 4
      %v3069 = vrot.slane %v408, 7
      %v3070 = vsel %vm2949, %v3068, %v3069
      %v3071 = vrot.slane %v3069, 4
      %v3072 = vrot.slane %v409, 7
      %v3073 = vsel %vm2949, %v3071, %v3072
      %v3074 = vrot.slane %v3072, 4
      %v3075 = vrot.slane %v410, 7
      %v3076 = vsel %vm2949, %v3074, %v3075
      %v3077 = vrot.slane %v3075, 4
      %v3078 = vrot.slane %v411, 7
      %v3079 = vsel %vm2949, %v3077, %v3078
      %v3080 = vrot.slane %v3078, 4
      %v3081 = vrot.slane %v412, 7
      %v3082 = vsel %vm2949, %v3080, %v3081
      %v3083 = vrot.slane %v3081, 4
      %v3084 = vrot.slane %v413, 7
      %v3085 = vsel %vm2949, %v3083, %v3084
      %v3086 = vrot.slane %v3084, 4
      %v3087 = vrot.slane %v414, 7
      %v3088 = vsel %vm2949, %v3086, %v3087
      %v3089 = vrot.slane %v3087, 4
      %v3090 = vrot.slane %v415, 7
      %v3091 = vsel %vm2949, %v3089, %v3090
      %v3092 = vrot.slane %v3090, 4
      %v3093 = vrot.slane %v416, 7
      %v3094 = vsel %vm2949, %v3092, %v3093
      %v3095 = vrot.slane %v3093, 4
      %v3096 = vrot.slane %v417, 7
      %v3097 = vsel %vm2949, %v3095, %v3096
      %v3098 = vrot.slane %v3096, 4
      %v3099 = vrot.slane %v418, 7
      %v3100 = vsel %vm2949, %v3098, %v3099
      %v3101 = vrot.slane %v3099, 4
      %v3102 = vrot.slane %v419, 7
      %v3103 = vsel %vm2949, %v3101, %v3102
      %v3104 = vrot.slane %v3102, 4
      %v3105 = vrot.slane %v420, 7
      %v3106 = vsel %vm2949, %v3104, %v3105
      %v3107 = vrot.slane %v3105, 4
      %v3108 = vrot.slane %v421, 7
      %v3109 = vsel %vm2949, %v3107, %v3108
      %v3110 = vrot.slane %v3108, 4
      %v3111 = vrot.slane %v422, 7
      %v3112 = vsel %vm2949, %v3110, %v3111
      %v3113 = vrot.slane %v3111, 4
      %v3114 = vrot.slane %v423, 7
      %v3115 = vsel %vm2949, %v3113, %v3114
      %v3116 = vrot.slane %v3114, 4
      %v3117 = vrot.slane %v424, 7
      %v3118 = vsel %vm2949, %v3116, %v3117
      %v3119 = vrot.slane %v3117, 4
      %v3120 = vrot.slane %v425, 7
      %v3121 = vsel %vm2949, %v3119, %v3120
      %v3122 = vrot.slane %v3120, 4
      %v3123 = vrot.slane %v426, 7
      %v3124 = vsel %vm2949, %v3122, %v3123
      %v3125 = vrot.slane %v3123, 4
      %v3126 = vrot.slane %v427, 7
      %v3127 = vsel %vm2949, %v3125, %v3126
      %v3128 = vrot.slane %v3126, 4
      %v3129 = vrot.slane %v428, 7
      %v3130 = vsel %vm2949, %v3128, %v3129
      %v3131 = vrot.slane %v3129, 4
      %v3132 = vrot.slane %v429, 7
      %v3133 = vsel %vm2949, %v3131, %v3132
      %v3134 = vrot.slane %v3132, 4
      %v3135 = vrot.slane %v430, 7
      %v3136 = vsel %vm2949, %v3134, %v3135
      %v3137 = vrot.slane %v3135, 4
      %v3138 = vrot.slane %v431, 7
      %v3139 = vsel %vm2949, %v3137, %v3138
      %v3140 = vrot.slane %v3138, 4
      %3205 = vst [vmem:[#allocation2 + $0x30] sm:$0xff] %v2953
      %3206 = vst [vmem:[#allocation2 + $0x68] sm:$0xff] %v2956
      %3207 = vst [vmem:[#allocation2 + $0xa0] sm:$0xff] %v2959
      %3208 = vst [vmem:[#allocation2 + $0xd8] sm:$0xff] %v2962
      %3209 = vst [vmem:[#allocation2 + $0x110] sm:$0xff] %v2965
      %3210 = vst [vmem:[#allocation2 + $0x148] sm:$0xff] %v2968
      %3211 = vst [vmem:[#allocation2 + $0x180] sm:$0xff] %v2971
      %3212 = vst [vmem:[#allocation2 + $0x1b8] sm:$0xff] %v2974
      %3213 = vst [vmem:[#allocation2 + $0x1f0] sm:$0xff] %v2977
      %3214 = vst [vmem:[#allocation2 + $0x228] sm:$0xff] %v2980
      %3215 = vst [vmem:[#allocation2 + $0x260] sm:$0xff] %v2983
      %3216 = vst [vmem:[#allocation2 + $0x298] sm:$0xff] %v2986
      %3217 = vst [vmem:[#allocation2 + $0x2d0] sm:$0xff] %v2989
      %3218 = vst [vmem:[#allocation2 + $0x308] sm:$0xff] %v2992
      %3219 = vst [vmem:[#allocation2 + $0x340] sm:$0xff] %v2995
      %3220 = vst [vmem:[#allocation2 + $0x378] sm:$0xff] %v2998
      %3221 = vst [vmem:[#allocation2 + $0x3b0] sm:$0xff] %v3001
      %3222 = vst [vmem:[#allocation2 + $0x3e8] sm:$0xff] %v3004
      %3223 = vst [vmem:[#allocation2 + $0x420] sm:$0xff] %v3007
      %3224 = vst [vmem:[#allocation2 + $0x458] sm:$0xff] %v3010
      %3225 = vst [vmem:[#allocation2 + $0x490] sm:$0xff] %v3013
      %3226 = vst [vmem:[#allocation2 + $0x4c8] sm:$0xff] %v3016
      %3227 = vst [vmem:[#allocation2 + $0x500] sm:$0xff] %v3019
      %3228 = vst [vmem:[#allocation2 + $0x538] sm:$0xff] %v3022
      %3229 = vst [vmem:[#allocation2 + $0x570] sm:$0xff] %v3025
      %3230 = vst [vmem:[#allocation2 + $0x5a8] sm:$0xff] %v3028
      %3231 = vst [vmem:[#allocation2 + $0x5e0] sm:$0xff] %v3031
      %3232 = vst [vmem:[#allocation2 + $0x618] sm:$0xff] %v3034
      %3233 = vst [vmem:[#allocation2 + $0x650] sm:$0xff] %v3037
      %3234 = vst [vmem:[#allocation2 + $0x688] sm:$0xff] %v3040
      %3235 = vst [vmem:[#allocation2 + $0x6c0] sm:$0xff] %v3043
      %3236 = vst [vmem:[#allocation2 + $0x6f8] sm:$0xff] %v3046
      %3237 = vst [vmem:[#allocation2 + $0x730] sm:$0xff] %v3049
      %3238 = vst [vmem:[#allocation2 + $0x768] sm:$0xff] %v3052
      %3239 = vst [vmem:[#allocation2 + $0x7a0] sm:$0xff] %v3055
      %3240 = vst [vmem:[#allocation2 + $0x7d8] sm:$0xff] %v3058
      %3241 = vst [vmem:[#allocation2 + $0x810] sm:$0xff] %v3061
      %3242 = vst [vmem:[#allocation2 + $0x848] sm:$0xff] %v3064
      %3243 = vst [vmem:[#allocation2 + $0x880] sm:$0xff] %v3067
      %3244 = vst [vmem:[#allocation2 + $0x8b8] sm:$0xff] %v3070
      %3245 = vst [vmem:[#allocation2 + $0x8f0] sm:$0xff] %v3073
      %3246 = vst [vmem:[#allocation2 + $0x928] sm:$0xff] %v3076
      %3247 = vst [vmem:[#allocation2 + $0x960] sm:$0xff] %v3079
      %3248 = vst [vmem:[#allocation2 + $0x998] sm:$0xff] %v3082
      %3249 = vst [vmem:[#allocation2 + $0x9d0] sm:$0xff] %v3085
      %3250 = vst [vmem:[#allocation2 + $0xa08] sm:$0xff] %v3088
      %3251 = vst [vmem:[#allocation2 + $0xa40] sm:$0xff] %v3091
      %3252 = vst [vmem:[#allocation2 + $0xa78] sm:$0xff] %v3094
      %3253 = vst [vmem:[#allocation2 + $0xab0] sm:$0xff] %v3097
      %3254 = vst [vmem:[#allocation2 + $0xae8] sm:$0xff] %v3100
      %3255 = vst [vmem:[#allocation2 + $0xb20] sm:$0xff] %v3103
      %3256 = vst [vmem:[#allocation2 + $0xb58] sm:$0xff] %v3106
      %3257 = vst [vmem:[#allocation2 + $0xb90] sm:$0xff] %v3109
      %3258 = vst [vmem:[#allocation2 + $0xbc8] sm:$0xff] %v3112
      %3259 = vst [vmem:[#allocation2 + $0xc00] sm:$0xff] %v3115
      %3260 = vst [vmem:[#allocation2 + $0xc38] sm:$0xff] %v3118
      %3261 = vst [vmem:[#allocation2 + $0xc70] sm:$0xff] %v3121
      %3262 = vst [vmem:[#allocation2 + $0xca8] sm:$0xff] %v3124
      %3263 = vst [vmem:[#allocation2 + $0xce0] sm:$0xff] %v3127
      %3264 = vst [vmem:[#allocation2 + $0xd18] sm:$0xff] %v3130
      %3265 = vst [vmem:[#allocation2 + $0xd50] sm:$0xff] %v3133
      %3266 = vst [vmem:[#allocation2 + $0xd88] sm:$0xff] %v3136
      %3267 = vst [vmem:[#allocation2 + $0xdc0] sm:$0xff] %v3139
      %3268 = vst [vmem:[#allocation2 + $0xdf8] sm:$0x11] %v3140
      %v3269 = vrot.slane %v432, 7
      %3271 = vst [vmem:[#allocation2 + $0xdf8] sm:$0xee] %v3269
      %v3272 = vld [vmem:[#allocation2] sm:$0xff]
      %v3273 = vld [vmem:[#allocation2 + $0x8] sm:$0xff]
      %v3274 = vld [vmem:[#allocation2 + $0x10] sm:$0xff]
      %v3275 = vld [vmem:[#allocation2 + $0x18] sm:$0xff]
      %v3276 = vld [vmem:[#allocation2 + $0x20] sm:$0xff]
      %v3277 = vld [vmem:[#allocation2 + $0x28] sm:$0xff]
      %v3278 = vld [vmem:[#allocation2 + $0x30] sm:$0xff]
      %v3279 = vld [vmem:[#allocation2 + $0x38] sm:$0xff]
      %v3280 = vld [vmem:[#allocation2 + $0x40] sm:$0xff]
      %v3281 = vld [vmem:[#allocation2 + $0x48] sm:$0xff]
      %v3282 = vld [vmem:[#allocation2 + $0x50] sm:$0xff]
      %v3283 = vld [vmem:[#allocation2 + $0x58] sm:$0xff]
      %v3284 = vld [vmem:[#allocation2 + $0x60] sm:$0xff]
      %v3285 = vld [vmem:[#allocation2 + $0x68] sm:$0xff]
      %v3286 = vld [vmem:[#allocation2 + $0x70] sm:$0xff]
      %v3287 = vld [vmem:[#allocation2 + $0x78] sm:$0xff]
      %v3288 = vld [vmem:[#allocation2 + $0x80] sm:$0xff]
      %v3289 = vld [vmem:[#allocation2 + $0x88] sm:$0xff]
      %v3290 = vld [vmem:[#allocation2 + $0x90] sm:$0xff]
      %v3291 = vld [vmem:[#allocation2 + $0x98] sm:$0xff]
      %v3292 = vld [vmem:[#allocation2 + $0xa0] sm:$0xff]
      %v3293 = vld [vmem:[#allocation2 + $0xa8] sm:$0xff]
      %v3294 = vld [vmem:[#allocation2 + $0xb0] sm:$0xff]
      %v3295 = vld [vmem:[#allocation2 + $0xb8] sm:$0xff]
      %v3296 = vld [vmem:[#allocation2 + $0xc0] sm:$0xff]
      %v3297 = vld [vmem:[#allocation2 + $0xc8] sm:$0xff]
      %v3298 = vld [vmem:[#allocation2 + $0xd0] sm:$0xff]
      %v3299 = vld [vmem:[#allocation2 + $0xd8] sm:$0xff]
      %v3300 = vld [vmem:[#allocation2 + $0xe0] sm:$0xff]
      %v3301 = vld [vmem:[#allocation2 + $0xe8] sm:$0xff]
      %v3302 = vld [vmem:[#allocation2 + $0xf0] sm:$0xff]
      %v3303 = vld [vmem:[#allocation2 + $0xf8] sm:$0xff]
      %v3304 = vld [vmem:[#allocation2 + $0x100] sm:$0xff]
      %v3305 = vld [vmem:[#allocation2 + $0x108] sm:$0xff]
      %v3306 = vld [vmem:[#allocation2 + $0x110] sm:$0xff]
      %v3307 = vld [vmem:[#allocation2 + $0x118] sm:$0xff]
      %v3308 = vld [vmem:[#allocation2 + $0x120] sm:$0xff]
      %v3309 = vld [vmem:[#allocation2 + $0x128] sm:$0xff]
      %v3310 = vld [vmem:[#allocation2 + $0x130] sm:$0xff]
      %v3311 = vld [vmem:[#allocation2 + $0x138] sm:$0xff]
      %v3312 = vld [vmem:[#allocation2 + $0x140] sm:$0xff]
      %v3313 = vld [vmem:[#allocation2 + $0x148] sm:$0xff]
      %v3314 = vld [vmem:[#allocation2 + $0x150] sm:$0xff]
      %v3315 = vld [vmem:[#allocation2 + $0x158] sm:$0xff]
      %v3316 = vld [vmem:[#allocation2 + $0x160] sm:$0xff]
      %v3317 = vld [vmem:[#allocation2 + $0x168] sm:$0xff]
      %v3318 = vld [vmem:[#allocation2 + $0x170] sm:$0xff]
      %v3319 = vld [vmem:[#allocation2 + $0x178] sm:$0xff]
      %v3320 = vld [vmem:[#allocation2 + $0x180] sm:$0xff]
      %v3321 = vld [vmem:[#allocation2 + $0x188] sm:$0xff]
      %v3322 = vld [vmem:[#allocation2 + $0x190] sm:$0xff]
      %v3323 = vld [vmem:[#allocation2 + $0x198] sm:$0xff]
      %v3324 = vld [vmem:[#allocation2 + $0x1a0] sm:$0xff]
      %v3325 = vld [vmem:[#allocation2 + $0x1a8] sm:$0xff]
      %v3326 = vld [vmem:[#allocation2 + $0x1b0] sm:$0xff]
      %v3327 = vld [vmem:[#allocation2 + $0x1b8] sm:$0xff]
      %v3328 = vld [vmem:[#allocation2 + $0x1c0] sm:$0xff]
      %v3329 = vld [vmem:[#allocation2 + $0x1c8] sm:$0xff]
      %v3330 = vld [vmem:[#allocation2 + $0x1d0] sm:$0xff]
      %v3331 = vld [vmem:[#allocation2 + $0x1d8] sm:$0xff]
      %v3332 = vld [vmem:[#allocation2 + $0x1e0] sm:$0xff]
      %v3333 = vld [vmem:[#allocation2 + $0x1e8] sm:$0xff]
      %v3334 = vld [vmem:[#allocation2 + $0x1f0] sm:$0xff]
      %v3335 = vld [vmem:[#allocation2 + $0x1f8] sm:$0xff]
      %v3336 = vld [vmem:[#allocation2 + $0x200] sm:$0xff]
      %v3337 = vld [vmem:[#allocation2 + $0x208] sm:$0xff]
      %v3338 = vld [vmem:[#allocation2 + $0x210] sm:$0xff]
      %v3339 = vld [vmem:[#allocation2 + $0x218] sm:$0xff]
      %v3340 = vld [vmem:[#allocation2 + $0x220] sm:$0xff]
      %v3341 = vld [vmem:[#allocation2 + $0x228] sm:$0xff]
      %v3342 = vld [vmem:[#allocation2 + $0x230] sm:$0xff]
      %v3343 = vld [vmem:[#allocation2 + $0x238] sm:$0xff]
      %v3344 = vld [vmem:[#allocation2 + $0x240] sm:$0xff]
      %v3345 = vld [vmem:[#allocation2 + $0x248] sm:$0xff]
      %v3346 = vld [vmem:[#allocation2 + $0x250] sm:$0xff]
      %v3347 = vld [vmem:[#allocation2 + $0x258] sm:$0xff]
      %v3348 = vld [vmem:[#allocation2 + $0x260] sm:$0xff]
      %v3349 = vld [vmem:[#allocation2 + $0x268] sm:$0xff]
      %v3350 = vld [vmem:[#allocation2 + $0x270] sm:$0xff]
      %v3351 = vld [vmem:[#allocation2 + $0x278] sm:$0xff]
      %v3352 = vld [vmem:[#allocation2 + $0x280] sm:$0xff]
      %v3353 = vld [vmem:[#allocation2 + $0x288] sm:$0xff]
      %v3354 = vld [vmem:[#allocation2 + $0x290] sm:$0xff]
      %v3355 = vld [vmem:[#allocation2 + $0x298] sm:$0xff]
      %v3356 = vld [vmem:[#allocation2 + $0x2a0] sm:$0xff]
      %v3357 = vld [vmem:[#allocation2 + $0x2a8] sm:$0xff]
      %v3358 = vld [vmem:[#allocation2 + $0x2b0] sm:$0xff]
      %v3359 = vld [vmem:[#allocation2 + $0x2b8] sm:$0xff]
      %v3360 = vld [vmem:[#allocation2 + $0x2c0] sm:$0xff]
      %v3361 = vld [vmem:[#allocation2 + $0x2c8] sm:$0xff]
      %v3362 = vld [vmem:[#allocation2 + $0x2d0] sm:$0xff]
      %v3363 = vld [vmem:[#allocation2 + $0x2d8] sm:$0xff]
      %v3364 = vld [vmem:[#allocation2 + $0x2e0] sm:$0xff]
      %v3365 = vld [vmem:[#allocation2 + $0x2e8] sm:$0xff]
      %v3366 = vld [vmem:[#allocation2 + $0x2f0] sm:$0xff]
      %v3367 = vld [vmem:[#allocation2 + $0x2f8] sm:$0xff]
      %v3368 = vld [vmem:[#allocation2 + $0x300] sm:$0xff]
      %v3369 = vld [vmem:[#allocation2 + $0x308] sm:$0xff]
      %v3370 = vld [vmem:[#allocation2 + $0x310] sm:$0xff]
      %v3371 = vld [vmem:[#allocation2 + $0x318] sm:$0xff]
      %v3372 = vld [vmem:[#allocation2 + $0x320] sm:$0xff]
      %v3373 = vld [vmem:[#allocation2 + $0x328] sm:$0xff]
      %v3374 = vld [vmem:[#allocation2 + $0x330] sm:$0xff]
      %v3375 = vld [vmem:[#allocation2 + $0x338] sm:$0xff]
      %v3376 = vld [vmem:[#allocation2 + $0x340] sm:$0xff]
      %v3377 = vld [vmem:[#allocation2 + $0x348] sm:$0xff]
      %v3378 = vld [vmem:[#allocation2 + $0x350] sm:$0xff]
      %v3379 = vld [vmem:[#allocation2 + $0x358] sm:$0xff]
      %v3380 = vld [vmem:[#allocation2 + $0x360] sm:$0xff]
      %v3381 = vld [vmem:[#allocation2 + $0x368] sm:$0xff]
      %v3382 = vld [vmem:[#allocation2 + $0x370] sm:$0xff]
      %v3383 = vld [vmem:[#allocation2 + $0x378] sm:$0xff]
      %v3384 = vld [vmem:[#allocation2 + $0x380] sm:$0xff]
      %v3385 = vld [vmem:[#allocation2 + $0x388] sm:$0xff]
      %v3386 = vld [vmem:[#allocation2 + $0x390] sm:$0xff]
      %v3387 = vld [vmem:[#allocation2 + $0x398] sm:$0xff]
      %v3388 = vld [vmem:[#allocation2 + $0x3a0] sm:$0xff]
      %v3389 = vld [vmem:[#allocation2 + $0x3a8] sm:$0xff]
      %v3390 = vld [vmem:[#allocation2 + $0x3b0] sm:$0xff]
      %v3391 = vld [vmem:[#allocation2 + $0x3b8] sm:$0xff]
      %v3392 = vld [vmem:[#allocation2 + $0x3c0] sm:$0xff]
      %v3393 = vld [vmem:[#allocation2 + $0x3c8] sm:$0xff]
      %v3394 = vld [vmem:[#allocation2 + $0x3d0] sm:$0xff]
      %v3395 = vld [vmem:[#allocation2 + $0x3d8] sm:$0xff]
      %v3396 = vld [vmem:[#allocation2 + $0x3e0] sm:$0xff]
      %v3397 = vld [vmem:[#allocation2 + $0x3e8] sm:$0xff]
      %v3398 = vld [vmem:[#allocation2 + $0x3f0] sm:$0xff]
      %v3399 = vld [vmem:[#allocation2 + $0x3f8] sm:$0xff]
      %v3400 = vld [vmem:[#allocation2 + $0x400] sm:$0xff]
      %v3401 = vld [vmem:[#allocation2 + $0x408] sm:$0xff]
      %v3402 = vld [vmem:[#allocation2 + $0x410] sm:$0xff]
      %v3403 = vld [vmem:[#allocation2 + $0x418] sm:$0xff]
      %v3404 = vld [vmem:[#allocation2 + $0x420] sm:$0xff]
      %v3405 = vld [vmem:[#allocation2 + $0x428] sm:$0xff]
      %v3406 = vld [vmem:[#allocation2 + $0x430] sm:$0xff]
      %v3407 = vld [vmem:[#allocation2 + $0x438] sm:$0xff]
      %v3408 = vld [vmem:[#allocation2 + $0x440] sm:$0xff]
      %v3409 = vld [vmem:[#allocation2 + $0x448] sm:$0xff]
      %v3410 = vld [vmem:[#allocation2 + $0x450] sm:$0xff]
      %v3411 = vld [vmem:[#allocation2 + $0x458] sm:$0xff]
      %v3412 = vld [vmem:[#allocation2 + $0x460] sm:$0xff]
      %v3413 = vld [vmem:[#allocation2 + $0x468] sm:$0xff]
      %v3414 = vld [vmem:[#allocation2 + $0x470] sm:$0xff]
      %v3415 = vld [vmem:[#allocation2 + $0x478] sm:$0xff]
      %v3416 = vld [vmem:[#allocation2 + $0x480] sm:$0xff]
      %v3417 = vld [vmem:[#allocation2 + $0x488] sm:$0xff]
      %v3418 = vld [vmem:[#allocation2 + $0x490] sm:$0xff]
      %v3419 = vld [vmem:[#allocation2 + $0x498] sm:$0xff]
      %v3420 = vld [vmem:[#allocation2 + $0x4a0] sm:$0xff]
      %v3421 = vld [vmem:[#allocation2 + $0x4a8] sm:$0xff]
      %v3422 = vld [vmem:[#allocation2 + $0x4b0] sm:$0xff]
      %v3423 = vld [vmem:[#allocation2 + $0x4b8] sm:$0xff]
      %v3424 = vld [vmem:[#allocation2 + $0x4c0] sm:$0xff]
      %v3425 = vld [vmem:[#allocation2 + $0x4c8] sm:$0xff]
      %v3426 = vld [vmem:[#allocation2 + $0x4d0] sm:$0xff]
      %v3427 = vld [vmem:[#allocation2 + $0x4d8] sm:$0xff]
      %v3428 = vld [vmem:[#allocation2 + $0x4e0] sm:$0xff]
      %v3429 = vld [vmem:[#allocation2 + $0x4e8] sm:$0xff]
      %v3430 = vld [vmem:[#allocation2 + $0x4f0] sm:$0xff]
      %v3431 = vld [vmem:[#allocation2 + $0x4f8] sm:$0xff]
      %v3432 = vld [vmem:[#allocation2 + $0x500] sm:$0xff]
      %v3433 = vld [vmem:[#allocation2 + $0x508] sm:$0xff]
      %v3434 = vld [vmem:[#allocation2 + $0x510] sm:$0xff]
      %v3435 = vld [vmem:[#allocation2 + $0x518] sm:$0xff]
      %v3436 = vld [vmem:[#allocation2 + $0x520] sm:$0xff]
      %v3437 = vld [vmem:[#allocation2 + $0x528] sm:$0xff]
      %v3438 = vld [vmem:[#allocation2 + $0x530] sm:$0xff]
      %v3439 = vld [vmem:[#allocation2 + $0x538] sm:$0xff]
      %v3440 = vld [vmem:[#allocation2 + $0x540] sm:$0xff]
      %v3441 = vld [vmem:[#allocation2 + $0x548] sm:$0xff]
      %v3442 = vld [vmem:[#allocation2 + $0x550] sm:$0xff]
      %v3443 = vld [vmem:[#allocation2 + $0x558] sm:$0xff]
      %v3444 = vld [vmem:[#allocation2 + $0x560] sm:$0xff]
      %v3445 = vld [vmem:[#allocation2 + $0x568] sm:$0xff]
      %v3446 = vld [vmem:[#allocation2 + $0x570] sm:$0xff]
      %v3447 = vld [vmem:[#allocation2 + $0x578] sm:$0xff]
      %v3448 = vld [vmem:[#allocation2 + $0x580] sm:$0xff]
      %v3449 = vld [vmem:[#allocation2 + $0x588] sm:$0xff]
      %v3450 = vld [vmem:[#allocation2 + $0x590] sm:$0xff]
      %v3451 = vld [vmem:[#allocation2 + $0x598] sm:$0xff]
      %v3452 = vld [vmem:[#allocation2 + $0x5a0] sm:$0xff]
      %v3453 = vld [vmem:[#allocation2 + $0x5a8] sm:$0xff]
      %v3454 = vld [vmem:[#allocation2 + $0x5b0] sm:$0xff]
      %v3455 = vld [vmem:[#allocation2 + $0x5b8] sm:$0xff]
      %v3456 = vld [vmem:[#allocation2 + $0x5c0] sm:$0xff]
      %v3457 = vld [vmem:[#allocation2 + $0x5c8] sm:$0xff]
      %v3458 = vld [vmem:[#allocation2 + $0x5d0] sm:$0xff]
      %v3459 = vld [vmem:[#allocation2 + $0x5d8] sm:$0xff]
      %v3460 = vld [vmem:[#allocation2 + $0x5e0] sm:$0xff]
      %v3461 = vld [vmem:[#allocation2 + $0x5e8] sm:$0xff]
      %v3462 = vld [vmem:[#allocation2 + $0x5f0] sm:$0xff]
      %v3463 = vld [vmem:[#allocation2 + $0x5f8] sm:$0xff]
      %v3464 = vld [vmem:[#allocation2 + $0x600] sm:$0xff]
      %v3465 = vld [vmem:[#allocation2 + $0x608] sm:$0xff]
      %v3466 = vld [vmem:[#allocation2 + $0x610] sm:$0xff]
      %v3467 = vld [vmem:[#allocation2 + $0x618] sm:$0xff]
      %v3468 = vld [vmem:[#allocation2 + $0x620] sm:$0xff]
      %v3469 = vld [vmem:[#allocation2 + $0x628] sm:$0xff]
      %v3470 = vld [vmem:[#allocation2 + $0x630] sm:$0xff]
      %v3471 = vld [vmem:[#allocation2 + $0x638] sm:$0xff]
      %v3472 = vld [vmem:[#allocation2 + $0x640] sm:$0xff]
      %v3473 = vld [vmem:[#allocation2 + $0x648] sm:$0xff]
      %v3474 = vld [vmem:[#allocation2 + $0x650] sm:$0xff]
      %v3475 = vld [vmem:[#allocation2 + $0x658] sm:$0xff]
      %v3476 = vld [vmem:[#allocation2 + $0x660] sm:$0xff]
      %v3477 = vld [vmem:[#allocation2 + $0x668] sm:$0xff]
      %v3478 = vld [vmem:[#allocation2 + $0x670] sm:$0xff]
      %v3479 = vld [vmem:[#allocation2 + $0x678] sm:$0xff]
      %v3480 = vld [vmem:[#allocation2 + $0x680] sm:$0xff]
      %v3481 = vld [vmem:[#allocation2 + $0x688] sm:$0xff]
      %v3482 = vld [vmem:[#allocation2 + $0x690] sm:$0xff]
      %v3483 = vld [vmem:[#allocation2 + $0x698] sm:$0xff]
      %v3484 = vld [vmem:[#allocation2 + $0x6a0] sm:$0xff]
      %v3485 = vld [vmem:[#allocation2 + $0x6a8] sm:$0xff]
      %v3486 = vld [vmem:[#allocation2 + $0x6b0] sm:$0xff]
      %v3487 = vld [vmem:[#allocation2 + $0x6b8] sm:$0xff]
      %v3488 = vld [vmem:[#allocation2 + $0x6c0] sm:$0xff]
      %v3489 = vld [vmem:[#allocation2 + $0x6c8] sm:$0xff]
      %v3490 = vld [vmem:[#allocation2 + $0x6d0] sm:$0xff]
      %v3491 = vld [vmem:[#allocation2 + $0x6d8] sm:$0xff]
      %v3492 = vld [vmem:[#allocation2 + $0x6e0] sm:$0xff]
      %v3493 = vld [vmem:[#allocation2 + $0x6e8] sm:$0xff]
      %v3494 = vld [vmem:[#allocation2 + $0x6f0] sm:$0xff]
      %v3495 = vld [vmem:[#allocation2 + $0x6f8] sm:$0xff]
      %v3496 = vld [vmem:[#allocation2 + $0x700] sm:$0xff]
      %v3497 = vld [vmem:[#allocation2 + $0x708] sm:$0xff]
      %v3498 = vld [vmem:[#allocation2 + $0x710] sm:$0xff]
      %v3499 = vld [vmem:[#allocation2 + $0x718] sm:$0xff]
      %v3500 = vld [vmem:[#allocation2 + $0x720] sm:$0xff]
      %v3501 = vld [vmem:[#allocation2 + $0x728] sm:$0xff]
      %v3502 = vld [vmem:[#allocation2 + $0x730] sm:$0xff]
      %v3503 = vld [vmem:[#allocation2 + $0x738] sm:$0xff]
      %v3504 = vld [vmem:[#allocation2 + $0x740] sm:$0xff]
      %v3505 = vld [vmem:[#allocation2 + $0x748] sm:$0xff]
      %v3506 = vld [vmem:[#allocation2 + $0x750] sm:$0xff]
      %v3507 = vld [vmem:[#allocation2 + $0x758] sm:$0xff]
      %v3508 = vld [vmem:[#allocation2 + $0x760] sm:$0xff]
      %v3509 = vld [vmem:[#allocation2 + $0x768] sm:$0xff]
      %v3510 = vld [vmem:[#allocation2 + $0x770] sm:$0xff]
      %v3511 = vld [vmem:[#allocation2 + $0x778] sm:$0xff]
      %v3512 = vld [vmem:[#allocation2 + $0x780] sm:$0xff]
      %v3513 = vld [vmem:[#allocation2 + $0x788] sm:$0xff]
      %v3514 = vld [vmem:[#allocation2 + $0x790] sm:$0xff]
      %v3515 = vld [vmem:[#allocation2 + $0x798] sm:$0xff]
      %v3516 = vld [vmem:[#allocation2 + $0x7a0] sm:$0xff]
      %v3517 = vld [vmem:[#allocation2 + $0x7a8] sm:$0xff]
      %v3518 = vld [vmem:[#allocation2 + $0x7b0] sm:$0xff]
      %v3519 = vld [vmem:[#allocation2 + $0x7b8] sm:$0xff]
      %v3520 = vld [vmem:[#allocation2 + $0x7c0] sm:$0xff]
      %v3521 = vld [vmem:[#allocation2 + $0x7c8] sm:$0xff]
      %v3522 = vld [vmem:[#allocation2 + $0x7d0] sm:$0xff]
      %v3523 = vld [vmem:[#allocation2 + $0x7d8] sm:$0xff]
      %v3524 = vld [vmem:[#allocation2 + $0x7e0] sm:$0xff]
      %v3525 = vld [vmem:[#allocation2 + $0x7e8] sm:$0xff]
      %v3526 = vld [vmem:[#allocation2 + $0x7f0] sm:$0xff]
      %v3527 = vld [vmem:[#allocation2 + $0x7f8] sm:$0xff]
      %v3528 = vld [vmem:[#allocation2 + $0x800] sm:$0xff]
      %v3529 = vld [vmem:[#allocation2 + $0x808] sm:$0xff]
      %v3530 = vld [vmem:[#allocation2 + $0x810] sm:$0xff]
      %v3531 = vld [vmem:[#allocation2 + $0x818] sm:$0xff]
      %v3532 = vld [vmem:[#allocation2 + $0x820] sm:$0xff]
      %v3533 = vld [vmem:[#allocation2 + $0x828] sm:$0xff]
      %v3534 = vld [vmem:[#allocation2 + $0x830] sm:$0xff]
      %v3535 = vld [vmem:[#allocation2 + $0x838] sm:$0xff]
      %v3536 = vld [vmem:[#allocation2 + $0x840] sm:$0xff]
      %v3537 = vld [vmem:[#allocation2 + $0x848] sm:$0xff]
      %v3538 = vld [vmem:[#allocation2 + $0x850] sm:$0xff]
      %v3539 = vld [vmem:[#allocation2 + $0x858] sm:$0xff]
      %v3540 = vld [vmem:[#allocation2 + $0x860] sm:$0xff]
      %v3541 = vld [vmem:[#allocation2 + $0x868] sm:$0xff]
      %v3542 = vld [vmem:[#allocation2 + $0x870] sm:$0xff]
      %v3543 = vld [vmem:[#allocation2 + $0x878] sm:$0xff]
      %v3544 = vld [vmem:[#allocation2 + $0x880] sm:$0xff]
      %v3545 = vld [vmem:[#allocation2 + $0x888] sm:$0xff]
      %v3546 = vld [vmem:[#allocation2 + $0x890] sm:$0xff]
      %v3547 = vld [vmem:[#allocation2 + $0x898] sm:$0xff]
      %v3548 = vld [vmem:[#allocation2 + $0x8a0] sm:$0xff]
      %v3549 = vld [vmem:[#allocation2 + $0x8a8] sm:$0xff]
      %v3550 = vld [vmem:[#allocation2 + $0x8b0] sm:$0xff]
      %v3551 = vld [vmem:[#allocation2 + $0x8b8] sm:$0xff]
      %v3552 = vld [vmem:[#allocation2 + $0x8c0] sm:$0xff]
      %v3553 = vld [vmem:[#allocation2 + $0x8c8] sm:$0xff]
      %v3554 = vld [vmem:[#allocation2 + $0x8d0] sm:$0xff]
      %v3555 = vld [vmem:[#allocation2 + $0x8d8] sm:$0xff]
      %v3556 = vld [vmem:[#allocation2 + $0x8e0] sm:$0xff]
      %v3557 = vld [vmem:[#allocation2 + $0x8e8] sm:$0xff]
      %v3558 = vld [vmem:[#allocation2 + $0x8f0] sm:$0xff]
      %v3559 = vld [vmem:[#allocation2 + $0x8f8] sm:$0xff]
      %v3560 = vld [vmem:[#allocation2 + $0x900] sm:$0xff]
      %v3561 = vld [vmem:[#allocation2 + $0x908] sm:$0xff]
      %v3562 = vld [vmem:[#allocation2 + $0x910] sm:$0xff]
      %v3563 = vld [vmem:[#allocation2 + $0x918] sm:$0xff]
      %v3564 = vld [vmem:[#allocation2 + $0x920] sm:$0xff]
      %v3565 = vld [vmem:[#allocation2 + $0x928] sm:$0xff]
      %v3566 = vld [vmem:[#allocation2 + $0x930] sm:$0xff]
      %v3567 = vld [vmem:[#allocation2 + $0x938] sm:$0xff]
      %v3568 = vld [vmem:[#allocation2 + $0x940] sm:$0xff]
      %v3569 = vld [vmem:[#allocation2 + $0x948] sm:$0xff]
      %v3570 = vld [vmem:[#allocation2 + $0x950] sm:$0xff]
      %v3571 = vld [vmem:[#allocation2 + $0x958] sm:$0xff]
      %v3572 = vld [vmem:[#allocation2 + $0x960] sm:$0xff]
      %v3573 = vld [vmem:[#allocation2 + $0x968] sm:$0xff]
      %v3574 = vld [vmem:[#allocation2 + $0x970] sm:$0xff]
      %v3575 = vld [vmem:[#allocation2 + $0x978] sm:$0xff]
      %v3576 = vld [vmem:[#allocation2 + $0x980] sm:$0xff]
      %v3577 = vld [vmem:[#allocation2 + $0x988] sm:$0xff]
      %v3578 = vld [vmem:[#allocation2 + $0x990] sm:$0xff]
      %v3579 = vld [vmem:[#allocation2 + $0x998] sm:$0xff]
      %v3580 = vld [vmem:[#allocation2 + $0x9a0] sm:$0xff]
      %v3581 = vld [vmem:[#allocation2 + $0x9a8] sm:$0xff]
      %v3582 = vld [vmem:[#allocation2 + $0x9b0] sm:$0xff]
      %v3583 = vld [vmem:[#allocation2 + $0x9b8] sm:$0xff]
      %v3584 = vld [vmem:[#allocation2 + $0x9c0] sm:$0xff]
      %v3585 = vld [vmem:[#allocation2 + $0x9c8] sm:$0xff]
      %v3586 = vld [vmem:[#allocation2 + $0x9d0] sm:$0xff]
      %v3587 = vld [vmem:[#allocation2 + $0x9d8] sm:$0xff]
      %v3588 = vld [vmem:[#allocation2 + $0x9e0] sm:$0xff]
      %v3589 = vld [vmem:[#allocation2 + $0x9e8] sm:$0xff]
      %v3590 = vld [vmem:[#allocation2 + $0x9f0] sm:$0xff]
      %v3591 = vld [vmem:[#allocation2 + $0x9f8] sm:$0xff]
      %v3592 = vld [vmem:[#allocation2 + $0xa00] sm:$0xff]
      %v3593 = vld [vmem:[#allocation2 + $0xa08] sm:$0xff]
      %v3594 = vld [vmem:[#allocation2 + $0xa10] sm:$0xff]
      %v3595 = vld [vmem:[#allocation2 + $0xa18] sm:$0xff]
      %v3596 = vld [vmem:[#allocation2 + $0xa20] sm:$0xff]
      %v3597 = vld [vmem:[#allocation2 + $0xa28] sm:$0xff]
      %v3598 = vld [vmem:[#allocation2 + $0xa30] sm:$0xff]
      %v3599 = vld [vmem:[#allocation2 + $0xa38] sm:$0xff]
      %v3600 = vld [vmem:[#allocation2 + $0xa40] sm:$0xff]
      %v3601 = vld [vmem:[#allocation2 + $0xa48] sm:$0xff]
      %v3602 = vld [vmem:[#allocation2 + $0xa50] sm:$0xff]
      %v3603 = vld [vmem:[#allocation2 + $0xa58] sm:$0xff]
      %v3604 = vld [vmem:[#allocation2 + $0xa60] sm:$0xff]
      %v3605 = vld [vmem:[#allocation2 + $0xa68] sm:$0xff]
      %v3606 = vld [vmem:[#allocation2 + $0xa70] sm:$0xff]
      %v3607 = vld [vmem:[#allocation2 + $0xa78] sm:$0xff]
      %v3608 = vld [vmem:[#allocation2 + $0xa80] sm:$0xff]
      %v3609 = vld [vmem:[#allocation2 + $0xa88] sm:$0xff]
      %v3610 = vld [vmem:[#allocation2 + $0xa90] sm:$0xff]
      %v3611 = vld [vmem:[#allocation2 + $0xa98] sm:$0xff]
      %v3612 = vld [vmem:[#allocation2 + $0xaa0] sm:$0xff]
      %v3613 = vld [vmem:[#allocation2 + $0xaa8] sm:$0xff]
      %v3614 = vld [vmem:[#allocation2 + $0xab0] sm:$0xff]
      %v3615 = vld [vmem:[#allocation2 + $0xab8] sm:$0xff]
      %v3616 = vld [vmem:[#allocation2 + $0xac0] sm:$0xff]
      %v3617 = vld [vmem:[#allocation2 + $0xac8] sm:$0xff]
      %v3618 = vld [vmem:[#allocation2 + $0xad0] sm:$0xff]
      %v3619 = vld [vmem:[#allocation2 + $0xad8] sm:$0xff]
      %v3620 = vld [vmem:[#allocation2 + $0xae0] sm:$0xff]
      %v3621 = vld [vmem:[#allocation2 + $0xae8] sm:$0xff]
      %v3622 = vld [vmem:[#allocation2 + $0xaf0] sm:$0xff]
      %v3623 = vld [vmem:[#allocation2 + $0xaf8] sm:$0xff]
      %v3624 = vld [vmem:[#allocation2 + $0xb00] sm:$0xff]
      %v3625 = vld [vmem:[#allocation2 + $0xb08] sm:$0xff]
      %v3626 = vld [vmem:[#allocation2 + $0xb10] sm:$0xff]
      %v3627 = vld [vmem:[#allocation2 + $0xb18] sm:$0xff]
      %v3628 = vld [vmem:[#allocation2 + $0xb20] sm:$0xff]
      %v3629 = vld [vmem:[#allocation2 + $0xb28] sm:$0xff]
      %v3630 = vld [vmem:[#allocation2 + $0xb30] sm:$0xff]
      %v3631 = vld [vmem:[#allocation2 + $0xb38] sm:$0xff]
      %v3632 = vld [vmem:[#allocation2 + $0xb40] sm:$0xff]
      %v3633 = vld [vmem:[#allocation2 + $0xb48] sm:$0xff]
      %v3634 = vld [vmem:[#allocation2 + $0xb50] sm:$0xff]
      %v3635 = vld [vmem:[#allocation2 + $0xb58] sm:$0xff]
      %v3636 = vld [vmem:[#allocation2 + $0xb60] sm:$0xff]
      %v3637 = vld [vmem:[#allocation2 + $0xb68] sm:$0xff]
      %v3638 = vld [vmem:[#allocation2 + $0xb70] sm:$0xff]
      %v3639 = vld [vmem:[#allocation2 + $0xb78] sm:$0xff]
      %v3640 = vld [vmem:[#allocation2 + $0xb80] sm:$0xff]
      %v3641 = vld [vmem:[#allocation2 + $0xb88] sm:$0xff]
      %v3642 = vld [vmem:[#allocation2 + $0xb90] sm:$0xff]
      %v3643 = vld [vmem:[#allocation2 + $0xb98] sm:$0xff]
      %v3644 = vld [vmem:[#allocation2 + $0xba0] sm:$0xff]
      %v3645 = vld [vmem:[#allocation2 + $0xba8] sm:$0xff]
      %v3646 = vld [vmem:[#allocation2 + $0xbb0] sm:$0xff]
      %v3647 = vld [vmem:[#allocation2 + $0xbb8] sm:$0xff]
      %v3648 = vld [vmem:[#allocation2 + $0xbc0] sm:$0xff]
      %v3649 = vld [vmem:[#allocation2 + $0xbc8] sm:$0xff]
      %v3650 = vld [vmem:[#allocation2 + $0xbd0] sm:$0xff]
      %v3651 = vld [vmem:[#allocation2 + $0xbd8] sm:$0xff]
      %v3652 = vld [vmem:[#allocation2 + $0xbe0] sm:$0xff]
      %v3653 = vld [vmem:[#allocation2 + $0xbe8] sm:$0xff]
      %v3654 = vld [vmem:[#allocation2 + $0xbf0] sm:$0xff]
      %v3655 = vld [vmem:[#allocation2 + $0xbf8] sm:$0xff]
      %v3656 = vld [vmem:[#allocation2 + $0xc00] sm:$0xff]
      %v3657 = vld [vmem:[#allocation2 + $0xc08] sm:$0xff]
      %v3658 = vld [vmem:[#allocation2 + $0xc10] sm:$0xff]
      %v3659 = vld [vmem:[#allocation2 + $0xc18] sm:$0xff]
      %v3660 = vld [vmem:[#allocation2 + $0xc20] sm:$0xff]
      %v3661 = vld [vmem:[#allocation2 + $0xc28] sm:$0xff]
      %v3662 = vld [vmem:[#allocation2 + $0xc30] sm:$0xff]
      %v3663 = vld [vmem:[#allocation2 + $0xc38] sm:$0xff]
      %v3664 = vld [vmem:[#allocation2 + $0xc40] sm:$0xff]
      %v3665 = vld [vmem:[#allocation2 + $0xc48] sm:$0xff]
      %v3666 = vld [vmem:[#allocation2 + $0xc50] sm:$0xff]
      %v3667 = vld [vmem:[#allocation2 + $0xc58] sm:$0xff]
      %v3668 = vld [vmem:[#allocation2 + $0xc60] sm:$0xff]
      %v3669 = vld [vmem:[#allocation2 + $0xc68] sm:$0xff]
      %v3670 = vld [vmem:[#allocation2 + $0xc70] sm:$0xff]
      %v3671 = vld [vmem:[#allocation2 + $0xc78] sm:$0xff]
      %v3672 = vld [vmem:[#allocation2 + $0xc80] sm:$0xff]
      %v3673 = vld [vmem:[#allocation2 + $0xc88] sm:$0xff]
      %v3674 = vld [vmem:[#allocation2 + $0xc90] sm:$0xff]
      %v3675 = vld [vmem:[#allocation2 + $0xc98] sm:$0xff]
      %v3676 = vld [vmem:[#allocation2 + $0xca0] sm:$0xff]
      %v3677 = vld [vmem:[#allocation2 + $0xca8] sm:$0xff]
      %v3678 = vld [vmem:[#allocation2 + $0xcb0] sm:$0xff]
      %v3679 = vld [vmem:[#allocation2 + $0xcb8] sm:$0xff]
      %v3680 = vld [vmem:[#allocation2 + $0xcc0] sm:$0xff]
      %v3681 = vld [vmem:[#allocation2 + $0xcc8] sm:$0xff]
      %v3682 = vld [vmem:[#allocation2 + $0xcd0] sm:$0xff]
      %v3683 = vld [vmem:[#allocation2 + $0xcd8] sm:$0xff]
      %v3684 = vld [vmem:[#allocation2 + $0xce0] sm:$0xff]
      %v3685 = vld [vmem:[#allocation2 + $0xce8] sm:$0xff]
      %v3686 = vld [vmem:[#allocation2 + $0xcf0] sm:$0xff]
      %v3687 = vld [vmem:[#allocation2 + $0xcf8] sm:$0xff]
      %v3688 = vld [vmem:[#allocation2 + $0xd00] sm:$0xff]
      %v3689 = vld [vmem:[#allocation2 + $0xd08] sm:$0xff]
      %v3690 = vld [vmem:[#allocation2 + $0xd10] sm:$0xff]
      %v3691 = vld [vmem:[#allocation2 + $0xd18] sm:$0xff]
      %v3692 = vld [vmem:[#allocation2 + $0xd20] sm:$0xff]
      %v3693 = vld [vmem:[#allocation2 + $0xd28] sm:$0xff]
      %v3694 = vld [vmem:[#allocation2 + $0xd30] sm:$0xff]
      %v3695 = vld [vmem:[#allocation2 + $0xd38] sm:$0xff]
      %v3696 = vld [vmem:[#allocation2 + $0xd40] sm:$0xff]
      %v3697 = vld [vmem:[#allocation2 + $0xd48] sm:$0xff]
      %v3698 = vld [vmem:[#allocation2 + $0xd50] sm:$0xff]
      %v3699 = vld [vmem:[#allocation2 + $0xd58] sm:$0xff]
      %v3700 = vld [vmem:[#allocation2 + $0xd60] sm:$0xff]
      %v3701 = vld [vmem:[#allocation2 + $0xd68] sm:$0xff]
      %v3702 = vld [vmem:[#allocation2 + $0xd70] sm:$0xff]
      %v3703 = vld [vmem:[#allocation2 + $0xd78] sm:$0xff]
      %v3704 = vld [vmem:[#allocation2 + $0xd80] sm:$0xff]
      %v3705 = vld [vmem:[#allocation2 + $0xd88] sm:$0xff]
      %v3706 = vld [vmem:[#allocation2 + $0xd90] sm:$0xff]
      %v3707 = vld [vmem:[#allocation2 + $0xd98] sm:$0xff]
      %v3708 = vld [vmem:[#allocation2 + $0xda0] sm:$0xff]
      %v3709 = vld [vmem:[#allocation2 + $0xda8] sm:$0xff]
      %v3710 = vld [vmem:[#allocation2 + $0xdb0] sm:$0xff]
      %v3711 = vld [vmem:[#allocation2 + $0xdb8] sm:$0xff]
      %v3712 = vld [vmem:[#allocation2 + $0xdc0] sm:$0xff]
      %v3713 = vld [vmem:[#allocation2 + $0xdc8] sm:$0xff]
      %v3714 = vld [vmem:[#allocation2 + $0xdd0] sm:$0xff]
      %v3715 = vld [vmem:[#allocation2 + $0xdd8] sm:$0xff]
      %v3716 = vld [vmem:[#allocation2 + $0xde0] sm:$0xff]
      %v3717 = vld [vmem:[#allocation2 + $0xde8] sm:$0xff]
      %v3718 = vld [vmem:[#allocation2 + $0xdf0] sm:$0xff]
      %v3719 = vld [vmem:[#allocation2 + $0xdf8] sm:$0xff]
      %v3720 = vld [vmem:[%s2] sm:$0xf]
      %v3721 = vld [vmem:[%s2 + $0x4] sm:$0xf]
      %v3722 = vld [vmem:[%s2 + $0x8] sm:$0xf]
      %v3723 = vld [vmem:[%s2 + $0xc] sm:$0xf]
      %v3724 = vld [vmem:[%s2 + $0x10] sm:$0xf]
      %v3725 = vld [vmem:[%s2 + $0x14] sm:$0xf]
      %v3726 = vld [vmem:[%s2 + $0x18] sm:$0xf]
      %v3727 = vld [vmem:[%s2 + $0x1c] sm:$0xf]
      %v3728 = vld [vmem:[%s2 + $0x20] sm:$0xf]
      %v3729 = vld [vmem:[%s2 + $0x24] sm:$0xf]
      %v3730 = vld [vmem:[%s2 + $0x28] sm:$0xf]
      %v3731 = vld [vmem:[%s2 + $0x2c] sm:$0xf]
      %v3732 = vld [vmem:[%s2 + $0x30] sm:$0xf]
      %v3733 = vld [vmem:[%s2 + $0x34] sm:$0xf]
      %v3734 = vld [vmem:[%s2 + $0x38] sm:$0xf]
      %v3735 = vld [vmem:[%s2 + $0x3c] sm:$0xf]
      %v3736 = vld [vmem:[%s2 + $0x40] sm:$0xf]
      %v3737 = vld [vmem:[%s2 + $0x44] sm:$0xf]
      %v3738 = vld [vmem:[%s2 + $0x48] sm:$0xf]
      %v3739 = vld [vmem:[%s2 + $0x4c] sm:$0xf]
      %v3740 = vld [vmem:[%s2 + $0x50] sm:$0xf]
      %v3741 = vld [vmem:[%s2 + $0x54] sm:$0xf]
      %v3742 = vld [vmem:[%s2 + $0x58] sm:$0xf]
      %v3743 = vld [vmem:[%s2 + $0x5c] sm:$0xf]
      %v3744 = vld [vmem:[%s2 + $0x60] sm:$0xf]
      %v3745 = vld [vmem:[%s2 + $0x64] sm:$0xf]
      %v3746 = vld [vmem:[%s2 + $0x68] sm:$0xf]
      %v3747 = vld [vmem:[%s2 + $0x6c] sm:$0xf]
      %v3748 = vld [vmem:[%s2 + $0x70] sm:$0xf]
      %v3749 = vld [vmem:[%s2 + $0x74] sm:$0xf]
      %v3750 = vld [vmem:[%s2 + $0x78] sm:$0xf]
      %v3751 = vld [vmem:[%s2 + $0x7c] sm:$0xf]
      %v3752 = vld [vmem:[%s2 + $0x80] sm:$0xf]
      %v3753 = vld [vmem:[%s2 + $0x84] sm:$0xf]
      %v3754 = vld [vmem:[%s2 + $0x88] sm:$0xf]
      %v3755 = vld [vmem:[%s2 + $0x8c] sm:$0xf]
      %v3756 = vld [vmem:[%s2 + $0x90] sm:$0xf]
      %v3757 = vld [vmem:[%s2 + $0x94] sm:$0xf]
      %v3758 = vld [vmem:[%s2 + $0x98] sm:$0xf]
      %v3759 = vld [vmem:[%s2 + $0x9c] sm:$0xf]
      %v3760 = vld [vmem:[%s2 + $0xa0] sm:$0xf]
      %v3761 = vld [vmem:[%s2 + $0xa4] sm:$0xf]
      %v3762 = vld [vmem:[%s2 + $0xa8] sm:$0xf]
      %v3763 = vld [vmem:[%s2 + $0xac] sm:$0xf]
      %v3764 = vld [vmem:[%s2 + $0xb0] sm:$0xf]
      %v3765 = vld [vmem:[%s2 + $0xb4] sm:$0xf]
      %v3766 = vld [vmem:[%s2 + $0xb8] sm:$0xf]
      %v3767 = vld [vmem:[%s2 + $0xbc] sm:$0xf]
      %v3768 = vld [vmem:[%s2 + $0xc0] sm:$0xf]
      %v3769 = vld [vmem:[%s2 + $0xc4] sm:$0xf]
      %v3770 = vld [vmem:[%s2 + $0xc8] sm:$0xf]
      %v3771 = vld [vmem:[%s2 + $0xcc] sm:$0xf]
      %v3772 = vld [vmem:[%s2 + $0xd0] sm:$0xf]
      %v3773 = vld [vmem:[%s2 + $0xd4] sm:$0xf]
      %v3774 = vld [vmem:[%s2 + $0xd8] sm:$0xf]
      %v3775 = vld [vmem:[%s2 + $0xdc] sm:$0xf]
      %v3776 = vld [vmem:[%s2 + $0xe0] sm:$0xf]
      %v3777 = vld [vmem:[%s2 + $0xe4] sm:$0xf]
      %v3778 = vld [vmem:[%s2 + $0xe8] sm:$0xf]
      %v3779 = vld [vmem:[%s2 + $0xec] sm:$0xf]
      %v3780 = vld [vmem:[%s2 + $0xf0] sm:$0xf]
      %v3781 = vld [vmem:[%s2 + $0xf4] sm:$0xf]
      %v3782 = vld [vmem:[%s2 + $0xf8] sm:$0xf]
      %v3783 = vld [vmem:[%s2 + $0xfc] sm:$0xf]
      %v3784 = vld [vmem:[%s2 + $0x100] sm:$0xf]
      %v3785 = vld [vmem:[%s2 + $0x104] sm:$0xf]
      %v3786 = vld [vmem:[%s2 + $0x108] sm:$0xf]
      %v3787 = vld [vmem:[%s2 + $0x10c] sm:$0xf]
      %v3788 = vld [vmem:[%s2 + $0x110] sm:$0xf]
      %v3789 = vld [vmem:[%s2 + $0x114] sm:$0xf]
      %v3790 = vld [vmem:[%s2 + $0x118] sm:$0xf]
      %v3791 = vld [vmem:[%s2 + $0x11c] sm:$0xf]
      %v3792 = vld [vmem:[%s2 + $0x120] sm:$0xf]
      %v3793 = vld [vmem:[%s2 + $0x124] sm:$0xf]
      %v3794 = vld [vmem:[%s2 + $0x128] sm:$0xf]
      %v3795 = vld [vmem:[%s2 + $0x12c] sm:$0xf]
      %v3796 = vld [vmem:[%s2 + $0x130] sm:$0xf]
      %v3797 = vld [vmem:[%s2 + $0x134] sm:$0xf]
      %v3798 = vld [vmem:[%s2 + $0x138] sm:$0xf]
      %v3799 = vld [vmem:[%s2 + $0x13c] sm:$0xf]
      %v3800 = vld [vmem:[%s2 + $0x140] sm:$0xf]
      %v3801 = vld [vmem:[%s2 + $0x144] sm:$0xf]
      %v3802 = vld [vmem:[%s2 + $0x148] sm:$0xf]
      %v3803 = vld [vmem:[%s2 + $0x14c] sm:$0xf]
      %v3804 = vld [vmem:[%s2 + $0x150] sm:$0xf]
      %v3805 = vld [vmem:[%s2 + $0x154] sm:$0xf]
      %v3806 = vld [vmem:[%s2 + $0x158] sm:$0xf]
      %v3807 = vld [vmem:[%s2 + $0x15c] sm:$0xf]
      %v3808 = vld [vmem:[%s2 + $0x160] sm:$0xf]
      %v3809 = vld [vmem:[%s2 + $0x164] sm:$0xf]
      %v3810 = vld [vmem:[%s2 + $0x168] sm:$0xf]
      %v3811 = vld [vmem:[%s2 + $0x16c] sm:$0xf]
      %v3812 = vld [vmem:[%s2 + $0x170] sm:$0xf]
      %v3813 = vld [vmem:[%s2 + $0x174] sm:$0xf]
      %v3814 = vld [vmem:[%s2 + $0x178] sm:$0xf]
      %v3815 = vld [vmem:[%s2 + $0x17c] sm:$0xf]
      %v3816 = vld [vmem:[%s2 + $0x180] sm:$0xf]
      %v3817 = vld [vmem:[%s2 + $0x184] sm:$0xf]
      %v3818 = vld [vmem:[%s2 + $0x188] sm:$0xf]
      %v3819 = vld [vmem:[%s2 + $0x18c] sm:$0xf]
      %v3820 = vld [vmem:[%s2 + $0x190] sm:$0xf]
      %v3821 = vld [vmem:[%s2 + $0x194] sm:$0xf]
      %v3822 = vld [vmem:[%s2 + $0x198] sm:$0xf]
      %v3823 = vld [vmem:[%s2 + $0x19c] sm:$0xf]
      %v3824 = vld [vmem:[%s2 + $0x1a0] sm:$0xf]
      %v3825 = vld [vmem:[%s2 + $0x1a4] sm:$0xf]
      %v3826 = vld [vmem:[%s2 + $0x1a8] sm:$0xf]
      %v3827 = vld [vmem:[%s2 + $0x1ac] sm:$0xf]
      %v3828 = vld [vmem:[%s2 + $0x1b0] sm:$0xf]
      %v3829 = vld [vmem:[%s2 + $0x1b4] sm:$0xf]
      %v3830 = vld [vmem:[%s2 + $0x1b8] sm:$0xf]
      %v3831 = vld [vmem:[%s2 + $0x1bc] sm:$0xf]
      %v3832 = vld [vmem:[%s2 + $0x1c0] sm:$0xf]
      %v3833 = vld [vmem:[%s2 + $0x1c4] sm:$0xf]
      %v3834 = vld [vmem:[%s2 + $0x1c8] sm:$0xf]
      %v3835 = vld [vmem:[%s2 + $0x1cc] sm:$0xf]
      %v3836 = vld [vmem:[%s2 + $0x1d0] sm:$0xf]
      %v3837 = vld [vmem:[%s2 + $0x1d4] sm:$0xf]
      %v3838 = vld [vmem:[%s2 + $0x1d8] sm:$0xf]
      %v3839 = vld [vmem:[%s2 + $0x1dc] sm:$0xf]
      %v3840 = vld [vmem:[%s2 + $0x1e0] sm:$0xf]
      %v3841 = vld [vmem:[%s2 + $0x1e4] sm:$0xf]
      %v3842 = vld [vmem:[%s2 + $0x1e8] sm:$0xf]
      %v3843 = vld [vmem:[%s2 + $0x1ec] sm:$0xf]
      %v3844 = vld [vmem:[%s2 + $0x1f0] sm:$0xf]
      %v3845 = vld [vmem:[%s2 + $0x1f4] sm:$0xf]
      %v3846 = vld [vmem:[%s2 + $0x1f8] sm:$0xf]
      %v3847 = vld [vmem:[%s2 + $0x1fc] sm:$0xf]
      %v3848 = vld [vmem:[%s2 + $0x200] sm:$0xf]
      %v3849 = vld [vmem:[%s2 + $0x204] sm:$0xf]
      %v3850 = vld [vmem:[%s2 + $0x208] sm:$0xf]
      %v3851 = vld [vmem:[%s2 + $0x20c] sm:$0xf]
      %v3852 = vld [vmem:[%s2 + $0x210] sm:$0xf]
      %v3853 = vld [vmem:[%s2 + $0x214] sm:$0xf]
      %v3854 = vld [vmem:[%s2 + $0x218] sm:$0xf]
      %v3855 = vld [vmem:[%s2 + $0x21c] sm:$0xf]
      %v3856 = vld [vmem:[%s2 + $0x220] sm:$0xf]
      %v3857 = vld [vmem:[%s2 + $0x224] sm:$0xf]
      %v3858 = vld [vmem:[%s2 + $0x228] sm:$0xf]
      %v3859 = vld [vmem:[%s2 + $0x22c] sm:$0xf]
      %v3860 = vld [vmem:[%s2 + $0x230] sm:$0xf]
      %v3861 = vld [vmem:[%s2 + $0x234] sm:$0xf]
      %v3862 = vld [vmem:[%s2 + $0x238] sm:$0xf]
      %v3863 = vld [vmem:[%s2 + $0x23c] sm:$0xf]
      %v3864 = vld [vmem:[%s2 + $0x240] sm:$0xf]
      %v3865 = vld [vmem:[%s2 + $0x244] sm:$0xf]
      %v3866 = vld [vmem:[%s2 + $0x248] sm:$0xf]
      %v3867 = vld [vmem:[%s2 + $0x24c] sm:$0xf]
      %v3868 = vld [vmem:[%s2 + $0x250] sm:$0xf]
      %v3869 = vld [vmem:[%s2 + $0x254] sm:$0xf]
      %v3870 = vld [vmem:[%s2 + $0x258] sm:$0xf]
      %v3871 = vld [vmem:[%s2 + $0x25c] sm:$0xf]
      %v3872 = vld [vmem:[%s2 + $0x260] sm:$0xf]
      %v3873 = vld [vmem:[%s2 + $0x264] sm:$0xf]
      %v3874 = vld [vmem:[%s2 + $0x268] sm:$0xf]
      %v3875 = vld [vmem:[%s2 + $0x26c] sm:$0xf]
      %v3876 = vld [vmem:[%s2 + $0x270] sm:$0xf]
      %v3877 = vld [vmem:[%s2 + $0x274] sm:$0xf]
      %v3878 = vld [vmem:[%s2 + $0x278] sm:$0xf]
      %v3879 = vld [vmem:[%s2 + $0x27c] sm:$0xf]
      %v3880 = vld [vmem:[%s2 + $0x280] sm:$0xf]
      %v3881 = vld [vmem:[%s2 + $0x284] sm:$0xf]
      %v3882 = vld [vmem:[%s2 + $0x288] sm:$0xf]
      %v3883 = vld [vmem:[%s2 + $0x28c] sm:$0xf]
      %v3884 = vld [vmem:[%s2 + $0x290] sm:$0xf]
      %v3885 = vld [vmem:[%s2 + $0x294] sm:$0xf]
      %v3886 = vld [vmem:[%s2 + $0x298] sm:$0xf]
      %v3887 = vld [vmem:[%s2 + $0x29c] sm:$0xf]
      %v3888 = vld [vmem:[%s2 + $0x2a0] sm:$0xf]
      %v3889 = vld [vmem:[%s2 + $0x2a4] sm:$0xf]
      %v3890 = vld [vmem:[%s2 + $0x2a8] sm:$0xf]
      %v3891 = vld [vmem:[%s2 + $0x2ac] sm:$0xf]
      %v3892 = vld [vmem:[%s2 + $0x2b0] sm:$0xf]
      %v3893 = vld [vmem:[%s2 + $0x2b4] sm:$0xf]
      %v3894 = vld [vmem:[%s2 + $0x2b8] sm:$0xf]
      %v3895 = vld [vmem:[%s2 + $0x2bc] sm:$0xf]
      %v3896 = vld [vmem:[%s2 + $0x2c0] sm:$0xf]
      %v3897 = vld [vmem:[%s2 + $0x2c4] sm:$0xf]
      %v3898 = vld [vmem:[%s2 + $0x2c8] sm:$0xf]
      %v3899 = vld [vmem:[%s2 + $0x2cc] sm:$0xf]
      %v3900 = vld [vmem:[%s2 + $0x2d0] sm:$0xf]
      %v3901 = vld [vmem:[%s2 + $0x2d4] sm:$0xf]
      %v3902 = vld [vmem:[%s2 + $0x2d8] sm:$0xf]
      %v3903 = vld [vmem:[%s2 + $0x2dc] sm:$0xf]
      %v3904 = vld [vmem:[%s2 + $0x2e0] sm:$0xf]
      %v3905 = vld [vmem:[%s2 + $0x2e4] sm:$0xf]
      %v3906 = vld [vmem:[%s2 + $0x2e8] sm:$0xf]
      %v3907 = vld [vmem:[%s2 + $0x2ec] sm:$0xf]
      %v3908 = vld [vmem:[%s2 + $0x2f0] sm:$0xf]
      %v3909 = vld [vmem:[%s2 + $0x2f4] sm:$0xf]
      %v3910 = vld [vmem:[%s2 + $0x2f8] sm:$0xf]
      %v3911 = vld [vmem:[%s2 + $0x2fc] sm:$0xf]
      %v3912 = vld [vmem:[%s2 + $0x300] sm:$0xf]
      %v3913 = vld [vmem:[%s2 + $0x304] sm:$0xf]
      %v3914 = vld [vmem:[%s2 + $0x308] sm:$0xf]
      %v3915 = vld [vmem:[%s2 + $0x30c] sm:$0xf]
      %v3916 = vld [vmem:[%s2 + $0x310] sm:$0xf]
      %v3917 = vld [vmem:[%s2 + $0x314] sm:$0xf]
      %v3918 = vld [vmem:[%s2 + $0x318] sm:$0xf]
      %v3919 = vld [vmem:[%s2 + $0x31c] sm:$0xf]
      %v3920 = vld [vmem:[%s2 + $0x320] sm:$0xf]
      %v3921 = vld [vmem:[%s2 + $0x324] sm:$0xf]
      %v3922 = vld [vmem:[%s2 + $0x328] sm:$0xf]
      %v3923 = vld [vmem:[%s2 + $0x32c] sm:$0xf]
      %v3924 = vld [vmem:[%s2 + $0x330] sm:$0xf]
      %v3925 = vld [vmem:[%s2 + $0x334] sm:$0xf]
      %v3926 = vld [vmem:[%s2 + $0x338] sm:$0xf]
      %v3927 = vld [vmem:[%s2 + $0x33c] sm:$0xf]
      %v3928 = vld [vmem:[%s2 + $0x340] sm:$0xf]
      %v3929 = vld [vmem:[%s2 + $0x344] sm:$0xf]
      %v3930 = vld [vmem:[%s2 + $0x348] sm:$0xf]
      %v3931 = vld [vmem:[%s2 + $0x34c] sm:$0xf]
      %v3932 = vld [vmem:[%s2 + $0x350] sm:$0xf]
      %v3933 = vld [vmem:[%s2 + $0x354] sm:$0xf]
      %v3934 = vld [vmem:[%s2 + $0x358] sm:$0xf]
      %v3935 = vld [vmem:[%s2 + $0x35c] sm:$0xf]
      %v3936 = vld [vmem:[%s2 + $0x360] sm:$0xf]
      %v3937 = vld [vmem:[%s2 + $0x364] sm:$0xf]
      %v3938 = vld [vmem:[%s2 + $0x368] sm:$0xf]
      %v3939 = vld [vmem:[%s2 + $0x36c] sm:$0xf]
      %v3940 = vld [vmem:[%s2 + $0x370] sm:$0xf]
      %v3941 = vld [vmem:[%s2 + $0x374] sm:$0xf]
      %v3942 = vld [vmem:[%s2 + $0x378] sm:$0xf]
      %v3943 = vld [vmem:[%s2 + $0x37c] sm:$0xf]
      %v3944 = vld [vmem:[%s3] sm:$0x1]
      %v3946 = vlaneseq
      %v3947 = vshrl.u32 %v3946, 7
      %v3948 = vsub.s32 0, %v3947
      %v3949 = vrot.slane %v3944, %v3948
      %v4399 = vunpack.c.l.b16 %v3272
      %v4400 = vunpack.c.h.b16 %v3272
      %v4401 = vunpack.c.l.b16 %v3273
      %v4402 = vunpack.c.h.b16 %v3273
      %v4403 = vunpack.c.l.b16 %v3274
      %v4404 = vunpack.c.h.b16 %v3274
      %v4405 = vunpack.c.l.b16 %v3275
      %v4406 = vunpack.c.h.b16 %v3275
      %v4407 = vunpack.c.l.b16 %v3276
      %v4408 = vunpack.c.h.b16 %v3276
      %v4409 = vunpack.c.l.b16 %v3277
      %v4410 = vunpack.c.h.b16 %v3277
      %v4411 = vunpack.c.l.b16 %v3278
      %v4412 = vunpack.c.h.b16 %v3278
      %v4413 = vunpack.c.l.b16 %v3279
      %v4414 = vunpack.c.h.b16 %v3279
      %v4415 = vunpack.c.l.b16 %v3280
      %v4416 = vunpack.c.h.b16 %v3280
      %v4417 = vunpack.c.l.b16 %v3281
      %v4418 = vunpack.c.h.b16 %v3281
      %v4419 = vunpack.c.l.b16 %v3282
      %v4420 = vunpack.c.h.b16 %v3282
      %v4421 = vunpack.c.l.b16 %v3283
      %v4422 = vunpack.c.h.b16 %v3283
      %v4423 = vunpack.c.l.b16 %v3284
      %v4424 = vunpack.c.h.b16 %v3284
      %v4425 = vunpack.c.l.b16 %v3285
      %v4426 = vunpack.c.h.b16 %v3285
      %v4427 = vunpack.c.l.b16 %v3286
      %v4428 = vunpack.c.h.b16 %v3286
      %v4429 = vunpack.c.l.b16 %v3287
      %v4430 = vunpack.c.h.b16 %v3287
      %v4431 = vunpack.c.l.b16 %v3288
      %v4432 = vunpack.c.h.b16 %v3288
      %v4433 = vunpack.c.l.b16 %v3289
      %v4434 = vunpack.c.h.b16 %v3289
      %v4435 = vunpack.c.l.b16 %v3290
      %v4436 = vunpack.c.h.b16 %v3290
      %v4437 = vunpack.c.l.b16 %v3291
      %v4438 = vunpack.c.h.b16 %v3291
      %v4439 = vunpack.c.l.b16 %v3292
      %v4440 = vunpack.c.h.b16 %v3292
      %v4441 = vunpack.c.l.b16 %v3293
      %v4442 = vunpack.c.h.b16 %v3293
      %v4443 = vunpack.c.l.b16 %v3294
      %v4444 = vunpack.c.h.b16 %v3294
      %v4445 = vunpack.c.l.b16 %v3295
      %v4446 = vunpack.c.h.b16 %v3295
      %v4447 = vunpack.c.l.b16 %v3296
      %v4448 = vunpack.c.h.b16 %v3296
      %v4449 = vunpack.c.l.b16 %v3297
      %v4450 = vunpack.c.h.b16 %v3297
      %v4451 = vunpack.c.l.b16 %v3298
      %v4452 = vunpack.c.h.b16 %v3298
      %v4453 = vunpack.c.l.b16 %v3299
      %v4454 = vunpack.c.h.b16 %v3299
      %v4455 = vunpack.c.l.b16 %v3300
      %v4456 = vunpack.c.h.b16 %v3300
      %v4457 = vunpack.c.l.b16 %v3301
      %v4458 = vunpack.c.h.b16 %v3301
      %v4459 = vunpack.c.l.b16 %v3302
      %v4460 = vunpack.c.h.b16 %v3302
      %v4461 = vunpack.c.l.b16 %v3303
      %v4462 = vunpack.c.h.b16 %v3303
      %v4463 = vunpack.c.l.b16 %v3304
      %v4464 = vunpack.c.h.b16 %v3304
      %v4465 = vunpack.c.l.b16 %v3305
      %v4466 = vunpack.c.h.b16 %v3305
      %v4467 = vunpack.c.l.b16 %v3306
      %v4468 = vunpack.c.h.b16 %v3306
      %v4469 = vunpack.c.l.b16 %v3307
      %v4470 = vunpack.c.h.b16 %v3307
      %v4471 = vunpack.c.l.b16 %v3308
      %v4472 = vunpack.c.h.b16 %v3308
      %v4473 = vunpack.c.l.b16 %v3309
      %v4474 = vunpack.c.h.b16 %v3309
      %v4475 = vunpack.c.l.b16 %v3310
      %v4476 = vunpack.c.h.b16 %v3310
      %v4477 = vunpack.c.l.b16 %v3311
      %v4478 = vunpack.c.h.b16 %v3311
      %v4479 = vunpack.c.l.b16 %v3312
      %v4480 = vunpack.c.h.b16 %v3312
      %v4481 = vunpack.c.l.b16 %v3313
      %v4482 = vunpack.c.h.b16 %v3313
      %v4483 = vunpack.c.l.b16 %v3314
      %v4484 = vunpack.c.h.b16 %v3314
      %v4485 = vunpack.c.l.b16 %v3315
      %v4486 = vunpack.c.h.b16 %v3315
      %v4487 = vunpack.c.l.b16 %v3316
      %v4488 = vunpack.c.h.b16 %v3316
      %v4489 = vunpack.c.l.b16 %v3317
      %v4490 = vunpack.c.h.b16 %v3317
      %v4491 = vunpack.c.l.b16 %v3318
      %v4492 = vunpack.c.h.b16 %v3318
      %v4493 = vunpack.c.l.b16 %v3319
      %v4494 = vunpack.c.h.b16 %v3319
      %v4495 = vunpack.c.l.b16 %v3320
      %v4496 = vunpack.c.h.b16 %v3320
      %v4497 = vunpack.c.l.b16 %v3321
      %v4498 = vunpack.c.h.b16 %v3321
      %v4499 = vunpack.c.l.b16 %v3322
      %v4500 = vunpack.c.h.b16 %v3322
      %v4501 = vunpack.c.l.b16 %v3323
      %v4502 = vunpack.c.h.b16 %v3323
      %v4503 = vunpack.c.l.b16 %v3324
      %v4504 = vunpack.c.h.b16 %v3324
      %v4505 = vunpack.c.l.b16 %v3325
      %v4506 = vunpack.c.h.b16 %v3325
      %v4507 = vunpack.c.l.b16 %v3326
      %v4508 = vunpack.c.h.b16 %v3326
      %v4509 = vunpack.c.l.b16 %v3327
      %v4510 = vunpack.c.h.b16 %v3327
      %v4511 = vunpack.c.l.b16 %v3328
      %v4512 = vunpack.c.h.b16 %v3328
      %v4513 = vunpack.c.l.b16 %v3329
      %v4514 = vunpack.c.h.b16 %v3329
      %v4515 = vunpack.c.l.b16 %v3330
      %v4516 = vunpack.c.h.b16 %v3330
      %v4517 = vunpack.c.l.b16 %v3331
      %v4518 = vunpack.c.h.b16 %v3331
      %v4519 = vunpack.c.l.b16 %v3332
      %v4520 = vunpack.c.h.b16 %v3332
      %v4521 = vunpack.c.l.b16 %v3333
      %v4522 = vunpack.c.h.b16 %v3333
      %v4523 = vunpack.c.l.b16 %v3334
      %v4524 = vunpack.c.h.b16 %v3334
      %v4525 = vunpack.c.l.b16 %v3335
      %v4526 = vunpack.c.h.b16 %v3335
      %v4527 = vunpack.c.l.b16 %v3336
      %v4528 = vunpack.c.h.b16 %v3336
      %v4529 = vunpack.c.l.b16 %v3337
      %v4530 = vunpack.c.h.b16 %v3337
      %v4531 = vunpack.c.l.b16 %v3338
      %v4532 = vunpack.c.h.b16 %v3338
      %v4533 = vunpack.c.l.b16 %v3339
      %v4534 = vunpack.c.h.b16 %v3339
      %v4535 = vunpack.c.l.b16 %v3340
      %v4536 = vunpack.c.h.b16 %v3340
      %v4537 = vunpack.c.l.b16 %v3341
      %v4538 = vunpack.c.h.b16 %v3341
      %v4539 = vunpack.c.l.b16 %v3342
      %v4540 = vunpack.c.h.b16 %v3342
      %v4541 = vunpack.c.l.b16 %v3343
      %v4542 = vunpack.c.h.b16 %v3343
      %v4543 = vunpack.c.l.b16 %v3344
      %v4544 = vunpack.c.h.b16 %v3344
      %v4545 = vunpack.c.l.b16 %v3345
      %v4546 = vunpack.c.h.b16 %v3345
      %v4547 = vunpack.c.l.b16 %v3346
      %v4548 = vunpack.c.h.b16 %v3346
      %v4549 = vunpack.c.l.b16 %v3347
      %v4550 = vunpack.c.h.b16 %v3347
      %v4551 = vunpack.c.l.b16 %v3348
      %v4552 = vunpack.c.h.b16 %v3348
      %v4553 = vunpack.c.l.b16 %v3349
      %v4554 = vunpack.c.h.b16 %v3349
      %v4555 = vunpack.c.l.b16 %v3350
      %v4556 = vunpack.c.h.b16 %v3350
      %v4557 = vunpack.c.l.b16 %v3351
      %v4558 = vunpack.c.h.b16 %v3351
      %v4559 = vunpack.c.l.b16 %v3352
      %v4560 = vunpack.c.h.b16 %v3352
      %v4561 = vunpack.c.l.b16 %v3353
      %v4562 = vunpack.c.h.b16 %v3353
      %v4563 = vunpack.c.l.b16 %v3354
      %v4564 = vunpack.c.h.b16 %v3354
      %v4565 = vunpack.c.l.b16 %v3355
      %v4566 = vunpack.c.h.b16 %v3355
      %v4567 = vunpack.c.l.b16 %v3356
      %v4568 = vunpack.c.h.b16 %v3356
      %v4569 = vunpack.c.l.b16 %v3357
      %v4570 = vunpack.c.h.b16 %v3357
      %v4571 = vunpack.c.l.b16 %v3358
      %v4572 = vunpack.c.h.b16 %v3358
      %v4573 = vunpack.c.l.b16 %v3359
      %v4574 = vunpack.c.h.b16 %v3359
      %v4575 = vunpack.c.l.b16 %v3360
      %v4576 = vunpack.c.h.b16 %v3360
      %v4577 = vunpack.c.l.b16 %v3361
      %v4578 = vunpack.c.h.b16 %v3361
      %v4579 = vunpack.c.l.b16 %v3362
      %v4580 = vunpack.c.h.b16 %v3362
      %v4581 = vunpack.c.l.b16 %v3363
      %v4582 = vunpack.c.h.b16 %v3363
      %v4583 = vunpack.c.l.b16 %v3364
      %v4584 = vunpack.c.h.b16 %v3364
      %v4585 = vunpack.c.l.b16 %v3365
      %v4586 = vunpack.c.h.b16 %v3365
      %v4587 = vunpack.c.l.b16 %v3366
      %v4588 = vunpack.c.h.b16 %v3366
      %v4589 = vunpack.c.l.b16 %v3367
      %v4590 = vunpack.c.h.b16 %v3367
      %v4591 = vunpack.c.l.b16 %v3368
      %v4592 = vunpack.c.h.b16 %v3368
      %v4593 = vunpack.c.l.b16 %v3369
      %v4594 = vunpack.c.h.b16 %v3369
      %v4595 = vunpack.c.l.b16 %v3370
      %v4596 = vunpack.c.h.b16 %v3370
      %v4597 = vunpack.c.l.b16 %v3371
      %v4598 = vunpack.c.h.b16 %v3371
      %v4599 = vunpack.c.l.b16 %v3372
      %v4600 = vunpack.c.h.b16 %v3372
      %v4601 = vunpack.c.l.b16 %v3373
      %v4602 = vunpack.c.h.b16 %v3373
      %v4603 = vunpack.c.l.b16 %v3374
      %v4604 = vunpack.c.h.b16 %v3374
      %v4605 = vunpack.c.l.b16 %v3375
      %v4606 = vunpack.c.h.b16 %v3375
      %v4607 = vunpack.c.l.b16 %v3376
      %v4608 = vunpack.c.h.b16 %v3376
      %v4609 = vunpack.c.l.b16 %v3377
      %v4610 = vunpack.c.h.b16 %v3377
      %v4611 = vunpack.c.l.b16 %v3378
      %v4612 = vunpack.c.h.b16 %v3378
      %v4613 = vunpack.c.l.b16 %v3379
      %v4614 = vunpack.c.h.b16 %v3379
      %v4615 = vunpack.c.l.b16 %v3380
      %v4616 = vunpack.c.h.b16 %v3380
      %v4617 = vunpack.c.l.b16 %v3381
      %v4618 = vunpack.c.h.b16 %v3381
      %v4619 = vunpack.c.l.b16 %v3382
      %v4620 = vunpack.c.h.b16 %v3382
      %v4621 = vunpack.c.l.b16 %v3383
      %v4622 = vunpack.c.h.b16 %v3383
      %v4623 = vunpack.c.l.b16 %v3384
      %v4624 = vunpack.c.h.b16 %v3384
      %v4625 = vunpack.c.l.b16 %v3385
      %v4626 = vunpack.c.h.b16 %v3385
      %v4627 = vunpack.c.l.b16 %v3386
      %v4628 = vunpack.c.h.b16 %v3386
      %v4629 = vunpack.c.l.b16 %v3387
      %v4630 = vunpack.c.h.b16 %v3387
      %v4631 = vunpack.c.l.b16 %v3388
      %v4632 = vunpack.c.h.b16 %v3388
      %v4633 = vunpack.c.l.b16 %v3389
      %v4634 = vunpack.c.h.b16 %v3389
      %v4635 = vunpack.c.l.b16 %v3390
      %v4636 = vunpack.c.h.b16 %v3390
      %v4637 = vunpack.c.l.b16 %v3391
      %v4638 = vunpack.c.h.b16 %v3391
      %v4639 = vunpack.c.l.b16 %v3392
      %v4640 = vunpack.c.h.b16 %v3392
      %v4641 = vunpack.c.l.b16 %v3393
      %v4642 = vunpack.c.h.b16 %v3393
      %v4643 = vunpack.c.l.b16 %v3394
      %v4644 = vunpack.c.h.b16 %v3394
      %v4645 = vunpack.c.l.b16 %v3395
      %v4646 = vunpack.c.h.b16 %v3395
      %v4647 = vunpack.c.l.b16 %v3396
      %v4648 = vunpack.c.h.b16 %v3396
      %v4649 = vunpack.c.l.b16 %v3397
      %v4650 = vunpack.c.h.b16 %v3397
      %v4651 = vunpack.c.l.b16 %v3398
      %v4652 = vunpack.c.h.b16 %v3398
      %v4653 = vunpack.c.l.b16 %v3399
      %v4654 = vunpack.c.h.b16 %v3399
      %v4655 = vunpack.c.l.b16 %v3400
      %v4656 = vunpack.c.h.b16 %v3400
      %v4657 = vunpack.c.l.b16 %v3401
      %v4658 = vunpack.c.h.b16 %v3401
      %v4659 = vunpack.c.l.b16 %v3402
      %v4660 = vunpack.c.h.b16 %v3402
      %v4661 = vunpack.c.l.b16 %v3403
      %v4662 = vunpack.c.h.b16 %v3403
      %v4663 = vunpack.c.l.b16 %v3404
      %v4664 = vunpack.c.h.b16 %v3404
      %v4665 = vunpack.c.l.b16 %v3405
      %v4666 = vunpack.c.h.b16 %v3405
      %v4667 = vunpack.c.l.b16 %v3406
      %v4668 = vunpack.c.h.b16 %v3406
      %v4669 = vunpack.c.l.b16 %v3407
      %v4670 = vunpack.c.h.b16 %v3407
      %v4671 = vunpack.c.l.b16 %v3408
      %v4672 = vunpack.c.h.b16 %v3408
      %v4673 = vunpack.c.l.b16 %v3409
      %v4674 = vunpack.c.h.b16 %v3409
      %v4675 = vunpack.c.l.b16 %v3410
      %v4676 = vunpack.c.h.b16 %v3410
      %v4677 = vunpack.c.l.b16 %v3411
      %v4678 = vunpack.c.h.b16 %v3411
      %v4679 = vunpack.c.l.b16 %v3412
      %v4680 = vunpack.c.h.b16 %v3412
      %v4681 = vunpack.c.l.b16 %v3413
      %v4682 = vunpack.c.h.b16 %v3413
      %v4683 = vunpack.c.l.b16 %v3414
      %v4684 = vunpack.c.h.b16 %v3414
      %v4685 = vunpack.c.l.b16 %v3415
      %v4686 = vunpack.c.h.b16 %v3415
      %v4687 = vunpack.c.l.b16 %v3416
      %v4688 = vunpack.c.h.b16 %v3416
      %v4689 = vunpack.c.l.b16 %v3417
      %v4690 = vunpack.c.h.b16 %v3417
      %v4691 = vunpack.c.l.b16 %v3418
      %v4692 = vunpack.c.h.b16 %v3418
      %v4693 = vunpack.c.l.b16 %v3419
      %v4694 = vunpack.c.h.b16 %v3419
      %v4695 = vunpack.c.l.b16 %v3420
      %v4696 = vunpack.c.h.b16 %v3420
      %v4697 = vunpack.c.l.b16 %v3421
      %v4698 = vunpack.c.h.b16 %v3421
      %v4699 = vunpack.c.l.b16 %v3422
      %v4700 = vunpack.c.h.b16 %v3422
      %v4701 = vunpack.c.l.b16 %v3423
      %v4702 = vunpack.c.h.b16 %v3423
      %v4703 = vunpack.c.l.b16 %v3424
      %v4704 = vunpack.c.h.b16 %v3424
      %v4705 = vunpack.c.l.b16 %v3425
      %v4706 = vunpack.c.h.b16 %v3425
      %v4707 = vunpack.c.l.b16 %v3426
      %v4708 = vunpack.c.h.b16 %v3426
      %v4709 = vunpack.c.l.b16 %v3427
      %v4710 = vunpack.c.h.b16 %v3427
      %v4711 = vunpack.c.l.b16 %v3428
      %v4712 = vunpack.c.h.b16 %v3428
      %v4713 = vunpack.c.l.b16 %v3429
      %v4714 = vunpack.c.h.b16 %v3429
      %v4715 = vunpack.c.l.b16 %v3430
      %v4716 = vunpack.c.h.b16 %v3430
      %v4717 = vunpack.c.l.b16 %v3431
      %v4718 = vunpack.c.h.b16 %v3431
      %v4719 = vunpack.c.l.b16 %v3432
      %v4720 = vunpack.c.h.b16 %v3432
      %v4721 = vunpack.c.l.b16 %v3433
      %v4722 = vunpack.c.h.b16 %v3433
      %v4723 = vunpack.c.l.b16 %v3434
      %v4724 = vunpack.c.h.b16 %v3434
      %v4725 = vunpack.c.l.b16 %v3435
      %v4726 = vunpack.c.h.b16 %v3435
      %v4727 = vunpack.c.l.b16 %v3436
      %v4728 = vunpack.c.h.b16 %v3436
      %v4729 = vunpack.c.l.b16 %v3437
      %v4730 = vunpack.c.h.b16 %v3437
      %v4731 = vunpack.c.l.b16 %v3438
      %v4732 = vunpack.c.h.b16 %v3438
      %v4733 = vunpack.c.l.b16 %v3439
      %v4734 = vunpack.c.h.b16 %v3439
      %v4735 = vunpack.c.l.b16 %v3440
      %v4736 = vunpack.c.h.b16 %v3440
      %v4737 = vunpack.c.l.b16 %v3441
      %v4738 = vunpack.c.h.b16 %v3441
      %v4739 = vunpack.c.l.b16 %v3442
      %v4740 = vunpack.c.h.b16 %v3442
      %v4741 = vunpack.c.l.b16 %v3443
      %v4742 = vunpack.c.h.b16 %v3443
      %v4743 = vunpack.c.l.b16 %v3444
      %v4744 = vunpack.c.h.b16 %v3444
      %v4745 = vunpack.c.l.b16 %v3445
      %v4746 = vunpack.c.h.b16 %v3445
      %v4747 = vunpack.c.l.b16 %v3446
      %v4748 = vunpack.c.h.b16 %v3446
      %v4749 = vunpack.c.l.b16 %v3447
      %v4750 = vunpack.c.h.b16 %v3447
      %v4751 = vunpack.c.l.b16 %v3448
      %v4752 = vunpack.c.h.b16 %v3448
      %v4753 = vunpack.c.l.b16 %v3449
      %v4754 = vunpack.c.h.b16 %v3449
      %v4755 = vunpack.c.l.b16 %v3450
      %v4756 = vunpack.c.h.b16 %v3450
      %v4757 = vunpack.c.l.b16 %v3451
      %v4758 = vunpack.c.h.b16 %v3451
      %v4759 = vunpack.c.l.b16 %v3452
      %v4760 = vunpack.c.h.b16 %v3452
      %v4761 = vunpack.c.l.b16 %v3453
      %v4762 = vunpack.c.h.b16 %v3453
      %v4763 = vunpack.c.l.b16 %v3454
      %v4764 = vunpack.c.h.b16 %v3454
      %v4765 = vunpack.c.l.b16 %v3455
      %v4766 = vunpack.c.h.b16 %v3455
      %v4767 = vunpack.c.l.b16 %v3456
      %v4768 = vunpack.c.h.b16 %v3456
      %v4769 = vunpack.c.l.b16 %v3457
      %v4770 = vunpack.c.h.b16 %v3457
      %v4771 = vunpack.c.l.b16 %v3458
      %v4772 = vunpack.c.h.b16 %v3458
      %v4773 = vunpack.c.l.b16 %v3459
      %v4774 = vunpack.c.h.b16 %v3459
      %v4775 = vunpack.c.l.b16 %v3460
      %v4776 = vunpack.c.h.b16 %v3460
      %v4777 = vunpack.c.l.b16 %v3461
      %v4778 = vunpack.c.h.b16 %v3461
      %v4779 = vunpack.c.l.b16 %v3462
      %v4780 = vunpack.c.h.b16 %v3462
      %v4781 = vunpack.c.l.b16 %v3463
      %v4782 = vunpack.c.h.b16 %v3463
      %v4783 = vunpack.c.l.b16 %v3464
      %v4784 = vunpack.c.h.b16 %v3464
      %v4785 = vunpack.c.l.b16 %v3465
      %v4786 = vunpack.c.h.b16 %v3465
      %v4787 = vunpack.c.l.b16 %v3466
      %v4788 = vunpack.c.h.b16 %v3466
      %v4789 = vunpack.c.l.b16 %v3467
      %v4790 = vunpack.c.h.b16 %v3467
      %v4791 = vunpack.c.l.b16 %v3468
      %v4792 = vunpack.c.h.b16 %v3468
      %v4793 = vunpack.c.l.b16 %v3469
      %v4794 = vunpack.c.h.b16 %v3469
      %v4795 = vunpack.c.l.b16 %v3470
      %v4796 = vunpack.c.h.b16 %v3470
      %v4797 = vunpack.c.l.b16 %v3471
      %v4798 = vunpack.c.h.b16 %v3471
      %v4799 = vunpack.c.l.b16 %v3472
      %v4800 = vunpack.c.h.b16 %v3472
      %v4801 = vunpack.c.l.b16 %v3473
      %v4802 = vunpack.c.h.b16 %v3473
      %v4803 = vunpack.c.l.b16 %v3474
      %v4804 = vunpack.c.h.b16 %v3474
      %v4805 = vunpack.c.l.b16 %v3475
      %v4806 = vunpack.c.h.b16 %v3475
      %v4807 = vunpack.c.l.b16 %v3476
      %v4808 = vunpack.c.h.b16 %v3476
      %v4809 = vunpack.c.l.b16 %v3477
      %v4810 = vunpack.c.h.b16 %v3477
      %v4811 = vunpack.c.l.b16 %v3478
      %v4812 = vunpack.c.h.b16 %v3478
      %v4813 = vunpack.c.l.b16 %v3479
      %v4814 = vunpack.c.h.b16 %v3479
      %v4815 = vunpack.c.l.b16 %v3480
      %v4816 = vunpack.c.h.b16 %v3480
      %v4817 = vunpack.c.l.b16 %v3481
      %v4818 = vunpack.c.h.b16 %v3481
      %v4819 = vunpack.c.l.b16 %v3482
      %v4820 = vunpack.c.h.b16 %v3482
      %v4821 = vunpack.c.l.b16 %v3483
      %v4822 = vunpack.c.h.b16 %v3483
      %v4823 = vunpack.c.l.b16 %v3484
      %v4824 = vunpack.c.h.b16 %v3484
      %v4825 = vunpack.c.l.b16 %v3485
      %v4826 = vunpack.c.h.b16 %v3485
      %v4827 = vunpack.c.l.b16 %v3486
      %v4828 = vunpack.c.h.b16 %v3486
      %v4829 = vunpack.c.l.b16 %v3487
      %v4830 = vunpack.c.h.b16 %v3487
      %v4831 = vunpack.c.l.b16 %v3488
      %v4832 = vunpack.c.h.b16 %v3488
      %v4833 = vunpack.c.l.b16 %v3489
      %v4834 = vunpack.c.h.b16 %v3489
      %v4835 = vunpack.c.l.b16 %v3490
      %v4836 = vunpack.c.h.b16 %v3490
      %v4837 = vunpack.c.l.b16 %v3491
      %v4838 = vunpack.c.h.b16 %v3491
      %v4839 = vunpack.c.l.b16 %v3492
      %v4840 = vunpack.c.h.b16 %v3492
      %v4841 = vunpack.c.l.b16 %v3493
      %v4842 = vunpack.c.h.b16 %v3493
      %v4843 = vunpack.c.l.b16 %v3494
      %v4844 = vunpack.c.h.b16 %v3494
      %v4845 = vunpack.c.l.b16 %v3495
      %v4846 = vunpack.c.h.b16 %v3495
      %v4847 = vunpack.c.l.b16 %v3496
      %v4848 = vunpack.c.h.b16 %v3496
      %v4849 = vunpack.c.l.b16 %v3497
      %v4850 = vunpack.c.h.b16 %v3497
      %v4851 = vunpack.c.l.b16 %v3498
      %v4852 = vunpack.c.h.b16 %v3498
      %v4853 = vunpack.c.l.b16 %v3499
      %v4854 = vunpack.c.h.b16 %v3499
      %v4855 = vunpack.c.l.b16 %v3500
      %v4856 = vunpack.c.h.b16 %v3500
      %v4857 = vunpack.c.l.b16 %v3501
      %v4858 = vunpack.c.h.b16 %v3501
      %v4859 = vunpack.c.l.b16 %v3502
      %v4860 = vunpack.c.h.b16 %v3502
      %v4861 = vunpack.c.l.b16 %v3503
      %v4862 = vunpack.c.h.b16 %v3503
      %v4863 = vunpack.c.l.b16 %v3504
      %v4864 = vunpack.c.h.b16 %v3504
      %v4865 = vunpack.c.l.b16 %v3505
      %v4866 = vunpack.c.h.b16 %v3505
      %v4867 = vunpack.c.l.b16 %v3506
      %v4868 = vunpack.c.h.b16 %v3506
      %v4869 = vunpack.c.l.b16 %v3507
      %v4870 = vunpack.c.h.b16 %v3507
      %v4871 = vunpack.c.l.b16 %v3508
      %v4872 = vunpack.c.h.b16 %v3508
      %v4873 = vunpack.c.l.b16 %v3509
      %v4874 = vunpack.c.h.b16 %v3509
      %v4875 = vunpack.c.l.b16 %v3510
      %v4876 = vunpack.c.h.b16 %v3510
      %v4877 = vunpack.c.l.b16 %v3511
      %v4878 = vunpack.c.h.b16 %v3511
      %v4879 = vunpack.c.l.b16 %v3512
      %v4880 = vunpack.c.h.b16 %v3512
      %v4881 = vunpack.c.l.b16 %v3513
      %v4882 = vunpack.c.h.b16 %v3513
      %v4883 = vunpack.c.l.b16 %v3514
      %v4884 = vunpack.c.h.b16 %v3514
      %v4885 = vunpack.c.l.b16 %v3515
      %v4886 = vunpack.c.h.b16 %v3515
      %v4887 = vunpack.c.l.b16 %v3516
      %v4888 = vunpack.c.h.b16 %v3516
      %v4889 = vunpack.c.l.b16 %v3517
      %v4890 = vunpack.c.h.b16 %v3517
      %v4891 = vunpack.c.l.b16 %v3518
      %v4892 = vunpack.c.h.b16 %v3518
      %v4893 = vunpack.c.l.b16 %v3519
      %v4894 = vunpack.c.h.b16 %v3519
      %v4895 = vunpack.c.l.b16 %v3520
      %v4896 = vunpack.c.h.b16 %v3520
      %v4897 = vunpack.c.l.b16 %v3521
      %v4898 = vunpack.c.h.b16 %v3521
      %v4899 = vunpack.c.l.b16 %v3522
      %v4900 = vunpack.c.h.b16 %v3522
      %v4901 = vunpack.c.l.b16 %v3523
      %v4902 = vunpack.c.h.b16 %v3523
      %v4903 = vunpack.c.l.b16 %v3524
      %v4904 = vunpack.c.h.b16 %v3524
      %v4905 = vunpack.c.l.b16 %v3525
      %v4906 = vunpack.c.h.b16 %v3525
      %v4907 = vunpack.c.l.b16 %v3526
      %v4908 = vunpack.c.h.b16 %v3526
      %v4909 = vunpack.c.l.b16 %v3527
      %v4910 = vunpack.c.h.b16 %v3527
      %v4911 = vunpack.c.l.b16 %v3528
      %v4912 = vunpack.c.h.b16 %v3528
      %v4913 = vunpack.c.l.b16 %v3529
      %v4914 = vunpack.c.h.b16 %v3529
      %v4915 = vunpack.c.l.b16 %v3530
      %v4916 = vunpack.c.h.b16 %v3530
      %v4917 = vunpack.c.l.b16 %v3531
      %v4918 = vunpack.c.h.b16 %v3531
      %v4919 = vunpack.c.l.b16 %v3532
      %v4920 = vunpack.c.h.b16 %v3532
      %v4921 = vunpack.c.l.b16 %v3533
      %v4922 = vunpack.c.h.b16 %v3533
      %v4923 = vunpack.c.l.b16 %v3534
      %v4924 = vunpack.c.h.b16 %v3534
      %v4925 = vunpack.c.l.b16 %v3535
      %v4926 = vunpack.c.h.b16 %v3535
      %v4927 = vunpack.c.l.b16 %v3536
      %v4928 = vunpack.c.h.b16 %v3536
      %v4929 = vunpack.c.l.b16 %v3537
      %v4930 = vunpack.c.h.b16 %v3537
      %v4931 = vunpack.c.l.b16 %v3538
      %v4932 = vunpack.c.h.b16 %v3538
      %v4933 = vunpack.c.l.b16 %v3539
      %v4934 = vunpack.c.h.b16 %v3539
      %v4935 = vunpack.c.l.b16 %v3540
      %v4936 = vunpack.c.h.b16 %v3540
      %v4937 = vunpack.c.l.b16 %v3541
      %v4938 = vunpack.c.h.b16 %v3541
      %v4939 = vunpack.c.l.b16 %v3542
      %v4940 = vunpack.c.h.b16 %v3542
      %v4941 = vunpack.c.l.b16 %v3543
      %v4942 = vunpack.c.h.b16 %v3543
      %v4943 = vunpack.c.l.b16 %v3544
      %v4944 = vunpack.c.h.b16 %v3544
      %v4945 = vunpack.c.l.b16 %v3545
      %v4946 = vunpack.c.h.b16 %v3545
      %v4947 = vunpack.c.l.b16 %v3546
      %v4948 = vunpack.c.h.b16 %v3546
      %v4949 = vunpack.c.l.b16 %v3547
      %v4950 = vunpack.c.h.b16 %v3547
      %v4951 = vunpack.c.l.b16 %v3548
      %v4952 = vunpack.c.h.b16 %v3548
      %v4953 = vunpack.c.l.b16 %v3549
      %v4954 = vunpack.c.h.b16 %v3549
      %v4955 = vunpack.c.l.b16 %v3550
      %v4956 = vunpack.c.h.b16 %v3550
      %v4957 = vunpack.c.l.b16 %v3551
      %v4958 = vunpack.c.h.b16 %v3551
      %v4959 = vunpack.c.l.b16 %v3552
      %v4960 = vunpack.c.h.b16 %v3552
      %v4961 = vunpack.c.l.b16 %v3553
      %v4962 = vunpack.c.h.b16 %v3553
      %v4963 = vunpack.c.l.b16 %v3554
      %v4964 = vunpack.c.h.b16 %v3554
      %v4965 = vunpack.c.l.b16 %v3555
      %v4966 = vunpack.c.h.b16 %v3555
      %v4967 = vunpack.c.l.b16 %v3556
      %v4968 = vunpack.c.h.b16 %v3556
      %v4969 = vunpack.c.l.b16 %v3557
      %v4970 = vunpack.c.h.b16 %v3557
      %v4971 = vunpack.c.l.b16 %v3558
      %v4972 = vunpack.c.h.b16 %v3558
      %v4973 = vunpack.c.l.b16 %v3559
      %v4974 = vunpack.c.h.b16 %v3559
      %v4975 = vunpack.c.l.b16 %v3560
      %v4976 = vunpack.c.h.b16 %v3560
      %v4977 = vunpack.c.l.b16 %v3561
      %v4978 = vunpack.c.h.b16 %v3561
      %v4979 = vunpack.c.l.b16 %v3562
      %v4980 = vunpack.c.h.b16 %v3562
      %v4981 = vunpack.c.l.b16 %v3563
      %v4982 = vunpack.c.h.b16 %v3563
      %v4983 = vunpack.c.l.b16 %v3564
      %v4984 = vunpack.c.h.b16 %v3564
      %v4985 = vunpack.c.l.b16 %v3565
      %v4986 = vunpack.c.h.b16 %v3565
      %v4987 = vunpack.c.l.b16 %v3566
      %v4988 = vunpack.c.h.b16 %v3566
      %v4989 = vunpack.c.l.b16 %v3567
      %v4990 = vunpack.c.h.b16 %v3567
      %v4991 = vunpack.c.l.b16 %v3568
      %v4992 = vunpack.c.h.b16 %v3568
      %v4993 = vunpack.c.l.b16 %v3569
      %v4994 = vunpack.c.h.b16 %v3569
      %v4995 = vunpack.c.l.b16 %v3570
      %v4996 = vunpack.c.h.b16 %v3570
      %v4997 = vunpack.c.l.b16 %v3571
      %v4998 = vunpack.c.h.b16 %v3571
      %v4999 = vunpack.c.l.b16 %v3572
      %v5000 = vunpack.c.h.b16 %v3572
      %v5001 = vunpack.c.l.b16 %v3573
      %v5002 = vunpack.c.h.b16 %v3573
      %v5003 = vunpack.c.l.b16 %v3574
      %v5004 = vunpack.c.h.b16 %v3574
      %v5005 = vunpack.c.l.b16 %v3575
      %v5006 = vunpack.c.h.b16 %v3575
      %v5007 = vunpack.c.l.b16 %v3576
      %v5008 = vunpack.c.h.b16 %v3576
      %v5009 = vunpack.c.l.b16 %v3577
      %v5010 = vunpack.c.h.b16 %v3577
      %v5011 = vunpack.c.l.b16 %v3578
      %v5012 = vunpack.c.h.b16 %v3578
      %v5013 = vunpack.c.l.b16 %v3579
      %v5014 = vunpack.c.h.b16 %v3579
      %v5015 = vunpack.c.l.b16 %v3580
      %v5016 = vunpack.c.h.b16 %v3580
      %v5017 = vunpack.c.l.b16 %v3581
      %v5018 = vunpack.c.h.b16 %v3581
      %v5019 = vunpack.c.l.b16 %v3582
      %v5020 = vunpack.c.h.b16 %v3582
      %v5021 = vunpack.c.l.b16 %v3583
      %v5022 = vunpack.c.h.b16 %v3583
      %v5023 = vunpack.c.l.b16 %v3584
      %v5024 = vunpack.c.h.b16 %v3584
      %v5025 = vunpack.c.l.b16 %v3585
      %v5026 = vunpack.c.h.b16 %v3585
      %v5027 = vunpack.c.l.b16 %v3586
      %v5028 = vunpack.c.h.b16 %v3586
      %v5029 = vunpack.c.l.b16 %v3587
      %v5030 = vunpack.c.h.b16 %v3587
      %v5031 = vunpack.c.l.b16 %v3588
      %v5032 = vunpack.c.h.b16 %v3588
      %v5033 = vunpack.c.l.b16 %v3589
      %v5034 = vunpack.c.h.b16 %v3589
      %v5035 = vunpack.c.l.b16 %v3590
      %v5036 = vunpack.c.h.b16 %v3590
      %v5037 = vunpack.c.l.b16 %v3591
      %v5038 = vunpack.c.h.b16 %v3591
      %v5039 = vunpack.c.l.b16 %v3592
      %v5040 = vunpack.c.h.b16 %v3592
      %v5041 = vunpack.c.l.b16 %v3593
      %v5042 = vunpack.c.h.b16 %v3593
      %v5043 = vunpack.c.l.b16 %v3594
      %v5044 = vunpack.c.h.b16 %v3594
      %v5045 = vunpack.c.l.b16 %v3595
      %v5046 = vunpack.c.h.b16 %v3595
      %v5047 = vunpack.c.l.b16 %v3596
      %v5048 = vunpack.c.h.b16 %v3596
      %v5049 = vunpack.c.l.b16 %v3597
      %v5050 = vunpack.c.h.b16 %v3597
      %v5051 = vunpack.c.l.b16 %v3598
      %v5052 = vunpack.c.h.b16 %v3598
      %v5053 = vunpack.c.l.b16 %v3599
      %v5054 = vunpack.c.h.b16 %v3599
      %v5055 = vunpack.c.l.b16 %v3600
      %v5056 = vunpack.c.h.b16 %v3600
      %v5057 = vunpack.c.l.b16 %v3601
      %v5058 = vunpack.c.h.b16 %v3601
      %v5059 = vunpack.c.l.b16 %v3602
      %v5060 = vunpack.c.h.b16 %v3602
      %v5061 = vunpack.c.l.b16 %v3603
      %v5062 = vunpack.c.h.b16 %v3603
      %v5063 = vunpack.c.l.b16 %v3604
      %v5064 = vunpack.c.h.b16 %v3604
      %v5065 = vunpack.c.l.b16 %v3605
      %v5066 = vunpack.c.h.b16 %v3605
      %v5067 = vunpack.c.l.b16 %v3606
      %v5068 = vunpack.c.h.b16 %v3606
      %v5069 = vunpack.c.l.b16 %v3607
      %v5070 = vunpack.c.h.b16 %v3607
      %v5071 = vunpack.c.l.b16 %v3608
      %v5072 = vunpack.c.h.b16 %v3608
      %v5073 = vunpack.c.l.b16 %v3609
      %v5074 = vunpack.c.h.b16 %v3609
      %v5075 = vunpack.c.l.b16 %v3610
      %v5076 = vunpack.c.h.b16 %v3610
      %v5077 = vunpack.c.l.b16 %v3611
      %v5078 = vunpack.c.h.b16 %v3611
      %v5079 = vunpack.c.l.b16 %v3612
      %v5080 = vunpack.c.h.b16 %v3612
      %v5081 = vunpack.c.l.b16 %v3613
      %v5082 = vunpack.c.h.b16 %v3613
      %v5083 = vunpack.c.l.b16 %v3614
      %v5084 = vunpack.c.h.b16 %v3614
      %v5085 = vunpack.c.l.b16 %v3615
      %v5086 = vunpack.c.h.b16 %v3615
      %v5087 = vunpack.c.l.b16 %v3616
      %v5088 = vunpack.c.h.b16 %v3616
      %v5089 = vunpack.c.l.b16 %v3617
      %v5090 = vunpack.c.h.b16 %v3617
      %v5091 = vunpack.c.l.b16 %v3618
      %v5092 = vunpack.c.h.b16 %v3618
      %v5093 = vunpack.c.l.b16 %v3619
      %v5094 = vunpack.c.h.b16 %v3619
      %v5095 = vunpack.c.l.b16 %v3620
      %v5096 = vunpack.c.h.b16 %v3620
      %v5097 = vunpack.c.l.b16 %v3621
      %v5098 = vunpack.c.h.b16 %v3621
      %v5099 = vunpack.c.l.b16 %v3622
      %v5100 = vunpack.c.h.b16 %v3622
      %v5101 = vunpack.c.l.b16 %v3623
      %v5102 = vunpack.c.h.b16 %v3623
      %v5103 = vunpack.c.l.b16 %v3624
      %v5104 = vunpack.c.h.b16 %v3624
      %v5105 = vunpack.c.l.b16 %v3625
      %v5106 = vunpack.c.h.b16 %v3625
      %v5107 = vunpack.c.l.b16 %v3626
      %v5108 = vunpack.c.h.b16 %v3626
      %v5109 = vunpack.c.l.b16 %v3627
      %v5110 = vunpack.c.h.b16 %v3627
      %v5111 = vunpack.c.l.b16 %v3628
      %v5112 = vunpack.c.h.b16 %v3628
      %v5113 = vunpack.c.l.b16 %v3629
      %v5114 = vunpack.c.h.b16 %v3629
      %v5115 = vunpack.c.l.b16 %v3630
      %v5116 = vunpack.c.h.b16 %v3630
      %v5117 = vunpack.c.l.b16 %v3631
      %v5118 = vunpack.c.h.b16 %v3631
      %v5119 = vunpack.c.l.b16 %v3632
      %v5120 = vunpack.c.h.b16 %v3632
      %v5121 = vunpack.c.l.b16 %v3633
      %v5122 = vunpack.c.h.b16 %v3633
      %v5123 = vunpack.c.l.b16 %v3634
      %v5124 = vunpack.c.h.b16 %v3634
      %v5125 = vunpack.c.l.b16 %v3635
      %v5126 = vunpack.c.h.b16 %v3635
      %v5127 = vunpack.c.l.b16 %v3636
      %v5128 = vunpack.c.h.b16 %v3636
      %v5129 = vunpack.c.l.b16 %v3637
      %v5130 = vunpack.c.h.b16 %v3637
      %v5131 = vunpack.c.l.b16 %v3638
      %v5132 = vunpack.c.h.b16 %v3638
      %v5133 = vunpack.c.l.b16 %v3639
      %v5134 = vunpack.c.h.b16 %v3639
      %v5135 = vunpack.c.l.b16 %v3640
      %v5136 = vunpack.c.h.b16 %v3640
      %v5137 = vunpack.c.l.b16 %v3641
      %v5138 = vunpack.c.h.b16 %v3641
      %v5139 = vunpack.c.l.b16 %v3642
      %v5140 = vunpack.c.h.b16 %v3642
      %v5141 = vunpack.c.l.b16 %v3643
      %v5142 = vunpack.c.h.b16 %v3643
      %v5143 = vunpack.c.l.b16 %v3644
      %v5144 = vunpack.c.h.b16 %v3644
      %v5145 = vunpack.c.l.b16 %v3645
      %v5146 = vunpack.c.h.b16 %v3645
      %v5147 = vunpack.c.l.b16 %v3646
      %v5148 = vunpack.c.h.b16 %v3646
      %v5149 = vunpack.c.l.b16 %v3647
      %v5150 = vunpack.c.h.b16 %v3647
      %v5151 = vunpack.c.l.b16 %v3648
      %v5152 = vunpack.c.h.b16 %v3648
      %v5153 = vunpack.c.l.b16 %v3649
      %v5154 = vunpack.c.h.b16 %v3649
      %v5155 = vunpack.c.l.b16 %v3650
      %v5156 = vunpack.c.h.b16 %v3650
      %v5157 = vunpack.c.l.b16 %v3651
      %v5158 = vunpack.c.h.b16 %v3651
      %v5159 = vunpack.c.l.b16 %v3652
      %v5160 = vunpack.c.h.b16 %v3652
      %v5161 = vunpack.c.l.b16 %v3653
      %v5162 = vunpack.c.h.b16 %v3653
      %v5163 = vunpack.c.l.b16 %v3654
      %v5164 = vunpack.c.h.b16 %v3654
      %v5165 = vunpack.c.l.b16 %v3655
      %v5166 = vunpack.c.h.b16 %v3655
      %v5167 = vunpack.c.l.b16 %v3656
      %v5168 = vunpack.c.h.b16 %v3656
      %v5169 = vunpack.c.l.b16 %v3657
      %v5170 = vunpack.c.h.b16 %v3657
      %v5171 = vunpack.c.l.b16 %v3658
      %v5172 = vunpack.c.h.b16 %v3658
      %v5173 = vunpack.c.l.b16 %v3659
      %v5174 = vunpack.c.h.b16 %v3659
      %v5175 = vunpack.c.l.b16 %v3660
      %v5176 = vunpack.c.h.b16 %v3660
      %v5177 = vunpack.c.l.b16 %v3661
      %v5178 = vunpack.c.h.b16 %v3661
      %v5179 = vunpack.c.l.b16 %v3662
      %v5180 = vunpack.c.h.b16 %v3662
      %v5181 = vunpack.c.l.b16 %v3663
      %v5182 = vunpack.c.h.b16 %v3663
      %v5183 = vunpack.c.l.b16 %v3664
      %v5184 = vunpack.c.h.b16 %v3664
      %v5185 = vunpack.c.l.b16 %v3665
      %v5186 = vunpack.c.h.b16 %v3665
      %v5187 = vunpack.c.l.b16 %v3666
      %v5188 = vunpack.c.h.b16 %v3666
      %v5189 = vunpack.c.l.b16 %v3667
      %v5190 = vunpack.c.h.b16 %v3667
      %v5191 = vunpack.c.l.b16 %v3668
      %v5192 = vunpack.c.h.b16 %v3668
      %v5193 = vunpack.c.l.b16 %v3669
      %v5194 = vunpack.c.h.b16 %v3669
      %v5195 = vunpack.c.l.b16 %v3670
      %v5196 = vunpack.c.h.b16 %v3670
      %v5197 = vunpack.c.l.b16 %v3671
      %v5198 = vunpack.c.h.b16 %v3671
      %v5199 = vunpack.c.l.b16 %v3672
      %v5200 = vunpack.c.h.b16 %v3672
      %v5201 = vunpack.c.l.b16 %v3673
      %v5202 = vunpack.c.h.b16 %v3673
      %v5203 = vunpack.c.l.b16 %v3674
      %v5204 = vunpack.c.h.b16 %v3674
      %v5205 = vunpack.c.l.b16 %v3675
      %v5206 = vunpack.c.h.b16 %v3675
      %v5207 = vunpack.c.l.b16 %v3676
      %v5208 = vunpack.c.h.b16 %v3676
      %v5209 = vunpack.c.l.b16 %v3677
      %v5210 = vunpack.c.h.b16 %v3677
      %v5211 = vunpack.c.l.b16 %v3678
      %v5212 = vunpack.c.h.b16 %v3678
      %v5213 = vunpack.c.l.b16 %v3679
      %v5214 = vunpack.c.h.b16 %v3679
      %v5215 = vunpack.c.l.b16 %v3680
      %v5216 = vunpack.c.h.b16 %v3680
      %v5217 = vunpack.c.l.b16 %v3681
      %v5218 = vunpack.c.h.b16 %v3681
      %v5219 = vunpack.c.l.b16 %v3682
      %v5220 = vunpack.c.h.b16 %v3682
      %v5221 = vunpack.c.l.b16 %v3683
      %v5222 = vunpack.c.h.b16 %v3683
      %v5223 = vunpack.c.l.b16 %v3684
      %v5224 = vunpack.c.h.b16 %v3684
      %v5225 = vunpack.c.l.b16 %v3685
      %v5226 = vunpack.c.h.b16 %v3685
      %v5227 = vunpack.c.l.b16 %v3686
      %v5228 = vunpack.c.h.b16 %v3686
      %v5229 = vunpack.c.l.b16 %v3687
      %v5230 = vunpack.c.h.b16 %v3687
      %v5231 = vunpack.c.l.b16 %v3688
      %v5232 = vunpack.c.h.b16 %v3688
      %v5233 = vunpack.c.l.b16 %v3689
      %v5234 = vunpack.c.h.b16 %v3689
      %v5235 = vunpack.c.l.b16 %v3690
      %v5236 = vunpack.c.h.b16 %v3690
      %v5237 = vunpack.c.l.b16 %v3691
      %v5238 = vunpack.c.h.b16 %v3691
      %v5239 = vunpack.c.l.b16 %v3692
      %v5240 = vunpack.c.h.b16 %v3692
      %v5241 = vunpack.c.l.b16 %v3693
      %v5242 = vunpack.c.h.b16 %v3693
      %v5243 = vunpack.c.l.b16 %v3694
      %v5244 = vunpack.c.h.b16 %v3694
      %v5245 = vunpack.c.l.b16 %v3695
      %v5246 = vunpack.c.h.b16 %v3695
      %v5247 = vunpack.c.l.b16 %v3696
      %v5248 = vunpack.c.h.b16 %v3696
      %v5249 = vunpack.c.l.b16 %v3697
      %v5250 = vunpack.c.h.b16 %v3697
      %v5251 = vunpack.c.l.b16 %v3698
      %v5252 = vunpack.c.h.b16 %v3698
      %v5253 = vunpack.c.l.b16 %v3699
      %v5254 = vunpack.c.h.b16 %v3699
      %v5255 = vunpack.c.l.b16 %v3700
      %v5256 = vunpack.c.h.b16 %v3700
      %v5257 = vunpack.c.l.b16 %v3701
      %v5258 = vunpack.c.h.b16 %v3701
      %v5259 = vunpack.c.l.b16 %v3702
      %v5260 = vunpack.c.h.b16 %v3702
      %v5261 = vunpack.c.l.b16 %v3703
      %v5262 = vunpack.c.h.b16 %v3703
      %v5263 = vunpack.c.l.b16 %v3704
      %v5264 = vunpack.c.h.b16 %v3704
      %v5265 = vunpack.c.l.b16 %v3705
      %v5266 = vunpack.c.h.b16 %v3705
      %v5267 = vunpack.c.l.b16 %v3706
      %v5268 = vunpack.c.h.b16 %v3706
      %v5269 = vunpack.c.l.b16 %v3707
      %v5270 = vunpack.c.h.b16 %v3707
      %v5271 = vunpack.c.l.b16 %v3708
      %v5272 = vunpack.c.h.b16 %v3708
      %v5273 = vunpack.c.l.b16 %v3709
      %v5274 = vunpack.c.h.b16 %v3709
      %v5275 = vunpack.c.l.b16 %v3710
      %v5276 = vunpack.c.h.b16 %v3710
      %v5277 = vunpack.c.l.b16 %v3711
      %v5278 = vunpack.c.h.b16 %v3711
      %v5279 = vunpack.c.l.b16 %v3712
      %v5280 = vunpack.c.h.b16 %v3712
      %v5281 = vunpack.c.l.b16 %v3713
      %v5282 = vunpack.c.h.b16 %v3713
      %v5283 = vunpack.c.l.b16 %v3714
      %v5284 = vunpack.c.h.b16 %v3714
      %v5285 = vunpack.c.l.b16 %v3715
      %v5286 = vunpack.c.h.b16 %v3715
      %v5287 = vunpack.c.l.b16 %v3716
      %v5288 = vunpack.c.h.b16 %v3716
      %v5289 = vunpack.c.l.b16 %v3717
      %v5290 = vunpack.c.h.b16 %v3717
      %v5291 = vunpack.c.l.b16 %v3718
      %v5292 = vunpack.c.h.b16 %v3718
      %v5293 = vunpack.c.l.b16 %v3719
      %v5294 = vunpack.c.h.b16 %v3719
      %v5295 = vpack.c.b16 %v4413, %v4399
      %v5296 = vpack.c.b16 %v4414, %v4400
      %v5297 = vpack.c.b16 %v4415, %v4401
      %v5298 = vpack.c.b16 %v4416, %v4402
      %v5299 = vpack.c.b16 %v4417, %v4403
      %v5300 = vpack.c.b16 %v4418, %v4404
      %v5301 = vpack.c.b16 %v4419, %v4405
      %v5302 = vpack.c.b16 %v4420, %v4406
      %v5303 = vpack.c.b16 %v4421, %v4407
      %v5304 = vpack.c.b16 %v4422, %v4408
      %v5305 = vpack.c.b16 %v4423, %v4409
      %v5306 = vpack.c.b16 %v4424, %v4410
      %v5307 = vpack.c.b16 %v4425, %v4411
      %v5308 = vpack.c.b16 %v4426, %v4412
      %v5309 = vpack.c.b16 %v4441, %v4427
      %v5310 = vpack.c.b16 %v4442, %v4428
      %v5311 = vpack.c.b16 %v4443, %v4429
      %v5312 = vpack.c.b16 %v4444, %v4430
      %v5313 = vpack.c.b16 %v4445, %v4431
      %v5314 = vpack.c.b16 %v4446, %v4432
      %v5315 = vpack.c.b16 %v4447, %v4433
      %v5316 = vpack.c.b16 %v4448, %v4434
      %v5317 = vpack.c.b16 %v4449, %v4435
      %v5318 = vpack.c.b16 %v4450, %v4436
      %v5319 = vpack.c.b16 %v4451, %v4437
      %v5320 = vpack.c.b16 %v4452, %v4438
      %v5321 = vpack.c.b16 %v4453, %v4439
      %v5322 = vpack.c.b16 %v4454, %v4440
      %v5323 = vpack.c.b16 %v4469, %v4455
      %v5324 = vpack.c.b16 %v4470, %v4456
      %v5325 = vpack.c.b16 %v4471, %v4457
      %v5326 = vpack.c.b16 %v4472, %v4458
      %v5327 = vpack.c.b16 %v4473, %v4459
      %v5328 = vpack.c.b16 %v4474, %v4460
      %v5329 = vpack.c.b16 %v4475, %v4461
      %v5330 = vpack.c.b16 %v4476, %v4462
      %v5331 = vpack.c.b16 %v4477, %v4463
      %v5332 = vpack.c.b16 %v4478, %v4464
      %v5333 = vpack.c.b16 %v4479, %v4465
      %v5334 = vpack.c.b16 %v4480, %v4466
      %v5335 = vpack.c.b16 %v4481, %v4467
      %v5336 = vpack.c.b16 %v4482, %v4468
      %v5337 = vpack.c.b16 %v4497, %v4483
      %v5338 = vpack.c.b16 %v4498, %v4484
      %v5339 = vpack.c.b16 %v4499, %v4485
      %v5340 = vpack.c.b16 %v4500, %v4486
      %v5341 = vpack.c.b16 %v4501, %v4487
      %v5342 = vpack.c.b16 %v4502, %v4488
      %v5343 = vpack.c.b16 %v4503, %v4489
      %v5344 = vpack.c.b16 %v4504, %v4490
      %v5345 = vpack.c.b16 %v4505, %v4491
      %v5346 = vpack.c.b16 %v4506, %v4492
      %v5347 = vpack.c.b16 %v4507, %v4493
      %v5348 = vpack.c.b16 %v4508, %v4494
      %v5349 = vpack.c.b16 %v4509, %v4495
      %v5350 = vpack.c.b16 %v4510, %v4496
      %v5351 = vpack.c.b16 %v4525, %v4511
      %v5352 = vpack.c.b16 %v4526, %v4512
      %v5353 = vpack.c.b16 %v4527, %v4513
      %v5354 = vpack.c.b16 %v4528, %v4514
      %v5355 = vpack.c.b16 %v4529, %v4515
      %v5356 = vpack.c.b16 %v4530, %v4516
      %v5357 = vpack.c.b16 %v4531, %v4517
      %v5358 = vpack.c.b16 %v4532, %v4518
      %v5359 = vpack.c.b16 %v4533, %v4519
      %v5360 = vpack.c.b16 %v4534, %v4520
      %v5361 = vpack.c.b16 %v4535, %v4521
      %v5362 = vpack.c.b16 %v4536, %v4522
      %v5363 = vpack.c.b16 %v4537, %v4523
      %v5364 = vpack.c.b16 %v4538, %v4524
      %v5365 = vpack.c.b16 %v4553, %v4539
      %v5366 = vpack.c.b16 %v4554, %v4540
      %v5367 = vpack.c.b16 %v4555, %v4541
      %v5368 = vpack.c.b16 %v4556, %v4542
      %v5369 = vpack.c.b16 %v4557, %v4543
      %v5370 = vpack.c.b16 %v4558, %v4544
      %v5371 = vpack.c.b16 %v4559, %v4545
      %v5372 = vpack.c.b16 %v4560, %v4546
      %v5373 = vpack.c.b16 %v4561, %v4547
      %v5374 = vpack.c.b16 %v4562, %v4548
      %v5375 = vpack.c.b16 %v4563, %v4549
      %v5376 = vpack.c.b16 %v4564, %v4550
      %v5377 = vpack.c.b16 %v4565, %v4551
      %v5378 = vpack.c.b16 %v4566, %v4552
      %v5379 = vpack.c.b16 %v4581, %v4567
      %v5380 = vpack.c.b16 %v4582, %v4568
      %v5381 = vpack.c.b16 %v4583, %v4569
      %v5382 = vpack.c.b16 %v4584, %v4570
      %v5383 = vpack.c.b16 %v4585, %v4571
      %v5384 = vpack.c.b16 %v4586, %v4572
      %v5385 = vpack.c.b16 %v4587, %v4573
      %v5386 = vpack.c.b16 %v4588, %v4574
      %v5387 = vpack.c.b16 %v4589, %v4575
      %v5388 = vpack.c.b16 %v4590, %v4576
      %v5389 = vpack.c.b16 %v4591, %v4577
      %v5390 = vpack.c.b16 %v4592, %v4578
      %v5391 = vpack.c.b16 %v4593, %v4579
      %v5392 = vpack.c.b16 %v4594, %v4580
      %v5393 = vpack.c.b16 %v4609, %v4595
      %v5394 = vpack.c.b16 %v4610, %v4596
      %v5395 = vpack.c.b16 %v4611, %v4597
      %v5396 = vpack.c.b16 %v4612, %v4598
      %v5397 = vpack.c.b16 %v4613, %v4599
      %v5398 = vpack.c.b16 %v4614, %v4600
      %v5399 = vpack.c.b16 %v4615, %v4601
      %v5400 = vpack.c.b16 %v4616, %v4602
      %v5401 = vpack.c.b16 %v4617, %v4603
      %v5402 = vpack.c.b16 %v4618, %v4604
      %v5403 = vpack.c.b16 %v4619, %v4605
      %v5404 = vpack.c.b16 %v4620, %v4606
      %v5405 = vpack.c.b16 %v4621, %v4607
      %v5406 = vpack.c.b16 %v4622, %v4608
      %v5407 = vpack.c.b16 %v4637, %v4623
      %v5408 = vpack.c.b16 %v4638, %v4624
      %v5409 = vpack.c.b16 %v4639, %v4625
      %v5410 = vpack.c.b16 %v4640, %v4626
      %v5411 = vpack.c.b16 %v4641, %v4627
      %v5412 = vpack.c.b16 %v4642, %v4628
      %v5413 = vpack.c.b16 %v4643, %v4629
      %v5414 = vpack.c.b16 %v4644, %v4630
      %v5415 = vpack.c.b16 %v4645, %v4631
      %v5416 = vpack.c.b16 %v4646, %v4632
      %v5417 = vpack.c.b16 %v4647, %v4633
      %v5418 = vpack.c.b16 %v4648, %v4634
      %v5419 = vpack.c.b16 %v4649, %v4635
      %v5420 = vpack.c.b16 %v4650, %v4636
      %v5421 = vpack.c.b16 %v4665, %v4651
      %v5422 = vpack.c.b16 %v4666, %v4652
      %v5423 = vpack.c.b16 %v4667, %v4653
      %v5424 = vpack.c.b16 %v4668, %v4654
      %v5425 = vpack.c.b16 %v4669, %v4655
      %v5426 = vpack.c.b16 %v4670, %v4656
      %v5427 = vpack.c.b16 %v4671, %v4657
      %v5428 = vpack.c.b16 %v4672, %v4658
      %v5429 = vpack.c.b16 %v4673, %v4659
      %v5430 = vpack.c.b16 %v4674, %v4660
      %v5431 = vpack.c.b16 %v4675, %v4661
      %v5432 = vpack.c.b16 %v4676, %v4662
      %v5433 = vpack.c.b16 %v4677, %v4663
      %v5434 = vpack.c.b16 %v4678, %v4664
      %v5435 = vpack.c.b16 %v4693, %v4679
      %v5436 = vpack.c.b16 %v4694, %v4680
      %v5437 = vpack.c.b16 %v4695, %v4681
      %v5438 = vpack.c.b16 %v4696, %v4682
      %v5439 = vpack.c.b16 %v4697, %v4683
      %v5440 = vpack.c.b16 %v4698, %v4684
      %v5441 = vpack.c.b16 %v4699, %v4685
      %v5442 = vpack.c.b16 %v4700, %v4686
      %v5443 = vpack.c.b16 %v4701, %v4687
      %v5444 = vpack.c.b16 %v4702, %v4688
      %v5445 = vpack.c.b16 %v4703, %v4689
      %v5446 = vpack.c.b16 %v4704, %v4690
      %v5447 = vpack.c.b16 %v4705, %v4691
      %v5448 = vpack.c.b16 %v4706, %v4692
      %v5449 = vpack.c.b16 %v4721, %v4707
      %v5450 = vpack.c.b16 %v4722, %v4708
      %v5451 = vpack.c.b16 %v4723, %v4709
      %v5452 = vpack.c.b16 %v4724, %v4710
      %v5453 = vpack.c.b16 %v4725, %v4711
      %v5454 = vpack.c.b16 %v4726, %v4712
      %v5455 = vpack.c.b16 %v4727, %v4713
      %v5456 = vpack.c.b16 %v4728, %v4714
      %v5457 = vpack.c.b16 %v4729, %v4715
      %v5458 = vpack.c.b16 %v4730, %v4716
      %v5459 = vpack.c.b16 %v4731, %v4717
      %v5460 = vpack.c.b16 %v4732, %v4718
      %v5461 = vpack.c.b16 %v4733, %v4719
      %v5462 = vpack.c.b16 %v4734, %v4720
      %v5463 = vpack.c.b16 %v4749, %v4735
      %v5464 = vpack.c.b16 %v4750, %v4736
      %v5465 = vpack.c.b16 %v4751, %v4737
      %v5466 = vpack.c.b16 %v4752, %v4738
      %v5467 = vpack.c.b16 %v4753, %v4739
      %v5468 = vpack.c.b16 %v4754, %v4740
      %v5469 = vpack.c.b16 %v4755, %v4741
      %v5470 = vpack.c.b16 %v4756, %v4742
      %v5471 = vpack.c.b16 %v4757, %v4743
      %v5472 = vpack.c.b16 %v4758, %v4744
      %v5473 = vpack.c.b16 %v4759, %v4745
      %v5474 = vpack.c.b16 %v4760, %v4746
      %v5475 = vpack.c.b16 %v4761, %v4747
      %v5476 = vpack.c.b16 %v4762, %v4748
      %v5477 = vpack.c.b16 %v4777, %v4763
      %v5478 = vpack.c.b16 %v4778, %v4764
      %v5479 = vpack.c.b16 %v4779, %v4765
      %v5480 = vpack.c.b16 %v4780, %v4766
      %v5481 = vpack.c.b16 %v4781, %v4767
      %v5482 = vpack.c.b16 %v4782, %v4768
      %v5483 = vpack.c.b16 %v4783, %v4769
      %v5484 = vpack.c.b16 %v4784, %v4770
      %v5485 = vpack.c.b16 %v4785, %v4771
      %v5486 = vpack.c.b16 %v4786, %v4772
      %v5487 = vpack.c.b16 %v4787, %v4773
      %v5488 = vpack.c.b16 %v4788, %v4774
      %v5489 = vpack.c.b16 %v4789, %v4775
      %v5490 = vpack.c.b16 %v4790, %v4776
      %v5491 = vpack.c.b16 %v4805, %v4791
      %v5492 = vpack.c.b16 %v4806, %v4792
      %v5493 = vpack.c.b16 %v4807, %v4793
      %v5494 = vpack.c.b16 %v4808, %v4794
      %v5495 = vpack.c.b16 %v4809, %v4795
      %v5496 = vpack.c.b16 %v4810, %v4796
      %v5497 = vpack.c.b16 %v4811, %v4797
      %v5498 = vpack.c.b16 %v4812, %v4798
      %v5499 = vpack.c.b16 %v4813, %v4799
      %v5500 = vpack.c.b16 %v4814, %v4800
      %v5501 = vpack.c.b16 %v4815, %v4801
      %v5502 = vpack.c.b16 %v4816, %v4802
      %v5503 = vpack.c.b16 %v4817, %v4803
      %v5504 = vpack.c.b16 %v4818, %v4804
      %v5505 = vpack.c.b16 %v4833, %v4819
      %v5506 = vpack.c.b16 %v4834, %v4820
      %v5507 = vpack.c.b16 %v4835, %v4821
      %v5508 = vpack.c.b16 %v4836, %v4822
      %v5509 = vpack.c.b16 %v4837, %v4823
      %v5510 = vpack.c.b16 %v4838, %v4824
      %v5511 = vpack.c.b16 %v4839, %v4825
      %v5512 = vpack.c.b16 %v4840, %v4826
      %v5513 = vpack.c.b16 %v4841, %v4827
      %v5514 = vpack.c.b16 %v4842, %v4828
      %v5515 = vpack.c.b16 %v4843, %v4829
      %v5516 = vpack.c.b16 %v4844, %v4830
      %v5517 = vpack.c.b16 %v4845, %v4831
      %v5518 = vpack.c.b16 %v4846, %v4832
      %v5519 = vpack.c.b16 %v4861, %v4847
      %v5520 = vpack.c.b16 %v4862, %v4848
      %v5521 = vpack.c.b16 %v4863, %v4849
      %v5522 = vpack.c.b16 %v4864, %v4850
      %v5523 = vpack.c.b16 %v4865, %v4851
      %v5524 = vpack.c.b16 %v4866, %v4852
      %v5525 = vpack.c.b16 %v4867, %v4853
      %v5526 = vpack.c.b16 %v4868, %v4854
      %v5527 = vpack.c.b16 %v4869, %v4855
      %v5528 = vpack.c.b16 %v4870, %v4856
      %v5529 = vpack.c.b16 %v4871, %v4857
      %v5530 = vpack.c.b16 %v4872, %v4858
      %v5531 = vpack.c.b16 %v4873, %v4859
      %v5532 = vpack.c.b16 %v4874, %v4860
      %v5533 = vpack.c.b16 %v4889, %v4875
      %v5534 = vpack.c.b16 %v4890, %v4876
      %v5535 = vpack.c.b16 %v4891, %v4877
      %v5536 = vpack.c.b16 %v4892, %v4878
      %v5537 = vpack.c.b16 %v4893, %v4879
      %v5538 = vpack.c.b16 %v4894, %v4880
      %v5539 = vpack.c.b16 %v4895, %v4881
      %v5540 = vpack.c.b16 %v4896, %v4882
      %v5541 = vpack.c.b16 %v4897, %v4883
      %v5542 = vpack.c.b16 %v4898, %v4884
      %v5543 = vpack.c.b16 %v4899, %v4885
      %v5544 = vpack.c.b16 %v4900, %v4886
      %v5545 = vpack.c.b16 %v4901, %v4887
      %v5546 = vpack.c.b16 %v4902, %v4888
      %v5547 = vpack.c.b16 %v4917, %v4903
      %v5548 = vpack.c.b16 %v4918, %v4904
      %v5549 = vpack.c.b16 %v4919, %v4905
      %v5550 = vpack.c.b16 %v4920, %v4906
      %v5551 = vpack.c.b16 %v4921, %v4907
      %v5552 = vpack.c.b16 %v4922, %v4908
      %v5553 = vpack.c.b16 %v4923, %v4909
      %v5554 = vpack.c.b16 %v4924, %v4910
      %v5555 = vpack.c.b16 %v4925, %v4911
      %v5556 = vpack.c.b16 %v4926, %v4912
      %v5557 = vpack.c.b16 %v4927, %v4913
      %v5558 = vpack.c.b16 %v4928, %v4914
      %v5559 = vpack.c.b16 %v4929, %v4915
      %v5560 = vpack.c.b16 %v4930, %v4916
      %v5561 = vpack.c.b16 %v4945, %v4931
      %v5562 = vpack.c.b16 %v4946, %v4932
      %v5563 = vpack.c.b16 %v4947, %v4933
      %v5564 = vpack.c.b16 %v4948, %v4934
      %v5565 = vpack.c.b16 %v4949, %v4935
      %v5566 = vpack.c.b16 %v4950, %v4936
      %v5567 = vpack.c.b16 %v4951, %v4937
      %v5568 = vpack.c.b16 %v4952, %v4938
      %v5569 = vpack.c.b16 %v4953, %v4939
      %v5570 = vpack.c.b16 %v4954, %v4940
      %v5571 = vpack.c.b16 %v4955, %v4941
      %v5572 = vpack.c.b16 %v4956, %v4942
      %v5573 = vpack.c.b16 %v4957, %v4943
      %v5574 = vpack.c.b16 %v4958, %v4944
      %v5575 = vpack.c.b16 %v4973, %v4959
      %v5576 = vpack.c.b16 %v4974, %v4960
      %v5577 = vpack.c.b16 %v4975, %v4961
      %v5578 = vpack.c.b16 %v4976, %v4962
      %v5579 = vpack.c.b16 %v4977, %v4963
      %v5580 = vpack.c.b16 %v4978, %v4964
      %v5581 = vpack.c.b16 %v4979, %v4965
      %v5582 = vpack.c.b16 %v4980, %v4966
      %v5583 = vpack.c.b16 %v4981, %v4967
      %v5584 = vpack.c.b16 %v4982, %v4968
      %v5585 = vpack.c.b16 %v4983, %v4969
      %v5586 = vpack.c.b16 %v4984, %v4970
      %v5587 = vpack.c.b16 %v4985, %v4971
      %v5588 = vpack.c.b16 %v4986, %v4972
      %v5589 = vpack.c.b16 %v5001, %v4987
      %v5590 = vpack.c.b16 %v5002, %v4988
      %v5591 = vpack.c.b16 %v5003, %v4989
      %v5592 = vpack.c.b16 %v5004, %v4990
      %v5593 = vpack.c.b16 %v5005, %v4991
      %v5594 = vpack.c.b16 %v5006, %v4992
      %v5595 = vpack.c.b16 %v5007, %v4993
      %v5596 = vpack.c.b16 %v5008, %v4994
      %v5597 = vpack.c.b16 %v5009, %v4995
      %v5598 = vpack.c.b16 %v5010, %v4996
      %v5599 = vpack.c.b16 %v5011, %v4997
      %v5600 = vpack.c.b16 %v5012, %v4998
      %v5601 = vpack.c.b16 %v5013, %v4999
      %v5602 = vpack.c.b16 %v5014, %v5000
      %v5603 = vpack.c.b16 %v5029, %v5015
      %v5604 = vpack.c.b16 %v5030, %v5016
      %v5605 = vpack.c.b16 %v5031, %v5017
      %v5606 = vpack.c.b16 %v5032, %v5018
      %v5607 = vpack.c.b16 %v5033, %v5019
      %v5608 = vpack.c.b16 %v5034, %v5020
      %v5609 = vpack.c.b16 %v5035, %v5021
      %v5610 = vpack.c.b16 %v5036, %v5022
      %v5611 = vpack.c.b16 %v5037, %v5023
      %v5612 = vpack.c.b16 %v5038, %v5024
      %v5613 = vpack.c.b16 %v5039, %v5025
      %v5614 = vpack.c.b16 %v5040, %v5026
      %v5615 = vpack.c.b16 %v5041, %v5027
      %v5616 = vpack.c.b16 %v5042, %v5028
      %v5617 = vpack.c.b16 %v5057, %v5043
      %v5618 = vpack.c.b16 %v5058, %v5044
      %v5619 = vpack.c.b16 %v5059, %v5045
      %v5620 = vpack.c.b16 %v5060, %v5046
      %v5621 = vpack.c.b16 %v5061, %v5047
      %v5622 = vpack.c.b16 %v5062, %v5048
      %v5623 = vpack.c.b16 %v5063, %v5049
      %v5624 = vpack.c.b16 %v5064, %v5050
      %v5625 = vpack.c.b16 %v5065, %v5051
      %v5626 = vpack.c.b16 %v5066, %v5052
      %v5627 = vpack.c.b16 %v5067, %v5053
      %v5628 = vpack.c.b16 %v5068, %v5054
      %v5629 = vpack.c.b16 %v5069, %v5055
      %v5630 = vpack.c.b16 %v5070, %v5056
      %v5631 = vpack.c.b16 %v5085, %v5071
      %v5632 = vpack.c.b16 %v5086, %v5072
      %v5633 = vpack.c.b16 %v5087, %v5073
      %v5634 = vpack.c.b16 %v5088, %v5074
      %v5635 = vpack.c.b16 %v5089, %v5075
      %v5636 = vpack.c.b16 %v5090, %v5076
      %v5637 = vpack.c.b16 %v5091, %v5077
      %v5638 = vpack.c.b16 %v5092, %v5078
      %v5639 = vpack.c.b16 %v5093, %v5079
      %v5640 = vpack.c.b16 %v5094, %v5080
      %v5641 = vpack.c.b16 %v5095, %v5081
      %v5642 = vpack.c.b16 %v5096, %v5082
      %v5643 = vpack.c.b16 %v5097, %v5083
      %v5644 = vpack.c.b16 %v5098, %v5084
      %v5645 = vpack.c.b16 %v5113, %v5099
      %v5646 = vpack.c.b16 %v5114, %v5100
      %v5647 = vpack.c.b16 %v5115, %v5101
      %v5648 = vpack.c.b16 %v5116, %v5102
      %v5649 = vpack.c.b16 %v5117, %v5103
      %v5650 = vpack.c.b16 %v5118, %v5104
      %v5651 = vpack.c.b16 %v5119, %v5105
      %v5652 = vpack.c.b16 %v5120, %v5106
      %v5653 = vpack.c.b16 %v5121, %v5107
      %v5654 = vpack.c.b16 %v5122, %v5108
      %v5655 = vpack.c.b16 %v5123, %v5109
      %v5656 = vpack.c.b16 %v5124, %v5110
      %v5657 = vpack.c.b16 %v5125, %v5111
      %v5658 = vpack.c.b16 %v5126, %v5112
      %v5659 = vpack.c.b16 %v5141, %v5127
      %v5660 = vpack.c.b16 %v5142, %v5128
      %v5661 = vpack.c.b16 %v5143, %v5129
      %v5662 = vpack.c.b16 %v5144, %v5130
      %v5663 = vpack.c.b16 %v5145, %v5131
      %v5664 = vpack.c.b16 %v5146, %v5132
      %v5665 = vpack.c.b16 %v5147, %v5133
      %v5666 = vpack.c.b16 %v5148, %v5134
      %v5667 = vpack.c.b16 %v5149, %v5135
      %v5668 = vpack.c.b16 %v5150, %v5136
      %v5669 = vpack.c.b16 %v5151, %v5137
      %v5670 = vpack.c.b16 %v5152, %v5138
      %v5671 = vpack.c.b16 %v5153, %v5139
      %v5672 = vpack.c.b16 %v5154, %v5140
      %v5673 = vpack.c.b16 %v5169, %v5155
      %v5674 = vpack.c.b16 %v5170, %v5156
      %v5675 = vpack.c.b16 %v5171, %v5157
      %v5676 = vpack.c.b16 %v5172, %v5158
      %v5677 = vpack.c.b16 %v5173, %v5159
      %v5678 = vpack.c.b16 %v5174, %v5160
      %v5679 = vpack.c.b16 %v5175, %v5161
      %v5680 = vpack.c.b16 %v5176, %v5162
      %v5681 = vpack.c.b16 %v5177, %v5163
      %v5682 = vpack.c.b16 %v5178, %v5164
      %v5683 = vpack.c.b16 %v5179, %v5165
      %v5684 = vpack.c.b16 %v5180, %v5166
      %v5685 = vpack.c.b16 %v5181, %v5167
      %v5686 = vpack.c.b16 %v5182, %v5168
      %v5687 = vpack.c.b16 %v5197, %v5183
      %v5688 = vpack.c.b16 %v5198, %v5184
      %v5689 = vpack.c.b16 %v5199, %v5185
      %v5690 = vpack.c.b16 %v5200, %v5186
      %v5691 = vpack.c.b16 %v5201, %v5187
      %v5692 = vpack.c.b16 %v5202, %v5188
      %v5693 = vpack.c.b16 %v5203, %v5189
      %v5694 = vpack.c.b16 %v5204, %v5190
      %v5695 = vpack.c.b16 %v5205, %v5191
      %v5696 = vpack.c.b16 %v5206, %v5192
      %v5697 = vpack.c.b16 %v5207, %v5193
      %v5698 = vpack.c.b16 %v5208, %v5194
      %v5699 = vpack.c.b16 %v5209, %v5195
      %v5700 = vpack.c.b16 %v5210, %v5196
      %v5701 = vpack.c.b16 %v5225, %v5211
      %v5702 = vpack.c.b16 %v5226, %v5212
      %v5703 = vpack.c.b16 %v5227, %v5213
      %v5704 = vpack.c.b16 %v5228, %v5214
      %v5705 = vpack.c.b16 %v5229, %v5215
      %v5706 = vpack.c.b16 %v5230, %v5216
      %v5707 = vpack.c.b16 %v5231, %v5217
      %v5708 = vpack.c.b16 %v5232, %v5218
      %v5709 = vpack.c.b16 %v5233, %v5219
      %v5710 = vpack.c.b16 %v5234, %v5220
      %v5711 = vpack.c.b16 %v5235, %v5221
      %v5712 = vpack.c.b16 %v5236, %v5222
      %v5713 = vpack.c.b16 %v5237, %v5223
      %v5714 = vpack.c.b16 %v5238, %v5224
      %v5715 = vpack.c.b16 %v5253, %v5239
      %v5716 = vpack.c.b16 %v5254, %v5240
      %v5717 = vpack.c.b16 %v5255, %v5241
      %v5718 = vpack.c.b16 %v5256, %v5242
      %v5719 = vpack.c.b16 %v5257, %v5243
      %v5720 = vpack.c.b16 %v5258, %v5244
      %v5721 = vpack.c.b16 %v5259, %v5245
      %v5722 = vpack.c.b16 %v5260, %v5246
      %v5723 = vpack.c.b16 %v5261, %v5247
      %v5724 = vpack.c.b16 %v5262, %v5248
      %v5725 = vpack.c.b16 %v5263, %v5249
      %v5726 = vpack.c.b16 %v5264, %v5250
      %v5727 = vpack.c.b16 %v5265, %v5251
      %v5728 = vpack.c.b16 %v5266, %v5252
      %v5729 = vpack.c.b16 %v5281, %v5267
      %v5730 = vpack.c.b16 %v5282, %v5268
      %v5731 = vpack.c.b16 %v5283, %v5269
      %v5732 = vpack.c.b16 %v5284, %v5270
      %v5733 = vpack.c.b16 %v5285, %v5271
      %v5734 = vpack.c.b16 %v5286, %v5272
      %v5735 = vpack.c.b16 %v5287, %v5273
      %v5736 = vpack.c.b16 %v5288, %v5274
      %v5737 = vpack.c.b16 %v5289, %v5275
      %v5738 = vpack.c.b16 %v5290, %v5276
      %v5739 = vpack.c.b16 %v5291, %v5277
      %v5740 = vpack.c.b16 %v5292, %v5278
      %v5741 = vpack.c.b16 %v5293, %v5279
      %v5742 = vpack.c.b16 %v5294, %v5280
      %v6415 = vunpack.c.l.b16 %v3720
      %v6416 = vunpack.c.l.b16 %v3721
      %v6417 = vunpack.c.l.b16 %v3722
      %v6418 = vunpack.c.l.b16 %v3723
      %v6419 = vunpack.c.l.b16 %v3724
      %v6420 = vunpack.c.l.b16 %v3725
      %v6421 = vunpack.c.l.b16 %v3726
      %v6422 = vunpack.c.l.b16 %v3727
      %v6423 = vunpack.c.l.b16 %v3728
      %v6424 = vunpack.c.l.b16 %v3729
      %v6425 = vunpack.c.l.b16 %v3730
      %v6426 = vunpack.c.l.b16 %v3731
      %v6427 = vunpack.c.l.b16 %v3732
      %v6428 = vunpack.c.l.b16 %v3733
      %v6429 = vunpack.c.l.b16 %v3734
      %v6430 = vunpack.c.l.b16 %v3735
      %v6431 = vunpack.c.l.b16 %v3736
      %v6432 = vunpack.c.l.b16 %v3737
      %v6433 = vunpack.c.l.b16 %v3738
      %v6434 = vunpack.c.l.b16 %v3739
      %v6435 = vunpack.c.l.b16 %v3740
      %v6436 = vunpack.c.l.b16 %v3741
      %v6437 = vunpack.c.l.b16 %v3742
      %v6438 = vunpack.c.l.b16 %v3743
      %v6439 = vunpack.c.l.b16 %v3744
      %v6440 = vunpack.c.l.b16 %v3745
      %v6441 = vunpack.c.l.b16 %v3746
      %v6442 = vunpack.c.l.b16 %v3747
      %v6443 = vunpack.c.l.b16 %v3748
      %v6444 = vunpack.c.l.b16 %v3749
      %v6445 = vunpack.c.l.b16 %v3750
      %v6446 = vunpack.c.l.b16 %v3751
      %v6447 = vunpack.c.l.b16 %v3752
      %v6448 = vunpack.c.l.b16 %v3753
      %v6449 = vunpack.c.l.b16 %v3754
      %v6450 = vunpack.c.l.b16 %v3755
      %v6451 = vunpack.c.l.b16 %v3756
      %v6452 = vunpack.c.l.b16 %v3757
      %v6453 = vunpack.c.l.b16 %v3758
      %v6454 = vunpack.c.l.b16 %v3759
      %v6455 = vunpack.c.l.b16 %v3760
      %v6456 = vunpack.c.l.b16 %v3761
      %v6457 = vunpack.c.l.b16 %v3762
      %v6458 = vunpack.c.l.b16 %v3763
      %v6459 = vunpack.c.l.b16 %v3764
      %v6460 = vunpack.c.l.b16 %v3765
      %v6461 = vunpack.c.l.b16 %v3766
      %v6462 = vunpack.c.l.b16 %v3767
      %v6463 = vunpack.c.l.b16 %v3768
      %v6464 = vunpack.c.l.b16 %v3769
      %v6465 = vunpack.c.l.b16 %v3770
      %v6466 = vunpack.c.l.b16 %v3771
      %v6467 = vunpack.c.l.b16 %v3772
      %v6468 = vunpack.c.l.b16 %v3773
      %v6469 = vunpack.c.l.b16 %v3774
      %v6470 = vunpack.c.l.b16 %v3775
      %v6471 = vunpack.c.l.b16 %v3776
      %v6472 = vunpack.c.l.b16 %v3777
      %v6473 = vunpack.c.l.b16 %v3778
      %v6474 = vunpack.c.l.b16 %v3779
      %v6475 = vunpack.c.l.b16 %v3780
      %v6476 = vunpack.c.l.b16 %v3781
      %v6477 = vunpack.c.l.b16 %v3782
      %v6478 = vunpack.c.l.b16 %v3783
      %v6479 = vunpack.c.l.b16 %v3784
      %v6480 = vunpack.c.l.b16 %v3785
      %v6481 = vunpack.c.l.b16 %v3786
      %v6482 = vunpack.c.l.b16 %v3787
      %v6483 = vunpack.c.l.b16 %v3788
      %v6484 = vunpack.c.l.b16 %v3789
      %v6485 = vunpack.c.l.b16 %v3790
      %v6486 = vunpack.c.l.b16 %v3791
      %v6487 = vunpack.c.l.b16 %v3792
      %v6488 = vunpack.c.l.b16 %v3793
      %v6489 = vunpack.c.l.b16 %v3794
      %v6490 = vunpack.c.l.b16 %v3795
      %v6491 = vunpack.c.l.b16 %v3796
      %v6492 = vunpack.c.l.b16 %v3797
      %v6493 = vunpack.c.l.b16 %v3798
      %v6494 = vunpack.c.l.b16 %v3799
      %v6495 = vunpack.c.l.b16 %v3800
      %v6496 = vunpack.c.l.b16 %v3801
      %v6497 = vunpack.c.l.b16 %v3802
      %v6498 = vunpack.c.l.b16 %v3803
      %v6499 = vunpack.c.l.b16 %v3804
      %v6500 = vunpack.c.l.b16 %v3805
      %v6501 = vunpack.c.l.b16 %v3806
      %v6502 = vunpack.c.l.b16 %v3807
      %v6503 = vunpack.c.l.b16 %v3808
      %v6504 = vunpack.c.l.b16 %v3809
      %v6505 = vunpack.c.l.b16 %v3810
      %v6506 = vunpack.c.l.b16 %v3811
      %v6507 = vunpack.c.l.b16 %v3812
      %v6508 = vunpack.c.l.b16 %v3813
      %v6509 = vunpack.c.l.b16 %v3814
      %v6510 = vunpack.c.l.b16 %v3815
      %v6511 = vunpack.c.l.b16 %v3816
      %v6512 = vunpack.c.l.b16 %v3817
      %v6513 = vunpack.c.l.b16 %v3818
      %v6514 = vunpack.c.l.b16 %v3819
      %v6515 = vunpack.c.l.b16 %v3820
      %v6516 = vunpack.c.l.b16 %v3821
      %v6517 = vunpack.c.l.b16 %v3822
      %v6518 = vunpack.c.l.b16 %v3823
      %v6519 = vunpack.c.l.b16 %v3824
      %v6520 = vunpack.c.l.b16 %v3825
      %v6521 = vunpack.c.l.b16 %v3826
      %v6522 = vunpack.c.l.b16 %v3827
      %v6523 = vunpack.c.l.b16 %v3828
      %v6524 = vunpack.c.l.b16 %v3829
      %v6525 = vunpack.c.l.b16 %v3830
      %v6526 = vunpack.c.l.b16 %v3831
      %v6527 = vunpack.c.l.b16 %v3832
      %v6528 = vunpack.c.l.b16 %v3833
      %v6529 = vunpack.c.l.b16 %v3834
      %v6530 = vunpack.c.l.b16 %v3835
      %v6531 = vunpack.c.l.b16 %v3836
      %v6532 = vunpack.c.l.b16 %v3837
      %v6533 = vunpack.c.l.b16 %v3838
      %v6534 = vunpack.c.l.b16 %v3839
      %v6535 = vunpack.c.l.b16 %v3840
      %v6536 = vunpack.c.l.b16 %v3841
      %v6537 = vunpack.c.l.b16 %v3842
      %v6538 = vunpack.c.l.b16 %v3843
      %v6539 = vunpack.c.l.b16 %v3844
      %v6540 = vunpack.c.l.b16 %v3845
      %v6541 = vunpack.c.l.b16 %v3846
      %v6542 = vunpack.c.l.b16 %v3847
      %v6543 = vunpack.c.l.b16 %v3848
      %v6544 = vunpack.c.l.b16 %v3849
      %v6545 = vunpack.c.l.b16 %v3850
      %v6546 = vunpack.c.l.b16 %v3851
      %v6547 = vunpack.c.l.b16 %v3852
      %v6548 = vunpack.c.l.b16 %v3853
      %v6549 = vunpack.c.l.b16 %v3854
      %v6550 = vunpack.c.l.b16 %v3855
      %v6551 = vunpack.c.l.b16 %v3856
      %v6552 = vunpack.c.l.b16 %v3857
      %v6553 = vunpack.c.l.b16 %v3858
      %v6554 = vunpack.c.l.b16 %v3859
      %v6555 = vunpack.c.l.b16 %v3860
      %v6556 = vunpack.c.l.b16 %v3861
      %v6557 = vunpack.c.l.b16 %v3862
      %v6558 = vunpack.c.l.b16 %v3863
      %v6559 = vunpack.c.l.b16 %v3864
      %v6560 = vunpack.c.l.b16 %v3865
      %v6561 = vunpack.c.l.b16 %v3866
      %v6562 = vunpack.c.l.b16 %v3867
      %v6563 = vunpack.c.l.b16 %v3868
      %v6564 = vunpack.c.l.b16 %v3869
      %v6565 = vunpack.c.l.b16 %v3870
      %v6566 = vunpack.c.l.b16 %v3871
      %v6567 = vunpack.c.l.b16 %v3872
      %v6568 = vunpack.c.l.b16 %v3873
      %v6569 = vunpack.c.l.b16 %v3874
      %v6570 = vunpack.c.l.b16 %v3875
      %v6571 = vunpack.c.l.b16 %v3876
      %v6572 = vunpack.c.l.b16 %v3877
      %v6573 = vunpack.c.l.b16 %v3878
      %v6574 = vunpack.c.l.b16 %v3879
      %v6575 = vunpack.c.l.b16 %v3880
      %v6576 = vunpack.c.l.b16 %v3881
      %v6577 = vunpack.c.l.b16 %v3882
      %v6578 = vunpack.c.l.b16 %v3883
      %v6579 = vunpack.c.l.b16 %v3884
      %v6580 = vunpack.c.l.b16 %v3885
      %v6581 = vunpack.c.l.b16 %v3886
      %v6582 = vunpack.c.l.b16 %v3887
      %v6583 = vunpack.c.l.b16 %v3888
      %v6584 = vunpack.c.l.b16 %v3889
      %v6585 = vunpack.c.l.b16 %v3890
      %v6586 = vunpack.c.l.b16 %v3891
      %v6587 = vunpack.c.l.b16 %v3892
      %v6588 = vunpack.c.l.b16 %v3893
      %v6589 = vunpack.c.l.b16 %v3894
      %v6590 = vunpack.c.l.b16 %v3895
      %v6591 = vunpack.c.l.b16 %v3896
      %v6592 = vunpack.c.l.b16 %v3897
      %v6593 = vunpack.c.l.b16 %v3898
      %v6594 = vunpack.c.l.b16 %v3899
      %v6595 = vunpack.c.l.b16 %v3900
      %v6596 = vunpack.c.l.b16 %v3901
      %v6597 = vunpack.c.l.b16 %v3902
      %v6598 = vunpack.c.l.b16 %v3903
      %v6599 = vunpack.c.l.b16 %v3904
      %v6600 = vunpack.c.l.b16 %v3905
      %v6601 = vunpack.c.l.b16 %v3906
      %v6602 = vunpack.c.l.b16 %v3907
      %v6603 = vunpack.c.l.b16 %v3908
      %v6604 = vunpack.c.l.b16 %v3909
      %v6605 = vunpack.c.l.b16 %v3910
      %v6606 = vunpack.c.l.b16 %v3911
      %v6607 = vunpack.c.l.b16 %v3912
      %v6608 = vunpack.c.l.b16 %v3913
      %v6609 = vunpack.c.l.b16 %v3914
      %v6610 = vunpack.c.l.b16 %v3915
      %v6611 = vunpack.c.l.b16 %v3916
      %v6612 = vunpack.c.l.b16 %v3917
      %v6613 = vunpack.c.l.b16 %v3918
      %v6614 = vunpack.c.l.b16 %v3919
      %v6615 = vunpack.c.l.b16 %v3920
      %v6616 = vunpack.c.l.b16 %v3921
      %v6617 = vunpack.c.l.b16 %v3922
      %v6618 = vunpack.c.l.b16 %v3923
      %v6619 = vunpack.c.l.b16 %v3924
      %v6620 = vunpack.c.l.b16 %v3925
      %v6621 = vunpack.c.l.b16 %v3926
      %v6622 = vunpack.c.l.b16 %v3927
      %v6623 = vunpack.c.l.b16 %v3928
      %v6624 = vunpack.c.l.b16 %v3929
      %v6625 = vunpack.c.l.b16 %v3930
      %v6626 = vunpack.c.l.b16 %v3931
      %v6627 = vunpack.c.l.b16 %v3932
      %v6628 = vunpack.c.l.b16 %v3933
      %v6629 = vunpack.c.l.b16 %v3934
      %v6630 = vunpack.c.l.b16 %v3935
      %v6631 = vunpack.c.l.b16 %v3936
      %v6632 = vunpack.c.l.b16 %v3937
      %v6633 = vunpack.c.l.b16 %v3938
      %v6634 = vunpack.c.l.b16 %v3939
      %v6635 = vunpack.c.l.b16 %v3940
      %v6636 = vunpack.c.l.b16 %v3941
      %v6637 = vunpack.c.l.b16 %v3942
      %v6638 = vunpack.c.l.b16 %v3943
      %v6639 = vpack.c.b16 %v6416, %v6415
      %v6640 = vpack.c.b16 %v6418, %v6417
      %v6641 = vpack.c.b16 %v6420, %v6419
      %v6642 = vpack.c.b16 %v6422, %v6421
      %v6643 = vpack.c.b16 %v6424, %v6423
      %v6644 = vpack.c.b16 %v6426, %v6425
      %v6645 = vpack.c.b16 %v6428, %v6427
      %v6646 = vpack.c.b16 %v6430, %v6429
      %v6647 = vpack.c.b16 %v6432, %v6431
      %v6648 = vpack.c.b16 %v6434, %v6433
      %v6649 = vpack.c.b16 %v6436, %v6435
      %v6650 = vpack.c.b16 %v6438, %v6437
      %v6651 = vpack.c.b16 %v6440, %v6439
      %v6652 = vpack.c.b16 %v6442, %v6441
      %v6653 = vpack.c.b16 %v6444, %v6443
      %v6654 = vpack.c.b16 %v6446, %v6445
      %v6655 = vpack.c.b16 %v6448, %v6447
      %v6656 = vpack.c.b16 %v6450, %v6449
      %v6657 = vpack.c.b16 %v6452, %v6451
      %v6658 = vpack.c.b16 %v6454, %v6453
      %v6659 = vpack.c.b16 %v6456, %v6455
      %v6660 = vpack.c.b16 %v6458, %v6457
      %v6661 = vpack.c.b16 %v6460, %v6459
      %v6662 = vpack.c.b16 %v6462, %v6461
      %v6663 = vpack.c.b16 %v6464, %v6463
      %v6664 = vpack.c.b16 %v6466, %v6465
      %v6665 = vpack.c.b16 %v6468, %v6467
      %v6666 = vpack.c.b16 %v6470, %v6469
      %v6667 = vpack.c.b16 %v6472, %v6471
      %v6668 = vpack.c.b16 %v6474, %v6473
      %v6669 = vpack.c.b16 %v6476, %v6475
      %v6670 = vpack.c.b16 %v6478, %v6477
      %v6671 = vpack.c.b16 %v6480, %v6479
      %v6672 = vpack.c.b16 %v6482, %v6481
      %v6673 = vpack.c.b16 %v6484, %v6483
      %v6674 = vpack.c.b16 %v6486, %v6485
      %v6675 = vpack.c.b16 %v6488, %v6487
      %v6676 = vpack.c.b16 %v6490, %v6489
      %v6677 = vpack.c.b16 %v6492, %v6491
      %v6678 = vpack.c.b16 %v6494, %v6493
      %v6679 = vpack.c.b16 %v6496, %v6495
      %v6680 = vpack.c.b16 %v6498, %v6497
      %v6681 = vpack.c.b16 %v6500, %v6499
      %v6682 = vpack.c.b16 %v6502, %v6501
      %v6683 = vpack.c.b16 %v6504, %v6503
      %v6684 = vpack.c.b16 %v6506, %v6505
      %v6685 = vpack.c.b16 %v6508, %v6507
      %v6686 = vpack.c.b16 %v6510, %v6509
      %v6687 = vpack.c.b16 %v6512, %v6511
      %v6688 = vpack.c.b16 %v6514, %v6513
      %v6689 = vpack.c.b16 %v6516, %v6515
      %v6690 = vpack.c.b16 %v6518, %v6517
      %v6691 = vpack.c.b16 %v6520, %v6519
      %v6692 = vpack.c.b16 %v6522, %v6521
      %v6693 = vpack.c.b16 %v6524, %v6523
      %v6694 = vpack.c.b16 %v6526, %v6525
      %v6695 = vpack.c.b16 %v6528, %v6527
      %v6696 = vpack.c.b16 %v6530, %v6529
      %v6697 = vpack.c.b16 %v6532, %v6531
      %v6698 = vpack.c.b16 %v6534, %v6533
      %v6699 = vpack.c.b16 %v6536, %v6535
      %v6700 = vpack.c.b16 %v6538, %v6537
      %v6701 = vpack.c.b16 %v6540, %v6539
      %v6702 = vpack.c.b16 %v6542, %v6541
      %v6703 = vpack.c.b16 %v6544, %v6543
      %v6704 = vpack.c.b16 %v6546, %v6545
      %v6705 = vpack.c.b16 %v6548, %v6547
      %v6706 = vpack.c.b16 %v6550, %v6549
      %v6707 = vpack.c.b16 %v6552, %v6551
      %v6708 = vpack.c.b16 %v6554, %v6553
      %v6709 = vpack.c.b16 %v6556, %v6555
      %v6710 = vpack.c.b16 %v6558, %v6557
      %v6711 = vpack.c.b16 %v6560, %v6559
      %v6712 = vpack.c.b16 %v6562, %v6561
      %v6713 = vpack.c.b16 %v6564, %v6563
      %v6714 = vpack.c.b16 %v6566, %v6565
      %v6715 = vpack.c.b16 %v6568, %v6567
      %v6716 = vpack.c.b16 %v6570, %v6569
      %v6717 = vpack.c.b16 %v6572, %v6571
      %v6718 = vpack.c.b16 %v6574, %v6573
      %v6719 = vpack.c.b16 %v6576, %v6575
      %v6720 = vpack.c.b16 %v6578, %v6577
      %v6721 = vpack.c.b16 %v6580, %v6579
      %v6722 = vpack.c.b16 %v6582, %v6581
      %v6723 = vpack.c.b16 %v6584, %v6583
      %v6724 = vpack.c.b16 %v6586, %v6585
      %v6725 = vpack.c.b16 %v6588, %v6587
      %v6726 = vpack.c.b16 %v6590, %v6589
      %v6727 = vpack.c.b16 %v6592, %v6591
      %v6728 = vpack.c.b16 %v6594, %v6593
      %v6729 = vpack.c.b16 %v6596, %v6595
      %v6730 = vpack.c.b16 %v6598, %v6597
      %v6731 = vpack.c.b16 %v6600, %v6599
      %v6732 = vpack.c.b16 %v6602, %v6601
      %v6733 = vpack.c.b16 %v6604, %v6603
      %v6734 = vpack.c.b16 %v6606, %v6605
      %v6735 = vpack.c.b16 %v6608, %v6607
      %v6736 = vpack.c.b16 %v6610, %v6609
      %v6737 = vpack.c.b16 %v6612, %v6611
      %v6738 = vpack.c.b16 %v6614, %v6613
      %v6739 = vpack.c.b16 %v6616, %v6615
      %v6740 = vpack.c.b16 %v6618, %v6617
      %v6741 = vpack.c.b16 %v6620, %v6619
      %v6742 = vpack.c.b16 %v6622, %v6621
      %v6743 = vpack.c.b16 %v6624, %v6623
      %v6744 = vpack.c.b16 %v6626, %v6625
      %v6745 = vpack.c.b16 %v6628, %v6627
      %v6746 = vpack.c.b16 %v6630, %v6629
      %v6747 = vpack.c.b16 %v6632, %v6631
      %v6748 = vpack.c.b16 %v6634, %v6633
      %v6749 = vpack.c.b16 %v6636, %v6635
      %v6750 = vpack.c.b16 %v6638, %v6637
      %6863 = vmatprep.subr.bf16.mxu0 0
      %6864 = vmatpush1.bf16.msra.mxu0 %v6646
      %6865 = vmatprep.subr.bf16.mxu0 0
      %6866 = vmatpush1.bf16.msra.mxu0 %v6645
      %6867 = vmatprep.subr.bf16.mxu0 0
      %6868 = vmatpush1.bf16.msra.mxu0 %v6644
      %6869 = vmatprep.subr.bf16.mxu0 0
      %6870 = vmatpush1.bf16.msra.mxu0 %v6643
      %6871 = vmatprep.subr.bf16.mxu0 0
      %6872 = vmatpush1.bf16.msra.mxu0 %v6642
      %6873 = vmatprep.subr.bf16.mxu0 0
      %6874 = vmatpush1.bf16.msra.mxu0 %v6641
      %6875 = vmatprep.subr.bf16.mxu0 0
      %6876 = vmatpush1.bf16.msra.mxu0 %v6640
      %6877 = vmatprep.subr.bf16.mxu0 0
      %6878 = vmatpush1.bf16.msra.mxu0 %v6639
      %6879 = vmatprep.subr.bf16.mxu0 0
      %6880 = vmatpush2.bf16.msra.mxu0 %v6654
      %6881 = vmatprep.subr.bf16.mxu0 0
      %6882 = vmatpush2.bf16.msra.mxu0 %v6653
      %6883 = vmatprep.subr.bf16.mxu0 0
      %6884 = vmatpush2.bf16.msra.mxu0 %v6652
      %6885 = vmatprep.subr.bf16.mxu0 0
      %6886 = vmatpush2.bf16.msra.mxu0 %v6651
      %6887 = vmatprep.subr.bf16.mxu0 0
      %6888 = vmatpush2.bf16.msra.mxu0 %v6650
      %6889 = vmatprep.subr.bf16.mxu0 0
      %6890 = vmatpush2.bf16.msra.mxu0 %v6649
      %6891 = vmatprep.subr.bf16.mxu0 0
      %6892 = vmatpush2.bf16.msra.mxu0 %v6648
      %6893 = vmatprep.subr.bf16.mxu0 0
      %6894 = vmatpush2.bf16.msra.mxu0 %v6647
      %6895 = vmatprep.mubr.bf16.mxu0 %v5296
      %6896 = vmatmul.mubr.bf16.gmra.mxu0 %v5295
      %v6897 = vpop.f32.mrf.mxu0
      %v6898 = vadd.f32 %v3949, %v6897
      %v6899 = vpop.f32.mrf.mxu0
      %v6900 = vpop.f32.mrf.mxu0
      %v6901 = vadd.f32 %v3949, %v6900
      %v6902 = vpop.f32.mrf.mxu0
      %6903 = vmatprep.mubr.bf16.mxu0 %v5310
      %6904 = vmatmul.mubr.bf16.gmra.mxu0 %v5309
      %v6905 = vpop.f32.mrf.mxu0
      %v6906 = vadd.f32 %v3949, %v6905
      %v6907 = vpop.f32.mrf.mxu0
      %v6908 = vpop.f32.mrf.mxu0
      %v6909 = vadd.f32 %v3949, %v6908
      %v6910 = vpop.f32.mrf.mxu0
      %6911 = vmatprep.mubr.bf16.mxu0 %v5324
      %6912 = vmatmul.mubr.bf16.gmra.mxu0 %v5323
      %v6913 = vpop.f32.mrf.mxu0
      %v6914 = vadd.f32 %v3949, %v6913
      %v6915 = vpop.f32.mrf.mxu0
      %v6916 = vpop.f32.mrf.mxu0
      %v6917 = vadd.f32 %v3949, %v6916
      %v6918 = vpop.f32.mrf.mxu0
      %6919 = vmatprep.mubr.bf16.mxu0 %v5338
      %6920 = vmatmul.mubr.bf16.gmra.mxu0 %v5337
      %v6921 = vpop.f32.mrf.mxu0
      %v6922 = vadd.f32 %v3949, %v6921
      %v6923 = vpop.f32.mrf.mxu0
      %v6924 = vpop.f32.mrf.mxu0
      %v6925 = vadd.f32 %v3949, %v6924
      %v6926 = vpop.f32.mrf.mxu0
      %6927 = vmatprep.mubr.bf16.mxu0 %v5352
      %6928 = vmatmul.mubr.bf16.gmra.mxu0 %v5351
      %v6929 = vpop.f32.mrf.mxu0
      %v6930 = vadd.f32 %v3949, %v6929
      %v6931 = vpop.f32.mrf.mxu0
      %v6932 = vpop.f32.mrf.mxu0
      %v6933 = vadd.f32 %v3949, %v6932
      %v6934 = vpop.f32.mrf.mxu0
      %6935 = vmatprep.mubr.bf16.mxu0 %v5366
      %6936 = vmatmul.mubr.bf16.gmra.mxu0 %v5365
      %v6937 = vpop.f32.mrf.mxu0
      %v6938 = vadd.f32 %v3949, %v6937
      %v6939 = vpop.f32.mrf.mxu0
      %v6940 = vpop.f32.mrf.mxu0
      %v6941 = vadd.f32 %v3949, %v6940
      %v6942 = vpop.f32.mrf.mxu0
      %6943 = vmatprep.mubr.bf16.mxu0 %v5380
      %6944 = vmatmul.mubr.bf16.gmra.mxu0 %v5379
      %v6945 = vpop.f32.mrf.mxu0
      %v6946 = vadd.f32 %v3949, %v6945
      %v6947 = vpop.f32.mrf.mxu0
      %v6948 = vpop.f32.mrf.mxu0
      %v6949 = vadd.f32 %v3949, %v6948
      %v6950 = vpop.f32.mrf.mxu0
      %6951 = vmatprep.mubr.bf16.mxu0 %v5394
      %6952 = vmatmul.mubr.bf16.gmra.mxu0 %v5393
      %v6953 = vpop.f32.mrf.mxu0
      %v6954 = vadd.f32 %v3949, %v6953
      %v6955 = vpop.f32.mrf.mxu0
      %v6956 = vpop.f32.mrf.mxu0
      %v6957 = vadd.f32 %v3949, %v6956
      %v6958 = vpop.f32.mrf.mxu0
      %6959 = vmatprep.mubr.bf16.mxu0 %v5408
      %6960 = vmatmul.mubr.bf16.gmra.mxu0 %v5407
      %v6961 = vpop.f32.mrf.mxu0
      %v6962 = vadd.f32 %v3949, %v6961
      %v6963 = vpop.f32.mrf.mxu0
      %v6964 = vpop.f32.mrf.mxu0
      %v6965 = vadd.f32 %v3949, %v6964
      %v6966 = vpop.f32.mrf.mxu0
      %6967 = vmatprep.mubr.bf16.mxu0 %v5422
      %6968 = vmatmul.mubr.bf16.gmra.mxu0 %v5421
      %v6969 = vpop.f32.mrf.mxu0
      %v6970 = vadd.f32 %v3949, %v6969
      %v6971 = vpop.f32.mrf.mxu0
      %v6972 = vpop.f32.mrf.mxu0
      %v6973 = vadd.f32 %v3949, %v6972
      %v6974 = vpop.f32.mrf.mxu0
      %6975 = vmatprep.mubr.bf16.mxu0 %v5436
      %6976 = vmatmul.mubr.bf16.gmra.mxu0 %v5435
      %v6977 = vpop.f32.mrf.mxu0
      %v6978 = vadd.f32 %v3949, %v6977
      %v6979 = vpop.f32.mrf.mxu0
      %v6980 = vpop.f32.mrf.mxu0
      %v6981 = vadd.f32 %v3949, %v6980
      %v6982 = vpop.f32.mrf.mxu0
      %6983 = vmatprep.mubr.bf16.mxu0 %v5450
      %6984 = vmatmul.mubr.bf16.gmra.mxu0 %v5449
      %v6985 = vpop.f32.mrf.mxu0
      %v6986 = vadd.f32 %v3949, %v6985
      %v6987 = vpop.f32.mrf.mxu0
      %v6988 = vpop.f32.mrf.mxu0
      %v6989 = vadd.f32 %v3949, %v6988
      %v6990 = vpop.f32.mrf.mxu0
      %6991 = vmatprep.mubr.bf16.mxu0 %v5464
      %6992 = vmatmul.mubr.bf16.gmra.mxu0 %v5463
      %v6993 = vpop.f32.mrf.mxu0
      %v6994 = vadd.f32 %v3949, %v6993
      %v6995 = vpop.f32.mrf.mxu0
      %v6996 = vpop.f32.mrf.mxu0
      %v6997 = vadd.f32 %v3949, %v6996
      %v6998 = vpop.f32.mrf.mxu0
      %6999 = vmatprep.mubr.bf16.mxu0 %v5478
      %7000 = vmatmul.mubr.bf16.gmra.mxu0 %v5477
      %v7001 = vpop.f32.mrf.mxu0
      %v7002 = vadd.f32 %v3949, %v7001
      %v7003 = vpop.f32.mrf.mxu0
      %v7004 = vpop.f32.mrf.mxu0
      %v7005 = vadd.f32 %v3949, %v7004
      %v7006 = vpop.f32.mrf.mxu0
      %7007 = vmatprep.mubr.bf16.mxu0 %v5492
      %7008 = vmatmul.mubr.bf16.gmra.mxu0 %v5491
      %v7009 = vpop.f32.mrf.mxu0
      %v7010 = vadd.f32 %v3949, %v7009
      %v7011 = vpop.f32.mrf.mxu0
      %v7012 = vpop.f32.mrf.mxu0
      %v7013 = vadd.f32 %v3949, %v7012
      %v7014 = vpop.f32.mrf.mxu0
      %7015 = vmatprep.mubr.bf16.mxu0 %v5506
      %7016 = vmatmul.mubr.bf16.gmra.mxu0 %v5505
      %v7017 = vpop.f32.mrf.mxu0
      %v7018 = vadd.f32 %v3949, %v7017
      %v7019 = vpop.f32.mrf.mxu0
      %v7020 = vpop.f32.mrf.mxu0
      %v7021 = vadd.f32 %v3949, %v7020
      %v7022 = vpop.f32.mrf.mxu0
      %7023 = vmatprep.mubr.bf16.mxu0 %v5520
      %7024 = vmatmul.mubr.bf16.gmra.mxu0 %v5519
      %v7025 = vpop.f32.mrf.mxu0
      %v7026 = vadd.f32 %v3949, %v7025
      %v7027 = vpop.f32.mrf.mxu0
      %v7028 = vpop.f32.mrf.mxu0
      %v7029 = vadd.f32 %v3949, %v7028
      %v7030 = vpop.f32.mrf.mxu0
      %7031 = vmatprep.mubr.bf16.mxu0 %v5534
      %7032 = vmatmul.mubr.bf16.gmra.mxu0 %v5533
      %v7033 = vpop.f32.mrf.mxu0
      %v7034 = vadd.f32 %v3949, %v7033
      %v7035 = vpop.f32.mrf.mxu0
      %v7036 = vpop.f32.mrf.mxu0
      %v7037 = vadd.f32 %v3949, %v7036
      %v7038 = vpop.f32.mrf.mxu0
      %7039 = vmatprep.mubr.bf16.mxu0 %v5548
      %7040 = vmatmul.mubr.bf16.gmra.mxu0 %v5547
      %v7041 = vpop.f32.mrf.mxu0
      %v7042 = vadd.f32 %v3949, %v7041
      %v7043 = vpop.f32.mrf.mxu0
      %v7044 = vpop.f32.mrf.mxu0
      %v7045 = vadd.f32 %v3949, %v7044
      %v7046 = vpop.f32.mrf.mxu0
      %7047 = vmatprep.mubr.bf16.mxu0 %v5562
      %7048 = vmatmul.mubr.bf16.gmra.mxu0 %v5561
      %v7049 = vpop.f32.mrf.mxu0
      %v7050 = vadd.f32 %v3949, %v7049
      %v7051 = vpop.f32.mrf.mxu0
      %v7052 = vpop.f32.mrf.mxu0
      %v7053 = vadd.f32 %v3949, %v7052
      %v7054 = vpop.f32.mrf.mxu0
      %7055 = vmatprep.mubr.bf16.mxu0 %v5576
      %7056 = vmatmul.mubr.bf16.gmra.mxu0 %v5575
      %v7057 = vpop.f32.mrf.mxu0
      %v7058 = vadd.f32 %v3949, %v7057
      %v7059 = vpop.f32.mrf.mxu0
      %v7060 = vpop.f32.mrf.mxu0
      %v7061 = vadd.f32 %v3949, %v7060
      %v7062 = vpop.f32.mrf.mxu0
      %7063 = vmatprep.mubr.bf16.mxu0 %v5590
      %7064 = vmatmul.mubr.bf16.gmra.mxu0 %v5589
      %v7065 = vpop.f32.mrf.mxu0
      %v7066 = vadd.f32 %v3949, %v7065
      %v7067 = vpop.f32.mrf.mxu0
      %v7068 = vpop.f32.mrf.mxu0
      %v7069 = vadd.f32 %v3949, %v7068
      %v7070 = vpop.f32.mrf.mxu0
      %7071 = vmatprep.mubr.bf16.mxu0 %v5604
      %7072 = vmatmul.mubr.bf16.gmra.mxu0 %v5603
      %v7073 = vpop.f32.mrf.mxu0
      %v7074 = vadd.f32 %v3949, %v7073
      %v7075 = vpop.f32.mrf.mxu0
      %v7076 = vpop.f32.mrf.mxu0
      %v7077 = vadd.f32 %v3949, %v7076
      %v7078 = vpop.f32.mrf.mxu0
      %7079 = vmatprep.mubr.bf16.mxu0 %v5618
      %7080 = vmatmul.mubr.bf16.gmra.mxu0 %v5617
      %v7081 = vpop.f32.mrf.mxu0
      %v7082 = vadd.f32 %v3949, %v7081
      %v7083 = vpop.f32.mrf.mxu0
      %v7084 = vpop.f32.mrf.mxu0
      %v7085 = vadd.f32 %v3949, %v7084
      %v7086 = vpop.f32.mrf.mxu0
      %7087 = vmatprep.mubr.bf16.mxu0 %v5632
      %7088 = vmatmul.mubr.bf16.gmra.mxu0 %v5631
      %v7089 = vpop.f32.mrf.mxu0
      %v7090 = vadd.f32 %v3949, %v7089
      %v7091 = vpop.f32.mrf.mxu0
      %v7092 = vpop.f32.mrf.mxu0
      %v7093 = vadd.f32 %v3949, %v7092
      %v7094 = vpop.f32.mrf.mxu0
      %7095 = vmatprep.mubr.bf16.mxu0 %v5646
      %7096 = vmatmul.mubr.bf16.gmra.mxu0 %v5645
      %v7097 = vpop.f32.mrf.mxu0
      %v7098 = vadd.f32 %v3949, %v7097
      %v7099 = vpop.f32.mrf.mxu0
      %v7100 = vpop.f32.mrf.mxu0
      %v7101 = vadd.f32 %v3949, %v7100
      %v7102 = vpop.f32.mrf.mxu0
      %7103 = vmatprep.mubr.bf16.mxu0 %v5660
      %7104 = vmatmul.mubr.bf16.gmra.mxu0 %v5659
      %v7105 = vpop.f32.mrf.mxu0
      %v7106 = vadd.f32 %v3949, %v7105
      %v7107 = vpop.f32.mrf.mxu0
      %v7108 = vpop.f32.mrf.mxu0
      %v7109 = vadd.f32 %v3949, %v7108
      %v7110 = vpop.f32.mrf.mxu0
      %7111 = vmatprep.mubr.bf16.mxu0 %v5674
      %7112 = vmatmul.mubr.bf16.gmra.mxu0 %v5673
      %v7113 = vpop.f32.mrf.mxu0
      %v7114 = vadd.f32 %v3949, %v7113
      %v7115 = vpop.f32.mrf.mxu0
      %v7116 = vpop.f32.mrf.mxu0
      %v7117 = vadd.f32 %v3949, %v7116
      %v7118 = vpop.f32.mrf.mxu0
      %7119 = vmatprep.mubr.bf16.mxu0 %v5688
      %7120 = vmatmul.mubr.bf16.gmra.mxu0 %v5687
      %v7121 = vpop.f32.mrf.mxu0
      %v7122 = vadd.f32 %v3949, %v7121
      %v7123 = vpop.f32.mrf.mxu0
      %v7124 = vpop.f32.mrf.mxu0
      %v7125 = vadd.f32 %v3949, %v7124
      %v7126 = vpop.f32.mrf.mxu0
      %7127 = vmatprep.mubr.bf16.mxu0 %v5702
      %7128 = vmatmul.mubr.bf16.gmra.mxu0 %v5701
      %v7129 = vpop.f32.mrf.mxu0
      %v7130 = vadd.f32 %v3949, %v7129
      %v7131 = vpop.f32.mrf.mxu0
      %v7132 = vpop.f32.mrf.mxu0
      %v7133 = vadd.f32 %v3949, %v7132
      %v7134 = vpop.f32.mrf.mxu0
      %7135 = vmatprep.mubr.bf16.mxu0 %v5716
      %7136 = vmatmul.mubr.bf16.gmra.mxu0 %v5715
      %v7137 = vpop.f32.mrf.mxu0
      %v7138 = vadd.f32 %v3949, %v7137
      %v7139 = vpop.f32.mrf.mxu0
      %v7140 = vpop.f32.mrf.mxu0
      %v7141 = vadd.f32 %v3949, %v7140
      %v7142 = vpop.f32.mrf.mxu0
      %7143 = vmatprep.mubr.bf16.mxu0 %v5730
      %7144 = vmatmul.mubr.bf16.gmra.mxu0 %v5729
      %v7145 = vpop.f32.mrf.mxu0
      %v7146 = vadd.f32 %v3949, %v7145
      %v7147 = vpop.f32.mrf.mxu0
      %v7148 = vpop.f32.mrf.mxu0
      %v7149 = vadd.f32 %v3949, %v7148
      %v7150 = vpop.f32.mrf.mxu0
      %7151 = vdwg.mxu0
      %7152 = vmatprep.subr.bf16.mxu0 0
      %7153 = vmatpush1.bf16.msra.mxu0 %v6662
      %7154 = vmatprep.subr.bf16.mxu0 0
      %7155 = vmatpush1.bf16.msra.mxu0 %v6661
      %7156 = vmatprep.subr.bf16.mxu0 0
      %7157 = vmatpush1.bf16.msra.mxu0 %v6660
      %7158 = vmatprep.subr.bf16.mxu0 0
      %7159 = vmatpush1.bf16.msra.mxu0 %v6659
      %7160 = vmatprep.subr.bf16.mxu0 0
      %7161 = vmatpush1.bf16.msra.mxu0 %v6658
      %7162 = vmatprep.subr.bf16.mxu0 0
      %7163 = vmatpush1.bf16.msra.mxu0 %v6657
      %7164 = vmatprep.subr.bf16.mxu0 0
      %7165 = vmatpush1.bf16.msra.mxu0 %v6656
      %7166 = vmatprep.subr.bf16.mxu0 0
      %7167 = vmatpush1.bf16.msra.mxu0 %v6655
      %7168 = vmatprep.subr.bf16.mxu0 0
      %7169 = vmatpush2.bf16.msra.mxu0 %v6670
      %7170 = vmatprep.subr.bf16.mxu0 0
      %7171 = vmatpush2.bf16.msra.mxu0 %v6669
      %7172 = vmatprep.subr.bf16.mxu0 0
      %7173 = vmatpush2.bf16.msra.mxu0 %v6668
      %7174 = vmatprep.subr.bf16.mxu0 0
      %7175 = vmatpush2.bf16.msra.mxu0 %v6667
      %7176 = vmatprep.subr.bf16.mxu0 0
      %7177 = vmatpush2.bf16.msra.mxu0 %v6666
      %7178 = vmatprep.subr.bf16.mxu0 0
      %7179 = vmatpush2.bf16.msra.mxu0 %v6665
      %7180 = vmatprep.subr.bf16.mxu0 0
      %7181 = vmatpush2.bf16.msra.mxu0 %v6664
      %7182 = vmatprep.subr.bf16.mxu0 0
      %7183 = vmatpush2.bf16.msra.mxu0 %v6663
      %7184 = vmatprep.mubr.bf16.mxu0 %v5298
      %7185 = vmatmul.mubr.bf16.gmra.mxu0 %v5297
      %v7186 = vpop.f32.mrf.mxu0
      %v7187 = vadd.f32 %v6898, %v7186
      %v7188 = vpop.f32.mrf.mxu0
      %v7189 = vpop.f32.mrf.mxu0
      %v7190 = vadd.f32 %v6901, %v7189
      %v7191 = vpop.f32.mrf.mxu0
      %7192 = vmatprep.mubr.bf16.mxu0 %v5312
      %7193 = vmatmul.mubr.bf16.gmra.mxu0 %v5311
      %v7194 = vpop.f32.mrf.mxu0
      %v7195 = vadd.f32 %v6906, %v7194
      %v7196 = vpop.f32.mrf.mxu0
      %v7197 = vpop.f32.mrf.mxu0
      %v7198 = vadd.f32 %v6909, %v7197
      %v7199 = vpop.f32.mrf.mxu0
      %7200 = vmatprep.mubr.bf16.mxu0 %v5326
      %7201 = vmatmul.mubr.bf16.gmra.mxu0 %v5325
      %v7202 = vpop.f32.mrf.mxu0
      %v7203 = vadd.f32 %v6914, %v7202
      %v7204 = vpop.f32.mrf.mxu0
      %v7205 = vpop.f32.mrf.mxu0
      %v7206 = vadd.f32 %v6917, %v7205
      %v7207 = vpop.f32.mrf.mxu0
      %7208 = vmatprep.mubr.bf16.mxu0 %v5340
      %7209 = vmatmul.mubr.bf16.gmra.mxu0 %v5339
      %v7210 = vpop.f32.mrf.mxu0
      %v7211 = vadd.f32 %v6922, %v7210
      %v7212 = vpop.f32.mrf.mxu0
      %v7213 = vpop.f32.mrf.mxu0
      %v7214 = vadd.f32 %v6925, %v7213
      %v7215 = vpop.f32.mrf.mxu0
      %7216 = vmatprep.mubr.bf16.mxu0 %v5354
      %7217 = vmatmul.mubr.bf16.gmra.mxu0 %v5353
      %v7218 = vpop.f32.mrf.mxu0
      %v7219 = vadd.f32 %v6930, %v7218
      %v7220 = vpop.f32.mrf.mxu0
      %v7221 = vpop.f32.mrf.mxu0
      %v7222 = vadd.f32 %v6933, %v7221
      %v7223 = vpop.f32.mrf.mxu0
      %7224 = vmatprep.mubr.bf16.mxu0 %v5368
      %7225 = vmatmul.mubr.bf16.gmra.mxu0 %v5367
      %v7226 = vpop.f32.mrf.mxu0
      %v7227 = vadd.f32 %v6938, %v7226
      %v7228 = vpop.f32.mrf.mxu0
      %v7229 = vpop.f32.mrf.mxu0
      %v7230 = vadd.f32 %v6941, %v7229
      %v7231 = vpop.f32.mrf.mxu0
      %7232 = vmatprep.mubr.bf16.mxu0 %v5382
      %7233 = vmatmul.mubr.bf16.gmra.mxu0 %v5381
      %v7234 = vpop.f32.mrf.mxu0
      %v7235 = vadd.f32 %v6946, %v7234
      %v7236 = vpop.f32.mrf.mxu0
      %v7237 = vpop.f32.mrf.mxu0
      %v7238 = vadd.f32 %v6949, %v7237
      %v7239 = vpop.f32.mrf.mxu0
      %7240 = vmatprep.mubr.bf16.mxu0 %v5396
      %7241 = vmatmul.mubr.bf16.gmra.mxu0 %v5395
      %v7242 = vpop.f32.mrf.mxu0
      %v7243 = vadd.f32 %v6954, %v7242
      %v7244 = vpop.f32.mrf.mxu0
      %v7245 = vpop.f32.mrf.mxu0
      %v7246 = vadd.f32 %v6957, %v7245
      %v7247 = vpop.f32.mrf.mxu0
      %7248 = vmatprep.mubr.bf16.mxu0 %v5410
      %7249 = vmatmul.mubr.bf16.gmra.mxu0 %v5409
      %v7250 = vpop.f32.mrf.mxu0
      %v7251 = vadd.f32 %v6962, %v7250
      %v7252 = vpop.f32.mrf.mxu0
      %v7253 = vpop.f32.mrf.mxu0
      %v7254 = vadd.f32 %v6965, %v7253
      %v7255 = vpop.f32.mrf.mxu0
      %7256 = vmatprep.mubr.bf16.mxu0 %v5424
      %7257 = vmatmul.mubr.bf16.gmra.mxu0 %v5423
      %v7258 = vpop.f32.mrf.mxu0
      %v7259 = vadd.f32 %v6970, %v7258
      %v7260 = vpop.f32.mrf.mxu0
      %v7261 = vpop.f32.mrf.mxu0
      %v7262 = vadd.f32 %v6973, %v7261
      %v7263 = vpop.f32.mrf.mxu0
      %7264 = vmatprep.mubr.bf16.mxu0 %v5438
      %7265 = vmatmul.mubr.bf16.gmra.mxu0 %v5437
      %v7266 = vpop.f32.mrf.mxu0
      %v7267 = vadd.f32 %v6978, %v7266
      %v7268 = vpop.f32.mrf.mxu0
      %v7269 = vpop.f32.mrf.mxu0
      %v7270 = vadd.f32 %v6981, %v7269
      %v7271 = vpop.f32.mrf.mxu0
      %7272 = vmatprep.mubr.bf16.mxu0 %v5452
      %7273 = vmatmul.mubr.bf16.gmra.mxu0 %v5451
      %v7274 = vpop.f32.mrf.mxu0
      %v7275 = vadd.f32 %v6986, %v7274
      %v7276 = vpop.f32.mrf.mxu0
      %v7277 = vpop.f32.mrf.mxu0
      %v7278 = vadd.f32 %v6989, %v7277
      %v7279 = vpop.f32.mrf.mxu0
      %7280 = vmatprep.mubr.bf16.mxu0 %v5466
      %7281 = vmatmul.mubr.bf16.gmra.mxu0 %v5465
      %v7282 = vpop.f32.mrf.mxu0
      %v7283 = vadd.f32 %v6994, %v7282
      %v7284 = vpop.f32.mrf.mxu0
      %v7285 = vpop.f32.mrf.mxu0
      %v7286 = vadd.f32 %v6997, %v7285
      %v7287 = vpop.f32.mrf.mxu0
      %7288 = vmatprep.mubr.bf16.mxu0 %v5480
      %7289 = vmatmul.mubr.bf16.gmra.mxu0 %v5479
      %v7290 = vpop.f32.mrf.mxu0
      %v7291 = vadd.f32 %v7002, %v7290
      %v7292 = vpop.f32.mrf.mxu0
      %v7293 = vpop.f32.mrf.mxu0
      %v7294 = vadd.f32 %v7005, %v7293
      %v7295 = vpop.f32.mrf.mxu0
      %7296 = vmatprep.mubr.bf16.mxu0 %v5494
      %7297 = vmatmul.mubr.bf16.gmra.mxu0 %v5493
      %v7298 = vpop.f32.mrf.mxu0
      %v7299 = vadd.f32 %v7010, %v7298
      %v7300 = vpop.f32.mrf.mxu0
      %v7301 = vpop.f32.mrf.mxu0
      %v7302 = vadd.f32 %v7013, %v7301
      %v7303 = vpop.f32.mrf.mxu0
      %7304 = vmatprep.mubr.bf16.mxu0 %v5508
      %7305 = vmatmul.mubr.bf16.gmra.mxu0 %v5507
      %v7306 = vpop.f32.mrf.mxu0
      %v7307 = vadd.f32 %v7018, %v7306
      %v7308 = vpop.f32.mrf.mxu0
      %v7309 = vpop.f32.mrf.mxu0
      %v7310 = vadd.f32 %v7021, %v7309
      %v7311 = vpop.f32.mrf.mxu0
      %7312 = vmatprep.mubr.bf16.mxu0 %v5522
      %7313 = vmatmul.mubr.bf16.gmra.mxu0 %v5521
      %v7314 = vpop.f32.mrf.mxu0
      %v7315 = vadd.f32 %v7026, %v7314
      %v7316 = vpop.f32.mrf.mxu0
      %v7317 = vpop.f32.mrf.mxu0
      %v7318 = vadd.f32 %v7029, %v7317
      %v7319 = vpop.f32.mrf.mxu0
      %7320 = vmatprep.mubr.bf16.mxu0 %v5536
      %7321 = vmatmul.mubr.bf16.gmra.mxu0 %v5535
      %v7322 = vpop.f32.mrf.mxu0
      %v7323 = vadd.f32 %v7034, %v7322
      %v7324 = vpop.f32.mrf.mxu0
      %v7325 = vpop.f32.mrf.mxu0
      %v7326 = vadd.f32 %v7037, %v7325
      %v7327 = vpop.f32.mrf.mxu0
      %7328 = vmatprep.mubr.bf16.mxu0 %v5550
      %7329 = vmatmul.mubr.bf16.gmra.mxu0 %v5549
      %v7330 = vpop.f32.mrf.mxu0
      %v7331 = vadd.f32 %v7042, %v7330
      %v7332 = vpop.f32.mrf.mxu0
      %v7333 = vpop.f32.mrf.mxu0
      %v7334 = vadd.f32 %v7045, %v7333
      %v7335 = vpop.f32.mrf.mxu0
      %7336 = vmatprep.mubr.bf16.mxu0 %v5564
      %7337 = vmatmul.mubr.bf16.gmra.mxu0 %v5563
      %v7338 = vpop.f32.mrf.mxu0
      %v7339 = vadd.f32 %v7050, %v7338
      %v7340 = vpop.f32.mrf.mxu0
      %v7341 = vpop.f32.mrf.mxu0
      %v7342 = vadd.f32 %v7053, %v7341
      %v7343 = vpop.f32.mrf.mxu0
      %7344 = vmatprep.mubr.bf16.mxu0 %v5578
      %7345 = vmatmul.mubr.bf16.gmra.mxu0 %v5577
      %v7346 = vpop.f32.mrf.mxu0
      %v7347 = vadd.f32 %v7058, %v7346
      %v7348 = vpop.f32.mrf.mxu0
      %v7349 = vpop.f32.mrf.mxu0
      %v7350 = vadd.f32 %v7061, %v7349
      %v7351 = vpop.f32.mrf.mxu0
      %7352 = vmatprep.mubr.bf16.mxu0 %v5592
      %7353 = vmatmul.mubr.bf16.gmra.mxu0 %v5591
      %v7354 = vpop.f32.mrf.mxu0
      %v7355 = vadd.f32 %v7066, %v7354
      %v7356 = vpop.f32.mrf.mxu0
      %v7357 = vpop.f32.mrf.mxu0
      %v7358 = vadd.f32 %v7069, %v7357
      %v7359 = vpop.f32.mrf.mxu0
      %7360 = vmatprep.mubr.bf16.mxu0 %v5606
      %7361 = vmatmul.mubr.bf16.gmra.mxu0 %v5605
      %v7362 = vpop.f32.mrf.mxu0
      %v7363 = vadd.f32 %v7074, %v7362
      %v7364 = vpop.f32.mrf.mxu0
      %v7365 = vpop.f32.mrf.mxu0
      %v7366 = vadd.f32 %v7077, %v7365
      %v7367 = vpop.f32.mrf.mxu0
      %7368 = vmatprep.mubr.bf16.mxu0 %v5620
      %7369 = vmatmul.mubr.bf16.gmra.mxu0 %v5619
      %v7370 = vpop.f32.mrf.mxu0
      %v7371 = vadd.f32 %v7082, %v7370
      %v7372 = vpop.f32.mrf.mxu0
      %v7373 = vpop.f32.mrf.mxu0
      %v7374 = vadd.f32 %v7085, %v7373
      %v7375 = vpop.f32.mrf.mxu0
      %7376 = vmatprep.mubr.bf16.mxu0 %v5634
      %7377 = vmatmul.mubr.bf16.gmra.mxu0 %v5633
      %v7378 = vpop.f32.mrf.mxu0
      %v7379 = vadd.f32 %v7090, %v7378
      %v7380 = vpop.f32.mrf.mxu0
      %v7381 = vpop.f32.mrf.mxu0
      %v7382 = vadd.f32 %v7093, %v7381
      %v7383 = vpop.f32.mrf.mxu0
      %7384 = vmatprep.mubr.bf16.mxu0 %v5648
      %7385 = vmatmul.mubr.bf16.gmra.mxu0 %v5647
      %v7386 = vpop.f32.mrf.mxu0
      %v7387 = vadd.f32 %v7098, %v7386
      %v7388 = vpop.f32.mrf.mxu0
      %v7389 = vpop.f32.mrf.mxu0
      %v7390 = vadd.f32 %v7101, %v7389
      %v7391 = vpop.f32.mrf.mxu0
      %7392 = vmatprep.mubr.bf16.mxu0 %v5662
      %7393 = vmatmul.mubr.bf16.gmra.mxu0 %v5661
      %v7394 = vpop.f32.mrf.mxu0
      %v7395 = vadd.f32 %v7106, %v7394
      %v7396 = vpop.f32.mrf.mxu0
      %v7397 = vpop.f32.mrf.mxu0
      %v7398 = vadd.f32 %v7109, %v7397
      %v7399 = vpop.f32.mrf.mxu0
      %7400 = vmatprep.mubr.bf16.mxu0 %v5676
      %7401 = vmatmul.mubr.bf16.gmra.mxu0 %v5675
      %v7402 = vpop.f32.mrf.mxu0
      %v7403 = vadd.f32 %v7114, %v7402
      %v7404 = vpop.f32.mrf.mxu0
      %v7405 = vpop.f32.mrf.mxu0
      %v7406 = vadd.f32 %v7117, %v7405
      %v7407 = vpop.f32.mrf.mxu0
      %7408 = vmatprep.mubr.bf16.mxu0 %v5690
      %7409 = vmatmul.mubr.bf16.gmra.mxu0 %v5689
      %v7410 = vpop.f32.mrf.mxu0
      %v7411 = vadd.f32 %v7122, %v7410
      %v7412 = vpop.f32.mrf.mxu0
      %v7413 = vpop.f32.mrf.mxu0
      %v7414 = vadd.f32 %v7125, %v7413
      %v7415 = vpop.f32.mrf.mxu0
      %7416 = vmatprep.mubr.bf16.mxu0 %v5704
      %7417 = vmatmul.mubr.bf16.gmra.mxu0 %v5703
      %v7418 = vpop.f32.mrf.mxu0
      %v7419 = vadd.f32 %v7130, %v7418
      %v7420 = vpop.f32.mrf.mxu0
      %v7421 = vpop.f32.mrf.mxu0
      %v7422 = vadd.f32 %v7133, %v7421
      %v7423 = vpop.f32.mrf.mxu0
      %7424 = vmatprep.mubr.bf16.mxu0 %v5718
      %7425 = vmatmul.mubr.bf16.gmra.mxu0 %v5717
      %v7426 = vpop.f32.mrf.mxu0
      %v7427 = vadd.f32 %v7138, %v7426
      %v7428 = vpop.f32.mrf.mxu0
      %v7429 = vpop.f32.mrf.mxu0
      %v7430 = vadd.f32 %v7141, %v7429
      %v7431 = vpop.f32.mrf.mxu0
      %7432 = vmatprep.mubr.bf16.mxu0 %v5732
      %7433 = vmatmul.mubr.bf16.gmra.mxu0 %v5731
      %v7434 = vpop.f32.mrf.mxu0
      %v7435 = vadd.f32 %v7146, %v7434
      %v7436 = vpop.f32.mrf.mxu0
      %v7437 = vpop.f32.mrf.mxu0
      %v7438 = vadd.f32 %v7149, %v7437
      %v7439 = vpop.f32.mrf.mxu0
      %7440 = vdwg.mxu0
      %7441 = vmatprep.subr.bf16.mxu0 0
      %7442 = vmatpush1.bf16.msra.mxu0 %v6678
      %7443 = vmatprep.subr.bf16.mxu0 0
      %7444 = vmatpush1.bf16.msra.mxu0 %v6677
      %7445 = vmatprep.subr.bf16.mxu0 0
      %7446 = vmatpush1.bf16.msra.mxu0 %v6676
      %7447 = vmatprep.subr.bf16.mxu0 0
      %7448 = vmatpush1.bf16.msra.mxu0 %v6675
      %7449 = vmatprep.subr.bf16.mxu0 0
      %7450 = vmatpush1.bf16.msra.mxu0 %v6674
      %7451 = vmatprep.subr.bf16.mxu0 0
      %7452 = vmatpush1.bf16.msra.mxu0 %v6673
      %7453 = vmatprep.subr.bf16.mxu0 0
      %7454 = vmatpush1.bf16.msra.mxu0 %v6672
      %7455 = vmatprep.subr.bf16.mxu0 0
      %7456 = vmatpush1.bf16.msra.mxu0 %v6671
      %7457 = vmatprep.subr.bf16.mxu0 0
      %7458 = vmatpush2.bf16.msra.mxu0 %v6686
      %7459 = vmatprep.subr.bf16.mxu0 0
      %7460 = vmatpush2.bf16.msra.mxu0 %v6685
      %7461 = vmatprep.subr.bf16.mxu0 0
      %7462 = vmatpush2.bf16.msra.mxu0 %v6684
      %7463 = vmatprep.subr.bf16.mxu0 0
      %7464 = vmatpush2.bf16.msra.mxu0 %v6683
      %7465 = vmatprep.subr.bf16.mxu0 0
      %7466 = vmatpush2.bf16.msra.mxu0 %v6682
      %7467 = vmatprep.subr.bf16.mxu0 0
      %7468 = vmatpush2.bf16.msra.mxu0 %v6681
      %7469 = vmatprep.subr.bf16.mxu0 0
      %7470 = vmatpush2.bf16.msra.mxu0 %v6680
      %7471 = vmatprep.subr.bf16.mxu0 0
      %7472 = vmatpush2.bf16.msra.mxu0 %v6679
      %7473 = vmatprep.mubr.bf16.mxu0 %v5300
      %7474 = vmatmul.mubr.bf16.gmra.mxu0 %v5299
      %v7475 = vpop.f32.mrf.mxu0
      %v7476 = vadd.f32 %v7187, %v7475
      %v7477 = vpop.f32.mrf.mxu0
      %v7478 = vpop.f32.mrf.mxu0
      %v7479 = vadd.f32 %v7190, %v7478
      %v7480 = vpop.f32.mrf.mxu0
      %7481 = vmatprep.mubr.bf16.mxu0 %v5314
      %7482 = vmatmul.mubr.bf16.gmra.mxu0 %v5313
      %v7483 = vpop.f32.mrf.mxu0
      %v7484 = vadd.f32 %v7195, %v7483
      %v7485 = vpop.f32.mrf.mxu0
      %v7486 = vpop.f32.mrf.mxu0
      %v7487 = vadd.f32 %v7198, %v7486
      %v7488 = vpop.f32.mrf.mxu0
      %7489 = vmatprep.mubr.bf16.mxu0 %v5328
      %7490 = vmatmul.mubr.bf16.gmra.mxu0 %v5327
      %v7491 = vpop.f32.mrf.mxu0
      %v7492 = vadd.f32 %v7203, %v7491
      %v7493 = vpop.f32.mrf.mxu0
      %v7494 = vpop.f32.mrf.mxu0
      %v7495 = vadd.f32 %v7206, %v7494
      %v7496 = vpop.f32.mrf.mxu0
      %7497 = vmatprep.mubr.bf16.mxu0 %v5342
      %7498 = vmatmul.mubr.bf16.gmra.mxu0 %v5341
      %v7499 = vpop.f32.mrf.mxu0
      %v7500 = vadd.f32 %v7211, %v7499
      %v7501 = vpop.f32.mrf.mxu0
      %v7502 = vpop.f32.mrf.mxu0
      %v7503 = vadd.f32 %v7214, %v7502
      %v7504 = vpop.f32.mrf.mxu0
      %7505 = vmatprep.mubr.bf16.mxu0 %v5356
      %7506 = vmatmul.mubr.bf16.gmra.mxu0 %v5355
      %v7507 = vpop.f32.mrf.mxu0
      %v7508 = vadd.f32 %v7219, %v7507
      %v7509 = vpop.f32.mrf.mxu0
      %v7510 = vpop.f32.mrf.mxu0
      %v7511 = vadd.f32 %v7222, %v7510
      %v7512 = vpop.f32.mrf.mxu0
      %7513 = vmatprep.mubr.bf16.mxu0 %v5370
      %7514 = vmatmul.mubr.bf16.gmra.mxu0 %v5369
      %v7515 = vpop.f32.mrf.mxu0
      %v7516 = vadd.f32 %v7227, %v7515
      %v7517 = vpop.f32.mrf.mxu0
      %v7518 = vpop.f32.mrf.mxu0
      %v7519 = vadd.f32 %v7230, %v7518
      %v7520 = vpop.f32.mrf.mxu0
      %7521 = vmatprep.mubr.bf16.mxu0 %v5384
      %7522 = vmatmul.mubr.bf16.gmra.mxu0 %v5383
      %v7523 = vpop.f32.mrf.mxu0
      %v7524 = vadd.f32 %v7235, %v7523
      %v7525 = vpop.f32.mrf.mxu0
      %v7526 = vpop.f32.mrf.mxu0
      %v7527 = vadd.f32 %v7238, %v7526
      %v7528 = vpop.f32.mrf.mxu0
      %7529 = vmatprep.mubr.bf16.mxu0 %v5398
      %7530 = vmatmul.mubr.bf16.gmra.mxu0 %v5397
      %v7531 = vpop.f32.mrf.mxu0
      %v7532 = vadd.f32 %v7243, %v7531
      %v7533 = vpop.f32.mrf.mxu0
      %v7534 = vpop.f32.mrf.mxu0
      %v7535 = vadd.f32 %v7246, %v7534
      %v7536 = vpop.f32.mrf.mxu0
      %7537 = vmatprep.mubr.bf16.mxu0 %v5412
      %7538 = vmatmul.mubr.bf16.gmra.mxu0 %v5411
      %v7539 = vpop.f32.mrf.mxu0
      %v7540 = vadd.f32 %v7251, %v7539
      %v7541 = vpop.f32.mrf.mxu0
      %v7542 = vpop.f32.mrf.mxu0
      %v7543 = vadd.f32 %v7254, %v7542
      %v7544 = vpop.f32.mrf.mxu0
      %7545 = vmatprep.mubr.bf16.mxu0 %v5426
      %7546 = vmatmul.mubr.bf16.gmra.mxu0 %v5425
      %v7547 = vpop.f32.mrf.mxu0
      %v7548 = vadd.f32 %v7259, %v7547
      %v7549 = vpop.f32.mrf.mxu0
      %v7550 = vpop.f32.mrf.mxu0
      %v7551 = vadd.f32 %v7262, %v7550
      %v7552 = vpop.f32.mrf.mxu0
      %7553 = vmatprep.mubr.bf16.mxu0 %v5440
      %7554 = vmatmul.mubr.bf16.gmra.mxu0 %v5439
      %v7555 = vpop.f32.mrf.mxu0
      %v7556 = vadd.f32 %v7267, %v7555
      %v7557 = vpop.f32.mrf.mxu0
      %v7558 = vpop.f32.mrf.mxu0
      %v7559 = vadd.f32 %v7270, %v7558
      %v7560 = vpop.f32.mrf.mxu0
      %7561 = vmatprep.mubr.bf16.mxu0 %v5454
      %7562 = vmatmul.mubr.bf16.gmra.mxu0 %v5453
      %v7563 = vpop.f32.mrf.mxu0
      %v7564 = vadd.f32 %v7275, %v7563
      %v7565 = vpop.f32.mrf.mxu0
      %v7566 = vpop.f32.mrf.mxu0
      %v7567 = vadd.f32 %v7278, %v7566
      %v7568 = vpop.f32.mrf.mxu0
      %7569 = vmatprep.mubr.bf16.mxu0 %v5468
      %7570 = vmatmul.mubr.bf16.gmra.mxu0 %v5467
      %v7571 = vpop.f32.mrf.mxu0
      %v7572 = vadd.f32 %v7283, %v7571
      %v7573 = vpop.f32.mrf.mxu0
      %v7574 = vpop.f32.mrf.mxu0
      %v7575 = vadd.f32 %v7286, %v7574
      %v7576 = vpop.f32.mrf.mxu0
      %7577 = vmatprep.mubr.bf16.mxu0 %v5482
      %7578 = vmatmul.mubr.bf16.gmra.mxu0 %v5481
      %v7579 = vpop.f32.mrf.mxu0
      %v7580 = vadd.f32 %v7291, %v7579
      %v7581 = vpop.f32.mrf.mxu0
      %v7582 = vpop.f32.mrf.mxu0
      %v7583 = vadd.f32 %v7294, %v7582
      %v7584 = vpop.f32.mrf.mxu0
      %7585 = vmatprep.mubr.bf16.mxu0 %v5496
      %7586 = vmatmul.mubr.bf16.gmra.mxu0 %v5495
      %v7587 = vpop.f32.mrf.mxu0
      %v7588 = vadd.f32 %v7299, %v7587
      %v7589 = vpop.f32.mrf.mxu0
      %v7590 = vpop.f32.mrf.mxu0
      %v7591 = vadd.f32 %v7302, %v7590
      %v7592 = vpop.f32.mrf.mxu0
      %7593 = vmatprep.mubr.bf16.mxu0 %v5510
      %7594 = vmatmul.mubr.bf16.gmra.mxu0 %v5509
      %v7595 = vpop.f32.mrf.mxu0
      %v7596 = vadd.f32 %v7307, %v7595
      %v7597 = vpop.f32.mrf.mxu0
      %v7598 = vpop.f32.mrf.mxu0
      %v7599 = vadd.f32 %v7310, %v7598
      %v7600 = vpop.f32.mrf.mxu0
      %7601 = vmatprep.mubr.bf16.mxu0 %v5524
      %7602 = vmatmul.mubr.bf16.gmra.mxu0 %v5523
      %v7603 = vpop.f32.mrf.mxu0
      %v7604 = vadd.f32 %v7315, %v7603
      %v7605 = vpop.f32.mrf.mxu0
      %v7606 = vpop.f32.mrf.mxu0
      %v7607 = vadd.f32 %v7318, %v7606
      %v7608 = vpop.f32.mrf.mxu0
      %7609 = vmatprep.mubr.bf16.mxu0 %v5538
      %7610 = vmatmul.mubr.bf16.gmra.mxu0 %v5537
      %v7611 = vpop.f32.mrf.mxu0
      %v7612 = vadd.f32 %v7323, %v7611
      %v7613 = vpop.f32.mrf.mxu0
      %v7614 = vpop.f32.mrf.mxu0
      %v7615 = vadd.f32 %v7326, %v7614
      %v7616 = vpop.f32.mrf.mxu0
      %7617 = vmatprep.mubr.bf16.mxu0 %v5552
      %7618 = vmatmul.mubr.bf16.gmra.mxu0 %v5551
      %v7619 = vpop.f32.mrf.mxu0
      %v7620 = vadd.f32 %v7331, %v7619
      %v7621 = vpop.f32.mrf.mxu0
      %v7622 = vpop.f32.mrf.mxu0
      %v7623 = vadd.f32 %v7334, %v7622
      %v7624 = vpop.f32.mrf.mxu0
      %7625 = vmatprep.mubr.bf16.mxu0 %v5566
      %7626 = vmatmul.mubr.bf16.gmra.mxu0 %v5565
      %v7627 = vpop.f32.mrf.mxu0
      %v7628 = vadd.f32 %v7339, %v7627
      %v7629 = vpop.f32.mrf.mxu0
      %v7630 = vpop.f32.mrf.mxu0
      %v7631 = vadd.f32 %v7342, %v7630
      %v7632 = vpop.f32.mrf.mxu0
      %7633 = vmatprep.mubr.bf16.mxu0 %v5580
      %7634 = vmatmul.mubr.bf16.gmra.mxu0 %v5579
      %v7635 = vpop.f32.mrf.mxu0
      %v7636 = vadd.f32 %v7347, %v7635
      %v7637 = vpop.f32.mrf.mxu0
      %v7638 = vpop.f32.mrf.mxu0
      %v7639 = vadd.f32 %v7350, %v7638
      %v7640 = vpop.f32.mrf.mxu0
      %7641 = vmatprep.mubr.bf16.mxu0 %v5594
      %7642 = vmatmul.mubr.bf16.gmra.mxu0 %v5593
      %v7643 = vpop.f32.mrf.mxu0
      %v7644 = vadd.f32 %v7355, %v7643
      %v7645 = vpop.f32.mrf.mxu0
      %v7646 = vpop.f32.mrf.mxu0
      %v7647 = vadd.f32 %v7358, %v7646
      %v7648 = vpop.f32.mrf.mxu0
      %7649 = vmatprep.mubr.bf16.mxu0 %v5608
      %7650 = vmatmul.mubr.bf16.gmra.mxu0 %v5607
      %v7651 = vpop.f32.mrf.mxu0
      %v7652 = vadd.f32 %v7363, %v7651
      %v7653 = vpop.f32.mrf.mxu0
      %v7654 = vpop.f32.mrf.mxu0
      %v7655 = vadd.f32 %v7366, %v7654
      %v7656 = vpop.f32.mrf.mxu0
      %7657 = vmatprep.mubr.bf16.mxu0 %v5622
      %7658 = vmatmul.mubr.bf16.gmra.mxu0 %v5621
      %v7659 = vpop.f32.mrf.mxu0
      %v7660 = vadd.f32 %v7371, %v7659
      %v7661 = vpop.f32.mrf.mxu0
      %v7662 = vpop.f32.mrf.mxu0
      %v7663 = vadd.f32 %v7374, %v7662
      %v7664 = vpop.f32.mrf.mxu0
      %7665 = vmatprep.mubr.bf16.mxu0 %v5636
      %7666 = vmatmul.mubr.bf16.gmra.mxu0 %v5635
      %v7667 = vpop.f32.mrf.mxu0
      %v7668 = vadd.f32 %v7379, %v7667
      %v7669 = vpop.f32.mrf.mxu0
      %v7670 = vpop.f32.mrf.mxu0
      %v7671 = vadd.f32 %v7382, %v7670
      %v7672 = vpop.f32.mrf.mxu0
      %7673 = vmatprep.mubr.bf16.mxu0 %v5650
      %7674 = vmatmul.mubr.bf16.gmra.mxu0 %v5649
      %v7675 = vpop.f32.mrf.mxu0
      %v7676 = vadd.f32 %v7387, %v7675
      %v7677 = vpop.f32.mrf.mxu0
      %v7678 = vpop.f32.mrf.mxu0
      %v7679 = vadd.f32 %v7390, %v7678
      %v7680 = vpop.f32.mrf.mxu0
      %7681 = vmatprep.mubr.bf16.mxu0 %v5664
      %7682 = vmatmul.mubr.bf16.gmra.mxu0 %v5663
      %v7683 = vpop.f32.mrf.mxu0
      %v7684 = vadd.f32 %v7395, %v7683
      %v7685 = vpop.f32.mrf.mxu0
      %v7686 = vpop.f32.mrf.mxu0
      %v7687 = vadd.f32 %v7398, %v7686
      %v7688 = vpop.f32.mrf.mxu0
      %7689 = vmatprep.mubr.bf16.mxu0 %v5678
      %7690 = vmatmul.mubr.bf16.gmra.mxu0 %v5677
      %v7691 = vpop.f32.mrf.mxu0
      %v7692 = vadd.f32 %v7403, %v7691
      %v7693 = vpop.f32.mrf.mxu0
      %v7694 = vpop.f32.mrf.mxu0
      %v7695 = vadd.f32 %v7406, %v7694
      %v7696 = vpop.f32.mrf.mxu0
      %7697 = vmatprep.mubr.bf16.mxu0 %v5692
      %7698 = vmatmul.mubr.bf16.gmra.mxu0 %v5691
      %v7699 = vpop.f32.mrf.mxu0
      %v7700 = vadd.f32 %v7411, %v7699
      %v7701 = vpop.f32.mrf.mxu0
      %v7702 = vpop.f32.mrf.mxu0
      %v7703 = vadd.f32 %v7414, %v7702
      %v7704 = vpop.f32.mrf.mxu0
      %7705 = vmatprep.mubr.bf16.mxu0 %v5706
      %7706 = vmatmul.mubr.bf16.gmra.mxu0 %v5705
      %v7707 = vpop.f32.mrf.mxu0
      %v7708 = vadd.f32 %v7419, %v7707
      %v7709 = vpop.f32.mrf.mxu0
      %v7710 = vpop.f32.mrf.mxu0
      %v7711 = vadd.f32 %v7422, %v7710
      %v7712 = vpop.f32.mrf.mxu0
      %7713 = vmatprep.mubr.bf16.mxu0 %v5720
      %7714 = vmatmul.mubr.bf16.gmra.mxu0 %v5719
      %v7715 = vpop.f32.mrf.mxu0
      %v7716 = vadd.f32 %v7427, %v7715
      %v7717 = vpop.f32.mrf.mxu0
      %v7718 = vpop.f32.mrf.mxu0
      %v7719 = vadd.f32 %v7430, %v7718
      %v7720 = vpop.f32.mrf.mxu0
      %7721 = vmatprep.mubr.bf16.mxu0 %v5734
      %7722 = vmatmul.mubr.bf16.gmra.mxu0 %v5733
      %v7723 = vpop.f32.mrf.mxu0
      %v7724 = vadd.f32 %v7435, %v7723
      %v7725 = vpop.f32.mrf.mxu0
      %v7726 = vpop.f32.mrf.mxu0
      %v7727 = vadd.f32 %v7438, %v7726
      %v7728 = vpop.f32.mrf.mxu0
      %7729 = vdwg.mxu0
      %7730 = vmatprep.subr.bf16.mxu0 0
      %7731 = vmatpush1.bf16.msra.mxu0 %v6694
      %7732 = vmatprep.subr.bf16.mxu0 0
      %7733 = vmatpush1.bf16.msra.mxu0 %v6693
      %7734 = vmatprep.subr.bf16.mxu0 0
      %7735 = vmatpush1.bf16.msra.mxu0 %v6692
      %7736 = vmatprep.subr.bf16.mxu0 0
      %7737 = vmatpush1.bf16.msra.mxu0 %v6691
      %7738 = vmatprep.subr.bf16.mxu0 0
      %7739 = vmatpush1.bf16.msra.mxu0 %v6690
      %7740 = vmatprep.subr.bf16.mxu0 0
      %7741 = vmatpush1.bf16.msra.mxu0 %v6689
      %7742 = vmatprep.subr.bf16.mxu0 0
      %7743 = vmatpush1.bf16.msra.mxu0 %v6688
      %7744 = vmatprep.subr.bf16.mxu0 0
      %7745 = vmatpush1.bf16.msra.mxu0 %v6687
      %7746 = vmatprep.subr.bf16.mxu0 0
      %7747 = vmatpush2.bf16.msra.mxu0 %v6702
      %7748 = vmatprep.subr.bf16.mxu0 0
      %7749 = vmatpush2.bf16.msra.mxu0 %v6701
      %7750 = vmatprep.subr.bf16.mxu0 0
      %7751 = vmatpush2.bf16.msra.mxu0 %v6700
      %7752 = vmatprep.subr.bf16.mxu0 0
      %7753 = vmatpush2.bf16.msra.mxu0 %v6699
      %7754 = vmatprep.subr.bf16.mxu0 0
      %7755 = vmatpush2.bf16.msra.mxu0 %v6698
      %7756 = vmatprep.subr.bf16.mxu0 0
      %7757 = vmatpush2.bf16.msra.mxu0 %v6697
      %7758 = vmatprep.subr.bf16.mxu0 0
      %7759 = vmatpush2.bf16.msra.mxu0 %v6696
      %7760 = vmatprep.subr.bf16.mxu0 0
      %7761 = vmatpush2.bf16.msra.mxu0 %v6695
      %7762 = vmatprep.mubr.bf16.mxu0 %v5302
      %7763 = vmatmul.mubr.bf16.gmra.mxu0 %v5301
      %v7764 = vpop.f32.mrf.mxu0
      %v7765 = vadd.f32 %v7476, %v7764
      %v7766 = vpop.f32.mrf.mxu0
      %v7767 = vpop.f32.mrf.mxu0
      %v7768 = vadd.f32 %v7479, %v7767
      %v7769 = vpop.f32.mrf.mxu0
      %7770 = vmatprep.mubr.bf16.mxu0 %v5316
      %7771 = vmatmul.mubr.bf16.gmra.mxu0 %v5315
      %v7772 = vpop.f32.mrf.mxu0
      %v7773 = vadd.f32 %v7484, %v7772
      %v7774 = vpop.f32.mrf.mxu0
      %v7775 = vpop.f32.mrf.mxu0
      %v7776 = vadd.f32 %v7487, %v7775
      %v7777 = vpop.f32.mrf.mxu0
      %7778 = vmatprep.mubr.bf16.mxu0 %v5330
      %7779 = vmatmul.mubr.bf16.gmra.mxu0 %v5329
      %v7780 = vpop.f32.mrf.mxu0
      %v7781 = vadd.f32 %v7492, %v7780
      %v7782 = vpop.f32.mrf.mxu0
      %v7783 = vpop.f32.mrf.mxu0
      %v7784 = vadd.f32 %v7495, %v7783
      %v7785 = vpop.f32.mrf.mxu0
      %7786 = vmatprep.mubr.bf16.mxu0 %v5344
      %7787 = vmatmul.mubr.bf16.gmra.mxu0 %v5343
      %v7788 = vpop.f32.mrf.mxu0
      %v7789 = vadd.f32 %v7500, %v7788
      %v7790 = vpop.f32.mrf.mxu0
      %v7791 = vpop.f32.mrf.mxu0
      %v7792 = vadd.f32 %v7503, %v7791
      %v7793 = vpop.f32.mrf.mxu0
      %7794 = vmatprep.mubr.bf16.mxu0 %v5358
      %7795 = vmatmul.mubr.bf16.gmra.mxu0 %v5357
      %v7796 = vpop.f32.mrf.mxu0
      %v7797 = vadd.f32 %v7508, %v7796
      %v7798 = vpop.f32.mrf.mxu0
      %v7799 = vpop.f32.mrf.mxu0
      %v7800 = vadd.f32 %v7511, %v7799
      %v7801 = vpop.f32.mrf.mxu0
      %7802 = vmatprep.mubr.bf16.mxu0 %v5372
      %7803 = vmatmul.mubr.bf16.gmra.mxu0 %v5371
      %v7804 = vpop.f32.mrf.mxu0
      %v7805 = vadd.f32 %v7516, %v7804
      %v7806 = vpop.f32.mrf.mxu0
      %v7807 = vpop.f32.mrf.mxu0
      %v7808 = vadd.f32 %v7519, %v7807
      %v7809 = vpop.f32.mrf.mxu0
      %7810 = vmatprep.mubr.bf16.mxu0 %v5386
      %7811 = vmatmul.mubr.bf16.gmra.mxu0 %v5385
      %v7812 = vpop.f32.mrf.mxu0
      %v7813 = vadd.f32 %v7524, %v7812
      %v7814 = vpop.f32.mrf.mxu0
      %v7815 = vpop.f32.mrf.mxu0
      %v7816 = vadd.f32 %v7527, %v7815
      %v7817 = vpop.f32.mrf.mxu0
      %7818 = vmatprep.mubr.bf16.mxu0 %v5400
      %7819 = vmatmul.mubr.bf16.gmra.mxu0 %v5399
      %v7820 = vpop.f32.mrf.mxu0
      %v7821 = vadd.f32 %v7532, %v7820
      %v7822 = vpop.f32.mrf.mxu0
      %v7823 = vpop.f32.mrf.mxu0
      %v7824 = vadd.f32 %v7535, %v7823
      %v7825 = vpop.f32.mrf.mxu0
      %7826 = vmatprep.mubr.bf16.mxu0 %v5414
      %7827 = vmatmul.mubr.bf16.gmra.mxu0 %v5413
      %v7828 = vpop.f32.mrf.mxu0
      %v7829 = vadd.f32 %v7540, %v7828
      %v7830 = vpop.f32.mrf.mxu0
      %v7831 = vpop.f32.mrf.mxu0
      %v7832 = vadd.f32 %v7543, %v7831
      %v7833 = vpop.f32.mrf.mxu0
      %7834 = vmatprep.mubr.bf16.mxu0 %v5428
      %7835 = vmatmul.mubr.bf16.gmra.mxu0 %v5427
      %v7836 = vpop.f32.mrf.mxu0
      %v7837 = vadd.f32 %v7548, %v7836
      %v7838 = vpop.f32.mrf.mxu0
      %v7839 = vpop.f32.mrf.mxu0
      %v7840 = vadd.f32 %v7551, %v7839
      %v7841 = vpop.f32.mrf.mxu0
      %7842 = vmatprep.mubr.bf16.mxu0 %v5442
      %7843 = vmatmul.mubr.bf16.gmra.mxu0 %v5441
      %v7844 = vpop.f32.mrf.mxu0
      %v7845 = vadd.f32 %v7556, %v7844
      %v7846 = vpop.f32.mrf.mxu0
      %v7847 = vpop.f32.mrf.mxu0
      %v7848 = vadd.f32 %v7559, %v7847
      %v7849 = vpop.f32.mrf.mxu0
      %7850 = vmatprep.mubr.bf16.mxu0 %v5456
      %7851 = vmatmul.mubr.bf16.gmra.mxu0 %v5455
      %v7852 = vpop.f32.mrf.mxu0
      %v7853 = vadd.f32 %v7564, %v7852
      %v7854 = vpop.f32.mrf.mxu0
      %v7855 = vpop.f32.mrf.mxu0
      %v7856 = vadd.f32 %v7567, %v7855
      %v7857 = vpop.f32.mrf.mxu0
      %7858 = vmatprep.mubr.bf16.mxu0 %v5470
      %7859 = vmatmul.mubr.bf16.gmra.mxu0 %v5469
      %v7860 = vpop.f32.mrf.mxu0
      %v7861 = vadd.f32 %v7572, %v7860
      %v7862 = vpop.f32.mrf.mxu0
      %v7863 = vpop.f32.mrf.mxu0
      %v7864 = vadd.f32 %v7575, %v7863
      %v7865 = vpop.f32.mrf.mxu0
      %7866 = vmatprep.mubr.bf16.mxu0 %v5484
      %7867 = vmatmul.mubr.bf16.gmra.mxu0 %v5483
      %v7868 = vpop.f32.mrf.mxu0
      %v7869 = vadd.f32 %v7580, %v7868
      %v7870 = vpop.f32.mrf.mxu0
      %v7871 = vpop.f32.mrf.mxu0
      %v7872 = vadd.f32 %v7583, %v7871
      %v7873 = vpop.f32.mrf.mxu0
      %7874 = vmatprep.mubr.bf16.mxu0 %v5498
      %7875 = vmatmul.mubr.bf16.gmra.mxu0 %v5497
      %v7876 = vpop.f32.mrf.mxu0
      %v7877 = vadd.f32 %v7588, %v7876
      %v7878 = vpop.f32.mrf.mxu0
      %v7879 = vpop.f32.mrf.mxu0
      %v7880 = vadd.f32 %v7591, %v7879
      %v7881 = vpop.f32.mrf.mxu0
      %7882 = vmatprep.mubr.bf16.mxu0 %v5512
      %7883 = vmatmul.mubr.bf16.gmra.mxu0 %v5511
      %v7884 = vpop.f32.mrf.mxu0
      %v7885 = vadd.f32 %v7596, %v7884
      %v7886 = vpop.f32.mrf.mxu0
      %v7887 = vpop.f32.mrf.mxu0
      %v7888 = vadd.f32 %v7599, %v7887
      %v7889 = vpop.f32.mrf.mxu0
      %7890 = vmatprep.mubr.bf16.mxu0 %v5526
      %7891 = vmatmul.mubr.bf16.gmra.mxu0 %v5525
      %v7892 = vpop.f32.mrf.mxu0
      %v7893 = vadd.f32 %v7604, %v7892
      %v7894 = vpop.f32.mrf.mxu0
      %v7895 = vpop.f32.mrf.mxu0
      %v7896 = vadd.f32 %v7607, %v7895
      %v7897 = vpop.f32.mrf.mxu0
      %7898 = vmatprep.mubr.bf16.mxu0 %v5540
      %7899 = vmatmul.mubr.bf16.gmra.mxu0 %v5539
      %v7900 = vpop.f32.mrf.mxu0
      %v7901 = vadd.f32 %v7612, %v7900
      %v7902 = vpop.f32.mrf.mxu0
      %v7903 = vpop.f32.mrf.mxu0
      %v7904 = vadd.f32 %v7615, %v7903
      %v7905 = vpop.f32.mrf.mxu0
      %7906 = vmatprep.mubr.bf16.mxu0 %v5554
      %7907 = vmatmul.mubr.bf16.gmra.mxu0 %v5553
      %v7908 = vpop.f32.mrf.mxu0
      %v7909 = vadd.f32 %v7620, %v7908
      %v7910 = vpop.f32.mrf.mxu0
      %v7911 = vpop.f32.mrf.mxu0
      %v7912 = vadd.f32 %v7623, %v7911
      %v7913 = vpop.f32.mrf.mxu0
      %7914 = vmatprep.mubr.bf16.mxu0 %v5568
      %7915 = vmatmul.mubr.bf16.gmra.mxu0 %v5567
      %v7916 = vpop.f32.mrf.mxu0
      %v7917 = vadd.f32 %v7628, %v7916
      %v7918 = vpop.f32.mrf.mxu0
      %v7919 = vpop.f32.mrf.mxu0
      %v7920 = vadd.f32 %v7631, %v7919
      %v7921 = vpop.f32.mrf.mxu0
      %7922 = vmatprep.mubr.bf16.mxu0 %v5582
      %7923 = vmatmul.mubr.bf16.gmra.mxu0 %v5581
      %v7924 = vpop.f32.mrf.mxu0
      %v7925 = vadd.f32 %v7636, %v7924
      %v7926 = vpop.f32.mrf.mxu0
      %v7927 = vpop.f32.mrf.mxu0
      %v7928 = vadd.f32 %v7639, %v7927
      %v7929 = vpop.f32.mrf.mxu0
      %7930 = vmatprep.mubr.bf16.mxu0 %v5596
      %7931 = vmatmul.mubr.bf16.gmra.mxu0 %v5595
      %v7932 = vpop.f32.mrf.mxu0
      %v7933 = vadd.f32 %v7644, %v7932
      %v7934 = vpop.f32.mrf.mxu0
      %v7935 = vpop.f32.mrf.mxu0
      %v7936 = vadd.f32 %v7647, %v7935
      %v7937 = vpop.f32.mrf.mxu0
      %7938 = vmatprep.mubr.bf16.mxu0 %v5610
      %7939 = vmatmul.mubr.bf16.gmra.mxu0 %v5609
      %v7940 = vpop.f32.mrf.mxu0
      %v7941 = vadd.f32 %v7652, %v7940
      %v7942 = vpop.f32.mrf.mxu0
      %v7943 = vpop.f32.mrf.mxu0
      %v7944 = vadd.f32 %v7655, %v7943
      %v7945 = vpop.f32.mrf.mxu0
      %7946 = vmatprep.mubr.bf16.mxu0 %v5624
      %7947 = vmatmul.mubr.bf16.gmra.mxu0 %v5623
      %v7948 = vpop.f32.mrf.mxu0
      %v7949 = vadd.f32 %v7660, %v7948
      %v7950 = vpop.f32.mrf.mxu0
      %v7951 = vpop.f32.mrf.mxu0
      %v7952 = vadd.f32 %v7663, %v7951
      %v7953 = vpop.f32.mrf.mxu0
      %7954 = vmatprep.mubr.bf16.mxu0 %v5638
      %7955 = vmatmul.mubr.bf16.gmra.mxu0 %v5637
      %v7956 = vpop.f32.mrf.mxu0
      %v7957 = vadd.f32 %v7668, %v7956
      %v7958 = vpop.f32.mrf.mxu0
      %v7959 = vpop.f32.mrf.mxu0
      %v7960 = vadd.f32 %v7671, %v7959
      %v7961 = vpop.f32.mrf.mxu0
      %7962 = vmatprep.mubr.bf16.mxu0 %v5652
      %7963 = vmatmul.mubr.bf16.gmra.mxu0 %v5651
      %v7964 = vpop.f32.mrf.mxu0
      %v7965 = vadd.f32 %v7676, %v7964
      %v7966 = vpop.f32.mrf.mxu0
      %v7967 = vpop.f32.mrf.mxu0
      %v7968 = vadd.f32 %v7679, %v7967
      %v7969 = vpop.f32.mrf.mxu0
      %7970 = vmatprep.mubr.bf16.mxu0 %v5666
      %7971 = vmatmul.mubr.bf16.gmra.mxu0 %v5665
      %v7972 = vpop.f32.mrf.mxu0
      %v7973 = vadd.f32 %v7684, %v7972
      %v7974 = vpop.f32.mrf.mxu0
      %v7975 = vpop.f32.mrf.mxu0
      %v7976 = vadd.f32 %v7687, %v7975
      %v7977 = vpop.f32.mrf.mxu0
      %7978 = vmatprep.mubr.bf16.mxu0 %v5680
      %7979 = vmatmul.mubr.bf16.gmra.mxu0 %v5679
      %v7980 = vpop.f32.mrf.mxu0
      %v7981 = vadd.f32 %v7692, %v7980
      %v7982 = vpop.f32.mrf.mxu0
      %v7983 = vpop.f32.mrf.mxu0
      %v7984 = vadd.f32 %v7695, %v7983
      %v7985 = vpop.f32.mrf.mxu0
      %7986 = vmatprep.mubr.bf16.mxu0 %v5694
      %7987 = vmatmul.mubr.bf16.gmra.mxu0 %v5693
      %v7988 = vpop.f32.mrf.mxu0
      %v7989 = vadd.f32 %v7700, %v7988
      %v7990 = vpop.f32.mrf.mxu0
      %v7991 = vpop.f32.mrf.mxu0
      %v7992 = vadd.f32 %v7703, %v7991
      %v7993 = vpop.f32.mrf.mxu0
      %7994 = vmatprep.mubr.bf16.mxu0 %v5708
      %7995 = vmatmul.mubr.bf16.gmra.mxu0 %v5707
      %v7996 = vpop.f32.mrf.mxu0
      %v7997 = vadd.f32 %v7708, %v7996
      %v7998 = vpop.f32.mrf.mxu0
      %v7999 = vpop.f32.mrf.mxu0
      %v8000 = vadd.f32 %v7711, %v7999
      %v8001 = vpop.f32.mrf.mxu0
      %8002 = vmatprep.mubr.bf16.mxu0 %v5722
      %8003 = vmatmul.mubr.bf16.gmra.mxu0 %v5721
      %v8004 = vpop.f32.mrf.mxu0
      %v8005 = vadd.f32 %v7716, %v8004
      %v8006 = vpop.f32.mrf.mxu0
      %v8007 = vpop.f32.mrf.mxu0
      %v8008 = vadd.f32 %v7719, %v8007
      %v8009 = vpop.f32.mrf.mxu0
      %8010 = vmatprep.mubr.bf16.mxu0 %v5736
      %8011 = vmatmul.mubr.bf16.gmra.mxu0 %v5735
      %v8012 = vpop.f32.mrf.mxu0
      %v8013 = vadd.f32 %v7724, %v8012
      %v8014 = vpop.f32.mrf.mxu0
      %v8015 = vpop.f32.mrf.mxu0
      %v8016 = vadd.f32 %v7727, %v8015
      %v8017 = vpop.f32.mrf.mxu0
      %8018 = vdwg.mxu0
      %8019 = vmatprep.subr.bf16.mxu0 0
      %8020 = vmatpush1.bf16.msra.mxu0 %v6710
      %8021 = vmatprep.subr.bf16.mxu0 0
      %8022 = vmatpush1.bf16.msra.mxu0 %v6709
      %8023 = vmatprep.subr.bf16.mxu0 0
      %8024 = vmatpush1.bf16.msra.mxu0 %v6708
      %8025 = vmatprep.subr.bf16.mxu0 0
      %8026 = vmatpush1.bf16.msra.mxu0 %v6707
      %8027 = vmatprep.subr.bf16.mxu0 0
      %8028 = vmatpush1.bf16.msra.mxu0 %v6706
      %8029 = vmatprep.subr.bf16.mxu0 0
      %8030 = vmatpush1.bf16.msra.mxu0 %v6705
      %8031 = vmatprep.subr.bf16.mxu0 0
      %8032 = vmatpush1.bf16.msra.mxu0 %v6704
      %8033 = vmatprep.subr.bf16.mxu0 0
      %8034 = vmatpush1.bf16.msra.mxu0 %v6703
      %8035 = vmatprep.subr.bf16.mxu0 0
      %8036 = vmatpush2.bf16.msra.mxu0 %v6718
      %8037 = vmatprep.subr.bf16.mxu0 0
      %8038 = vmatpush2.bf16.msra.mxu0 %v6717
      %8039 = vmatprep.subr.bf16.mxu0 0
      %8040 = vmatpush2.bf16.msra.mxu0 %v6716
      %8041 = vmatprep.subr.bf16.mxu0 0
      %8042 = vmatpush2.bf16.msra.mxu0 %v6715
      %8043 = vmatprep.subr.bf16.mxu0 0
      %8044 = vmatpush2.bf16.msra.mxu0 %v6714
      %8045 = vmatprep.subr.bf16.mxu0 0
      %8046 = vmatpush2.bf16.msra.mxu0 %v6713
      %8047 = vmatprep.subr.bf16.mxu0 0
      %8048 = vmatpush2.bf16.msra.mxu0 %v6712
      %8049 = vmatprep.subr.bf16.mxu0 0
      %8050 = vmatpush2.bf16.msra.mxu0 %v6711
      %8051 = vmatprep.mubr.bf16.mxu0 %v5304
      %8052 = vmatmul.mubr.bf16.gmra.mxu0 %v5303
      %v8053 = vpop.f32.mrf.mxu0
      %v8054 = vadd.f32 %v7765, %v8053
      %v8055 = vpop.f32.mrf.mxu0
      %v8056 = vpop.f32.mrf.mxu0
      %v8057 = vadd.f32 %v7768, %v8056
      %v8058 = vpop.f32.mrf.mxu0
      %8059 = vmatprep.mubr.bf16.mxu0 %v5318
      %8060 = vmatmul.mubr.bf16.gmra.mxu0 %v5317
      %v8061 = vpop.f32.mrf.mxu0
      %v8062 = vadd.f32 %v7773, %v8061
      %v8063 = vpop.f32.mrf.mxu0
      %v8064 = vpop.f32.mrf.mxu0
      %v8065 = vadd.f32 %v7776, %v8064
      %v8066 = vpop.f32.mrf.mxu0
      %8067 = vmatprep.mubr.bf16.mxu0 %v5332
      %8068 = vmatmul.mubr.bf16.gmra.mxu0 %v5331
      %v8069 = vpop.f32.mrf.mxu0
      %v8070 = vadd.f32 %v7781, %v8069
      %v8071 = vpop.f32.mrf.mxu0
      %v8072 = vpop.f32.mrf.mxu0
      %v8073 = vadd.f32 %v7784, %v8072
      %v8074 = vpop.f32.mrf.mxu0
      %8075 = vmatprep.mubr.bf16.mxu0 %v5346
      %8076 = vmatmul.mubr.bf16.gmra.mxu0 %v5345
      %v8077 = vpop.f32.mrf.mxu0
      %v8078 = vadd.f32 %v7789, %v8077
      %v8079 = vpop.f32.mrf.mxu0
      %v8080 = vpop.f32.mrf.mxu0
      %v8081 = vadd.f32 %v7792, %v8080
      %v8082 = vpop.f32.mrf.mxu0
      %8083 = vmatprep.mubr.bf16.mxu0 %v5360
      %8084 = vmatmul.mubr.bf16.gmra.mxu0 %v5359
      %v8085 = vpop.f32.mrf.mxu0
      %v8086 = vadd.f32 %v7797, %v8085
      %v8087 = vpop.f32.mrf.mxu0
      %v8088 = vpop.f32.mrf.mxu0
      %v8089 = vadd.f32 %v7800, %v8088
      %v8090 = vpop.f32.mrf.mxu0
      %8091 = vmatprep.mubr.bf16.mxu0 %v5374
      %8092 = vmatmul.mubr.bf16.gmra.mxu0 %v5373
      %v8093 = vpop.f32.mrf.mxu0
      %v8094 = vadd.f32 %v7805, %v8093
      %v8095 = vpop.f32.mrf.mxu0
      %v8096 = vpop.f32.mrf.mxu0
      %v8097 = vadd.f32 %v7808, %v8096
      %v8098 = vpop.f32.mrf.mxu0
      %8099 = vmatprep.mubr.bf16.mxu0 %v5388
      %8100 = vmatmul.mubr.bf16.gmra.mxu0 %v5387
      %v8101 = vpop.f32.mrf.mxu0
      %v8102 = vadd.f32 %v7813, %v8101
      %v8103 = vpop.f32.mrf.mxu0
      %v8104 = vpop.f32.mrf.mxu0
      %v8105 = vadd.f32 %v7816, %v8104
      %v8106 = vpop.f32.mrf.mxu0
      %8107 = vmatprep.mubr.bf16.mxu0 %v5402
      %8108 = vmatmul.mubr.bf16.gmra.mxu0 %v5401
      %v8109 = vpop.f32.mrf.mxu0
      %v8110 = vadd.f32 %v7821, %v8109
      %v8111 = vpop.f32.mrf.mxu0
      %v8112 = vpop.f32.mrf.mxu0
      %v8113 = vadd.f32 %v7824, %v8112
      %v8114 = vpop.f32.mrf.mxu0
      %8115 = vmatprep.mubr.bf16.mxu0 %v5416
      %8116 = vmatmul.mubr.bf16.gmra.mxu0 %v5415
      %v8117 = vpop.f32.mrf.mxu0
      %v8118 = vadd.f32 %v7829, %v8117
      %v8119 = vpop.f32.mrf.mxu0
      %v8120 = vpop.f32.mrf.mxu0
      %v8121 = vadd.f32 %v7832, %v8120
      %v8122 = vpop.f32.mrf.mxu0
      %8123 = vmatprep.mubr.bf16.mxu0 %v5430
      %8124 = vmatmul.mubr.bf16.gmra.mxu0 %v5429
      %v8125 = vpop.f32.mrf.mxu0
      %v8126 = vadd.f32 %v7837, %v8125
      %v8127 = vpop.f32.mrf.mxu0
      %v8128 = vpop.f32.mrf.mxu0
      %v8129 = vadd.f32 %v7840, %v8128
      %v8130 = vpop.f32.mrf.mxu0
      %8131 = vmatprep.mubr.bf16.mxu0 %v5444
      %8132 = vmatmul.mubr.bf16.gmra.mxu0 %v5443
      %v8133 = vpop.f32.mrf.mxu0
      %v8134 = vadd.f32 %v7845, %v8133
      %v8135 = vpop.f32.mrf.mxu0
      %v8136 = vpop.f32.mrf.mxu0
      %v8137 = vadd.f32 %v7848, %v8136
      %v8138 = vpop.f32.mrf.mxu0
      %8139 = vmatprep.mubr.bf16.mxu0 %v5458
      %8140 = vmatmul.mubr.bf16.gmra.mxu0 %v5457
      %v8141 = vpop.f32.mrf.mxu0
      %v8142 = vadd.f32 %v7853, %v8141
      %v8143 = vpop.f32.mrf.mxu0
      %v8144 = vpop.f32.mrf.mxu0
      %v8145 = vadd.f32 %v7856, %v8144
      %v8146 = vpop.f32.mrf.mxu0
      %8147 = vmatprep.mubr.bf16.mxu0 %v5472
      %8148 = vmatmul.mubr.bf16.gmra.mxu0 %v5471
      %v8149 = vpop.f32.mrf.mxu0
      %v8150 = vadd.f32 %v7861, %v8149
      %v8151 = vpop.f32.mrf.mxu0
      %v8152 = vpop.f32.mrf.mxu0
      %v8153 = vadd.f32 %v7864, %v8152
      %v8154 = vpop.f32.mrf.mxu0
      %8155 = vmatprep.mubr.bf16.mxu0 %v5486
      %8156 = vmatmul.mubr.bf16.gmra.mxu0 %v5485
      %v8157 = vpop.f32.mrf.mxu0
      %v8158 = vadd.f32 %v7869, %v8157
      %v8159 = vpop.f32.mrf.mxu0
      %v8160 = vpop.f32.mrf.mxu0
      %v8161 = vadd.f32 %v7872, %v8160
      %v8162 = vpop.f32.mrf.mxu0
      %8163 = vmatprep.mubr.bf16.mxu0 %v5500
      %8164 = vmatmul.mubr.bf16.gmra.mxu0 %v5499
      %v8165 = vpop.f32.mrf.mxu0
      %v8166 = vadd.f32 %v7877, %v8165
      %v8167 = vpop.f32.mrf.mxu0
      %v8168 = vpop.f32.mrf.mxu0
      %v8169 = vadd.f32 %v7880, %v8168
      %v8170 = vpop.f32.mrf.mxu0
      %8171 = vmatprep.mubr.bf16.mxu0 %v5514
      %8172 = vmatmul.mubr.bf16.gmra.mxu0 %v5513
      %v8173 = vpop.f32.mrf.mxu0
      %v8174 = vadd.f32 %v7885, %v8173
      %v8175 = vpop.f32.mrf.mxu0
      %v8176 = vpop.f32.mrf.mxu0
      %v8177 = vadd.f32 %v7888, %v8176
      %v8178 = vpop.f32.mrf.mxu0
      %8179 = vmatprep.mubr.bf16.mxu0 %v5528
      %8180 = vmatmul.mubr.bf16.gmra.mxu0 %v5527
      %v8181 = vpop.f32.mrf.mxu0
      %v8182 = vadd.f32 %v7893, %v8181
      %v8183 = vpop.f32.mrf.mxu0
      %v8184 = vpop.f32.mrf.mxu0
      %v8185 = vadd.f32 %v7896, %v8184
      %v8186 = vpop.f32.mrf.mxu0
      %8187 = vmatprep.mubr.bf16.mxu0 %v5542
      %8188 = vmatmul.mubr.bf16.gmra.mxu0 %v5541
      %v8189 = vpop.f32.mrf.mxu0
      %v8190 = vadd.f32 %v7901, %v8189
      %v8191 = vpop.f32.mrf.mxu0
      %v8192 = vpop.f32.mrf.mxu0
      %v8193 = vadd.f32 %v7904, %v8192
      %v8194 = vpop.f32.mrf.mxu0
      %8195 = vmatprep.mubr.bf16.mxu0 %v5556
      %8196 = vmatmul.mubr.bf16.gmra.mxu0 %v5555
      %v8197 = vpop.f32.mrf.mxu0
      %v8198 = vadd.f32 %v7909, %v8197
      %v8199 = vpop.f32.mrf.mxu0
      %v8200 = vpop.f32.mrf.mxu0
      %v8201 = vadd.f32 %v7912, %v8200
      %v8202 = vpop.f32.mrf.mxu0
      %8203 = vmatprep.mubr.bf16.mxu0 %v5570
      %8204 = vmatmul.mubr.bf16.gmra.mxu0 %v5569
      %v8205 = vpop.f32.mrf.mxu0
      %v8206 = vadd.f32 %v7917, %v8205
      %v8207 = vpop.f32.mrf.mxu0
      %v8208 = vpop.f32.mrf.mxu0
      %v8209 = vadd.f32 %v7920, %v8208
      %v8210 = vpop.f32.mrf.mxu0
      %8211 = vmatprep.mubr.bf16.mxu0 %v5584
      %8212 = vmatmul.mubr.bf16.gmra.mxu0 %v5583
      %v8213 = vpop.f32.mrf.mxu0
      %v8214 = vadd.f32 %v7925, %v8213
      %v8215 = vpop.f32.mrf.mxu0
      %v8216 = vpop.f32.mrf.mxu0
      %v8217 = vadd.f32 %v7928, %v8216
      %v8218 = vpop.f32.mrf.mxu0
      %8219 = vmatprep.mubr.bf16.mxu0 %v5598
      %8220 = vmatmul.mubr.bf16.gmra.mxu0 %v5597
      %v8221 = vpop.f32.mrf.mxu0
      %v8222 = vadd.f32 %v7933, %v8221
      %v8223 = vpop.f32.mrf.mxu0
      %v8224 = vpop.f32.mrf.mxu0
      %v8225 = vadd.f32 %v7936, %v8224
      %v8226 = vpop.f32.mrf.mxu0
      %8227 = vmatprep.mubr.bf16.mxu0 %v5612
      %8228 = vmatmul.mubr.bf16.gmra.mxu0 %v5611
      %v8229 = vpop.f32.mrf.mxu0
      %v8230 = vadd.f32 %v7941, %v8229
      %v8231 = vpop.f32.mrf.mxu0
      %v8232 = vpop.f32.mrf.mxu0
      %v8233 = vadd.f32 %v7944, %v8232
      %v8234 = vpop.f32.mrf.mxu0
      %8235 = vmatprep.mubr.bf16.mxu0 %v5626
      %8236 = vmatmul.mubr.bf16.gmra.mxu0 %v5625
      %v8237 = vpop.f32.mrf.mxu0
      %v8238 = vadd.f32 %v7949, %v8237
      %v8239 = vpop.f32.mrf.mxu0
      %v8240 = vpop.f32.mrf.mxu0
      %v8241 = vadd.f32 %v7952, %v8240
      %v8242 = vpop.f32.mrf.mxu0
      %8243 = vmatprep.mubr.bf16.mxu0 %v5640
      %8244 = vmatmul.mubr.bf16.gmra.mxu0 %v5639
      %v8245 = vpop.f32.mrf.mxu0
      %v8246 = vadd.f32 %v7957, %v8245
      %v8247 = vpop.f32.mrf.mxu0
      %v8248 = vpop.f32.mrf.mxu0
      %v8249 = vadd.f32 %v7960, %v8248
      %v8250 = vpop.f32.mrf.mxu0
      %8251 = vmatprep.mubr.bf16.mxu0 %v5654
      %8252 = vmatmul.mubr.bf16.gmra.mxu0 %v5653
      %v8253 = vpop.f32.mrf.mxu0
      %v8254 = vadd.f32 %v7965, %v8253
      %v8255 = vpop.f32.mrf.mxu0
      %v8256 = vpop.f32.mrf.mxu0
      %v8257 = vadd.f32 %v7968, %v8256
      %v8258 = vpop.f32.mrf.mxu0
      %8259 = vmatprep.mubr.bf16.mxu0 %v5668
      %8260 = vmatmul.mubr.bf16.gmra.mxu0 %v5667
      %v8261 = vpop.f32.mrf.mxu0
      %v8262 = vadd.f32 %v7973, %v8261
      %v8263 = vpop.f32.mrf.mxu0
      %v8264 = vpop.f32.mrf.mxu0
      %v8265 = vadd.f32 %v7976, %v8264
      %v8266 = vpop.f32.mrf.mxu0
      %8267 = vmatprep.mubr.bf16.mxu0 %v5682
      %8268 = vmatmul.mubr.bf16.gmra.mxu0 %v5681
      %v8269 = vpop.f32.mrf.mxu0
      %v8270 = vadd.f32 %v7981, %v8269
      %v8271 = vpop.f32.mrf.mxu0
      %v8272 = vpop.f32.mrf.mxu0
      %v8273 = vadd.f32 %v7984, %v8272
      %v8274 = vpop.f32.mrf.mxu0
      %8275 = vmatprep.mubr.bf16.mxu0 %v5696
      %8276 = vmatmul.mubr.bf16.gmra.mxu0 %v5695
      %v8277 = vpop.f32.mrf.mxu0
      %v8278 = vadd.f32 %v7989, %v8277
      %v8279 = vpop.f32.mrf.mxu0
      %v8280 = vpop.f32.mrf.mxu0
      %v8281 = vadd.f32 %v7992, %v8280
      %v8282 = vpop.f32.mrf.mxu0
      %8283 = vmatprep.mubr.bf16.mxu0 %v5710
      %8284 = vmatmul.mubr.bf16.gmra.mxu0 %v5709
      %v8285 = vpop.f32.mrf.mxu0
      %v8286 = vadd.f32 %v7997, %v8285
      %v8287 = vpop.f32.mrf.mxu0
      %v8288 = vpop.f32.mrf.mxu0
      %v8289 = vadd.f32 %v8000, %v8288
      %v8290 = vpop.f32.mrf.mxu0
      %8291 = vmatprep.mubr.bf16.mxu0 %v5724
      %8292 = vmatmul.mubr.bf16.gmra.mxu0 %v5723
      %v8293 = vpop.f32.mrf.mxu0
      %v8294 = vadd.f32 %v8005, %v8293
      %v8295 = vpop.f32.mrf.mxu0
      %v8296 = vpop.f32.mrf.mxu0
      %v8297 = vadd.f32 %v8008, %v8296
      %v8298 = vpop.f32.mrf.mxu0
      %8299 = vmatprep.mubr.bf16.mxu0 %v5738
      %8300 = vmatmul.mubr.bf16.gmra.mxu0 %v5737
      %v8301 = vpop.f32.mrf.mxu0
      %v8302 = vadd.f32 %v8013, %v8301
      %v8303 = vpop.f32.mrf.mxu0
      %v8304 = vpop.f32.mrf.mxu0
      %v8305 = vadd.f32 %v8016, %v8304
      %v8306 = vpop.f32.mrf.mxu0
      %8307 = vdwg.mxu0
      %8308 = vmatprep.subr.bf16.mxu0 0
      %8309 = vmatpush1.bf16.msra.mxu0 %v6726
      %8310 = vmatprep.subr.bf16.mxu0 0
      %8311 = vmatpush1.bf16.msra.mxu0 %v6725
      %8312 = vmatprep.subr.bf16.mxu0 0
      %8313 = vmatpush1.bf16.msra.mxu0 %v6724
      %8314 = vmatprep.subr.bf16.mxu0 0
      %8315 = vmatpush1.bf16.msra.mxu0 %v6723
      %8316 = vmatprep.subr.bf16.mxu0 0
      %8317 = vmatpush1.bf16.msra.mxu0 %v6722
      %8318 = vmatprep.subr.bf16.mxu0 0
      %8319 = vmatpush1.bf16.msra.mxu0 %v6721
      %8320 = vmatprep.subr.bf16.mxu0 0
      %8321 = vmatpush1.bf16.msra.mxu0 %v6720
      %8322 = vmatprep.subr.bf16.mxu0 0
      %8323 = vmatpush1.bf16.msra.mxu0 %v6719
      %8324 = vmatprep.subr.bf16.mxu0 0
      %8325 = vmatpush2.bf16.msra.mxu0 %v6734
      %8326 = vmatprep.subr.bf16.mxu0 0
      %8327 = vmatpush2.bf16.msra.mxu0 %v6733
      %8328 = vmatprep.subr.bf16.mxu0 0
      %8329 = vmatpush2.bf16.msra.mxu0 %v6732
      %8330 = vmatprep.subr.bf16.mxu0 0
      %8331 = vmatpush2.bf16.msra.mxu0 %v6731
      %8332 = vmatprep.subr.bf16.mxu0 0
      %8333 = vmatpush2.bf16.msra.mxu0 %v6730
      %8334 = vmatprep.subr.bf16.mxu0 0
      %8335 = vmatpush2.bf16.msra.mxu0 %v6729
      %8336 = vmatprep.subr.bf16.mxu0 0
      %8337 = vmatpush2.bf16.msra.mxu0 %v6728
      %8338 = vmatprep.subr.bf16.mxu0 0
      %8339 = vmatpush2.bf16.msra.mxu0 %v6727
      %8340 = vmatprep.mubr.bf16.mxu0 %v5306
      %8341 = vmatmul.mubr.bf16.gmra.mxu0 %v5305
      %v8342 = vpop.f32.mrf.mxu0
      %v8343 = vadd.f32 %v8054, %v8342
      %v8344 = vpop.f32.mrf.mxu0
      %v8345 = vpop.f32.mrf.mxu0
      %v8346 = vadd.f32 %v8057, %v8345
      %v8347 = vpop.f32.mrf.mxu0
      %8348 = vmatprep.mubr.bf16.mxu0 %v5320
      %8349 = vmatmul.mubr.bf16.gmra.mxu0 %v5319
      %v8350 = vpop.f32.mrf.mxu0
      %v8351 = vadd.f32 %v8062, %v8350
      %v8352 = vpop.f32.mrf.mxu0
      %v8353 = vpop.f32.mrf.mxu0
      %v8354 = vadd.f32 %v8065, %v8353
      %v8355 = vpop.f32.mrf.mxu0
      %8356 = vmatprep.mubr.bf16.mxu0 %v5334
      %8357 = vmatmul.mubr.bf16.gmra.mxu0 %v5333
      %v8358 = vpop.f32.mrf.mxu0
      %v8359 = vadd.f32 %v8070, %v8358
      %v8360 = vpop.f32.mrf.mxu0
      %v8361 = vpop.f32.mrf.mxu0
      %v8362 = vadd.f32 %v8073, %v8361
      %v8363 = vpop.f32.mrf.mxu0
      %8364 = vmatprep.mubr.bf16.mxu0 %v5348
      %8365 = vmatmul.mubr.bf16.gmra.mxu0 %v5347
      %v8366 = vpop.f32.mrf.mxu0
      %v8367 = vadd.f32 %v8078, %v8366
      %v8368 = vpop.f32.mrf.mxu0
      %v8369 = vpop.f32.mrf.mxu0
      %v8370 = vadd.f32 %v8081, %v8369
      %v8371 = vpop.f32.mrf.mxu0
      %8372 = vmatprep.mubr.bf16.mxu0 %v5362
      %8373 = vmatmul.mubr.bf16.gmra.mxu0 %v5361
      %v8374 = vpop.f32.mrf.mxu0
      %v8375 = vadd.f32 %v8086, %v8374
      %v8376 = vpop.f32.mrf.mxu0
      %v8377 = vpop.f32.mrf.mxu0
      %v8378 = vadd.f32 %v8089, %v8377
      %v8379 = vpop.f32.mrf.mxu0
      %8380 = vmatprep.mubr.bf16.mxu0 %v5376
      %8381 = vmatmul.mubr.bf16.gmra.mxu0 %v5375
      %v8382 = vpop.f32.mrf.mxu0
      %v8383 = vadd.f32 %v8094, %v8382
      %v8384 = vpop.f32.mrf.mxu0
      %v8385 = vpop.f32.mrf.mxu0
      %v8386 = vadd.f32 %v8097, %v8385
      %v8387 = vpop.f32.mrf.mxu0
      %8388 = vmatprep.mubr.bf16.mxu0 %v5390
      %8389 = vmatmul.mubr.bf16.gmra.mxu0 %v5389
      %v8390 = vpop.f32.mrf.mxu0
      %v8391 = vadd.f32 %v8102, %v8390
      %v8392 = vpop.f32.mrf.mxu0
      %v8393 = vpop.f32.mrf.mxu0
      %v8394 = vadd.f32 %v8105, %v8393
      %v8395 = vpop.f32.mrf.mxu0
      %8396 = vmatprep.mubr.bf16.mxu0 %v5404
      %8397 = vmatmul.mubr.bf16.gmra.mxu0 %v5403
      %v8398 = vpop.f32.mrf.mxu0
      %v8399 = vadd.f32 %v8110, %v8398
      %v8400 = vpop.f32.mrf.mxu0
      %v8401 = vpop.f32.mrf.mxu0
      %v8402 = vadd.f32 %v8113, %v8401
      %v8403 = vpop.f32.mrf.mxu0
      %8404 = vmatprep.mubr.bf16.mxu0 %v5418
      %8405 = vmatmul.mubr.bf16.gmra.mxu0 %v5417
      %v8406 = vpop.f32.mrf.mxu0
      %v8407 = vadd.f32 %v8118, %v8406
      %v8408 = vpop.f32.mrf.mxu0
      %v8409 = vpop.f32.mrf.mxu0
      %v8410 = vadd.f32 %v8121, %v8409
      %v8411 = vpop.f32.mrf.mxu0
      %8412 = vmatprep.mubr.bf16.mxu0 %v5432
      %8413 = vmatmul.mubr.bf16.gmra.mxu0 %v5431
      %v8414 = vpop.f32.mrf.mxu0
      %v8415 = vadd.f32 %v8126, %v8414
      %v8416 = vpop.f32.mrf.mxu0
      %v8417 = vpop.f32.mrf.mxu0
      %v8418 = vadd.f32 %v8129, %v8417
      %v8419 = vpop.f32.mrf.mxu0
      %8420 = vmatprep.mubr.bf16.mxu0 %v5446
      %8421 = vmatmul.mubr.bf16.gmra.mxu0 %v5445
      %v8422 = vpop.f32.mrf.mxu0
      %v8423 = vadd.f32 %v8134, %v8422
      %v8424 = vpop.f32.mrf.mxu0
      %v8425 = vpop.f32.mrf.mxu0
      %v8426 = vadd.f32 %v8137, %v8425
      %v8427 = vpop.f32.mrf.mxu0
      %8428 = vmatprep.mubr.bf16.mxu0 %v5460
      %8429 = vmatmul.mubr.bf16.gmra.mxu0 %v5459
      %v8430 = vpop.f32.mrf.mxu0
      %v8431 = vadd.f32 %v8142, %v8430
      %v8432 = vpop.f32.mrf.mxu0
      %v8433 = vpop.f32.mrf.mxu0
      %v8434 = vadd.f32 %v8145, %v8433
      %v8435 = vpop.f32.mrf.mxu0
      %8436 = vmatprep.mubr.bf16.mxu0 %v5474
      %8437 = vmatmul.mubr.bf16.gmra.mxu0 %v5473
      %v8438 = vpop.f32.mrf.mxu0
      %v8439 = vadd.f32 %v8150, %v8438
      %v8440 = vpop.f32.mrf.mxu0
      %v8441 = vpop.f32.mrf.mxu0
      %v8442 = vadd.f32 %v8153, %v8441
      %v8443 = vpop.f32.mrf.mxu0
      %8444 = vmatprep.mubr.bf16.mxu0 %v5488
      %8445 = vmatmul.mubr.bf16.gmra.mxu0 %v5487
      %v8446 = vpop.f32.mrf.mxu0
      %v8447 = vadd.f32 %v8158, %v8446
      %v8448 = vpop.f32.mrf.mxu0
      %v8449 = vpop.f32.mrf.mxu0
      %v8450 = vadd.f32 %v8161, %v8449
      %v8451 = vpop.f32.mrf.mxu0
      %8452 = vmatprep.mubr.bf16.mxu0 %v5502
      %8453 = vmatmul.mubr.bf16.gmra.mxu0 %v5501
      %v8454 = vpop.f32.mrf.mxu0
      %v8455 = vadd.f32 %v8166, %v8454
      %v8456 = vpop.f32.mrf.mxu0
      %v8457 = vpop.f32.mrf.mxu0
      %v8458 = vadd.f32 %v8169, %v8457
      %v8459 = vpop.f32.mrf.mxu0
      %8460 = vmatprep.mubr.bf16.mxu0 %v5516
      %8461 = vmatmul.mubr.bf16.gmra.mxu0 %v5515
      %v8462 = vpop.f32.mrf.mxu0
      %v8463 = vadd.f32 %v8174, %v8462
      %v8464 = vpop.f32.mrf.mxu0
      %v8465 = vpop.f32.mrf.mxu0
      %v8466 = vadd.f32 %v8177, %v8465
      %v8467 = vpop.f32.mrf.mxu0
      %8468 = vmatprep.mubr.bf16.mxu0 %v5530
      %8469 = vmatmul.mubr.bf16.gmra.mxu0 %v5529
      %v8470 = vpop.f32.mrf.mxu0
      %v8471 = vadd.f32 %v8182, %v8470
      %v8472 = vpop.f32.mrf.mxu0
      %v8473 = vpop.f32.mrf.mxu0
      %v8474 = vadd.f32 %v8185, %v8473
      %v8475 = vpop.f32.mrf.mxu0
      %8476 = vmatprep.mubr.bf16.mxu0 %v5544
      %8477 = vmatmul.mubr.bf16.gmra.mxu0 %v5543
      %v8478 = vpop.f32.mrf.mxu0
      %v8479 = vadd.f32 %v8190, %v8478
      %v8480 = vpop.f32.mrf.mxu0
      %v8481 = vpop.f32.mrf.mxu0
      %v8482 = vadd.f32 %v8193, %v8481
      %v8483 = vpop.f32.mrf.mxu0
      %8484 = vmatprep.mubr.bf16.mxu0 %v5558
      %8485 = vmatmul.mubr.bf16.gmra.mxu0 %v5557
      %v8486 = vpop.f32.mrf.mxu0
      %v8487 = vadd.f32 %v8198, %v8486
      %v8488 = vpop.f32.mrf.mxu0
      %v8489 = vpop.f32.mrf.mxu0
      %v8490 = vadd.f32 %v8201, %v8489
      %v8491 = vpop.f32.mrf.mxu0
      %8492 = vmatprep.mubr.bf16.mxu0 %v5572
      %8493 = vmatmul.mubr.bf16.gmra.mxu0 %v5571
      %v8494 = vpop.f32.mrf.mxu0
      %v8495 = vadd.f32 %v8206, %v8494
      %v8496 = vpop.f32.mrf.mxu0
      %v8497 = vpop.f32.mrf.mxu0
      %v8498 = vadd.f32 %v8209, %v8497
      %v8499 = vpop.f32.mrf.mxu0
      %8500 = vmatprep.mubr.bf16.mxu0 %v5586
      %8501 = vmatmul.mubr.bf16.gmra.mxu0 %v5585
      %v8502 = vpop.f32.mrf.mxu0
      %v8503 = vadd.f32 %v8214, %v8502
      %v8504 = vpop.f32.mrf.mxu0
      %v8505 = vpop.f32.mrf.mxu0
      %v8506 = vadd.f32 %v8217, %v8505
      %v8507 = vpop.f32.mrf.mxu0
      %8508 = vmatprep.mubr.bf16.mxu0 %v5600
      %8509 = vmatmul.mubr.bf16.gmra.mxu0 %v5599
      %v8510 = vpop.f32.mrf.mxu0
      %v8511 = vadd.f32 %v8222, %v8510
      %v8512 = vpop.f32.mrf.mxu0
      %v8513 = vpop.f32.mrf.mxu0
      %v8514 = vadd.f32 %v8225, %v8513
      %v8515 = vpop.f32.mrf.mxu0
      %8516 = vmatprep.mubr.bf16.mxu0 %v5614
      %8517 = vmatmul.mubr.bf16.gmra.mxu0 %v5613
      %v8518 = vpop.f32.mrf.mxu0
      %v8519 = vadd.f32 %v8230, %v8518
      %v8520 = vpop.f32.mrf.mxu0
      %v8521 = vpop.f32.mrf.mxu0
      %v8522 = vadd.f32 %v8233, %v8521
      %v8523 = vpop.f32.mrf.mxu0
      %8524 = vmatprep.mubr.bf16.mxu0 %v5628
      %8525 = vmatmul.mubr.bf16.gmra.mxu0 %v5627
      %v8526 = vpop.f32.mrf.mxu0
      %v8527 = vadd.f32 %v8238, %v8526
      %v8528 = vpop.f32.mrf.mxu0
      %v8529 = vpop.f32.mrf.mxu0
      %v8530 = vadd.f32 %v8241, %v8529
      %v8531 = vpop.f32.mrf.mxu0
      %8532 = vmatprep.mubr.bf16.mxu0 %v5642
      %8533 = vmatmul.mubr.bf16.gmra.mxu0 %v5641
      %v8534 = vpop.f32.mrf.mxu0
      %v8535 = vadd.f32 %v8246, %v8534
      %v8536 = vpop.f32.mrf.mxu0
      %v8537 = vpop.f32.mrf.mxu0
      %v8538 = vadd.f32 %v8249, %v8537
      %v8539 = vpop.f32.mrf.mxu0
      %8540 = vmatprep.mubr.bf16.mxu0 %v5656
      %8541 = vmatmul.mubr.bf16.gmra.mxu0 %v5655
      %v8542 = vpop.f32.mrf.mxu0
      %v8543 = vadd.f32 %v8254, %v8542
      %v8544 = vpop.f32.mrf.mxu0
      %v8545 = vpop.f32.mrf.mxu0
      %v8546 = vadd.f32 %v8257, %v8545
      %v8547 = vpop.f32.mrf.mxu0
      %8548 = vmatprep.mubr.bf16.mxu0 %v5670
      %8549 = vmatmul.mubr.bf16.gmra.mxu0 %v5669
      %v8550 = vpop.f32.mrf.mxu0
      %v8551 = vadd.f32 %v8262, %v8550
      %v8552 = vpop.f32.mrf.mxu0
      %v8553 = vpop.f32.mrf.mxu0
      %v8554 = vadd.f32 %v8265, %v8553
      %v8555 = vpop.f32.mrf.mxu0
      %8556 = vmatprep.mubr.bf16.mxu0 %v5684
      %8557 = vmatmul.mubr.bf16.gmra.mxu0 %v5683
      %v8558 = vpop.f32.mrf.mxu0
      %v8559 = vadd.f32 %v8270, %v8558
      %v8560 = vpop.f32.mrf.mxu0
      %v8561 = vpop.f32.mrf.mxu0
      %v8562 = vadd.f32 %v8273, %v8561
      %v8563 = vpop.f32.mrf.mxu0
      %8564 = vmatprep.mubr.bf16.mxu0 %v5698
      %8565 = vmatmul.mubr.bf16.gmra.mxu0 %v5697
      %v8566 = vpop.f32.mrf.mxu0
      %v8567 = vadd.f32 %v8278, %v8566
      %v8568 = vpop.f32.mrf.mxu0
      %v8569 = vpop.f32.mrf.mxu0
      %v8570 = vadd.f32 %v8281, %v8569
      %v8571 = vpop.f32.mrf.mxu0
      %8572 = vmatprep.mubr.bf16.mxu0 %v5712
      %8573 = vmatmul.mubr.bf16.gmra.mxu0 %v5711
      %v8574 = vpop.f32.mrf.mxu0
      %v8575 = vadd.f32 %v8286, %v8574
      %v8576 = vpop.f32.mrf.mxu0
      %v8577 = vpop.f32.mrf.mxu0
      %v8578 = vadd.f32 %v8289, %v8577
      %v8579 = vpop.f32.mrf.mxu0
      %8580 = vmatprep.mubr.bf16.mxu0 %v5726
      %8581 = vmatmul.mubr.bf16.gmra.mxu0 %v5725
      %v8582 = vpop.f32.mrf.mxu0
      %v8583 = vadd.f32 %v8294, %v8582
      %v8584 = vpop.f32.mrf.mxu0
      %v8585 = vpop.f32.mrf.mxu0
      %v8586 = vadd.f32 %v8297, %v8585
      %v8587 = vpop.f32.mrf.mxu0
      %8588 = vmatprep.mubr.bf16.mxu0 %v5740
      %8589 = vmatmul.mubr.bf16.gmra.mxu0 %v5739
      %v8590 = vpop.f32.mrf.mxu0
      %v8591 = vadd.f32 %v8302, %v8590
      %v8592 = vpop.f32.mrf.mxu0
      %v8593 = vpop.f32.mrf.mxu0
      %v8594 = vadd.f32 %v8305, %v8593
      %v8595 = vpop.f32.mrf.mxu0
      %8596 = vdwg.mxu0
      %8597 = vmatprep.subr.bf16.mxu0 0
      %8598 = vmatpush1.bf16.msra.mxu0 %v6742
      %8599 = vmatprep.subr.bf16.mxu0 0
      %8600 = vmatpush1.bf16.msra.mxu0 %v6741
      %8601 = vmatprep.subr.bf16.mxu0 0
      %8602 = vmatpush1.bf16.msra.mxu0 %v6740
      %8603 = vmatprep.subr.bf16.mxu0 0
      %8604 = vmatpush1.bf16.msra.mxu0 %v6739
      %8605 = vmatprep.subr.bf16.mxu0 0
      %8606 = vmatpush1.bf16.msra.mxu0 %v6738
      %8607 = vmatprep.subr.bf16.mxu0 0
      %8608 = vmatpush1.bf16.msra.mxu0 %v6737
      %8609 = vmatprep.subr.bf16.mxu0 0
      %8610 = vmatpush1.bf16.msra.mxu0 %v6736
      %8611 = vmatprep.subr.bf16.mxu0 0
      %8612 = vmatpush1.bf16.msra.mxu0 %v6735
      %8613 = vmatprep.subr.bf16.mxu0 0
      %8614 = vmatpush2.bf16.msra.mxu0 %v6750
      %8615 = vmatprep.subr.bf16.mxu0 0
      %8616 = vmatpush2.bf16.msra.mxu0 %v6749
      %8617 = vmatprep.subr.bf16.mxu0 0
      %8618 = vmatpush2.bf16.msra.mxu0 %v6748
      %8619 = vmatprep.subr.bf16.mxu0 0
      %8620 = vmatpush2.bf16.msra.mxu0 %v6747
      %8621 = vmatprep.subr.bf16.mxu0 0
      %8622 = vmatpush2.bf16.msra.mxu0 %v6746
      %8623 = vmatprep.subr.bf16.mxu0 0
      %8624 = vmatpush2.bf16.msra.mxu0 %v6745
      %8625 = vmatprep.subr.bf16.mxu0 0
      %8626 = vmatpush2.bf16.msra.mxu0 %v6744
      %8627 = vmatprep.subr.bf16.mxu0 0
      %8628 = vmatpush2.bf16.msra.mxu0 %v6743
      %8629 = vmatprep.mubr.bf16.mxu0 %v5308
      %8630 = vmatmul.mubr.bf16.gmra.mxu0 %v5307
      %v8631 = vpop.f32.mrf.mxu0
      %v8632 = vadd.f32 %v8343, %v8631
      %v8633 = vpop.f32.mrf.mxu0
      %v8634 = vpop.f32.mrf.mxu0
      %v8635 = vadd.f32 %v8346, %v8634
      %v8636 = vpop.f32.mrf.mxu0
      %8637 = vmatprep.mubr.bf16.mxu0 %v5322
      %8638 = vmatmul.mubr.bf16.gmra.mxu0 %v5321
      %v8639 = vpop.f32.mrf.mxu0
      %v8640 = vadd.f32 %v8351, %v8639
      %v8641 = vpop.f32.mrf.mxu0
      %v8642 = vpop.f32.mrf.mxu0
      %v8643 = vadd.f32 %v8354, %v8642
      %v8644 = vpop.f32.mrf.mxu0
      %8645 = vmatprep.mubr.bf16.mxu0 %v5336
      %8646 = vmatmul.mubr.bf16.gmra.mxu0 %v5335
      %v8647 = vpop.f32.mrf.mxu0
      %v8648 = vadd.f32 %v8359, %v8647
      %v8649 = vpop.f32.mrf.mxu0
      %v8650 = vpop.f32.mrf.mxu0
      %v8651 = vadd.f32 %v8362, %v8650
      %v8652 = vpop.f32.mrf.mxu0
      %8653 = vmatprep.mubr.bf16.mxu0 %v5350
      %8654 = vmatmul.mubr.bf16.gmra.mxu0 %v5349
      %v8655 = vpop.f32.mrf.mxu0
      %v8656 = vadd.f32 %v8367, %v8655
      %v8657 = vpop.f32.mrf.mxu0
      %v8658 = vpop.f32.mrf.mxu0
      %v8659 = vadd.f32 %v8370, %v8658
      %v8660 = vpop.f32.mrf.mxu0
      %8661 = vmatprep.mubr.bf16.mxu0 %v5364
      %8662 = vmatmul.mubr.bf16.gmra.mxu0 %v5363
      %v8663 = vpop.f32.mrf.mxu0
      %v8664 = vadd.f32 %v8375, %v8663
      %v8665 = vpop.f32.mrf.mxu0
      %v8666 = vpop.f32.mrf.mxu0
      %v8667 = vadd.f32 %v8378, %v8666
      %v8668 = vpop.f32.mrf.mxu0
      %8669 = vmatprep.mubr.bf16.mxu0 %v5378
      %8670 = vmatmul.mubr.bf16.gmra.mxu0 %v5377
      %v8671 = vpop.f32.mrf.mxu0
      %v8672 = vadd.f32 %v8383, %v8671
      %v8673 = vpop.f32.mrf.mxu0
      %v8674 = vpop.f32.mrf.mxu0
      %v8675 = vadd.f32 %v8386, %v8674
      %v8676 = vpop.f32.mrf.mxu0
      %8677 = vmatprep.mubr.bf16.mxu0 %v5392
      %8678 = vmatmul.mubr.bf16.gmra.mxu0 %v5391
      %v8679 = vpop.f32.mrf.mxu0
      %v8680 = vadd.f32 %v8391, %v8679
      %v8681 = vpop.f32.mrf.mxu0
      %v8682 = vpop.f32.mrf.mxu0
      %v8683 = vadd.f32 %v8394, %v8682
      %v8684 = vpop.f32.mrf.mxu0
      %8685 = vmatprep.mubr.bf16.mxu0 %v5406
      %8686 = vmatmul.mubr.bf16.gmra.mxu0 %v5405
      %v8687 = vpop.f32.mrf.mxu0
      %v8688 = vadd.f32 %v8399, %v8687
      %v8689 = vpop.f32.mrf.mxu0
      %v8690 = vpop.f32.mrf.mxu0
      %v8691 = vadd.f32 %v8402, %v8690
      %v8692 = vpop.f32.mrf.mxu0
      %8693 = vmatprep.mubr.bf16.mxu0 %v5420
      %8694 = vmatmul.mubr.bf16.gmra.mxu0 %v5419
      %v8695 = vpop.f32.mrf.mxu0
      %v8696 = vadd.f32 %v8407, %v8695
      %v8697 = vpop.f32.mrf.mxu0
      %v8698 = vpop.f32.mrf.mxu0
      %v8699 = vadd.f32 %v8410, %v8698
      %v8700 = vpop.f32.mrf.mxu0
      %8701 = vmatprep.mubr.bf16.mxu0 %v5434
      %8702 = vmatmul.mubr.bf16.gmra.mxu0 %v5433
      %v8703 = vpop.f32.mrf.mxu0
      %v8704 = vadd.f32 %v8415, %v8703
      %v8705 = vpop.f32.mrf.mxu0
      %v8706 = vpop.f32.mrf.mxu0
      %v8707 = vadd.f32 %v8418, %v8706
      %v8708 = vpop.f32.mrf.mxu0
      %8709 = vmatprep.mubr.bf16.mxu0 %v5448
      %8710 = vmatmul.mubr.bf16.gmra.mxu0 %v5447
      %v8711 = vpop.f32.mrf.mxu0
      %v8712 = vadd.f32 %v8423, %v8711
      %v8713 = vpop.f32.mrf.mxu0
      %v8714 = vpop.f32.mrf.mxu0
      %v8715 = vadd.f32 %v8426, %v8714
      %v8716 = vpop.f32.mrf.mxu0
      %8717 = vmatprep.mubr.bf16.mxu0 %v5462
      %8718 = vmatmul.mubr.bf16.gmra.mxu0 %v5461
      %v8719 = vpop.f32.mrf.mxu0
      %v8720 = vadd.f32 %v8431, %v8719
      %v8721 = vpop.f32.mrf.mxu0
      %v8722 = vpop.f32.mrf.mxu0
      %v8723 = vadd.f32 %v8434, %v8722
      %v8724 = vpop.f32.mrf.mxu0
      %8725 = vmatprep.mubr.bf16.mxu0 %v5476
      %8726 = vmatmul.mubr.bf16.gmra.mxu0 %v5475
      %v8727 = vpop.f32.mrf.mxu0
      %v8728 = vadd.f32 %v8439, %v8727
      %v8729 = vpop.f32.mrf.mxu0
      %v8730 = vpop.f32.mrf.mxu0
      %v8731 = vadd.f32 %v8442, %v8730
      %v8732 = vpop.f32.mrf.mxu0
      %8733 = vmatprep.mubr.bf16.mxu0 %v5490
      %8734 = vmatmul.mubr.bf16.gmra.mxu0 %v5489
      %v8735 = vpop.f32.mrf.mxu0
      %v8736 = vadd.f32 %v8447, %v8735
      %v8737 = vpop.f32.mrf.mxu0
      %v8738 = vpop.f32.mrf.mxu0
      %v8739 = vadd.f32 %v8450, %v8738
      %v8740 = vpop.f32.mrf.mxu0
      %8741 = vmatprep.mubr.bf16.mxu0 %v5504
      %8742 = vmatmul.mubr.bf16.gmra.mxu0 %v5503
      %v8743 = vpop.f32.mrf.mxu0
      %v8744 = vadd.f32 %v8455, %v8743
      %v8745 = vpop.f32.mrf.mxu0
      %v8746 = vpop.f32.mrf.mxu0
      %v8747 = vadd.f32 %v8458, %v8746
      %v8748 = vpop.f32.mrf.mxu0
      %8749 = vmatprep.mubr.bf16.mxu0 %v5518
      %8750 = vmatmul.mubr.bf16.gmra.mxu0 %v5517
      %v8751 = vpop.f32.mrf.mxu0
      %v8752 = vadd.f32 %v8463, %v8751
      %v8753 = vpop.f32.mrf.mxu0
      %v8754 = vpop.f32.mrf.mxu0
      %v8755 = vadd.f32 %v8466, %v8754
      %v8756 = vpop.f32.mrf.mxu0
      %8757 = vmatprep.mubr.bf16.mxu0 %v5532
      %8758 = vmatmul.mubr.bf16.gmra.mxu0 %v5531
      %v8759 = vpop.f32.mrf.mxu0
      %v8760 = vadd.f32 %v8471, %v8759
      %v8761 = vpop.f32.mrf.mxu0
      %v8762 = vpop.f32.mrf.mxu0
      %v8763 = vadd.f32 %v8474, %v8762
      %v8764 = vpop.f32.mrf.mxu0
      %8765 = vmatprep.mubr.bf16.mxu0 %v5546
      %8766 = vmatmul.mubr.bf16.gmra.mxu0 %v5545
      %v8767 = vpop.f32.mrf.mxu0
      %v8768 = vadd.f32 %v8479, %v8767
      %v8769 = vpop.f32.mrf.mxu0
      %v8770 = vpop.f32.mrf.mxu0
      %v8771 = vadd.f32 %v8482, %v8770
      %v8772 = vpop.f32.mrf.mxu0
      %8773 = vmatprep.mubr.bf16.mxu0 %v5560
      %8774 = vmatmul.mubr.bf16.gmra.mxu0 %v5559
      %v8775 = vpop.f32.mrf.mxu0
      %v8776 = vadd.f32 %v8487, %v8775
      %v8777 = vpop.f32.mrf.mxu0
      %v8778 = vpop.f32.mrf.mxu0
      %v8779 = vadd.f32 %v8490, %v8778
      %v8780 = vpop.f32.mrf.mxu0
      %8781 = vmatprep.mubr.bf16.mxu0 %v5574
      %8782 = vmatmul.mubr.bf16.gmra.mxu0 %v5573
      %v8783 = vpop.f32.mrf.mxu0
      %v8784 = vadd.f32 %v8495, %v8783
      %v8785 = vpop.f32.mrf.mxu0
      %v8786 = vpop.f32.mrf.mxu0
      %v8787 = vadd.f32 %v8498, %v8786
      %v8788 = vpop.f32.mrf.mxu0
      %8789 = vmatprep.mubr.bf16.mxu0 %v5588
      %8790 = vmatmul.mubr.bf16.gmra.mxu0 %v5587
      %v8791 = vpop.f32.mrf.mxu0
      %v8792 = vadd.f32 %v8503, %v8791
      %v8793 = vpop.f32.mrf.mxu0
      %v8794 = vpop.f32.mrf.mxu0
      %v8795 = vadd.f32 %v8506, %v8794
      %v8796 = vpop.f32.mrf.mxu0
      %8797 = vmatprep.mubr.bf16.mxu0 %v5602
      %8798 = vmatmul.mubr.bf16.gmra.mxu0 %v5601
      %v8799 = vpop.f32.mrf.mxu0
      %v8800 = vadd.f32 %v8511, %v8799
      %v8801 = vpop.f32.mrf.mxu0
      %v8802 = vpop.f32.mrf.mxu0
      %v8803 = vadd.f32 %v8514, %v8802
      %v8804 = vpop.f32.mrf.mxu0
      %8805 = vmatprep.mubr.bf16.mxu0 %v5616
      %8806 = vmatmul.mubr.bf16.gmra.mxu0 %v5615
      %v8807 = vpop.f32.mrf.mxu0
      %v8808 = vadd.f32 %v8519, %v8807
      %v8809 = vpop.f32.mrf.mxu0
      %v8810 = vpop.f32.mrf.mxu0
      %v8811 = vadd.f32 %v8522, %v8810
      %v8812 = vpop.f32.mrf.mxu0
      %8813 = vmatprep.mubr.bf16.mxu0 %v5630
      %8814 = vmatmul.mubr.bf16.gmra.mxu0 %v5629
      %v8815 = vpop.f32.mrf.mxu0
      %v8816 = vadd.f32 %v8527, %v8815
      %v8817 = vpop.f32.mrf.mxu0
      %v8818 = vpop.f32.mrf.mxu0
      %v8819 = vadd.f32 %v8530, %v8818
      %v8820 = vpop.f32.mrf.mxu0
      %8821 = vmatprep.mubr.bf16.mxu0 %v5644
      %8822 = vmatmul.mubr.bf16.gmra.mxu0 %v5643
      %v8823 = vpop.f32.mrf.mxu0
      %v8824 = vadd.f32 %v8535, %v8823
      %v8825 = vpop.f32.mrf.mxu0
      %v8826 = vpop.f32.mrf.mxu0
      %v8827 = vadd.f32 %v8538, %v8826
      %v8828 = vpop.f32.mrf.mxu0
      %8829 = vmatprep.mubr.bf16.mxu0 %v5658
      %8830 = vmatmul.mubr.bf16.gmra.mxu0 %v5657
      %v8831 = vpop.f32.mrf.mxu0
      %v8832 = vadd.f32 %v8543, %v8831
      %v8833 = vpop.f32.mrf.mxu0
      %v8834 = vpop.f32.mrf.mxu0
      %v8835 = vadd.f32 %v8546, %v8834
      %v8836 = vpop.f32.mrf.mxu0
      %8837 = vmatprep.mubr.bf16.mxu0 %v5672
      %8838 = vmatmul.mubr.bf16.gmra.mxu0 %v5671
      %v8839 = vpop.f32.mrf.mxu0
      %v8840 = vadd.f32 %v8551, %v8839
      %v8841 = vpop.f32.mrf.mxu0
      %v8842 = vpop.f32.mrf.mxu0
      %v8843 = vadd.f32 %v8554, %v8842
      %v8844 = vpop.f32.mrf.mxu0
      %8845 = vmatprep.mubr.bf16.mxu0 %v5686
      %8846 = vmatmul.mubr.bf16.gmra.mxu0 %v5685
      %v8847 = vpop.f32.mrf.mxu0
      %v8848 = vadd.f32 %v8559, %v8847
      %v8849 = vpop.f32.mrf.mxu0
      %v8850 = vpop.f32.mrf.mxu0
      %v8851 = vadd.f32 %v8562, %v8850
      %v8852 = vpop.f32.mrf.mxu0
      %8853 = vmatprep.mubr.bf16.mxu0 %v5700
      %8854 = vmatmul.mubr.bf16.gmra.mxu0 %v5699
      %v8855 = vpop.f32.mrf.mxu0
      %v8856 = vadd.f32 %v8567, %v8855
      %v8857 = vpop.f32.mrf.mxu0
      %v8858 = vpop.f32.mrf.mxu0
      %v8859 = vadd.f32 %v8570, %v8858
      %v8860 = vpop.f32.mrf.mxu0
      %8861 = vmatprep.mubr.bf16.mxu0 %v5714
      %8862 = vmatmul.mubr.bf16.gmra.mxu0 %v5713
      %v8863 = vpop.f32.mrf.mxu0
      %v8864 = vadd.f32 %v8575, %v8863
      %v8865 = vpop.f32.mrf.mxu0
      %v8866 = vpop.f32.mrf.mxu0
      %v8867 = vadd.f32 %v8578, %v8866
      %v8868 = vpop.f32.mrf.mxu0
      %8869 = vmatprep.mubr.bf16.mxu0 %v5728
      %8870 = vmatmul.mubr.bf16.gmra.mxu0 %v5727
      %v8871 = vpop.f32.mrf.mxu0
      %v8872 = vadd.f32 %v8583, %v8871
      %v8873 = vpop.f32.mrf.mxu0
      %v8874 = vpop.f32.mrf.mxu0
      %v8875 = vadd.f32 %v8586, %v8874
      %v8876 = vpop.f32.mrf.mxu0
      %8877 = vmatprep.mubr.bf16.mxu0 %v5742
      %8878 = vmatmul.mubr.bf16.gmra.mxu0 %v5741
      %v8879 = vpop.f32.mrf.mxu0
      %v8880 = vadd.f32 %v8591, %v8879
      %v8881 = vpop.f32.mrf.mxu0
      %v8882 = vpop.f32.mrf.mxu0
      %v8883 = vadd.f32 %v8594, %v8882
      %v8884 = vpop.f32.mrf.mxu0
      %8885 = vdwg.mxu0
      %v8886 = vmax.f32 %v8632, 0.0
      %v8887 = vmax.f32 %v8635, 0.0
      %v8888 = vmax.f32 %v8640, 0.0
      %v8889 = vmax.f32 %v8643, 0.0
      %v8890 = vmax.f32 %v8648, 0.0
      %v8891 = vmax.f32 %v8651, 0.0
      %v8892 = vmax.f32 %v8656, 0.0
      %v8893 = vmax.f32 %v8659, 0.0
      %v8894 = vmax.f32 %v8664, 0.0
      %v8895 = vmax.f32 %v8667, 0.0
      %v8896 = vmax.f32 %v8672, 0.0
      %v8897 = vmax.f32 %v8675, 0.0
      %v8898 = vmax.f32 %v8680, 0.0
      %v8899 = vmax.f32 %v8683, 0.0
      %v8900 = vmax.f32 %v8688, 0.0
      %v8901 = vmax.f32 %v8691, 0.0
      %v8902 = vmax.f32 %v8696, 0.0
      %v8903 = vmax.f32 %v8699, 0.0
      %v8904 = vmax.f32 %v8704, 0.0
      %v8905 = vmax.f32 %v8707, 0.0
      %v8906 = vmax.f32 %v8712, 0.0
      %v8907 = vmax.f32 %v8715, 0.0
      %v8908 = vmax.f32 %v8720, 0.0
      %v8909 = vmax.f32 %v8723, 0.0
      %v8910 = vmax.f32 %v8728, 0.0
      %v8911 = vmax.f32 %v8731, 0.0
      %v8912 = vmax.f32 %v8736, 0.0
      %v8913 = vmax.f32 %v8739, 0.0
      %v8914 = vmax.f32 %v8744, 0.0
      %v8915 = vmax.f32 %v8747, 0.0
      %v8916 = vmax.f32 %v8752, 0.0
      %v8917 = vmax.f32 %v8755, 0.0
      %v8918 = vmax.f32 %v8760, 0.0
      %v8919 = vmax.f32 %v8763, 0.0
      %v8920 = vmax.f32 %v8768, 0.0
      %v8921 = vmax.f32 %v8771, 0.0
      %v8922 = vmax.f32 %v8776, 0.0
      %v8923 = vmax.f32 %v8779, 0.0
      %v8924 = vmax.f32 %v8784, 0.0
      %v8925 = vmax.f32 %v8787, 0.0
      %v8926 = vmax.f32 %v8792, 0.0
      %v8927 = vmax.f32 %v8795, 0.0
      %v8928 = vmax.f32 %v8800, 0.0
      %v8929 = vmax.f32 %v8803, 0.0
      %v8930 = vmax.f32 %v8808, 0.0
      %v8931 = vmax.f32 %v8811, 0.0
      %v8932 = vmax.f32 %v8816, 0.0
      %v8933 = vmax.f32 %v8819, 0.0
      %v8934 = vmax.f32 %v8824, 0.0
      %v8935 = vmax.f32 %v8827, 0.0
      %v8936 = vmax.f32 %v8832, 0.0
      %v8937 = vmax.f32 %v8835, 0.0
      %v8938 = vmax.f32 %v8840, 0.0
      %v8939 = vmax.f32 %v8843, 0.0
      %v8940 = vmax.f32 %v8848, 0.0
      %v8941 = vmax.f32 %v8851, 0.0
      %v8942 = vmax.f32 %v8856, 0.0
      %v8943 = vmax.f32 %v8859, 0.0
      %v8944 = vmax.f32 %v8864, 0.0
      %v8945 = vmax.f32 %v8867, 0.0
      %v8946 = vmax.f32 %v8872, 0.0
      %v8947 = vmax.f32 %v8875, 0.0
      %v8948 = vmax.f32 %v8880, 0.0
      %v8949 = vmax.f32 %v8883, 0.0
      %v8950 = vpack.c.bf16 %v8887, %v8886
      %v8951 = vpack.c.bf16 %v8889, %v8888
      %v8952 = vpack.c.bf16 %v8891, %v8890
      %v8953 = vpack.c.bf16 %v8893, %v8892
      %v8954 = vpack.c.bf16 %v8895, %v8894
      %v8955 = vpack.c.bf16 %v8897, %v8896
      %v8956 = vpack.c.bf16 %v8899, %v8898
      %v8957 = vpack.c.bf16 %v8901, %v8900
      %v8958 = vpack.c.bf16 %v8903, %v8902
      %v8959 = vpack.c.bf16 %v8905, %v8904
      %v8960 = vpack.c.bf16 %v8907, %v8906
      %v8961 = vpack.c.bf16 %v8909, %v8908
      %v8962 = vpack.c.bf16 %v8911, %v8910
      %v8963 = vpack.c.bf16 %v8913, %v8912
      %v8964 = vpack.c.bf16 %v8915, %v8914
      %v8965 = vpack.c.bf16 %v8917, %v8916
      %v8966 = vpack.c.bf16 %v8919, %v8918
      %v8967 = vpack.c.bf16 %v8921, %v8920
      %v8968 = vpack.c.bf16 %v8923, %v8922
      %v8969 = vpack.c.bf16 %v8925, %v8924
      %v8970 = vpack.c.bf16 %v8927, %v8926
      %v8971 = vpack.c.bf16 %v8929, %v8928
      %v8972 = vpack.c.bf16 %v8931, %v8930
      %v8973 = vpack.c.bf16 %v8933, %v8932
      %v8974 = vpack.c.bf16 %v8935, %v8934
      %v8975 = vpack.c.bf16 %v8937, %v8936
      %v8976 = vpack.c.bf16 %v8939, %v8938
      %v8977 = vpack.c.bf16 %v8941, %v8940
      %v8978 = vpack.c.bf16 %v8943, %v8942
      %v8979 = vpack.c.bf16 %v8945, %v8944
      %v8980 = vpack.c.bf16 %v8947, %v8946
      %v8981 = vpack.c.bf16 %v8949, %v8948
      %v8982 = vld [vmem:[%s4] sm:$0xf]
      %v8983 = vld [vmem:[%s4 + $0x4] sm:$0xf]
      %v8984 = vld [vmem:[%s4 + $0x8] sm:$0xf]
      %v8985 = vld [vmem:[%s4 + $0xc] sm:$0xf]
      %v8986 = vld [vmem:[%s4 + $0x10] sm:$0xf]
      %v8987 = vld [vmem:[%s4 + $0x14] sm:$0xf]
      %v8988 = vld [vmem:[%s4 + $0x18] sm:$0xf]
      %v8989 = vld [vmem:[%s4 + $0x1c] sm:$0xf]
      %v8990 = vld [vmem:[%s4 + $0x20] sm:$0xf]
      %v8991 = vld [vmem:[%s4 + $0x24] sm:$0xf]
      %v8992 = vld [vmem:[%s4 + $0x28] sm:$0xf]
      %v8993 = vld [vmem:[%s4 + $0x2c] sm:$0xf]
      %v8994 = vld [vmem:[%s4 + $0x30] sm:$0xf]
      %v8995 = vld [vmem:[%s4 + $0x34] sm:$0xf]
      %v8996 = vld [vmem:[%s4 + $0x38] sm:$0xf]
      %v8997 = vld [vmem:[%s4 + $0x3c] sm:$0xf]
      %v8998 = vld [vmem:[%s5] sm:$0x1]
      %v9000 = vlaneseq
      %v9001 = vshrl.u32 %v9000, 7
      %v9002 = vsub.s32 0, %v9001
      %v9003 = vrot.slane %v8998, %v9002
      %v9021 = vunpack.c.l.b16 %v8982
      %v9022 = vunpack.c.l.b16 %v8983
      %v9023 = vunpack.c.l.b16 %v8984
      %v9024 = vunpack.c.l.b16 %v8985
      %v9025 = vunpack.c.l.b16 %v8986
      %v9026 = vunpack.c.l.b16 %v8987
      %v9027 = vunpack.c.l.b16 %v8988
      %v9028 = vunpack.c.l.b16 %v8989
      %v9029 = vunpack.c.l.b16 %v8990
      %v9030 = vunpack.c.l.b16 %v8991
      %v9031 = vunpack.c.l.b16 %v8992
      %v9032 = vunpack.c.l.b16 %v8993
      %v9033 = vunpack.c.l.b16 %v8994
      %v9034 = vunpack.c.l.b16 %v8995
      %v9035 = vunpack.c.l.b16 %v8996
      %v9036 = vunpack.c.l.b16 %v8997
      %v9037 = vpack.c.b16 %v9022, %v9021
      %v9038 = vpack.c.b16 %v9024, %v9023
      %v9039 = vpack.c.b16 %v9026, %v9025
      %v9040 = vpack.c.b16 %v9028, %v9027
      %v9041 = vpack.c.b16 %v9030, %v9029
      %v9042 = vpack.c.b16 %v9032, %v9031
      %v9043 = vpack.c.b16 %v9034, %v9033
      %v9044 = vpack.c.b16 %v9036, %v9035
      %9053 = vmatprep.subr.bf16.mxu0 0
      %9054 = vmatpush1.bf16.msra.mxu0 %v9044
      %9055 = vmatprep.subr.bf16.mxu0 0
      %9056 = vmatpush1.bf16.msra.mxu0 %v9043
      %9057 = vmatprep.subr.bf16.mxu0 0
      %9058 = vmatpush1.bf16.msra.mxu0 %v9042
      %9059 = vmatprep.subr.bf16.mxu0 0
      %9060 = vmatpush1.bf16.msra.mxu0 %v9041
      %9061 = vmatprep.subr.bf16.mxu0 0
      %9062 = vmatpush1.bf16.msra.mxu0 %v9040
      %9063 = vmatprep.subr.bf16.mxu0 0
      %9064 = vmatpush1.bf16.msra.mxu0 %v9039
      %9065 = vmatprep.subr.bf16.mxu0 0
      %9066 = vmatpush1.bf16.msra.mxu0 %v9038
      %9067 = vmatprep.subr.bf16.mxu0 0
      %9068 = vmatpush1.bf16.msra.mxu0 %v9037
      %9069 = vmatprep.subr.bf16.mxu0 0
      %9070 = vmatpush2.bf16.msra.mxu0 0
      %9071 = vmatprep.subr.bf16.mxu0 0
      %9072 = vmatpush2.bf16.msra.mxu0 0
      %9073 = vmatprep.subr.bf16.mxu0 0
      %9074 = vmatpush2.bf16.msra.mxu0 0
      %9075 = vmatprep.subr.bf16.mxu0 0
      %9076 = vmatpush2.bf16.msra.mxu0 0
      %9077 = vmatprep.subr.bf16.mxu0 0
      %9078 = vmatpush2.bf16.msra.mxu0 0
      %9079 = vmatprep.subr.bf16.mxu0 0
      %9080 = vmatpush2.bf16.msra.mxu0 0
      %9081 = vmatprep.subr.bf16.mxu0 0
      %9082 = vmatpush2.bf16.msra.mxu0 0
      %9083 = vmatprep.subr.bf16.mxu0 0
      %9084 = vmatpush2.bf16.msra.mxu0 0
      %9085 = vmatprep.mubr.bf16.mxu0 0
      %9086 = vmatmul.mubr.bf16.gmra.mxu0 %v8950
      %v9087 = vpop.f32.mrf.mxu0
      %v9088 = vadd.f32 %v9003, %v9087
      %v9089 = vpop.f32.mrf.mxu0
      %v9090 = vpop.f32.mrf.mxu0
      %v9091 = vadd.f32 %v9003, %v9090
      %v9092 = vpop.f32.mrf.mxu0
      %9093 = vmatprep.mubr.bf16.mxu0 0
      %9094 = vmatmul.mubr.bf16.gmra.mxu0 %v8951
      %v9095 = vpop.f32.mrf.mxu0
      %v9096 = vadd.f32 %v9003, %v9095
      %v9097 = vpop.f32.mrf.mxu0
      %v9098 = vpop.f32.mrf.mxu0
      %v9099 = vadd.f32 %v9003, %v9098
      %v9100 = vpop.f32.mrf.mxu0
      %9101 = vmatprep.mubr.bf16.mxu0 0
      %9102 = vmatmul.mubr.bf16.gmra.mxu0 %v8952
      %v9103 = vpop.f32.mrf.mxu0
      %v9104 = vadd.f32 %v9003, %v9103
      %v9105 = vpop.f32.mrf.mxu0
      %v9106 = vpop.f32.mrf.mxu0
      %v9107 = vadd.f32 %v9003, %v9106
      %v9108 = vpop.f32.mrf.mxu0
      %9109 = vmatprep.mubr.bf16.mxu0 0
      %9110 = vmatmul.mubr.bf16.gmra.mxu0 %v8953
      %v9111 = vpop.f32.mrf.mxu0
      %v9112 = vadd.f32 %v9003, %v9111
      %v9113 = vpop.f32.mrf.mxu0
      %v9114 = vpop.f32.mrf.mxu0
      %v9115 = vadd.f32 %v9003, %v9114
      %v9116 = vpop.f32.mrf.mxu0
      %9117 = vmatprep.mubr.bf16.mxu0 0
      %9118 = vmatmul.mubr.bf16.gmra.mxu0 %v8954
      %v9119 = vpop.f32.mrf.mxu0
      %v9120 = vadd.f32 %v9003, %v9119
      %v9121 = vpop.f32.mrf.mxu0
      %v9122 = vpop.f32.mrf.mxu0
      %v9123 = vadd.f32 %v9003, %v9122
      %v9124 = vpop.f32.mrf.mxu0
      %9125 = vmatprep.mubr.bf16.mxu0 0
      %9126 = vmatmul.mubr.bf16.gmra.mxu0 %v8955
      %v9127 = vpop.f32.mrf.mxu0
      %v9128 = vadd.f32 %v9003, %v9127
      %v9129 = vpop.f32.mrf.mxu0
      %v9130 = vpop.f32.mrf.mxu0
      %v9131 = vadd.f32 %v9003, %v9130
      %v9132 = vpop.f32.mrf.mxu0
      %9133 = vmatprep.mubr.bf16.mxu0 0
      %9134 = vmatmul.mubr.bf16.gmra.mxu0 %v8956
      %v9135 = vpop.f32.mrf.mxu0
      %v9136 = vadd.f32 %v9003, %v9135
      %v9137 = vpop.f32.mrf.mxu0
      %v9138 = vpop.f32.mrf.mxu0
      %v9139 = vadd.f32 %v9003, %v9138
      %v9140 = vpop.f32.mrf.mxu0
      %9141 = vmatprep.mubr.bf16.mxu0 0
      %9142 = vmatmul.mubr.bf16.gmra.mxu0 %v8957
      %v9143 = vpop.f32.mrf.mxu0
      %v9144 = vadd.f32 %v9003, %v9143
      %v9145 = vpop.f32.mrf.mxu0
      %v9146 = vpop.f32.mrf.mxu0
      %v9147 = vadd.f32 %v9003, %v9146
      %v9148 = vpop.f32.mrf.mxu0
      %9149 = vmatprep.mubr.bf16.mxu0 0
      %9150 = vmatmul.mubr.bf16.gmra.mxu0 %v8958
      %v9151 = vpop.f32.mrf.mxu0
      %v9152 = vadd.f32 %v9003, %v9151
      %v9153 = vpop.f32.mrf.mxu0
      %v9154 = vpop.f32.mrf.mxu0
      %v9155 = vadd.f32 %v9003, %v9154
      %v9156 = vpop.f32.mrf.mxu0
      %9157 = vmatprep.mubr.bf16.mxu0 0
      %9158 = vmatmul.mubr.bf16.gmra.mxu0 %v8959
      %v9159 = vpop.f32.mrf.mxu0
      %v9160 = vadd.f32 %v9003, %v9159
      %v9161 = vpop.f32.mrf.mxu0
      %v9162 = vpop.f32.mrf.mxu0
      %v9163 = vadd.f32 %v9003, %v9162
      %v9164 = vpop.f32.mrf.mxu0
      %9165 = vmatprep.mubr.bf16.mxu0 0
      %9166 = vmatmul.mubr.bf16.gmra.mxu0 %v8960
      %v9167 = vpop.f32.mrf.mxu0
      %v9168 = vadd.f32 %v9003, %v9167
      %v9169 = vpop.f32.mrf.mxu0
      %v9170 = vpop.f32.mrf.mxu0
      %v9171 = vadd.f32 %v9003, %v9170
      %v9172 = vpop.f32.mrf.mxu0
      %9173 = vmatprep.mubr.bf16.mxu0 0
      %9174 = vmatmul.mubr.bf16.gmra.mxu0 %v8961
      %v9175 = vpop.f32.mrf.mxu0
      %v9176 = vadd.f32 %v9003, %v9175
      %v9177 = vpop.f32.mrf.mxu0
      %v9178 = vpop.f32.mrf.mxu0
      %v9179 = vadd.f32 %v9003, %v9178
      %v9180 = vpop.f32.mrf.mxu0
      %9181 = vmatprep.mubr.bf16.mxu0 0
      %9182 = vmatmul.mubr.bf16.gmra.mxu0 %v8962
      %v9183 = vpop.f32.mrf.mxu0
      %v9184 = vadd.f32 %v9003, %v9183
      %v9185 = vpop.f32.mrf.mxu0
      %v9186 = vpop.f32.mrf.mxu0
      %v9187 = vadd.f32 %v9003, %v9186
      %v9188 = vpop.f32.mrf.mxu0
      %9189 = vmatprep.mubr.bf16.mxu0 0
      %9190 = vmatmul.mubr.bf16.gmra.mxu0 %v8963
      %v9191 = vpop.f32.mrf.mxu0
      %v9192 = vadd.f32 %v9003, %v9191
      %v9193 = vpop.f32.mrf.mxu0
      %v9194 = vpop.f32.mrf.mxu0
      %v9195 = vadd.f32 %v9003, %v9194
      %v9196 = vpop.f32.mrf.mxu0
      %9197 = vmatprep.mubr.bf16.mxu0 0
      %9198 = vmatmul.mubr.bf16.gmra.mxu0 %v8964
      %v9199 = vpop.f32.mrf.mxu0
      %v9200 = vadd.f32 %v9003, %v9199
      %v9201 = vpop.f32.mrf.mxu0
      %v9202 = vpop.f32.mrf.mxu0
      %v9203 = vadd.f32 %v9003, %v9202
      %v9204 = vpop.f32.mrf.mxu0
      %9205 = vmatprep.mubr.bf16.mxu0 0
      %9206 = vmatmul.mubr.bf16.gmra.mxu0 %v8965
      %v9207 = vpop.f32.mrf.mxu0
      %v9208 = vadd.f32 %v9003, %v9207
      %v9209 = vpop.f32.mrf.mxu0
      %v9210 = vpop.f32.mrf.mxu0
      %v9211 = vadd.f32 %v9003, %v9210
      %v9212 = vpop.f32.mrf.mxu0
      %9213 = vmatprep.mubr.bf16.mxu0 0
      %9214 = vmatmul.mubr.bf16.gmra.mxu0 %v8966
      %v9215 = vpop.f32.mrf.mxu0
      %v9216 = vadd.f32 %v9003, %v9215
      %v9217 = vpop.f32.mrf.mxu0
      %v9218 = vpop.f32.mrf.mxu0
      %v9219 = vadd.f32 %v9003, %v9218
      %v9220 = vpop.f32.mrf.mxu0
      %9221 = vmatprep.mubr.bf16.mxu0 0
      %9222 = vmatmul.mubr.bf16.gmra.mxu0 %v8967
      %v9223 = vpop.f32.mrf.mxu0
      %v9224 = vadd.f32 %v9003, %v9223
      %v9225 = vpop.f32.mrf.mxu0
      %v9226 = vpop.f32.mrf.mxu0
      %v9227 = vadd.f32 %v9003, %v9226
      %v9228 = vpop.f32.mrf.mxu0
      %9229 = vmatprep.mubr.bf16.mxu0 0
      %9230 = vmatmul.mubr.bf16.gmra.mxu0 %v8968
      %v9231 = vpop.f32.mrf.mxu0
      %v9232 = vadd.f32 %v9003, %v9231
      %v9233 = vpop.f32.mrf.mxu0
      %v9234 = vpop.f32.mrf.mxu0
      %v9235 = vadd.f32 %v9003, %v9234
      %v9236 = vpop.f32.mrf.mxu0
      %9237 = vmatprep.mubr.bf16.mxu0 0
      %9238 = vmatmul.mubr.bf16.gmra.mxu0 %v8969
      %v9239 = vpop.f32.mrf.mxu0
      %v9240 = vadd.f32 %v9003, %v9239
      %v9241 = vpop.f32.mrf.mxu0
      %v9242 = vpop.f32.mrf.mxu0
      %v9243 = vadd.f32 %v9003, %v9242
      %v9244 = vpop.f32.mrf.mxu0
      %9245 = vmatprep.mubr.bf16.mxu0 0
      %9246 = vmatmul.mubr.bf16.gmra.mxu0 %v8970
      %v9247 = vpop.f32.mrf.mxu0
      %v9248 = vadd.f32 %v9003, %v9247
      %v9249 = vpop.f32.mrf.mxu0
      %v9250 = vpop.f32.mrf.mxu0
      %v9251 = vadd.f32 %v9003, %v9250
      %v9252 = vpop.f32.mrf.mxu0
      %9253 = vmatprep.mubr.bf16.mxu0 0
      %9254 = vmatmul.mubr.bf16.gmra.mxu0 %v8971
      %v9255 = vpop.f32.mrf.mxu0
      %v9256 = vadd.f32 %v9003, %v9255
      %v9257 = vpop.f32.mrf.mxu0
      %v9258 = vpop.f32.mrf.mxu0
      %v9259 = vadd.f32 %v9003, %v9258
      %v9260 = vpop.f32.mrf.mxu0
      %9261 = vmatprep.mubr.bf16.mxu0 0
      %9262 = vmatmul.mubr.bf16.gmra.mxu0 %v8972
      %v9263 = vpop.f32.mrf.mxu0
      %v9264 = vadd.f32 %v9003, %v9263
      %v9265 = vpop.f32.mrf.mxu0
      %v9266 = vpop.f32.mrf.mxu0
      %v9267 = vadd.f32 %v9003, %v9266
      %v9268 = vpop.f32.mrf.mxu0
      %9269 = vmatprep.mubr.bf16.mxu0 0
      %9270 = vmatmul.mubr.bf16.gmra.mxu0 %v8973
      %v9271 = vpop.f32.mrf.mxu0
      %v9272 = vadd.f32 %v9003, %v9271
      %v9273 = vpop.f32.mrf.mxu0
      %v9274 = vpop.f32.mrf.mxu0
      %v9275 = vadd.f32 %v9003, %v9274
      %v9276 = vpop.f32.mrf.mxu0
      %9277 = vmatprep.mubr.bf16.mxu0 0
      %9278 = vmatmul.mubr.bf16.gmra.mxu0 %v8974
      %v9279 = vpop.f32.mrf.mxu0
      %v9280 = vadd.f32 %v9003, %v9279
      %v9281 = vpop.f32.mrf.mxu0
      %v9282 = vpop.f32.mrf.mxu0
      %v9283 = vadd.f32 %v9003, %v9282
      %v9284 = vpop.f32.mrf.mxu0
      %9285 = vmatprep.mubr.bf16.mxu0 0
      %9286 = vmatmul.mubr.bf16.gmra.mxu0 %v8975
      %v9287 = vpop.f32.mrf.mxu0
      %v9288 = vadd.f32 %v9003, %v9287
      %v9289 = vpop.f32.mrf.mxu0
      %v9290 = vpop.f32.mrf.mxu0
      %v9291 = vadd.f32 %v9003, %v9290
      %v9292 = vpop.f32.mrf.mxu0
      %9293 = vmatprep.mubr.bf16.mxu0 0
      %9294 = vmatmul.mubr.bf16.gmra.mxu0 %v8976
      %v9295 = vpop.f32.mrf.mxu0
      %v9296 = vadd.f32 %v9003, %v9295
      %v9297 = vpop.f32.mrf.mxu0
      %v9298 = vpop.f32.mrf.mxu0
      %v9299 = vadd.f32 %v9003, %v9298
      %v9300 = vpop.f32.mrf.mxu0
      %9301 = vmatprep.mubr.bf16.mxu0 0
      %9302 = vmatmul.mubr.bf16.gmra.mxu0 %v8977
      %v9303 = vpop.f32.mrf.mxu0
      %v9304 = vadd.f32 %v9003, %v9303
      %v9305 = vpop.f32.mrf.mxu0
      %v9306 = vpop.f32.mrf.mxu0
      %v9307 = vadd.f32 %v9003, %v9306
      %v9308 = vpop.f32.mrf.mxu0
      %9309 = vmatprep.mubr.bf16.mxu0 0
      %9310 = vmatmul.mubr.bf16.gmra.mxu0 %v8978
      %v9311 = vpop.f32.mrf.mxu0
      %v9312 = vadd.f32 %v9003, %v9311
      %v9313 = vpop.f32.mrf.mxu0
      %v9314 = vpop.f32.mrf.mxu0
      %v9315 = vadd.f32 %v9003, %v9314
      %v9316 = vpop.f32.mrf.mxu0
      %9317 = vmatprep.mubr.bf16.mxu0 0
      %9318 = vmatmul.mubr.bf16.gmra.mxu0 %v8979
      %v9319 = vpop.f32.mrf.mxu0
      %v9320 = vadd.f32 %v9003, %v9319
      %v9321 = vpop.f32.mrf.mxu0
      %v9322 = vpop.f32.mrf.mxu0
      %v9323 = vadd.f32 %v9003, %v9322
      %v9324 = vpop.f32.mrf.mxu0
      %9325 = vmatprep.mubr.bf16.mxu0 0
      %9326 = vmatmul.mubr.bf16.gmra.mxu0 %v8980
      %v9327 = vpop.f32.mrf.mxu0
      %v9328 = vadd.f32 %v9003, %v9327
      %v9329 = vpop.f32.mrf.mxu0
      %v9330 = vpop.f32.mrf.mxu0
      %v9331 = vadd.f32 %v9003, %v9330
      %v9332 = vpop.f32.mrf.mxu0
      %9333 = vmatprep.mubr.bf16.mxu0 0
      %9334 = vmatmul.mubr.bf16.gmra.mxu0 %v8981
      %v9335 = vpop.f32.mrf.mxu0
      %v9336 = vadd.f32 %v9003, %v9335
      %v9337 = vpop.f32.mrf.mxu0
      %v9338 = vpop.f32.mrf.mxu0
      %v9339 = vadd.f32 %v9003, %v9338
      %v9340 = vpop.f32.mrf.mxu0
      %9341 = vdwg.mxu0
      %v9342 = vsub.f32 0.0, %v9088
      %v9343 = vsub.f32 0.0, %v9091
      %v9344 = vsub.f32 0.0, %v9096
      %v9345 = vsub.f32 0.0, %v9099
      %v9346 = vsub.f32 0.0, %v9104
      %v9347 = vsub.f32 0.0, %v9107
      %v9348 = vsub.f32 0.0, %v9112
      %v9349 = vsub.f32 0.0, %v9115
      %v9350 = vsub.f32 0.0, %v9120
      %v9351 = vsub.f32 0.0, %v9123
      %v9352 = vsub.f32 0.0, %v9128
      %v9353 = vsub.f32 0.0, %v9131
      %v9354 = vsub.f32 0.0, %v9136
      %v9355 = vsub.f32 0.0, %v9139
      %v9356 = vsub.f32 0.0, %v9144
      %v9357 = vsub.f32 0.0, %v9147
      %v9358 = vsub.f32 0.0, %v9152
      %v9359 = vsub.f32 0.0, %v9155
      %v9360 = vsub.f32 0.0, %v9160
      %v9361 = vsub.f32 0.0, %v9163
      %v9362 = vsub.f32 0.0, %v9168
      %v9363 = vsub.f32 0.0, %v9171
      %v9364 = vsub.f32 0.0, %v9176
      %v9365 = vsub.f32 0.0, %v9179
      %v9366 = vsub.f32 0.0, %v9184
      %v9367 = vsub.f32 0.0, %v9187
      %v9368 = vsub.f32 0.0, %v9192
      %v9369 = vsub.f32 0.0, %v9195
      %v9370 = vsub.f32 0.0, %v9200
      %v9371 = vsub.f32 0.0, %v9203
      %v9372 = vsub.f32 0.0, %v9208
      %v9373 = vsub.f32 0.0, %v9211
      %v9374 = vsub.f32 0.0, %v9216
      %v9375 = vsub.f32 0.0, %v9219
      %v9376 = vsub.f32 0.0, %v9224
      %v9377 = vsub.f32 0.0, %v9227
      %v9378 = vsub.f32 0.0, %v9232
      %v9379 = vsub.f32 0.0, %v9235
      %v9380 = vsub.f32 0.0, %v9240
      %v9381 = vsub.f32 0.0, %v9243
      %v9382 = vsub.f32 0.0, %v9248
      %v9383 = vsub.f32 0.0, %v9251
      %v9384 = vsub.f32 0.0, %v9256
      %v9385 = vsub.f32 0.0, %v9259
      %v9386 = vsub.f32 0.0, %v9264
      %v9387 = vsub.f32 0.0, %v9267
      %v9388 = vsub.f32 0.0, %v9272
      %v9389 = vsub.f32 0.0, %v9275
      %v9390 = vsub.f32 0.0, %v9280
      %v9391 = vsub.f32 0.0, %v9283
      %v9392 = vsub.f32 0.0, %v9288
      %v9393 = vsub.f32 0.0, %v9291
      %v9394 = vsub.f32 0.0, %v9296
      %v9395 = vsub.f32 0.0, %v9299
      %v9396 = vsub.f32 0.0, %v9304
      %v9397 = vsub.f32 0.0, %v9307
      %v9398 = vsub.f32 0.0, %v9312
      %v9399 = vsub.f32 0.0, %v9315
      %v9400 = vsub.f32 0.0, %v9320
      %v9401 = vsub.f32 0.0, %v9323
      %v9402 = vsub.f32 0.0, %v9328
      %v9403 = vsub.f32 0.0, %v9331
      %v9404 = vsub.f32 0.0, %v9336
      %v9405 = vsub.f32 0.0, %v9339
      %v9406 = vmul.f32 %v9342, 1.442695
      %v9407 = vpow.pop %v9406
      %v9408 = vmul.f32 %v9343, 1.442695
      %v9409 = vpow.pop %v9408
      %v9410 = vmul.f32 %v9344, 1.442695
      %v9411 = vpow.pop %v9410
      %v9412 = vmul.f32 %v9345, 1.442695
      %v9413 = vpow.pop %v9412
      %v9414 = vmul.f32 %v9346, 1.442695
      %v9415 = vpow.pop %v9414
      %v9416 = vmul.f32 %v9347, 1.442695
      %v9417 = vpow.pop %v9416
      %v9418 = vmul.f32 %v9348, 1.442695
      %v9419 = vpow.pop %v9418
      %v9420 = vmul.f32 %v9349, 1.442695
      %v9421 = vpow.pop %v9420
      %v9422 = vmul.f32 %v9350, 1.442695
      %v9423 = vpow.pop %v9422
      %v9424 = vmul.f32 %v9351, 1.442695
      %v9425 = vpow.pop %v9424
      %v9426 = vmul.f32 %v9352, 1.442695
      %v9427 = vpow.pop %v9426
      %v9428 = vmul.f32 %v9353, 1.442695
      %v9429 = vpow.pop %v9428
      %v9430 = vmul.f32 %v9354, 1.442695
      %v9431 = vpow.pop %v9430
      %v9432 = vmul.f32 %v9355, 1.442695
      %v9433 = vpow.pop %v9432
      %v9434 = vmul.f32 %v9356, 1.442695
      %v9435 = vpow.pop %v9434
      %v9436 = vmul.f32 %v9357, 1.442695
      %v9437 = vpow.pop %v9436
      %v9438 = vmul.f32 %v9358, 1.442695
      %v9439 = vpow.pop %v9438
      %v9440 = vmul.f32 %v9359, 1.442695
      %v9441 = vpow.pop %v9440
      %v9442 = vmul.f32 %v9360, 1.442695
      %v9443 = vpow.pop %v9442
      %v9444 = vmul.f32 %v9361, 1.442695
      %v9445 = vpow.pop %v9444
      %v9446 = vmul.f32 %v9362, 1.442695
      %v9447 = vpow.pop %v9446
      %v9448 = vmul.f32 %v9363, 1.442695
      %v9449 = vpow.pop %v9448
      %v9450 = vmul.f32 %v9364, 1.442695
      %v9451 = vpow.pop %v9450
      %v9452 = vmul.f32 %v9365, 1.442695
      %v9453 = vpow.pop %v9452
      %v9454 = vmul.f32 %v9366, 1.442695
      %v9455 = vpow.pop %v9454
      %v9456 = vmul.f32 %v9367, 1.442695
      %v9457 = vpow.pop %v9456
      %v9458 = vmul.f32 %v9368, 1.442695
      %v9459 = vpow.pop %v9458
      %v9460 = vmul.f32 %v9369, 1.442695
      %v9461 = vpow.pop %v9460
      %v9462 = vmul.f32 %v9370, 1.442695
      %v9463 = vpow.pop %v9462
      %v9464 = vmul.f32 %v9371, 1.442695
      %v9465 = vpow.pop %v9464
      %v9466 = vmul.f32 %v9372, 1.442695
      %v9467 = vpow.pop %v9466
      %v9468 = vmul.f32 %v9373, 1.442695
      %v9469 = vpow.pop %v9468
      %v9470 = vmul.f32 %v9374, 1.442695
      %v9471 = vpow.pop %v9470
      %v9472 = vmul.f32 %v9375, 1.442695
      %v9473 = vpow.pop %v9472
      %v9474 = vmul.f32 %v9376, 1.442695
      %v9475 = vpow.pop %v9474
      %v9476 = vmul.f32 %v9377, 1.442695
      %v9477 = vpow.pop %v9476
      %v9478 = vmul.f32 %v9378, 1.442695
      %v9479 = vpow.pop %v9478
      %v9480 = vmul.f32 %v9379, 1.442695
      %v9481 = vpow.pop %v9480
      %v9482 = vmul.f32 %v9380, 1.442695
      %v9483 = vpow.pop %v9482
      %v9484 = vmul.f32 %v9381, 1.442695
      %v9485 = vpow.pop %v9484
      %v9486 = vmul.f32 %v9382, 1.442695
      %v9487 = vpow.pop %v9486
      %v9488 = vmul.f32 %v9383, 1.442695
      %v9489 = vpow.pop %v9488
      %v9490 = vmul.f32 %v9384, 1.442695
      %v9491 = vpow.pop %v9490
      %v9492 = vmul.f32 %v9385, 1.442695
      %v9493 = vpow.pop %v9492
      %v9494 = vmul.f32 %v9386, 1.442695
      %v9495 = vpow.pop %v9494
      %v9496 = vmul.f32 %v9387, 1.442695
      %v9497 = vpow.pop %v9496
      %v9498 = vmul.f32 %v9388, 1.442695
      %v9499 = vpow.pop %v9498
      %v9500 = vmul.f32 %v9389, 1.442695
      %v9501 = vpow.pop %v9500
      %v9502 = vmul.f32 %v9390, 1.442695
      %v9503 = vpow.pop %v9502
      %v9504 = vmul.f32 %v9391, 1.442695
      %v9505 = vpow.pop %v9504
      %v9506 = vmul.f32 %v9392, 1.442695
      %v9507 = vpow.pop %v9506
      %v9508 = vmul.f32 %v9393, 1.442695
      %v9509 = vpow.pop %v9508
      %v9510 = vmul.f32 %v9394, 1.442695
      %v9511 = vpow.pop %v9510
      %v9512 = vmul.f32 %v9395, 1.442695
      %v9513 = vpow.pop %v9512
      %v9514 = vmul.f32 %v9396, 1.442695
      %v9515 = vpow.pop %v9514
      %v9516 = vmul.f32 %v9397, 1.442695
      %v9517 = vpow.pop %v9516
      %v9518 = vmul.f32 %v9398, 1.442695
      %v9519 = vpow.pop %v9518
      %v9520 = vmul.f32 %v9399, 1.442695
      %v9521 = vpow.pop %v9520
      %v9522 = vmul.f32 %v9400, 1.442695
      %v9523 = vpow.pop %v9522
      %v9524 = vmul.f32 %v9401, 1.442695
      %v9525 = vpow.pop %v9524
      %v9526 = vmul.f32 %v9402, 1.442695
      %v9527 = vpow.pop %v9526
      %v9528 = vmul.f32 %v9403, 1.442695
      %v9529 = vpow.pop %v9528
      %v9530 = vmul.f32 %v9404, 1.442695
      %v9531 = vpow.pop %v9530
      %v9532 = vmul.f32 %v9405, 1.442695
      %v9533 = vpow.pop %v9532
      %v9534 = vadd.f32 %v9407, 1.0
      %v9535 = vadd.f32 %v9409, 1.0
      %v9536 = vadd.f32 %v9411, 1.0
      %v9537 = vadd.f32 %v9413, 1.0
      %v9538 = vadd.f32 %v9415, 1.0
      %v9539 = vadd.f32 %v9417, 1.0
      %v9540 = vadd.f32 %v9419, 1.0
      %v9541 = vadd.f32 %v9421, 1.0
      %v9542 = vadd.f32 %v9423, 1.0
      %v9543 = vadd.f32 %v9425, 1.0
      %v9544 = vadd.f32 %v9427, 1.0
      %v9545 = vadd.f32 %v9429, 1.0
      %v9546 = vadd.f32 %v9431, 1.0
      %v9547 = vadd.f32 %v9433, 1.0
      %v9548 = vadd.f32 %v9435, 1.0
      %v9549 = vadd.f32 %v9437, 1.0
      %v9550 = vadd.f32 %v9439, 1.0
      %v9551 = vadd.f32 %v9441, 1.0
      %v9552 = vadd.f32 %v9443, 1.0
      %v9553 = vadd.f32 %v9445, 1.0
      %v9554 = vadd.f32 %v9447, 1.0
      %v9555 = vadd.f32 %v9449, 1.0
      %v9556 = vadd.f32 %v9451, 1.0
      %v9557 = vadd.f32 %v9453, 1.0
      %v9558 = vadd.f32 %v9455, 1.0
      %v9559 = vadd.f32 %v9457, 1.0
      %v9560 = vadd.f32 %v9459, 1.0
      %v9561 = vadd.f32 %v9461, 1.0
      %v9562 = vadd.f32 %v9463, 1.0
      %v9563 = vadd.f32 %v9465, 1.0
      %v9564 = vadd.f32 %v9467, 1.0
      %v9565 = vadd.f32 %v9469, 1.0
      %v9566 = vadd.f32 %v9471, 1.0
      %v9567 = vadd.f32 %v9473, 1.0
      %v9568 = vadd.f32 %v9475, 1.0
      %v9569 = vadd.f32 %v9477, 1.0
      %v9570 = vadd.f32 %v9479, 1.0
      %v9571 = vadd.f32 %v9481, 1.0
      %v9572 = vadd.f32 %v9483, 1.0
      %v9573 = vadd.f32 %v9485, 1.0
      %v9574 = vadd.f32 %v9487, 1.0
      %v9575 = vadd.f32 %v9489, 1.0
      %v9576 = vadd.f32 %v9491, 1.0
      %v9577 = vadd.f32 %v9493, 1.0
      %v9578 = vadd.f32 %v9495, 1.0
      %v9579 = vadd.f32 %v9497, 1.0
      %v9580 = vadd.f32 %v9499, 1.0
      %v9581 = vadd.f32 %v9501, 1.0
      %v9582 = vadd.f32 %v9503, 1.0
      %v9583 = vadd.f32 %v9505, 1.0
      %v9584 = vadd.f32 %v9507, 1.0
      %v9585 = vadd.f32 %v9509, 1.0
      %v9586 = vadd.f32 %v9511, 1.0
      %v9587 = vadd.f32 %v9513, 1.0
      %v9588 = vadd.f32 %v9515, 1.0
      %v9589 = vadd.f32 %v9517, 1.0
      %v9590 = vadd.f32 %v9519, 1.0
      %v9591 = vadd.f32 %v9521, 1.0
      %v9592 = vadd.f32 %v9523, 1.0
      %v9593 = vadd.f32 %v9525, 1.0
      %v9594 = vadd.f32 %v9527, 1.0
      %v9595 = vadd.f32 %v9529, 1.0
      %v9596 = vadd.f32 %v9531, 1.0
      %v9597 = vadd.f32 %v9533, 1.0
      %v9598 = vrcp.pop %v9534
      %v9599 = vmul.f32 1.0, %v9598
      %v9600 = vrcp.pop %v9535
      %v9601 = vmul.f32 1.0, %v9600
      %v9602 = vrcp.pop %v9536
      %v9603 = vmul.f32 1.0, %v9602
      %v9604 = vrcp.pop %v9537
      %v9605 = vmul.f32 1.0, %v9604
      %v9606 = vrcp.pop %v9538
      %v9607 = vmul.f32 1.0, %v9606
      %v9608 = vrcp.pop %v9539
      %v9609 = vmul.f32 1.0, %v9608
      %v9610 = vrcp.pop %v9540
      %v9611 = vmul.f32 1.0, %v9610
      %v9612 = vrcp.pop %v9541
      %v9613 = vmul.f32 1.0, %v9612
      %v9614 = vrcp.pop %v9542
      %v9615 = vmul.f32 1.0, %v9614
      %v9616 = vrcp.pop %v9543
      %v9617 = vmul.f32 1.0, %v9616
      %v9618 = vrcp.pop %v9544
      %v9619 = vmul.f32 1.0, %v9618
      %v9620 = vrcp.pop %v9545
      %v9621 = vmul.f32 1.0, %v9620
      %v9622 = vrcp.pop %v9546
      %v9623 = vmul.f32 1.0, %v9622
      %v9624 = vrcp.pop %v9547
      %v9625 = vmul.f32 1.0, %v9624
      %v9626 = vrcp.pop %v9548
      %v9627 = vmul.f32 1.0, %v9626
      %v9628 = vrcp.pop %v9549
      %v9629 = vmul.f32 1.0, %v9628
      %v9630 = vrcp.pop %v9550
      %v9631 = vmul.f32 1.0, %v9630
      %v9632 = vrcp.pop %v9551
      %v9633 = vmul.f32 1.0, %v9632
      %v9634 = vrcp.pop %v9552
      %v9635 = vmul.f32 1.0, %v9634
      %v9636 = vrcp.pop %v9553
      %v9637 = vmul.f32 1.0, %v9636
      %v9638 = vrcp.pop %v9554
      %v9639 = vmul.f32 1.0, %v9638
      %v9640 = vrcp.pop %v9555
      %v9641 = vmul.f32 1.0, %v9640
      %v9642 = vrcp.pop %v9556
      %v9643 = vmul.f32 1.0, %v9642
      %v9644 = vrcp.pop %v9557
      %v9645 = vmul.f32 1.0, %v9644
      %v9646 = vrcp.pop %v9558
      %v9647 = vmul.f32 1.0, %v9646
      %v9648 = vrcp.pop %v9559
      %v9649 = vmul.f32 1.0, %v9648
      %v9650 = vrcp.pop %v9560
      %v9651 = vmul.f32 1.0, %v9650
      %v9652 = vrcp.pop %v9561
      %v9653 = vmul.f32 1.0, %v9652
      %v9654 = vrcp.pop %v9562
      %v9655 = vmul.f32 1.0, %v9654
      %v9656 = vrcp.pop %v9563
      %v9657 = vmul.f32 1.0, %v9656
      %v9658 = vrcp.pop %v9564
      %v9659 = vmul.f32 1.0, %v9658
      %v9660 = vrcp.pop %v9565
      %v9661 = vmul.f32 1.0, %v9660
      %v9662 = vrcp.pop %v9566
      %v9663 = vmul.f32 1.0, %v9662
      %v9664 = vrcp.pop %v9567
      %v9665 = vmul.f32 1.0, %v9664
      %v9666 = vrcp.pop %v9568
      %v9667 = vmul.f32 1.0, %v9666
      %v9668 = vrcp.pop %v9569
      %v9669 = vmul.f32 1.0, %v9668
      %v9670 = vrcp.pop %v9570
      %v9671 = vmul.f32 1.0, %v9670
      %v9672 = vrcp.pop %v9571
      %v9673 = vmul.f32 1.0, %v9672
      %v9674 = vrcp.pop %v9572
      %v9675 = vmul.f32 1.0, %v9674
      %v9676 = vrcp.pop %v9573
      %v9677 = vmul.f32 1.0, %v9676
      %v9678 = vrcp.pop %v9574
      %v9679 = vmul.f32 1.0, %v9678
      %v9680 = vrcp.pop %v9575
      %v9681 = vmul.f32 1.0, %v9680
      %v9682 = vrcp.pop %v9576
      %v9683 = vmul.f32 1.0, %v9682
      %v9684 = vrcp.pop %v9577
      %v9685 = vmul.f32 1.0, %v9684
      %v9686 = vrcp.pop %v9578
      %v9687 = vmul.f32 1.0, %v9686
      %v9688 = vrcp.pop %v9579
      %v9689 = vmul.f32 1.0, %v9688
      %v9690 = vrcp.pop %v9580
      %v9691 = vmul.f32 1.0, %v9690
      %v9692 = vrcp.pop %v9581
      %v9693 = vmul.f32 1.0, %v9692
      %v9694 = vrcp.pop %v9582
      %v9695 = vmul.f32 1.0, %v9694
      %v9696 = vrcp.pop %v9583
      %v9697 = vmul.f32 1.0, %v9696
      %v9698 = vrcp.pop %v9584
      %v9699 = vmul.f32 1.0, %v9698
      %v9700 = vrcp.pop %v9585
      %v9701 = vmul.f32 1.0, %v9700
      %v9702 = vrcp.pop %v9586
      %v9703 = vmul.f32 1.0, %v9702
      %v9704 = vrcp.pop %v9587
      %v9705 = vmul.f32 1.0, %v9704
      %v9706 = vrcp.pop %v9588
      %v9707 = vmul.f32 1.0, %v9706
      %v9708 = vrcp.pop %v9589
      %v9709 = vmul.f32 1.0, %v9708
      %v9710 = vrcp.pop %v9590
      %v9711 = vmul.f32 1.0, %v9710
      %v9712 = vrcp.pop %v9591
      %v9713 = vmul.f32 1.0, %v9712
      %v9714 = vrcp.pop %v9592
      %v9715 = vmul.f32 1.0, %v9714
      %v9716 = vrcp.pop %v9593
      %v9717 = vmul.f32 1.0, %v9716
      %v9718 = vrcp.pop %v9594
      %v9719 = vmul.f32 1.0, %v9718
      %v9720 = vrcp.pop %v9595
      %v9721 = vmul.f32 1.0, %v9720
      %v9722 = vrcp.pop %v9596
      %v9723 = vmul.f32 1.0, %v9722
      %v9724 = vrcp.pop %v9597
      %v9725 = vmul.f32 1.0, %v9724
      %9726 = vst [vmem:[%s365] sm:$0xff] %v9599
      %9727 = vst [vmem:[%s365 + $0x8] sm:$0xff] %v9601
      %9728 = vst [vmem:[%s365 + $0x10] sm:$0xff] %v9603
      %9729 = vst [vmem:[%s365 + $0x18] sm:$0xff] %v9605
      %9730 = vst [vmem:[%s365 + $0x20] sm:$0xff] %v9607
      %9731 = vst [vmem:[%s365 + $0x28] sm:$0xff] %v9609
      %9732 = vst [vmem:[%s365 + $0x30] sm:$0xff] %v9611
      %9733 = vst [vmem:[%s365 + $0x38] sm:$0xff] %v9613
      %9734 = vst [vmem:[%s365 + $0x40] sm:$0xff] %v9615
      %9735 = vst [vmem:[%s365 + $0x48] sm:$0xff] %v9617
      %9736 = vst [vmem:[%s365 + $0x50] sm:$0xff] %v9619
      %9737 = vst [vmem:[%s365 + $0x58] sm:$0xff] %v9621
      %9738 = vst [vmem:[%s365 + $0x60] sm:$0xff] %v9623
      %9739 = vst [vmem:[%s365 + $0x68] sm:$0xff] %v9625
      %9740 = vst [vmem:[%s365 + $0x70] sm:$0xff] %v9627
      %9741 = vst [vmem:[%s365 + $0x78] sm:$0xff] %v9629
      %9742 = vst [vmem:[%s365 + $0x80] sm:$0xff] %v9631
      %9743 = vst [vmem:[%s365 + $0x88] sm:$0xff] %v9633
      %9744 = vst [vmem:[%s365 + $0x90] sm:$0xff] %v9635
      %9745 = vst [vmem:[%s365 + $0x98] sm:$0xff] %v9637
      %9746 = vst [vmem:[%s365 + $0xa0] sm:$0xff] %v9639
      %9747 = vst [vmem:[%s365 + $0xa8] sm:$0xff] %v9641
      %9748 = vst [vmem:[%s365 + $0xb0] sm:$0xff] %v9643
      %9749 = vst [vmem:[%s365 + $0xb8] sm:$0xff] %v9645
      %9750 = vst [vmem:[%s365 + $0xc0] sm:$0xff] %v9647
      %9751 = vst [vmem:[%s365 + $0xc8] sm:$0xff] %v9649
      %9752 = vst [vmem:[%s365 + $0xd0] sm:$0xff] %v9651
      %9753 = vst [vmem:[%s365 + $0xd8] sm:$0xff] %v9653
      %9754 = vst [vmem:[%s365 + $0xe0] sm:$0xff] %v9655
      %9755 = vst [vmem:[%s365 + $0xe8] sm:$0xff] %v9657
      %9756 = vst [vmem:[%s365 + $0xf0] sm:$0xff] %v9659
      %9757 = vst [vmem:[%s365 + $0xf8] sm:$0xff] %v9661
      %9758 = vst [vmem:[%s365 + $0x100] sm:$0xff] %v9663
      %9759 = vst [vmem:[%s365 + $0x108] sm:$0xff] %v9665
      %9760 = vst [vmem:[%s365 + $0x110] sm:$0xff] %v9667
      %9761 = vst [vmem:[%s365 + $0x118] sm:$0xff] %v9669
      %9762 = vst [vmem:[%s365 + $0x120] sm:$0xff] %v9671
      %9763 = vst [vmem:[%s365 + $0x128] sm:$0xff] %v9673
      %9764 = vst [vmem:[%s365 + $0x130] sm:$0xff] %v9675
      %9765 = vst [vmem:[%s365 + $0x138] sm:$0xff] %v9677
      %9766 = vst [vmem:[%s365 + $0x140] sm:$0xff] %v9679
      %9767 = vst [vmem:[%s365 + $0x148] sm:$0xff] %v9681
      %9768 = vst [vmem:[%s365 + $0x150] sm:$0xff] %v9683
      %9769 = vst [vmem:[%s365 + $0x158] sm:$0xff] %v9685
      %9770 = vst [vmem:[%s365 + $0x160] sm:$0xff] %v9687
      %9771 = vst [vmem:[%s365 + $0x168] sm:$0xff] %v9689
      %9772 = vst [vmem:[%s365 + $0x170] sm:$0xff] %v9691
      %9773 = vst [vmem:[%s365 + $0x178] sm:$0xff] %v9693
      %9774 = vst [vmem:[%s365 + $0x180] sm:$0xff] %v9695
      %9775 = vst [vmem:[%s365 + $0x188] sm:$0xff] %v9697
      %9776 = vst [vmem:[%s365 + $0x190] sm:$0xff] %v9699
      %9777 = vst [vmem:[%s365 + $0x198] sm:$0xff] %v9701
      %9778 = vst [vmem:[%s365 + $0x1a0] sm:$0xff] %v9703
      %9779 = vst [vmem:[%s365 + $0x1a8] sm:$0xff] %v9705
      %9780 = vst [vmem:[%s365 + $0x1b0] sm:$0xff] %v9707
      %9781 = vst [vmem:[%s365 + $0x1b8] sm:$0xff] %v9709
      %9782 = vst [vmem:[%s365 + $0x1c0] sm:$0xff] %v9711
      %9783 = vst [vmem:[%s365 + $0x1c8] sm:$0xff] %v9713
      %9784 = vst [vmem:[%s365 + $0x1d0] sm:$0xff] %v9715
      %9785 = vst [vmem:[%s365 + $0x1d8] sm:$0xff] %v9717
      %9786 = vst [vmem:[%s365 + $0x1e0] sm:$0xff] %v9719
      %9787 = vst [vmem:[%s365 + $0x1e8] sm:$0xff] %v9721
      %9788 = vst [vmem:[%s365 + $0x1f0] sm:$0xff] %v9723
      %9789 = vst [vmem:[%s365 + $0x1f8] sm:$0xff] %v9725
      %s9790 = smul.u32 64, %s22
      %p9791 = scmp.lt.s32.totalorder %s21, 1
      %s9792 = scalar_select %p9791, %s21, 1
      %p9793 = scmp.lt.s32.totalorder %s9790, 63
      %s9794 = scalar_select %p9793, %s9790, 63
      %s9795 = smul.addr %s9792, 64
      %s9796 = sadd.s32 %s9794, %s9795
      %s9797 = smul.addr %s9796, 8
      %s9798 = scalar_lea.vmem %s6, %s9797
      // Predicated region
      $region45: #{final_layer_forward.1} parent=43 // pred_check
        %p9799 = pneg %p193
      $region46: #{final_layer_forward.1} parent=43 // pred_check_branch
        %9801 = sbr.rel (%p9799) target = $region48
      $region47: #{final_layer_forward.1} parent=43 // pred_region
        %s9802 = smul.u32 64, %s22
      $region48: #{final_layer_forward.1} parent=43 // pred_fallthru
        _
    $region44: #{final_layer_forward.1} parent=5 // pred_fallthru
      _
    %p9803 = scmp.le.s32.totalorder 2, %s12
    // Predicated region
    $region49: #{final_layer_forward.1} parent=5 // pred_check
      %p9804 = pneg %p9803
    $region50: #{final_layer_forward.1} parent=5 // pred_check_branch
      %9806 = sbr.rel (%p9804) target = $region52
    $region51: #{final_layer_forward.1} parent=5 // pred_region
      %s9807 = ssub.s32 %s12, 2
      // Predicated region
      $region53: #{final_layer_forward.1} parent=51 // pred_check
        %p9808 = pneg %p199
      $region54: #{final_layer_forward.1} parent=51 // pred_check_branch
        %9810 = sbr.rel (%p9808) target = $region56
      $region55: #{final_layer_forward.1} parent=51 // pred_region
        %s9811 = smul.u32 64, %s24
        %p9812 = scmp.lt.s32.totalorder %s23, 1
        %s9813 = scalar_select %p9812, %s23, 1
        %p9814 = scmp.lt.s32.totalorder %s9811, 63
        %s9815 = scalar_select %p9814, %s9811, 63
        %s9816 = smul.addr %s9813, 64
        %s9817 = sadd.s32 %s9815, %s9816
        %s9818 = smul.addr %s9817, 8
        %s9819 = scalar_lea.vmem %s6, %s9818
      $region56: #{final_layer_forward.1} parent=51 // pred_fallthru
        _
    $region52: #{final_layer_forward.1} parent=5 // pred_fallthru
      _
  $region6: #{final_layer_forward.1} parent=0 // loop_footer
    %s16 = sadd.s32 1, %s12
  $region7: #{final_layer_forward.1} parent=0 // loop_footer_branch
    %11 = sbr.rel target = $region3
  $region8: #{final_layer_forward.1} parent=0 // loop_exit
    _

</llo_original>
